<compile_context>
chip_gen: v7x
topology: tpu7x:2x2x1
jax: 0.10.0
libtpu: 0.0.40
codegen_flags: <defaults>
</compile_context>

<pallas_src>
import functools

import numpy as np
import jax
import jax.numpy as jnp
from jax.experimental import pallas as pl
from jax.experimental.pallas import tpu as pltpu

LEVELS = (5, 5)            # FSQ levels -> bottleneck dim = len(LEVELS) = 2
AUDIO_LATENT_DIM = 8
WINDOW_SIZE = 9
FSQ_EPS = 1e-3
FEAT = 1024
HIDDEN = 128
ENC_DIM = 64
ROW_ALIGN = 16             # bf16 activations: keep batch-tile rows on the (16,128) bf16 tile


def _silu(x):
    return x * jax.nn.sigmoid(x)


def _round_up(x, m):
    return ((x + m - 1) // m) * m


def _fsq_constants(levels):
    # TODO(synk): only uniform level lists supported as baked scalars (default [5, 5]).
    if len(set(levels)) != 1:
        raise NotImplementedError("non-uniform FSQ levels not supported in this kernel")
    L = int(levels[0])
    half_l = (L - 1.0) * (1.0 + FSQ_EPS) / 2.0
    offset = 0.5 if L % 2 == 0 else 0.0
    shift = float(np.arctanh(offset / half_l))
    inv_half_width = 1.0 / float(L // 2)
    return half_l, offset, shift, inv_half_width


def _fuse_proj_enc1(params, window_size):
    """Fuse initial_projection (1024->128 per window) with encoder Linear(128*W -> 128).

    W_fused[w*1024:(w+1)*1024, :] = W_proj @ W_enc1[w*128:(w+1)*128, :]
    b_fused = b_enc1 + sum_w b_proj @ W_enc1[w*128:(w+1)*128, :]
    Computed in f32, stored bf16 for the kernel (one-time wrapper cost, trivially small).
    """
    w_proj, b_proj = params["proj"]          # (1024, 128) bf16, (1, 128) f32
    w_enc1, b_enc1 = params["enc1"]          # (W*128, 128) bf16, (1, 128) f32
    wp = w_proj.astype(jnp.float32)
    we = w_enc1.astype(jnp.float32).reshape(window_size, HIDDEN, HIDDEN)
    w_fused = jnp.einsum("fh,whg->wfg", wp, we).reshape(window_size * FEAT, HIDDEN)
    b_fused = b_enc1.astype(jnp.float32) + jnp.einsum(
        "h,whg->g", b_proj[0].astype(jnp.float32), we)[None]
    return w_fused.astype(jnp.bfloat16), b_fused.astype(jnp.float32)


def _audio_latents_kernel(
    x_ref,                         # (tb, W*1024) bf16
    w_fused_ref, b_fused_ref,      # (W*1024, 128) bf16, (1, 128) f32
    w_enc2_ref, b_enc2_ref,        # (128, 64) bf16, (1, 64) f32
    w_fsq_in_ref, b_fsq_in_ref,    # (64, 2) bf16, (1, 2) f32
    w_fsq_out_ref, b_fsq_out_ref,  # (2, 64) bf16, (1, 64) f32
    w_dec1_ref, b_dec1_ref,        # (64, 64) bf16, (1, 64) f32
    w_dec2_ref, b_dec2_ref,        # (64, out_pad) bf16 (zero-padded), (1, out_pad) f32
    o_ref,                         # (tb, out_pad) f32
    *, fsq_half_l, fsq_offset, fsq_shift, fsq_inv_half_width,
):
    # Fused initial_projection + Linear(128*W, 128): one K=9216 contraction, then SiLU.
    h2 = _silu(jnp.dot(x_ref[...], w_fused_ref[...],
                       preferred_element_type=jnp.float32) + b_fused_ref[...])

    # TODO(synk): the reference declares nn.Linear(64, 64) here, which is shape-inconsistent
    # with its 128-dim input; implemented as Linear(128, 64) to keep the chain valid.
    h3 = _silu(jnp.dot(h2.astype(jnp.bfloat16), w_enc2_ref[...],
                       preferred_element_type=jnp.float32) + b_enc2_ref[...])

    # FSQ (lucidrains-style, forward only): project_in -> bound -> round -> scale -> project_out
    # TODO(synk): no straight-through estimator on round (inference-only forward).
    z = jnp.dot(h3.astype(jnp.bfloat16), w_fsq_in_ref[...],
                preferred_element_type=jnp.float32) + b_fsq_in_ref[...]
    z_q = (jnp.round(jnp.tanh(z + fsq_shift) * fsq_half_l - fsq_offset)
           * fsq_inv_half_width)
    q = jnp.dot(z_q.astype(jnp.bfloat16), w_fsq_out_ref[...],
                preferred_element_type=jnp.float32) + b_fsq_out_ref[...]

    # decoder: SiLU -> Linear(64,64) -> SiLU -> Linear(64, audio_latent_dim padded to 128)
    d = _silu(q)
    d = _silu(jnp.dot(d.astype(jnp.bfloat16), w_dec1_ref[...],
                      preferred_element_type=jnp.float32) + b_dec1_ref[...])
    out = jnp.dot(d.astype(jnp.bfloat16), w_dec2_ref[...],
                  preferred_element_type=jnp.float32) + b_dec2_ref[...]
    o_ref[...] = out.astype(o_ref.dtype)


def init_params(key, window_size=WINDOW_SIZE, audio_latent_dim=AUDIO_LATENT_DIM,
                levels=LEVELS):
    """PyTorch-default-style Linear init; weights stored (in, out) bf16, biases f32."""
    def linear(k, fan_in, fan_out):
        kw, kb = jax.random.split(k)
        bound = 1.0 / float(np.sqrt(fan_in))
        w = jax.random.uniform(kw, (fan_in, fan_out), jnp.float32, -bound, bound)
        b = jax.random.uniform(kb, (1, fan_out), jnp.float32, -bound, bound)
        return w.astype(jnp.bfloat16), b

    ks = jax.random.split(key, 7)
    fsq_dim = len(levels)
    params = {}
    params["proj"] = linear(ks[0], FEAT, HIDDEN)
    params["enc1"] = linear(ks[1], HIDDEN * window_size, HIDDEN)   # (1152, 128) flat
    params["enc2"] = linear(ks[2], HIDDEN, ENC_DIM)
    params["fsq_in"] = linear(ks[3], ENC_DIM, fsq_dim)
    params["fsq_out"] = linear(ks[4], fsq_dim, ENC_DIM)
    params["dec1"] = linear(ks[5], ENC_DIM, ENC_DIM)
    params["dec2"] = linear(ks[6], ENC_DIM, audio_latent_dim)
    return params


def audio_latents_forward(params, audio_features, *, levels=LEVELS, block_rows=512):
    """Batched forward. audio_features: (B, window_size, 1024) or (window_size, 1024).

    block_rows = rows (windows) per grid step. The kernel is HBM-bound, so bigger is better
    up to VMEM: 512-1024 on v6e/v5e (128 MiB VMEM), <=512 on v7x (64 MiB, bf16 input).
    block_rows is clamped so the grid has >=2 steps whenever the batch allows (v7x TC split
    and input-DMA/compute overlap).
    """
    single = audio_features.ndim == 2
    if single:
        audio_features = audio_features[None]
    B, W, F = audio_features.shape
    assert F == FEAT, f"expected feature dim {FEAT}, got {F}"
    audio_latent_dim = int(params["dec2"][0].shape[1])
    out_pad = _round_up(max(audio_latent_dim, 128), 128)   # lane-dense output slab
    half_l, offset, shift, inv_half_width = _fsq_constants(levels)

    # Batch tiling: multiples of ROW_ALIGN, and >=2 grid steps when the batch allows.
    B_aligned = _round_up(B, ROW_ALIGN)
    tb = max(ROW_ALIGN, min((int(block_rows) // ROW_ALIGN) * ROW_ALIGN, B_aligned))
    if B_aligned // tb < 2 and B_aligned >= 2 * ROW_ALIGN:
        tb = max(ROW_ALIGN, ((B_aligned // 2) // ROW_ALIGN) * ROW_ALIGN)
    B_pad = _round_up(B_aligned, tb)

    # bf16 activation stream: halves the dominant HBM input DMA (fuses if input already bf16).
    x = jnp.asarray(audio_features).astype(jnp.bfloat16).reshape(B, W * F)
    if B_pad != B:
        x = jnp.pad(x, ((0, B_pad - B), (0, 0)))

    # Fused proj+enc1 weight, and lane-padded dec2 weight/bias (zero columns beyond latent dim).
    w_fused, b_fused = _fuse_proj_enc1(params, W)
    w_dec2, b_dec2 = params["dec2"]
    w_dec2_p = jnp.zeros((ENC_DIM, out_pad), jnp.bfloat16).at[:, :audio_latent_dim].set(w_dec2)
    b_dec2_p = jnp.zeros((1, out_pad), jnp.float32).at[:, :audio_latent_dim].set(b_dec2)

    weights = (w_fused, b_fused,
               *params["enc2"], *params["fsq_in"], *params["fsq_out"],
               *params["dec1"], w_dec2_p, b_dec2_p)

    kernel = functools.partial(
        _audio_latents_kernel,
        fsq_half_l=half_l, fsq_offset=offset, fsq_shift=shift,
        fsq_inv_half_width=inv_half_width)

    x_spec = pl.BlockSpec((tb, W * F), lambda i: (i, 0))
    # Weights/biases: full-array blocks with a constant index_map -> DMA'd to VMEM once and
    # kept resident across all grid steps.
    # TODO(synk): pipeline_mode=pl.Buffered(1) on these specs would halve their VMEM footprint
    # (~2.4 MiB saved, relevant only on v7x); left at the default for maximum compatibility.
    w_specs = [pl.BlockSpec(w.shape, lambda i: (0, 0)) for w in weights]
    out_spec = pl.BlockSpec((tb, out_pad), lambda i: (i, 0))

    weight_bytes = int(sum(int(np.prod(w.shape)) * w.dtype.itemsize for w in weights))
    fsq_dim = len(levels)
    flops_per_row = 2 * (W * F * HIDDEN + HIDDEN * ENC_DIM + ENC_DIM * fsq_dim
                         + fsq_dim * ENC_DIM + ENC_DIM * ENC_DIM + ENC_DIM * out_pad)
    cost = pl.CostEstimate(
        flops=int(B_pad * flops_per_row),
        transcendentals=int(B_pad * (HIDDEN + 3 * ENC_DIM + fsq_dim)),
        bytes_accessed=int(B_pad * W * F * 2 + B_pad * out_pad * 4 + weight_bytes))

    # VMEM budget from actual tile sizes; cap at 56 MiB so it also fits v7x's 64 MiB physical.
    in_block_bytes = tb * W * F * 2
    out_block_bytes = tb * out_pad * 4
    vmem_bytes = 2 * (in_block_bytes + out_block_bytes) + 2 * weight_bytes + (8 << 20)
    vmem_bytes = int(min(max(vmem_bytes, 32 << 20), 56 << 20))

    out = pl.pallas_call(
        kernel,
        out_shape=jax.ShapeDtypeStruct((B_pad, out_pad), jnp.float32),
        grid_spec=pltpu.PrefetchScalarGridSpec(
            num_scalar_prefetch=0,
            grid=(B_pad // tb,),
            in_specs=[x_spec, *w_specs],
            out_specs=out_spec),
        compiler_params=pltpu.CompilerParams(
            # parallel batch axis -> sharded across v7x's two TensorCores (no-op on v5e/v6e).
            dimension_semantics=("parallel",),
            vmem_limit_bytes=vmem_bytes),
        cost_estimate=cost,
    )(x, *weights)

    out = out[:B, :audio_latent_dim]
    return out[0] if single else out


def audio_latents_ref(params, audio_features, levels=LEVELS):
    """Pure-JAX reference mirroring the kernel's math exactly (fused proj+enc1 bf16 weight,
    bf16 matmul inputs, f32 accumulation), so kernel-vs-reference deltas are only
    summation-order noise."""
    half_l, offset, shift, inv_half_width = _fsq_constants(levels)
    single = audio_features.ndim == 2
    if single:
        audio_features = audio_features[None]
    B, W, F = audio_features.shape

    def mm(a, w):  # bf16 inputs, f32 accumulation — same contract as the kernel's dots
        return jnp.matmul(a.astype(jnp.bfloat16), w.astype(jnp.bfloat16),
                          preferred_element_type=jnp.float32)

    w_fused, b_fused = _fuse_proj_enc1(params, W)
    x = audio_features.reshape(B, W * F)
    h2 = jax.nn.silu(mm(x, w_fused) + b_fused)
    w2, b2 = params["enc2"]
    h3 = jax.nn.silu(mm(h2, w2) + b2)
    wi, bi = params["fsq_in"]
    z = mm(h3, wi) + bi
    z_q = jnp.round(jnp.tanh(z + shift) * half_l - offset) * inv_half_width
    wo, bo = params["fsq_out"]
    q = mm(z_q, wo) + bo
    wd1, bd1 = params["dec1"]
    d = jax.nn.silu(mm(jax.nn.silu(q), wd1) + bd1)
    wd2, bd2 = params["dec2"]
    out = mm(d, wd2) + bd2
    return out[0] if single else out


if __name__ == "__main__":
    key = jax.random.PRNGKey(0)
    k_param, k_x = jax.random.split(key)
    params = init_params(k_param)

    B = 32  # small demo batch; block_rows=16 exercises a 2-step grid with resident weights
    audio_features = jax.random.normal(k_x, (B, WINDOW_SIZE, FEAT), jnp.float32)

    out = audio_latents_forward(params, audio_features, block_rows=16)
    out = jax.block_until_ready(out)
    assert out.shape == (B, AUDIO_LATENT_DIM)

    ref = audio_latents_ref(params, audio_features)
    np.testing.assert_allclose(np.asarray(out), np.asarray(ref), rtol=5e-3, atol=5e-3)

    print("KERNEL_OK")
</pallas_src>

<mosaic_0001>
module attributes {stable_mosaic.version = 11 : i64} {
  func.func @_audio_latents_kernel(%arg0: i32, %arg1: memref<16x9216xbf16, #tpu.memory_space<vmem>>, %arg2: memref<9216x128xbf16, #tpu.memory_space<vmem>>, %arg3: memref<1x128xf32, #tpu.memory_space<vmem>>, %arg4: memref<128x64xbf16, #tpu.memory_space<vmem>>, %arg5: memref<1x64xf32, #tpu.memory_space<vmem>>, %arg6: memref<64x2xbf16, #tpu.memory_space<vmem>>, %arg7: memref<1x2xf32, #tpu.memory_space<vmem>>, %arg8: memref<2x64xbf16, #tpu.memory_space<vmem>>, %arg9: memref<1x64xf32, #tpu.memory_space<vmem>>, %arg10: memref<64x64xbf16, #tpu.memory_space<vmem>>, %arg11: memref<1x64xf32, #tpu.memory_space<vmem>>, %arg12: memref<64x128xbf16, #tpu.memory_space<vmem>>, %arg13: memref<1x128xf32, #tpu.memory_space<vmem>>, %arg14: memref<16x128xf32, #tpu.memory_space<vmem>>) attributes {dimension_semantics = [#tpu.dimension_semantics<parallel>], iteration_bounds = array<i64: 2>, scalar_prefetch = 0 : i64, scratch_operands = 0 : i64, tpu.core_type = #tpu.core_type<tc>, window_params = [{transform_indices = @transform_0, window_bounds = array<i64: 16, 9216>}, {pipeline_mode = #tpu.pipeline_mode<synchronous>, transform_indices = @transform_1, window_bounds = array<i64: 9216, 128>}, {pipeline_mode = #tpu.pipeline_mode<synchronous>, transform_indices = @transform_2, window_bounds = array<i64: 1, 128>}, {pipeline_mode = #tpu.pipeline_mode<synchronous>, transform_indices = @transform_3, window_bounds = array<i64: 128, 64>}, {pipeline_mode = #tpu.pipeline_mode<synchronous>, transform_indices = @transform_4, window_bounds = array<i64: 1, 64>}, {pipeline_mode = #tpu.pipeline_mode<synchronous>, transform_indices = @transform_5, window_bounds = array<i64: 64, 2>}, {pipeline_mode = #tpu.pipeline_mode<synchronous>, transform_indices = @transform_6, window_bounds = array<i64: 1, 2>}, {pipeline_mode = #tpu.pipeline_mode<synchronous>, transform_indices = @transform_7, window_bounds = array<i64: 2, 64>}, {pipeline_mode = #tpu.pipeline_mode<synchronous>, transform_indices = @transform_8, window_bounds = array<i64: 1, 64>}, {pipeline_mode = #tpu.pipeline_mode<synchronous>, transform_indices = @transform_9, window_bounds = array<i64: 64, 64>}, {pipeline_mode = #tpu.pipeline_mode<synchronous>, transform_indices = @transform_10, window_bounds = array<i64: 1, 64>}, {pipeline_mode = #tpu.pipeline_mode<synchronous>, transform_indices = @transform_11, window_bounds = array<i64: 64, 128>}, {pipeline_mode = #tpu.pipeline_mode<synchronous>, transform_indices = @transform_12, window_bounds = array<i64: 1, 128>}, {transform_indices = @transform_13, window_bounds = array<i64: 16, 128>}]} {
    %c0 = arith.constant 0 : index
    %c0_0 = arith.constant 0 : index
    %0 = vector.load %arg1[%c0, %c0_0] : memref<16x9216xbf16, #tpu.memory_space<vmem>>, vector<16x9216xbf16>
    %c0_1 = arith.constant 0 : index
    %c0_2 = arith.constant 0 : index
    %1 = vector.load %arg2[%c0_1, %c0_2] : memref<9216x128xbf16, #tpu.memory_space<vmem>>, vector<9216x128xbf16>
    %cst = arith.constant dense<0.000000e+00> : vector<16x128xf32>
    %2 = tpu.matmul %0, %1, %cst {dimension_numbers = #tpu.dot_dimension_numbers<[1], [0], [0], [1], [0, 0, 1, 1], [], []>} : vector<16x9216xbf16>, vector<9216x128xbf16>, vector<16x128xf32> -> vector<16x128xf32>
    %c0_3 = arith.constant 0 : index
    %c0_4 = arith.constant 0 : index
    %3 = vector.load %arg3[%c0_3, %c0_4] : memref<1x128xf32, #tpu.memory_space<vmem>>, vector<1x128xf32>
    %4 = vector.broadcast %3 : vector<1x128xf32> to vector<16x128xf32>
    %5 = arith.addf %2, %4 : vector<16x128xf32>
    %6 = arith.negf %5 : vector<16x128xf32>
    %7 = math.exp %6 : vector<16x128xf32>
    %cst_5 = arith.constant 1.000000e+00 : f32
    %8 = vector.broadcast %cst_5 : f32 to vector<16x128xf32>
    %9 = arith.addf %8, %7 : vector<16x128xf32>
    %10 = arith.divf %8, %9 : vector<16x128xf32>
    %11 = arith.mulf %5, %10 : vector<16x128xf32>
    %12 = arith.truncf %11 : vector<16x128xf32> to vector<16x128xbf16>
    %c0_6 = arith.constant 0 : index
    %c0_7 = arith.constant 0 : index
    %13 = vector.load %arg4[%c0_6, %c0_7] : memref<128x64xbf16, #tpu.memory_space<vmem>>, vector<128x64xbf16>
    %cst_8 = arith.constant dense<0.000000e+00> : vector<16x64xf32>
    %14 = tpu.matmul %12, %13, %cst_8 {dimension_numbers = #tpu.dot_dimension_numbers<[1], [0], [0], [1], [0, 0, 1, 1], [], []>} : vector<16x128xbf16>, vector<128x64xbf16>, vector<16x64xf32> -> vector<16x64xf32>
    %c0_9 = arith.constant 0 : index
    %c0_10 = arith.constant 0 : index
    %15 = vector.load %arg5[%c0_9, %c0_10] : memref<1x64xf32, #tpu.memory_space<vmem>>, vector<1x64xf32>
    %16 = vector.broadcast %15 : vector<1x64xf32> to vector<16x64xf32>
    %17 = arith.addf %14, %16 : vector<16x64xf32>
    %18 = arith.negf %17 : vector<16x64xf32>
    %19 = math.exp %18 : vector<16x64xf32>
    %cst_11 = arith.constant 1.000000e+00 : f32
    %20 = vector.broadcast %cst_11 : f32 to vector<16x64xf32>
    %21 = arith.addf %20, %19 : vector<16x64xf32>
    %22 = arith.divf %20, %21 : vector<16x64xf32>
    %23 = arith.mulf %17, %22 : vector<16x64xf32>
    %24 = arith.truncf %23 : vector<16x64xf32> to vector<16x64xbf16>
    %c0_12 = arith.constant 0 : index
    %c0_13 = arith.constant 0 : index
    %25 = vector.load %arg6[%c0_12, %c0_13] : memref<64x2xbf16, #tpu.memory_space<vmem>>, vector<64x2xbf16>
    %cst_14 = arith.constant dense<0.000000e+00> : vector<16x2xf32>
    %26 = tpu.matmul %24, %25, %cst_14 {dimension_numbers = #tpu.dot_dimension_numbers<[1], [0], [0], [1], [0, 0, 1, 1], [], []>} : vector<16x64xbf16>, vector<64x2xbf16>, vector<16x2xf32> -> vector<16x2xf32>
    %c0_15 = arith.constant 0 : index
    %c0_16 = arith.constant 0 : index
    %27 = vector.load %arg7[%c0_15, %c0_16] : memref<1x2xf32, #tpu.memory_space<vmem>>, vector<1x2xf32>
    %28 = vector.broadcast %27 : vector<1x2xf32> to vector<16x2xf32>
    %29 = arith.addf %26, %28 : vector<16x2xf32>
    %cst_17 = arith.constant 0.000000e+00 : f32
    %30 = vector.broadcast %cst_17 : f32 to vector<16x2xf32>
    %31 = arith.addf %29, %30 : vector<16x2xf32>
    %32 = math.tanh %31 : vector<16x2xf32>
    %cst_18 = arith.constant 2.002000e+00 : f32
    %33 = vector.broadcast %cst_18 : f32 to vector<16x2xf32>
    %34 = arith.mulf %32, %33 : vector<16x2xf32>
    %cst_19 = arith.constant 0.000000e+00 : f32
    %35 = vector.broadcast %cst_19 : f32 to vector<16x2xf32>
    %36 = arith.subf %34, %35 : vector<16x2xf32>
    %37 = math.roundeven %36 : vector<16x2xf32>
    %cst_20 = arith.constant 5.000000e-01 : f32
    %38 = vector.broadcast %cst_20 : f32 to vector<16x2xf32>
    %39 = arith.mulf %37, %38 : vector<16x2xf32>
    %40 = arith.truncf %39 : vector<16x2xf32> to vector<16x2xbf16>
    %c0_21 = arith.constant 0 : index
    %c0_22 = arith.constant 0 : index
    %41 = vector.load %arg8[%c0_21, %c0_22] : memref<2x64xbf16, #tpu.memory_space<vmem>>, vector<2x64xbf16>
    %cst_23 = arith.constant dense<0.000000e+00> : vector<16x64xf32>
    %42 = tpu.matmul %40, %41, %cst_23 {dimension_numbers = #tpu.dot_dimension_numbers<[1], [0], [0], [1], [0, 0, 1, 1], [], []>} : vector<16x2xbf16>, vector<2x64xbf16>, vector<16x64xf32> -> vector<16x64xf32>
    %c0_24 = arith.constant 0 : index
    %c0_25 = arith.constant 0 : index
    %43 = vector.load %arg9[%c0_24, %c0_25] : memref<1x64xf32, #tpu.memory_space<vmem>>, vector<1x64xf32>
    %44 = vector.broadcast %43 : vector<1x64xf32> to vector<16x64xf32>
    %45 = arith.addf %42, %44 : vector<16x64xf32>
    %46 = arith.negf %45 : vector<16x64xf32>
    %47 = math.exp %46 : vector<16x64xf32>
    %cst_26 = arith.constant 1.000000e+00 : f32
    %48 = vector.broadcast %cst_26 : f32 to vector<16x64xf32>
    %49 = arith.addf %48, %47 : vector<16x64xf32>
    %50 = arith.divf %48, %49 : vector<16x64xf32>
    %51 = arith.mulf %45, %50 : vector<16x64xf32>
    %52 = arith.truncf %51 : vector<16x64xf32> to vector<16x64xbf16>
    %c0_27 = arith.constant 0 : index
    %c0_28 = arith.constant 0 : index
    %53 = vector.load %arg10[%c0_27, %c0_28] : memref<64x64xbf16, #tpu.memory_space<vmem>>, vector<64x64xbf16>
    %cst_29 = arith.constant dense<0.000000e+00> : vector<16x64xf32>
    %54 = tpu.matmul %52, %53, %cst_29 {dimension_numbers = #tpu.dot_dimension_numbers<[1], [0], [0], [1], [0, 0, 1, 1], [], []>} : vector<16x64xbf16>, vector<64x64xbf16>, vector<16x64xf32> -> vector<16x64xf32>
    %c0_30 = arith.constant 0 : index
    %c0_31 = arith.constant 0 : index
    %55 = vector.load %arg11[%c0_30, %c0_31] : memref<1x64xf32, #tpu.memory_space<vmem>>, vector<1x64xf32>
    %56 = vector.broadcast %55 : vector<1x64xf32> to vector<16x64xf32>
    %57 = arith.addf %54, %56 : vector<16x64xf32>
    %58 = arith.negf %57 : vector<16x64xf32>
    %59 = math.exp %58 : vector<16x64xf32>
    %cst_32 = arith.constant 1.000000e+00 : f32
    %60 = vector.broadcast %cst_32 : f32 to vector<16x64xf32>
    %61 = arith.addf %60, %59 : vector<16x64xf32>
    %62 = arith.divf %60, %61 : vector<16x64xf32>
    %63 = arith.mulf %57, %62 : vector<16x64xf32>
    %64 = arith.truncf %63 : vector<16x64xf32> to vector<16x64xbf16>
    %c0_33 = arith.constant 0 : index
    %c0_34 = arith.constant 0 : index
    %65 = vector.load %arg12[%c0_33, %c0_34] : memref<64x128xbf16, #tpu.memory_space<vmem>>, vector<64x128xbf16>
    %cst_35 = arith.constant dense<0.000000e+00> : vector<16x128xf32>
    %66 = tpu.matmul %64, %65, %cst_35 {dimension_numbers = #tpu.dot_dimension_numbers<[1], [0], [0], [1], [0, 0, 1, 1], [], []>} : vector<16x64xbf16>, vector<64x128xbf16>, vector<16x128xf32> -> vector<16x128xf32>
    %c0_36 = arith.constant 0 : index
    %c0_37 = arith.constant 0 : index
    %67 = vector.load %arg13[%c0_36, %c0_37] : memref<1x128xf32, #tpu.memory_space<vmem>>, vector<1x128xf32>
    %68 = vector.broadcast %67 : vector<1x128xf32> to vector<16x128xf32>
    %69 = arith.addf %66, %68 : vector<16x128xf32>
    %c0_38 = arith.constant 0 : index
    %c0_39 = arith.constant 0 : index
    %70 = vector.load %arg14[%c0_38, %c0_39] : memref<16x128xf32, #tpu.memory_space<vmem>>, vector<16x128xf32>
    tpu.vector_store %arg14[%c0_38, %c0_39], %69 {strides = array<i32>} : memref<16x128xf32, #tpu.memory_space<vmem>>, vector<16x128xf32>,
    return
  }
  func.func @transform_0(%arg0: i32) -> (i32, i32) {
    %c0_i32 = arith.constant 0 : i32
    %c0_i32_0 = arith.constant 0 : i32
    return %arg0, %c0_i32 : i32, i32
  }
  func.func @transform_1(%arg0: i32) -> (i32, i32) {
    %c0_i32 = arith.constant 0 : i32
    %c0_i32_0 = arith.constant 0 : i32
    %c0_i32_1 = arith.constant 0 : i32
    return %c0_i32, %c0_i32_0 : i32, i32
  }
  func.func @transform_2(%arg0: i32) -> (i32, i32) {
    %c0_i32 = arith.constant 0 : i32
    %c0_i32_0 = arith.constant 0 : i32
    %c0_i32_1 = arith.constant 0 : i32
    return %c0_i32, %c0_i32_0 : i32, i32
  }
  func.func @transform_3(%arg0: i32) -> (i32, i32) {
    %c0_i32 = arith.constant 0 : i32
    %c0_i32_0 = arith.constant 0 : i32
    %c0_i32_1 = arith.constant 0 : i32
    return %c0_i32, %c0_i32_0 : i32, i32
  }
  func.func @transform_4(%arg0: i32) -> (i32, i32) {
    %c0_i32 = arith.constant 0 : i32
    %c0_i32_0 = arith.constant 0 : i32
    %c0_i32_1 = arith.constant 0 : i32
    return %c0_i32, %c0_i32_0 : i32, i32
  }
  func.func @transform_5(%arg0: i32) -> (i32, i32) {
    %c0_i32 = arith.constant 0 : i32
    %c0_i32_0 = arith.constant 0 : i32
    %c0_i32_1 = arith.constant 0 : i32
    return %c0_i32, %c0_i32_0 : i32, i32
  }
  func.func @transform_6(%arg0: i32) -> (i32, i32) {
    %c0_i32 = arith.constant 0 : i32
    %c0_i32_0 = arith.constant 0 : i32
    %c0_i32_1 = arith.constant 0 : i32
    return %c0_i32, %c0_i32_0 : i32, i32
  }
  func.func @transform_7(%arg0: i32) -> (i32, i32) {
    %c0_i32 = arith.constant 0 : i32
    %c0_i32_0 = arith.constant 0 : i32
    %c0_i32_1 = arith.constant 0 : i32
    return %c0_i32, %c0_i32_0 : i32, i32
  }
  func.func @transform_8(%arg0: i32) -> (i32, i32) {
    %c0_i32 = arith.constant 0 : i32
    %c0_i32_0 = arith.constant 0 : i32
    %c0_i32_1 = arith.constant 0 : i32
    return %c0_i32, %c0_i32_0 : i32, i32
  }
  func.func @transform_9(%arg0: i32) -> (i32, i32) {
    %c0_i32 = arith.constant 0 : i32
    %c0_i32_0 = arith.constant 0 : i32
    %c0_i32_1 = arith.constant 0 : i32
    return %c0_i32, %c0_i32_0 : i32, i32
  }
  func.func @transform_10(%arg0: i32) -> (i32, i32) {
    %c0_i32 = arith.constant 0 : i32
    %c0_i32_0 = arith.constant 0 : i32
    %c0_i32_1 = arith.constant 0 : i32
    return %c0_i32, %c0_i32_0 : i32, i32
  }
  func.func @transform_11(%arg0: i32) -> (i32, i32) {
    %c0_i32 = arith.constant 0 : i32
    %c0_i32_0 = arith.constant 0 : i32
    %c0_i32_1 = arith.constant 0 : i32
    return %c0_i32, %c0_i32_0 : i32, i32
  }
  func.func @transform_12(%arg0: i32) -> (i32, i32) {
    %c0_i32 = arith.constant 0 : i32
    %c0_i32_0 = arith.constant 0 : i32
    %c0_i32_1 = arith.constant 0 : i32
    return %c0_i32, %c0_i32_0 : i32, i32
  }
  func.func @transform_13(%arg0: i32) -> (i32, i32) {
    %c0_i32 = arith.constant 0 : i32
    %c0_i32_0 = arith.constant 0 : i32
    return %arg0, %c0_i32 : i32, i32
  }
}

</mosaic_0001>

<llo_original>
// kernel: tpu_custom_call.1
$region0: #{tpu_custom_call.1}
  #allocation0 [shape = 'u32[]', space=smem, size = 0x4, offset = 0x4, fixed_abs, tag = 'smem constant byte address 0x4 - core index']
  #allocation1 [shape = 'u32[144,128]{1,0:T(1,128)}', space=vmem, size = 0x12000, scoped, tag = 'internal scratch']
  %s0 = inlined_call_operand.hbm [shape: bf16[32,9216], index: 0, kind: input, shape index: {}]
  %s1 = inlined_call_operand.hbm [shape: bf16[9216,128], index: 1, kind: input, shape index: {}]
  %s2 = inlined_call_operand.hbm [shape: f32[1,128], index: 2, kind: input, shape index: {}]
  %s3 = inlined_call_operand.vmem [shape: bf16[128,64], index: 3, kind: input, shape index: {}]
  %s4 = inlined_call_operand.hbm [shape: f32[1,64], index: 4, kind: input, shape index: {}]
  %s5 = inlined_call_operand.vmem [shape: bf16[64,2], index: 5, kind: input, shape index: {}]
  %s6 = inlined_call_operand.hbm [shape: f32[1,2], index: 6, kind: input, shape index: {}]
  %s7 = inlined_call_operand.hbm [shape: bf16[2,64], index: 7, kind: input, shape index: {}]
  %s8 = inlined_call_operand.hbm [shape: f32[1,64], index: 8, kind: input, shape index: {}]
  %s9 = inlined_call_operand.hbm [shape: bf16[64,64], index: 9, kind: input, shape index: {}]
  %s10 = inlined_call_operand.hbm [shape: f32[1,64], index: 10, kind: input, shape index: {}]
  %s11 = inlined_call_operand.hbm [shape: bf16[64,128], index: 11, kind: input, shape index: {}]
  %s12 = inlined_call_operand.hbm [shape: f32[1,128], index: 12, kind: input, shape index: {}]
  %s13 = inlined_call_operand.hbm [shape: f32[32,128], index: 13, kind: output, shape index: {}]
  %s14 = sld [smem:[#allocation0]]
  $region129: #{tpu_custom_call.1} parent=0
    _
  %s16 = ssub.s32 1, %s14
  %s17 = scalar_select 0, %s16, %s14
  $region1: #{tpu_custom_call.1} parent=0
    #allocation2 [shape = 'u8[589824]{0}', space=vmem, size = 0x90000, scoped, tag = 'input window, operand 0']
    #allocation3 [shape = 's32[2]{0}', space=sflag, size = 0x8, scoped, tag = 'scoped memory for tpu_custom_call.1']
    #allocation4 [shape = 's32[2]{0}', space=sflag, size = 0x8, scoped, tag = 'scoped memory for tpu_custom_call.1']
    #allocation5 [shape = 'u8[2359296]{0}', space=vmem, size = 0x240000, scoped, tag = 'input window, operand 1, single buffered']
    #allocation6 [shape = 's32[1]{0}', space=sflag, size = 0x4, scoped, tag = 'scoped memory for tpu_custom_call.1']
    #allocation7 [shape = 'u8[512]{0}', space=vmem, size = 0x400, scoped, tag = 'input window, operand 2, single buffered']
    #allocation8 [shape = 'u8[512]{0}', space=vmem, size = 0x400, scoped, tag = 'input window, operand 4, single buffered']
    #allocation9 [shape = 's32[1]{0}', space=sflag, size = 0x4, scoped, tag = 'scoped memory for tpu_custom_call.1']
    #allocation10 [shape = 'u8[512]{0}', space=vmem, size = 0x400, scoped, tag = 'input window, operand 6, single buffered']
    #allocation11 [shape = 'u8[512]{0}', space=vmem, size = 0x400, scoped, tag = 'input window, operand 7, single buffered']
    #allocation12 [shape = 's32[1]{0}', space=sflag, size = 0x4, scoped, tag = 'scoped memory for tpu_custom_call.1']
    #allocation13 [shape = 'u8[512]{0}', space=vmem, size = 0x400, scoped, tag = 'input window, operand 8, single buffered']
    #allocation14 [shape = 'u8[16384]{0}', space=vmem, size = 0x4000, scoped, tag = 'input window, operand 9, single buffered']
    #allocation15 [shape = 's32[1]{0}', space=sflag, size = 0x4, scoped, tag = 'scoped memory for tpu_custom_call.1']
    #allocation16 [shape = 'u8[512]{0}', space=vmem, size = 0x400, scoped, tag = 'input window, operand 10, single buffered']
    #allocation17 [shape = 'u8[16384]{0}', space=vmem, size = 0x4000, scoped, tag = 'input window, operand 11, single buffered']
    #allocation18 [shape = 's32[1]{0}', space=sflag, size = 0x4, scoped, tag = 'scoped memory for tpu_custom_call.1']
    #allocation19 [shape = 'u8[512]{0}', space=vmem, size = 0x400, scoped, tag = 'input window, operand 12, single buffered']
    #allocation20 [shape = 'u8[16384]{0}', space=vmem, size = 0x4000, scoped, tag = 'output window, operand 0']
    %18 = vsyncpa [#allocation3], 0
    %s19 = scalar_lea.sflag [#allocation3], 1
    %20 = vsyncpa %s19, 0
    %21 = vsyncpa [#allocation6], 0
    %22 = vsyncpa [#allocation9], 0
    %23 = vsyncpa [#allocation12], 0
    %24 = vsyncpa [#allocation15], 0
    %25 = vsyncpa [#allocation18], 0
    %26 = vsyncpa [#allocation4], 0
    %s27 = scalar_lea.sflag [#allocation4], 1
    %28 = vsyncpa %s27, 0
    loop: start=0, step=1, limit=4
    $region2: #{tpu_custom_call.1} parent=1 // loop_pre_header
      _
    $region3: #{tpu_custom_call.1} parent=1 // loop_header
      %s30 = sphi 0, %s34
      %p31 = scmp.ge.s32.totalorder %s30, 4
      %s40 = sphi 0, %s42
      %s43 = sphi 0, %s40
      %s44 = sphi 0, %s43
      %s60 = sphi 0, %s44
      %s64 = sphi 0, %s64
      %s66 = sphi 0, %s64
      %s67 = sphi 0, %s66
      %s81 = sphi 0, %s67
      %s85 = sphi 0, %s85
      %s87 = sphi 0, %s85
      %s88 = sphi 0, %s87
      %s102 = sphi 0, %s88
      %s106 = sphi 0, %s106
      %s108 = sphi 0, %s106
      %s109 = sphi 0, %s108
      %s123 = sphi 0, %s109
      %s127 = sphi 0, %s127
      %s129 = sphi 0, %s127
      %s130 = sphi 0, %s129
      %s144 = sphi 0, %s130
      %s148 = sphi 0, %s148
      %s150 = sphi 0, %s148
      %s151 = sphi 0, %s150
      %s165 = sphi 0, %s151
      %s169 = sphi 0, %s169
      %s171 = sphi 0, %s169
      %s172 = sphi 0, %s171
      %s186 = sphi 0, %s172
      %s190 = sphi 0, %s190
      %s192 = sphi 0, %s190
      %s193 = sphi 0, %s192
      %s207 = sphi 0, %s193
      %s211 = sphi 0, %s211
      %s213 = sphi 0, %s211
      %s214 = sphi 0, %s213
      %s228 = sphi 0, %s214
      %s232 = sphi 0, %s232
      %s234 = sphi 0, %s232
      %s235 = sphi 0, %s234
      %s249 = sphi 0, %s235
      %s253 = sphi 0, %s253
      %s255 = sphi 0, %s253
      %s256 = sphi 0, %s255
      %s270 = sphi 0, %s256
      %s274 = sphi 0, %s274
      %s276 = sphi 0, %s274
      %s277 = sphi 0, %s276
      %s291 = sphi 0, %s277
      %s295 = sphi 0, %s295
      %s297 = sphi 0, %s295
      %s298 = sphi 0, %s297
      %s312 = sphi 0, %s298
      %s318 = sphi 0, %s320
      %s321 = sphi 0, %s318
      %s322 = sphi 0, %s321
      %s338 = sphi 0, %s322
    $region4: #{tpu_custom_call.1} parent=1 // loop_header_branch
      %33 = sbr.rel (%p31) target = $region8
    $region5: #{tpu_custom_call.1} parent=1 // loop_body
      %s35 = ssub.s32 %s30, 1
      %s36 = ssub.s32 %s30, 2
      %s37 = sadd.s32 %s30, 1
      %s38 = ssub.s32 %s30, %s37
      %p39 = scmp.eq.s32.totalorder %s38, 0
      %s41 = sadd.s32 %s40, 1
      %s42 = scalar_select %p39, %s40, %s41
      %p45 = pneg %p39
      %p46 = scmp.eq.s32.totalorder %s30, 1
      %p47 = por %p45, %p46
      %p48 = scmp.ne.s32.totalorder %s40, %s43
      %p49 = scmp.eq.s32.totalorder %s30, 0
      %p50 = por %p48, %p49
      %p51 = scmp.ne.s32.totalorder %s40, %s43
      %p52 = scmp.eq.s32.totalorder %s35, 1
      %p53 = por %p51, %p52
      %p54 = scmp.ne.s32.totalorder %s43, %s44
      %p55 = scmp.eq.s32.totalorder %s35, 0
      %p56 = por %p54, %p55
      %p57 = scmp.ne.s32.totalorder %s43, %s44
      %p58 = scmp.eq.s32.totalorder %s36, 1
      %p59 = por %p57, %p58
      %p61 = scmp.ne.s32.totalorder %s44, %s60
      %p62 = scmp.eq.s32.totalorder %s36, 0
      %p63 = por %p61, %p62
      %s65 = sadd.s32 %s64, 1
      %p68 = scmp.eq.s32.totalorder %s30, 1
      %p69 = scmp.ne.s32.totalorder %s64, %s66
      %p70 = scmp.eq.s32.totalorder %s30, 0
      %p71 = por %p69, %p70
      %p72 = scmp.ne.s32.totalorder %s64, %s66
      %p73 = scmp.eq.s32.totalorder %s35, 1
      %p74 = por %p72, %p73
      %p75 = scmp.ne.s32.totalorder %s66, %s67
      %p76 = scmp.eq.s32.totalorder %s35, 0
      %p77 = por %p75, %p76
      %p78 = scmp.ne.s32.totalorder %s66, %s67
      %p79 = scmp.eq.s32.totalorder %s36, 1
      %p80 = por %p78, %p79
      %p82 = scmp.ne.s32.totalorder %s67, %s81
      %p83 = scmp.eq.s32.totalorder %s36, 0
      %p84 = por %p82, %p83
      %s86 = sadd.s32 %s85, 1
      %p89 = scmp.eq.s32.totalorder %s30, 1
      %p90 = scmp.ne.s32.totalorder %s85, %s87
      %p91 = scmp.eq.s32.totalorder %s30, 0
      %p92 = por %p90, %p91
      %p93 = scmp.ne.s32.totalorder %s85, %s87
      %p94 = scmp.eq.s32.totalorder %s35, 1
      %p95 = por %p93, %p94
      %p96 = scmp.ne.s32.totalorder %s87, %s88
      %p97 = scmp.eq.s32.totalorder %s35, 0
      %p98 = por %p96, %p97
      %p99 = scmp.ne.s32.totalorder %s87, %s88
      %p100 = scmp.eq.s32.totalorder %s36, 1
      %p101 = por %p99, %p100
      %p103 = scmp.ne.s32.totalorder %s88, %s102
      %p104 = scmp.eq.s32.totalorder %s36, 0
      %p105 = por %p103, %p104
      %s107 = sadd.s32 %s106, 1
      %p110 = scmp.eq.s32.totalorder %s30, 1
      %p111 = scmp.ne.s32.totalorder %s106, %s108
      %p112 = scmp.eq.s32.totalorder %s30, 0
      %p113 = por %p111, %p112
      %p114 = scmp.ne.s32.totalorder %s106, %s108
      %p115 = scmp.eq.s32.totalorder %s35, 1
      %p116 = por %p114, %p115
      %p117 = scmp.ne.s32.totalorder %s108, %s109
      %p118 = scmp.eq.s32.totalorder %s35, 0
      %p119 = por %p117, %p118
      %p120 = scmp.ne.s32.totalorder %s108, %s109
      %p121 = scmp.eq.s32.totalorder %s36, 1
      %p122 = por %p120, %p121
      %p124 = scmp.ne.s32.totalorder %s109, %s123
      %p125 = scmp.eq.s32.totalorder %s36, 0
      %p126 = por %p124, %p125
      %s128 = sadd.s32 %s127, 1
      %p131 = scmp.eq.s32.totalorder %s30, 1
      %p132 = scmp.ne.s32.totalorder %s127, %s129
      %p133 = scmp.eq.s32.totalorder %s30, 0
      %p134 = por %p132, %p133
      %p135 = scmp.ne.s32.totalorder %s127, %s129
      %p136 = scmp.eq.s32.totalorder %s35, 1
      %p137 = por %p135, %p136
      %p138 = scmp.ne.s32.totalorder %s129, %s130
      %p139 = scmp.eq.s32.totalorder %s35, 0
      %p140 = por %p138, %p139
      %p141 = scmp.ne.s32.totalorder %s129, %s130
      %p142 = scmp.eq.s32.totalorder %s36, 1
      %p143 = por %p141, %p142
      %p145 = scmp.ne.s32.totalorder %s130, %s144
      %p146 = scmp.eq.s32.totalorder %s36, 0
      %p147 = por %p145, %p146
      %s149 = sadd.s32 %s148, 1
      %p152 = scmp.eq.s32.totalorder %s30, 1
      %p153 = scmp.ne.s32.totalorder %s148, %s150
      %p154 = scmp.eq.s32.totalorder %s30, 0
      %p155 = por %p153, %p154
      %p156 = scmp.ne.s32.totalorder %s148, %s150
      %p157 = scmp.eq.s32.totalorder %s35, 1
      %p158 = por %p156, %p157
      %p159 = scmp.ne.s32.totalorder %s150, %s151
      %p160 = scmp.eq.s32.totalorder %s35, 0
      %p161 = por %p159, %p160
      %p162 = scmp.ne.s32.totalorder %s150, %s151
      %p163 = scmp.eq.s32.totalorder %s36, 1
      %p164 = por %p162, %p163
      %p166 = scmp.ne.s32.totalorder %s151, %s165
      %p167 = scmp.eq.s32.totalorder %s36, 0
      %p168 = por %p166, %p167
      %s170 = sadd.s32 %s169, 1
      %p173 = scmp.eq.s32.totalorder %s30, 1
      %p174 = scmp.ne.s32.totalorder %s169, %s171
      %p175 = scmp.eq.s32.totalorder %s30, 0
      %p176 = por %p174, %p175
      %p177 = scmp.ne.s32.totalorder %s169, %s171
      %p178 = scmp.eq.s32.totalorder %s35, 1
      %p179 = por %p177, %p178
      %p180 = scmp.ne.s32.totalorder %s171, %s172
      %p181 = scmp.eq.s32.totalorder %s35, 0
      %p182 = por %p180, %p181
      %p183 = scmp.ne.s32.totalorder %s171, %s172
      %p184 = scmp.eq.s32.totalorder %s36, 1
      %p185 = por %p183, %p184
      %p187 = scmp.ne.s32.totalorder %s172, %s186
      %p188 = scmp.eq.s32.totalorder %s36, 0
      %p189 = por %p187, %p188
      %s191 = sadd.s32 %s190, 1
      %p194 = scmp.eq.s32.totalorder %s30, 1
      %p195 = scmp.ne.s32.totalorder %s190, %s192
      %p196 = scmp.eq.s32.totalorder %s30, 0
      %p197 = por %p195, %p196
      %p198 = scmp.ne.s32.totalorder %s190, %s192
      %p199 = scmp.eq.s32.totalorder %s35, 1
      %p200 = por %p198, %p199
      %p201 = scmp.ne.s32.totalorder %s192, %s193
      %p202 = scmp.eq.s32.totalorder %s35, 0
      %p203 = por %p201, %p202
      %p204 = scmp.ne.s32.totalorder %s192, %s193
      %p205 = scmp.eq.s32.totalorder %s36, 1
      %p206 = por %p204, %p205
      %p208 = scmp.ne.s32.totalorder %s193, %s207
      %p209 = scmp.eq.s32.totalorder %s36, 0
      %p210 = por %p208, %p209
      %s212 = sadd.s32 %s211, 1
      %p215 = scmp.eq.s32.totalorder %s30, 1
      %p216 = scmp.ne.s32.totalorder %s211, %s213
      %p217 = scmp.eq.s32.totalorder %s30, 0
      %p218 = por %p216, %p217
      %p219 = scmp.ne.s32.totalorder %s211, %s213
      %p220 = scmp.eq.s32.totalorder %s35, 1
      %p221 = por %p219, %p220
      %p222 = scmp.ne.s32.totalorder %s213, %s214
      %p223 = scmp.eq.s32.totalorder %s35, 0
      %p224 = por %p222, %p223
      %p225 = scmp.ne.s32.totalorder %s213, %s214
      %p226 = scmp.eq.s32.totalorder %s36, 1
      %p227 = por %p225, %p226
      %p229 = scmp.ne.s32.totalorder %s214, %s228
      %p230 = scmp.eq.s32.totalorder %s36, 0
      %p231 = por %p229, %p230
      %s233 = sadd.s32 %s232, 1
      %p236 = scmp.eq.s32.totalorder %s30, 1
      %p237 = scmp.ne.s32.totalorder %s232, %s234
      %p238 = scmp.eq.s32.totalorder %s30, 0
      %p239 = por %p237, %p238
      %p240 = scmp.ne.s32.totalorder %s232, %s234
      %p241 = scmp.eq.s32.totalorder %s35, 1
      %p242 = por %p240, %p241
      %p243 = scmp.ne.s32.totalorder %s234, %s235
      %p244 = scmp.eq.s32.totalorder %s35, 0
      %p245 = por %p243, %p244
      %p246 = scmp.ne.s32.totalorder %s234, %s235
      %p247 = scmp.eq.s32.totalorder %s36, 1
      %p248 = por %p246, %p247
      %p250 = scmp.ne.s32.totalorder %s235, %s249
      %p251 = scmp.eq.s32.totalorder %s36, 0
      %p252 = por %p250, %p251
      %s254 = sadd.s32 %s253, 1
      %p257 = scmp.eq.s32.totalorder %s30, 1
      %p258 = scmp.ne.s32.totalorder %s253, %s255
      %p259 = scmp.eq.s32.totalorder %s30, 0
      %p260 = por %p258, %p259
      %p261 = scmp.ne.s32.totalorder %s253, %s255
      %p262 = scmp.eq.s32.totalorder %s35, 1
      %p263 = por %p261, %p262
      %p264 = scmp.ne.s32.totalorder %s255, %s256
      %p265 = scmp.eq.s32.totalorder %s35, 0
      %p266 = por %p264, %p265
      %p267 = scmp.ne.s32.totalorder %s255, %s256
      %p268 = scmp.eq.s32.totalorder %s36, 1
      %p269 = por %p267, %p268
      %p271 = scmp.ne.s32.totalorder %s256, %s270
      %p272 = scmp.eq.s32.totalorder %s36, 0
      %p273 = por %p271, %p272
      %s275 = sadd.s32 %s274, 1
      %p278 = scmp.eq.s32.totalorder %s30, 1
      %p279 = scmp.ne.s32.totalorder %s274, %s276
      %p280 = scmp.eq.s32.totalorder %s30, 0
      %p281 = por %p279, %p280
      %p282 = scmp.ne.s32.totalorder %s274, %s276
      %p283 = scmp.eq.s32.totalorder %s35, 1
      %p284 = por %p282, %p283
      %p285 = scmp.ne.s32.totalorder %s276, %s277
      %p286 = scmp.eq.s32.totalorder %s35, 0
      %p287 = por %p285, %p286
      %p288 = scmp.ne.s32.totalorder %s276, %s277
      %p289 = scmp.eq.s32.totalorder %s36, 1
      %p290 = por %p288, %p289
      %p292 = scmp.ne.s32.totalorder %s277, %s291
      %p293 = scmp.eq.s32.totalorder %s36, 0
      %p294 = por %p292, %p293
      %s296 = sadd.s32 %s295, 1
      %p299 = scmp.eq.s32.totalorder %s30, 1
      %p300 = scmp.ne.s32.totalorder %s295, %s297
      %p301 = scmp.eq.s32.totalorder %s30, 0
      %p302 = por %p300, %p301
      %p303 = scmp.ne.s32.totalorder %s295, %s297
      %p304 = scmp.eq.s32.totalorder %s35, 1
      %p305 = por %p303, %p304
      %p306 = scmp.ne.s32.totalorder %s297, %s298
      %p307 = scmp.eq.s32.totalorder %s35, 0
      %p308 = por %p306, %p307
      %p309 = scmp.ne.s32.totalorder %s297, %s298
      %p310 = scmp.eq.s32.totalorder %s36, 1
      %p311 = por %p309, %p310
      %p313 = scmp.ne.s32.totalorder %s298, %s312
      %p314 = scmp.eq.s32.totalorder %s36, 0
      %p315 = por %p313, %p314
      %s316 = ssub.s32 %s30, %s37
      %p317 = scmp.eq.s32.totalorder %s316, 0
      %s319 = sadd.s32 %s318, 1
      %s320 = scalar_select %p317, %s318, %s319
      %p323 = pneg %p317
      %p324 = scmp.eq.s32.totalorder %s30, 1
      %p325 = por %p323, %p324
      %p326 = scmp.ne.s32.totalorder %s318, %s321
      %p327 = scmp.eq.s32.totalorder %s30, 0
      %p328 = por %p326, %p327
      %p329 = scmp.ne.s32.totalorder %s318, %s321
      %p330 = scmp.eq.s32.totalorder %s35, 1
      %p331 = por %p329, %p330
      %p332 = scmp.ne.s32.totalorder %s321, %s322
      %p333 = scmp.eq.s32.totalorder %s35, 0
      %p334 = por %p332, %p333
      %p335 = scmp.ne.s32.totalorder %s321, %s322
      %p336 = scmp.eq.s32.totalorder %s36, 1
      %p337 = por %p335, %p336
      %p339 = scmp.ne.s32.totalorder %s322, %s338
      %p340 = scmp.eq.s32.totalorder %s36, 0
      %p341 = por %p339, %p340
      %p342 = scmp.le.s32.totalorder 1, %s30
      %p343 = scmp.lt.s32.totalorder %s30, 3
      %p344 = pnand %p342, %p343
      %p345 = pneg %p344
      // Predicated region
      $region9: #{tpu_custom_call.1} parent=5 // pred_check
        _
      $region10: #{tpu_custom_call.1} parent=5 // pred_check_branch
        %347 = sbr.rel (%p344) target = $region12
      $region11: #{tpu_custom_call.1} parent=5 // pred_region
        %s348 = ssub.s32 %s30, 1
        // Predicated region
        $region13: #{tpu_custom_call.1} parent=11 // pred_check
          %p349 = pneg %p77
        $region14: #{tpu_custom_call.1} parent=11 // pred_check_branch
          %351 = sbr.rel (%p349) target = $region16
        $region15: #{tpu_custom_call.1} parent=11 // pred_region
          %s353 = ssub.s32 73728, 73728
          %354 = vsyncadd [#allocation6], %s353
          %s355 = sshll.u32 [#allocation5], 4
          %s356 = int_to_ptr.vmem [resolvable:$true] %s355
          %361 = dma.hbm_to_vmem [thread:$0]  %s1, 73728, %s356, [#allocation6], 64, 64, 4
        $region16: #{tpu_custom_call.1} parent=11 // pred_fallthru
          _
        // Predicated region
        $region17: #{tpu_custom_call.1} parent=11 // pred_check
          %p362 = pneg %p98
        $region18: #{tpu_custom_call.1} parent=11 // pred_check_branch
          %364 = sbr.rel (%p362) target = $region20
        $region19: #{tpu_custom_call.1} parent=11 // pred_region
          %s366 = ssub.s32 16, 16
          %367 = vsyncadd [#allocation6], %s366
          %s369 = sshll.u32 [#allocation7], 4
          %s370 = int_to_ptr.vmem [resolvable:$true] %s369
          %372 = dma.hbm_to_vmem [thread:$0]  %s2, 16, %s370, [#allocation6]
        $region20: #{tpu_custom_call.1} parent=11 // pred_fallthru
          _
        // Predicated region
        $region21: #{tpu_custom_call.1} parent=11 // pred_check
          %p373 = pneg %p119
        $region22: #{tpu_custom_call.1} parent=11 // pred_check_branch
          %375 = sbr.rel (%p373) target = $region24
        $region23: #{tpu_custom_call.1} parent=11 // pred_region
          _
        $region24: #{tpu_custom_call.1} parent=11 // pred_fallthru
          _
        // Predicated region
        $region25: #{tpu_custom_call.1} parent=11 // pred_check
          %p376 = pneg %p140
        $region26: #{tpu_custom_call.1} parent=11 // pred_check_branch
          %378 = sbr.rel (%p376) target = $region28
        $region27: #{tpu_custom_call.1} parent=11 // pred_region
          %s380 = ssub.s32 16, 16
          %381 = vsyncadd [#allocation9], %s380
          %s383 = sshll.u32 [#allocation8], 4
          %s384 = int_to_ptr.vmem [resolvable:$true] %s383
          %386 = dma.hbm_to_vmem [thread:$0]  %s4, 16, %s384, [#allocation9]
        $region28: #{tpu_custom_call.1} parent=11 // pred_fallthru
          _
        // Predicated region
        $region29: #{tpu_custom_call.1} parent=11 // pred_check
          %p387 = pneg %p161
        $region30: #{tpu_custom_call.1} parent=11 // pred_check_branch
          %389 = sbr.rel (%p387) target = $region32
        $region31: #{tpu_custom_call.1} parent=11 // pred_region
          _
        $region32: #{tpu_custom_call.1} parent=11 // pred_fallthru
          _
        // Predicated region
        $region33: #{tpu_custom_call.1} parent=11 // pred_check
          %p390 = pneg %p182
        $region34: #{tpu_custom_call.1} parent=11 // pred_check_branch
          %392 = sbr.rel (%p390) target = $region36
        $region35: #{tpu_custom_call.1} parent=11 // pred_region
          %s394 = ssub.s32 16, 16
          %395 = vsyncadd [#allocation9], %s394
          %s397 = sshll.u32 [#allocation10], 4
          %s398 = int_to_ptr.vmem [resolvable:$true] %s397
          %400 = dma.hbm_to_vmem [thread:$0]  %s6, 16, %s398, [#allocation9]
        $region36: #{tpu_custom_call.1} parent=11 // pred_fallthru
          _
        // Predicated region
        $region37: #{tpu_custom_call.1} parent=11 // pred_check
          %p401 = pneg %p203
        $region38: #{tpu_custom_call.1} parent=11 // pred_check_branch
          %403 = sbr.rel (%p401) target = $region40
        $region39: #{tpu_custom_call.1} parent=11 // pred_region
          %s405 = ssub.s32 16, 16
          %406 = vsyncadd [#allocation12], %s405
          %s408 = sshll.u32 [#allocation11], 4
          %s409 = int_to_ptr.vmem [resolvable:$true] %s408
          %411 = dma.hbm_to_vmem [thread:$0]  %s7, 16, %s409, [#allocation12]
        $region40: #{tpu_custom_call.1} parent=11 // pred_fallthru
          _
        // Predicated region
        $region41: #{tpu_custom_call.1} parent=11 // pred_check
          %p412 = pneg %p224
        $region42: #{tpu_custom_call.1} parent=11 // pred_check_branch
          %414 = sbr.rel (%p412) target = $region44
        $region43: #{tpu_custom_call.1} parent=11 // pred_region
          %s416 = ssub.s32 16, 16
          %417 = vsyncadd [#allocation12], %s416
          %s419 = sshll.u32 [#allocation13], 4
          %s420 = int_to_ptr.vmem [resolvable:$true] %s419
          %422 = dma.hbm_to_vmem [thread:$0]  %s8, 16, %s420, [#allocation12]
        $region44: #{tpu_custom_call.1} parent=11 // pred_fallthru
          _
        // Predicated region
        $region45: #{tpu_custom_call.1} parent=11 // pred_check
          %p423 = pneg %p245
        $region46: #{tpu_custom_call.1} parent=11 // pred_check_branch
          %425 = sbr.rel (%p423) target = $region48
        $region47: #{tpu_custom_call.1} parent=11 // pred_region
          %s427 = ssub.s32 512, 512
          %428 = vsyncadd [#allocation15], %s427
          %s429 = sshll.u32 [#allocation14], 4
          %s430 = int_to_ptr.vmem [resolvable:$true] %s429
          %435 = dma.hbm_to_vmem [thread:$0]  %s9, 512, %s430, [#allocation15], 64, 64, 4
        $region48: #{tpu_custom_call.1} parent=11 // pred_fallthru
          _
        // Predicated region
        $region49: #{tpu_custom_call.1} parent=11 // pred_check
          %p436 = pneg %p266
        $region50: #{tpu_custom_call.1} parent=11 // pred_check_branch
          %438 = sbr.rel (%p436) target = $region52
        $region51: #{tpu_custom_call.1} parent=11 // pred_region
          %s440 = ssub.s32 16, 16
          %441 = vsyncadd [#allocation15], %s440
          %s443 = sshll.u32 [#allocation16], 4
          %s444 = int_to_ptr.vmem [resolvable:$true] %s443
          %446 = dma.hbm_to_vmem [thread:$0]  %s10, 16, %s444, [#allocation15]
        $region52: #{tpu_custom_call.1} parent=11 // pred_fallthru
          _
        // Predicated region
        $region53: #{tpu_custom_call.1} parent=11 // pred_check
          %p447 = pneg %p287
        $region54: #{tpu_custom_call.1} parent=11 // pred_check_branch
          %449 = sbr.rel (%p447) target = $region56
        $region55: #{tpu_custom_call.1} parent=11 // pred_region
          %s451 = ssub.s32 512, 512
          %452 = vsyncadd [#allocation18], %s451
          %s453 = sshll.u32 [#allocation17], 4
          %s454 = int_to_ptr.vmem [resolvable:$true] %s453
          %459 = dma.hbm_to_vmem [thread:$0]  %s11, 512, %s454, [#allocation18], 64, 64, 4
        $region56: #{tpu_custom_call.1} parent=11 // pred_fallthru
          _
        // Predicated region
        $region57: #{tpu_custom_call.1} parent=11 // pred_check
          %p460 = pneg %p308
        $region58: #{tpu_custom_call.1} parent=11 // pred_check_branch
          %462 = sbr.rel (%p460) target = $region60
        $region59: #{tpu_custom_call.1} parent=11 // pred_region
          %s464 = ssub.s32 16, 16
          %465 = vsyncadd [#allocation18], %s464
          %s467 = sshll.u32 [#allocation19], 4
          %s468 = int_to_ptr.vmem [resolvable:$true] %s467
          %470 = dma.hbm_to_vmem [thread:$0]  %s12, 16, %s468, [#allocation18]
        $region60: #{tpu_custom_call.1} parent=11 // pred_fallthru
          _
      $region12: #{tpu_custom_call.1} parent=5 // pred_fallthru
        _
      %p471 = scmp.lt.s32.totalorder %s30, 2
      // Predicated region
      $region61: #{tpu_custom_call.1} parent=5 // pred_check
        %p472 = pneg %p471
      $region62: #{tpu_custom_call.1} parent=5 // pred_check_branch
        %474 = sbr.rel (%p472) target = $region64
      $region63: #{tpu_custom_call.1} parent=5 // pred_region
        // Predicated region
        $region65: #{tpu_custom_call.1} parent=63 // pred_check
          %p475 = pneg %p50
        $region66: #{tpu_custom_call.1} parent=63 // pred_check_branch
          %477 = sbr.rel (%p475) target = $region68
        $region67: #{tpu_custom_call.1} parent=63 // pred_region
          %s478 = sand.u32 %s40, 1
          %s479 = scalar_lea.sflag [#allocation3], %s478
          %s480 = sand.u32 %s40, 1
          %s481 = smul.addr %s480, 576
          %s482 = scalar_lea.vmem [#allocation2], %s481
          %s483 = smul.u32 2, %s30
          %s485 = ssub.s32 9216, 9216
          %486 = vsyncadd %s479, %s485
          %s487 = smul.addr %s483, 72
          %s488 = smul.addr %s487, 64
          %s489 = scalar_lea.hbm %s0, %s488
          %s490 = sshll.u32 %s482, 4
          %s491 = int_to_ptr.vmem [resolvable:$true] %s490
          %496 = dma.hbm_to_vmem [thread:$0]  %s489, 9216, %s491, %s479, 4608, 4608, 288
        $region68: #{tpu_custom_call.1} parent=63 // pred_fallthru
          _
      $region64: #{tpu_custom_call.1} parent=5 // pred_fallthru
        _
      %p497 = scmp.le.s32.totalorder 1, %s30
      %p498 = scmp.lt.s32.totalorder %s30, 3
      %p499 = pnand %p497, %p498
      %p500 = pneg %p499
      // Predicated region
      $region69: #{tpu_custom_call.1} parent=5 // pred_check
        _
      $region70: #{tpu_custom_call.1} parent=5 // pred_check_branch
        %502 = sbr.rel (%p499) target = $region72
      $region71: #{tpu_custom_call.1} parent=5 // pred_region
        %s503 = ssub.s32 %s30, 1
        %s504 = sand.u32 %s43, 1
        %s505 = scalar_lea.sflag [#allocation3], %s504
        %s506 = sand.u32 %s43, 1
        %s507 = smul.addr %s506, 576
        %s508 = scalar_lea.vmem [#allocation2], %s507
        // Predicated region
        $region73: #{tpu_custom_call.1} parent=71 // pred_check
          %p509 = pneg %p56
        $region74: #{tpu_custom_call.1} parent=71 // pred_check_branch
          %511 = sbr.rel (%p509) target = $region76
        $region75: #{tpu_custom_call.1} parent=71 // pred_region
          %512 = dma.done %s505, 9216
        $region76: #{tpu_custom_call.1} parent=71 // pred_fallthru
          _
        // Predicated region
        $region77: #{tpu_custom_call.1} parent=71 // pred_check
          %p513 = pneg %p77
        $region78: #{tpu_custom_call.1} parent=71 // pred_check_branch
          %515 = sbr.rel (%p513) target = $region80
        $region79: #{tpu_custom_call.1} parent=71 // pred_region
          %516 = dma.done [#allocation6], 73728
        $region80: #{tpu_custom_call.1} parent=71 // pred_fallthru
          _
        // Predicated region
        $region81: #{tpu_custom_call.1} parent=71 // pred_check
          %p517 = pneg %p98
        $region82: #{tpu_custom_call.1} parent=71 // pred_check_branch
          %519 = sbr.rel (%p517) target = $region84
        $region83: #{tpu_custom_call.1} parent=71 // pred_region
          %520 = dma.done [#allocation6], 16
        $region84: #{tpu_custom_call.1} parent=71 // pred_fallthru
          _
        // Predicated region
        $region85: #{tpu_custom_call.1} parent=71 // pred_check
          %p521 = pneg %p140
        $region86: #{tpu_custom_call.1} parent=71 // pred_check_branch
          %523 = sbr.rel (%p521) target = $region88
        $region87: #{tpu_custom_call.1} parent=71 // pred_region
          %524 = dma.done [#allocation9], 16
        $region88: #{tpu_custom_call.1} parent=71 // pred_fallthru
          _
        // Predicated region
        $region89: #{tpu_custom_call.1} parent=71 // pred_check
          %p525 = pneg %p182
        $region90: #{tpu_custom_call.1} parent=71 // pred_check_branch
          %527 = sbr.rel (%p525) target = $region92
        $region91: #{tpu_custom_call.1} parent=71 // pred_region
          %528 = dma.done [#allocation9], 16
        $region92: #{tpu_custom_call.1} parent=71 // pred_fallthru
          _
        // Predicated region
        $region93: #{tpu_custom_call.1} parent=71 // pred_check
          %p529 = pneg %p203
        $region94: #{tpu_custom_call.1} parent=71 // pred_check_branch
          %531 = sbr.rel (%p529) target = $region96
        $region95: #{tpu_custom_call.1} parent=71 // pred_region
          %532 = dma.done [#allocation12], 16
        $region96: #{tpu_custom_call.1} parent=71 // pred_fallthru
          _
        // Predicated region
        $region97: #{tpu_custom_call.1} parent=71 // pred_check
          %p533 = pneg %p224
        $region98: #{tpu_custom_call.1} parent=71 // pred_check_branch
          %535 = sbr.rel (%p533) target = $region100
        $region99: #{tpu_custom_call.1} parent=71 // pred_region
          %536 = dma.done [#allocation12], 16
        $region100: #{tpu_custom_call.1} parent=71 // pred_fallthru
          _
        // Predicated region
        $region101: #{tpu_custom_call.1} parent=71 // pred_check
          %p537 = pneg %p245
        $region102: #{tpu_custom_call.1} parent=71 // pred_check_branch
          %539 = sbr.rel (%p537) target = $region104
        $region103: #{tpu_custom_call.1} parent=71 // pred_region
          %540 = dma.done [#allocation15], 512
        $region104: #{tpu_custom_call.1} parent=71 // pred_fallthru
          _
        // Predicated region
        $region105: #{tpu_custom_call.1} parent=71 // pred_check
          %p541 = pneg %p266
        $region106: #{tpu_custom_call.1} parent=71 // pred_check_branch
          %543 = sbr.rel (%p541) target = $region108
        $region107: #{tpu_custom_call.1} parent=71 // pred_region
          %544 = dma.done [#allocation15], 16
        $region108: #{tpu_custom_call.1} parent=71 // pred_fallthru
          _
        // Predicated region
        $region109: #{tpu_custom_call.1} parent=71 // pred_check
          %p545 = pneg %p287
        $region110: #{tpu_custom_call.1} parent=71 // pred_check_branch
          %547 = sbr.rel (%p545) target = $region112
        $region111: #{tpu_custom_call.1} parent=71 // pred_region
          %548 = dma.done [#allocation18], 512
        $region112: #{tpu_custom_call.1} parent=71 // pred_fallthru
          _
        // Predicated region
        $region113: #{tpu_custom_call.1} parent=71 // pred_check
          %p549 = pneg %p308
        $region114: #{tpu_custom_call.1} parent=71 // pred_check_branch
          %551 = sbr.rel (%p549) target = $region116
        $region115: #{tpu_custom_call.1} parent=71 // pred_region
          %552 = dma.done [#allocation18], 16
        $region116: #{tpu_custom_call.1} parent=71 // pred_fallthru
          _
        %s553 = sand.u32 %s43, 1
        %s554 = scalar_lea.sflag [#allocation3], %s553
        %s555 = sand.u32 %s43, 1
        %s556 = smul.addr %s555, 576
        %s557 = scalar_lea.vmem [#allocation2], %s556
        %p558 = pneg %p56
        %p559 = pneg %p53
        %p560 = pneg %p77
        %p561 = pneg %p74
        %p562 = pneg %p98
        %p563 = pneg %p95
        %p564 = pneg %p119
        %p565 = pneg %p116
        %p566 = pneg %p140
        %p567 = pneg %p137
        %p568 = pneg %p161
        %p569 = pneg %p158
        %p570 = pneg %p182
        %p571 = pneg %p179
        %p572 = pneg %p203
        %p573 = pneg %p200
        %p574 = pneg %p224
        %p575 = pneg %p221
        %p576 = pneg %p245
        %p577 = pneg %p242
        %p578 = pneg %p266
        %p579 = pneg %p263
        %p580 = pneg %p287
        %p581 = pneg %p284
        %p582 = pneg %p308
        %p583 = pneg %p305
        %p584 = pneg %p334
        %p585 = pneg %p331
        %s586 = sand.u32 %s321, 1
        %s587 = scalar_lea.sflag [#allocation4], %s586
        %s588 = sand.u32 %s321, 1
        %s589 = smul.addr %s588, 16
        %s590 = scalar_lea.vmem [#allocation20], %s589
        %s591 = smul.u32 2, %s35
        %s592 = smul.u32 2, %s35
        %v594 = vld [vmem:[%s508] sm:$0xff]
        %v595 = vld [vmem:[%s508 + $0x8] sm:$0xff]
        %v596 = vld [vmem:[%s508 + $0x10] sm:$0xff]
        %v597 = vld [vmem:[%s508 + $0x18] sm:$0xff]
        %v598 = vld [vmem:[%s508 + $0x20] sm:$0xff]
        %v599 = vld [vmem:[%s508 + $0x28] sm:$0xff]
        %v600 = vld [vmem:[%s508 + $0x30] sm:$0xff]
        %v601 = vld [vmem:[%s508 + $0x38] sm:$0xff]
        %v602 = vld [vmem:[%s508 + $0x40] sm:$0xff]
        %v603 = vld [vmem:[%s508 + $0x48] sm:$0xff]
        %v604 = vld [vmem:[%s508 + $0x50] sm:$0xff]
        %v605 = vld [vmem:[%s508 + $0x58] sm:$0xff]
        %v606 = vld [vmem:[%s508 + $0x60] sm:$0xff]
        %v607 = vld [vmem:[%s508 + $0x68] sm:$0xff]
        %v608 = vld [vmem:[%s508 + $0x70] sm:$0xff]
        %v609 = vld [vmem:[%s508 + $0x78] sm:$0xff]
        %v610 = vld [vmem:[%s508 + $0x80] sm:$0xff]
        %v611 = vld [vmem:[%s508 + $0x88] sm:$0xff]
        %v612 = vld [vmem:[%s508 + $0x90] sm:$0xff]
        %v613 = vld [vmem:[%s508 + $0x98] sm:$0xff]
        %v614 = vld [vmem:[%s508 + $0xa0] sm:$0xff]
        %v615 = vld [vmem:[%s508 + $0xa8] sm:$0xff]
        %v616 = vld [vmem:[%s508 + $0xb0] sm:$0xff]
        %v617 = vld [vmem:[%s508 + $0xb8] sm:$0xff]
        %v618 = vld [vmem:[%s508 + $0xc0] sm:$0xff]
        %v619 = vld [vmem:[%s508 + $0xc8] sm:$0xff]
        %v620 = vld [vmem:[%s508 + $0xd0] sm:$0xff]
        %v621 = vld [vmem:[%s508 + $0xd8] sm:$0xff]
        %v622 = vld [vmem:[%s508 + $0xe0] sm:$0xff]
        %v623 = vld [vmem:[%s508 + $0xe8] sm:$0xff]
        %v624 = vld [vmem:[%s508 + $0xf0] sm:$0xff]
        %v625 = vld [vmem:[%s508 + $0xf8] sm:$0xff]
        %v626 = vld [vmem:[%s508 + $0x100] sm:$0xff]
        %v627 = vld [vmem:[%s508 + $0x108] sm:$0xff]
        %v628 = vld [vmem:[%s508 + $0x110] sm:$0xff]
        %v629 = vld [vmem:[%s508 + $0x118] sm:$0xff]
        %v630 = vld [vmem:[%s508 + $0x120] sm:$0xff]
        %v631 = vld [vmem:[%s508 + $0x128] sm:$0xff]
        %v632 = vld [vmem:[%s508 + $0x130] sm:$0xff]
        %v633 = vld [vmem:[%s508 + $0x138] sm:$0xff]
        %v634 = vld [vmem:[%s508 + $0x140] sm:$0xff]
        %v635 = vld [vmem:[%s508 + $0x148] sm:$0xff]
        %v636 = vld [vmem:[%s508 + $0x150] sm:$0xff]
        %v637 = vld [vmem:[%s508 + $0x158] sm:$0xff]
        %v638 = vld [vmem:[%s508 + $0x160] sm:$0xff]
        %v639 = vld [vmem:[%s508 + $0x168] sm:$0xff]
        %v640 = vld [vmem:[%s508 + $0x170] sm:$0xff]
        %v641 = vld [vmem:[%s508 + $0x178] sm:$0xff]
        %v642 = vld [vmem:[%s508 + $0x180] sm:$0xff]
        %v643 = vld [vmem:[%s508 + $0x188] sm:$0xff]
        %v644 = vld [vmem:[%s508 + $0x190] sm:$0xff]
        %v645 = vld [vmem:[%s508 + $0x198] sm:$0xff]
        %v646 = vld [vmem:[%s508 + $0x1a0] sm:$0xff]
        %v647 = vld [vmem:[%s508 + $0x1a8] sm:$0xff]
        %v648 = vld [vmem:[%s508 + $0x1b0] sm:$0xff]
        %v649 = vld [vmem:[%s508 + $0x1b8] sm:$0xff]
        %v650 = vld [vmem:[%s508 + $0x1c0] sm:$0xff]
        %v651 = vld [vmem:[%s508 + $0x1c8] sm:$0xff]
        %v652 = vld [vmem:[%s508 + $0x1d0] sm:$0xff]
        %v653 = vld [vmem:[%s508 + $0x1d8] sm:$0xff]
        %v654 = vld [vmem:[%s508 + $0x1e0] sm:$0xff]
        %v655 = vld [vmem:[%s508 + $0x1e8] sm:$0xff]
        %v656 = vld [vmem:[%s508 + $0x1f0] sm:$0xff]
        %v657 = vld [vmem:[%s508 + $0x1f8] sm:$0xff]
        %v658 = vld [vmem:[%s508 + $0x200] sm:$0xff]
        %v659 = vld [vmem:[%s508 + $0x208] sm:$0xff]
        %v660 = vld [vmem:[%s508 + $0x210] sm:$0xff]
        %v661 = vld [vmem:[%s508 + $0x218] sm:$0xff]
        %v662 = vld [vmem:[%s508 + $0x220] sm:$0xff]
        %v663 = vld [vmem:[%s508 + $0x228] sm:$0xff]
        %v664 = vld [vmem:[%s508 + $0x230] sm:$0xff]
        %v665 = vld [vmem:[%s508 + $0x238] sm:$0xff]
        %v666 = vld [vmem:[#allocation5] sm:$0xf]
        %v667 = vld [vmem:[#allocation5 + $0x4] sm:$0xf]
        %v668 = vld [vmem:[#allocation5 + $0x8] sm:$0xf]
        %v669 = vld [vmem:[#allocation5 + $0xc] sm:$0xf]
        %v670 = vld [vmem:[#allocation5 + $0x10] sm:$0xf]
        %v671 = vld [vmem:[#allocation5 + $0x14] sm:$0xf]
        %v672 = vld [vmem:[#allocation5 + $0x18] sm:$0xf]
        %v673 = vld [vmem:[#allocation5 + $0x1c] sm:$0xf]
        %v674 = vld [vmem:[#allocation5 + $0x20] sm:$0xf]
        %v675 = vld [vmem:[#allocation5 + $0x24] sm:$0xf]
        %v676 = vld [vmem:[#allocation5 + $0x28] sm:$0xf]
        %v677 = vld [vmem:[#allocation5 + $0x2c] sm:$0xf]
        %v678 = vld [vmem:[#allocation5 + $0x30] sm:$0xf]
        %v679 = vld [vmem:[#allocation5 + $0x34] sm:$0xf]
        %v680 = vld [vmem:[#allocation5 + $0x38] sm:$0xf]
        %v681 = vld [vmem:[#allocation5 + $0x3c] sm:$0xf]
        %v682 = vld [vmem:[#allocation5 + $0x40] sm:$0xf]
        %v683 = vld [vmem:[#allocation5 + $0x44] sm:$0xf]
        %v684 = vld [vmem:[#allocation5 + $0x48] sm:$0xf]
        %v685 = vld [vmem:[#allocation5 + $0x4c] sm:$0xf]
        %v686 = vld [vmem:[#allocation5 + $0x50] sm:$0xf]
        %v687 = vld [vmem:[#allocation5 + $0x54] sm:$0xf]
        %v688 = vld [vmem:[#allocation5 + $0x58] sm:$0xf]
        %v689 = vld [vmem:[#allocation5 + $0x5c] sm:$0xf]
        %v690 = vld [vmem:[#allocation5 + $0x60] sm:$0xf]
        %v691 = vld [vmem:[#allocation5 + $0x64] sm:$0xf]
        %v692 = vld [vmem:[#allocation5 + $0x68] sm:$0xf]
        %v693 = vld [vmem:[#allocation5 + $0x6c] sm:$0xf]
        %v694 = vld [vmem:[#allocation5 + $0x70] sm:$0xf]
        %v695 = vld [vmem:[#allocation5 + $0x74] sm:$0xf]
        %v696 = vld [vmem:[#allocation5 + $0x78] sm:$0xf]
        %v697 = vld [vmem:[#allocation5 + $0x7c] sm:$0xf]
        %v698 = vld [vmem:[#allocation5 + $0x80] sm:$0xf]
        %v699 = vld [vmem:[#allocation5 + $0x84] sm:$0xf]
        %v700 = vld [vmem:[#allocation5 + $0x88] sm:$0xf]
        %v701 = vld [vmem:[#allocation5 + $0x8c] sm:$0xf]
        %v702 = vld [vmem:[#allocation5 + $0x90] sm:$0xf]
        %v703 = vld [vmem:[#allocation5 + $0x94] sm:$0xf]
        %v704 = vld [vmem:[#allocation5 + $0x98] sm:$0xf]
        %v705 = vld [vmem:[#allocation5 + $0x9c] sm:$0xf]
        %v706 = vld [vmem:[#allocation5 + $0xa0] sm:$0xf]
        %v707 = vld [vmem:[#allocation5 + $0xa4] sm:$0xf]
        %v708 = vld [vmem:[#allocation5 + $0xa8] sm:$0xf]
        %v709 = vld [vmem:[#allocation5 + $0xac] sm:$0xf]
        %v710 = vld [vmem:[#allocation5 + $0xb0] sm:$0xf]
        %v711 = vld [vmem:[#allocation5 + $0xb4] sm:$0xf]
        %v712 = vld [vmem:[#allocation5 + $0xb8] sm:$0xf]
        %v713 = vld [vmem:[#allocation5 + $0xbc] sm:$0xf]
        %v714 = vld [vmem:[#allocation5 + $0xc0] sm:$0xf]
        %v715 = vld [vmem:[#allocation5 + $0xc4] sm:$0xf]
        %v716 = vld [vmem:[#allocation5 + $0xc8] sm:$0xf]
        %v717 = vld [vmem:[#allocation5 + $0xcc] sm:$0xf]
        %v718 = vld [vmem:[#allocation5 + $0xd0] sm:$0xf]
        %v719 = vld [vmem:[#allocation5 + $0xd4] sm:$0xf]
        %v720 = vld [vmem:[#allocation5 + $0xd8] sm:$0xf]
        %v721 = vld [vmem:[#allocation5 + $0xdc] sm:$0xf]
        %v722 = vld [vmem:[#allocation5 + $0xe0] sm:$0xf]
        %v723 = vld [vmem:[#allocation5 + $0xe4] sm:$0xf]
        %v724 = vld [vmem:[#allocation5 + $0xe8] sm:$0xf]
        %v725 = vld [vmem:[#allocation5 + $0xec] sm:$0xf]
        %v726 = vld [vmem:[#allocation5 + $0xf0] sm:$0xf]
        %v727 = vld [vmem:[#allocation5 + $0xf4] sm:$0xf]
        %v728 = vld [vmem:[#allocation5 + $0xf8] sm:$0xf]
        %v729 = vld [vmem:[#allocation5 + $0xfc] sm:$0xf]
        %v730 = vld [vmem:[#allocation5 + $0x100] sm:$0xf]
        %v731 = vld [vmem:[#allocation5 + $0x104] sm:$0xf]
        %v732 = vld [vmem:[#allocation5 + $0x108] sm:$0xf]
        %v733 = vld [vmem:[#allocation5 + $0x10c] sm:$0xf]
        %v734 = vld [vmem:[#allocation5 + $0x110] sm:$0xf]
        %v735 = vld [vmem:[#allocation5 + $0x114] sm:$0xf]
        %v736 = vld [vmem:[#allocation5 + $0x118] sm:$0xf]
        %v737 = vld [vmem:[#allocation5 + $0x11c] sm:$0xf]
        %v738 = vld [vmem:[#allocation5 + $0x120] sm:$0xf]
        %v739 = vld [vmem:[#allocation5 + $0x124] sm:$0xf]
        %v740 = vld [vmem:[#allocation5 + $0x128] sm:$0xf]
        %v741 = vld [vmem:[#allocation5 + $0x12c] sm:$0xf]
        %v742 = vld [vmem:[#allocation5 + $0x130] sm:$0xf]
        %v743 = vld [vmem:[#allocation5 + $0x134] sm:$0xf]
        %v744 = vld [vmem:[#allocation5 + $0x138] sm:$0xf]
        %v745 = vld [vmem:[#allocation5 + $0x13c] sm:$0xf]
        %v746 = vld [vmem:[#allocation5 + $0x140] sm:$0xf]
        %v747 = vld [vmem:[#allocation5 + $0x144] sm:$0xf]
        %v748 = vld [vmem:[#allocation5 + $0x148] sm:$0xf]
        %v749 = vld [vmem:[#allocation5 + $0x14c] sm:$0xf]
        %v750 = vld [vmem:[#allocation5 + $0x150] sm:$0xf]
        %v751 = vld [vmem:[#allocation5 + $0x154] sm:$0xf]
        %v752 = vld [vmem:[#allocation5 + $0x158] sm:$0xf]
        %v753 = vld [vmem:[#allocation5 + $0x15c] sm:$0xf]
        %v754 = vld [vmem:[#allocation5 + $0x160] sm:$0xf]
        %v755 = vld [vmem:[#allocation5 + $0x164] sm:$0xf]
        %v756 = vld [vmem:[#allocation5 + $0x168] sm:$0xf]
        %v757 = vld [vmem:[#allocation5 + $0x16c] sm:$0xf]
        %v758 = vld [vmem:[#allocation5 + $0x170] sm:$0xf]
        %v759 = vld [vmem:[#allocation5 + $0x174] sm:$0xf]
        %v760 = vld [vmem:[#allocation5 + $0x178] sm:$0xf]
        %v761 = vld [vmem:[#allocation5 + $0x17c] sm:$0xf]
        %v762 = vld [vmem:[#allocation5 + $0x180] sm:$0xf]
        %v763 = vld [vmem:[#allocation5 + $0x184] sm:$0xf]
        %v764 = vld [vmem:[#allocation5 + $0x188] sm:$0xf]
        %v765 = vld [vmem:[#allocation5 + $0x18c] sm:$0xf]
        %v766 = vld [vmem:[#allocation5 + $0x190] sm:$0xf]
        %v767 = vld [vmem:[#allocation5 + $0x194] sm:$0xf]
        %v768 = vld [vmem:[#allocation5 + $0x198] sm:$0xf]
        %v769 = vld [vmem:[#allocation5 + $0x19c] sm:$0xf]
        %v770 = vld [vmem:[#allocation5 + $0x1a0] sm:$0xf]
        %v771 = vld [vmem:[#allocation5 + $0x1a4] sm:$0xf]
        %v772 = vld [vmem:[#allocation5 + $0x1a8] sm:$0xf]
        %v773 = vld [vmem:[#allocation5 + $0x1ac] sm:$0xf]
        %v774 = vld [vmem:[#allocation5 + $0x1b0] sm:$0xf]
        %v775 = vld [vmem:[#allocation5 + $0x1b4] sm:$0xf]
        %v776 = vld [vmem:[#allocation5 + $0x1b8] sm:$0xf]
        %v777 = vld [vmem:[#allocation5 + $0x1bc] sm:$0xf]
        %v778 = vld [vmem:[#allocation5 + $0x1c0] sm:$0xf]
        %v779 = vld [vmem:[#allocation5 + $0x1c4] sm:$0xf]
        %v780 = vld [vmem:[#allocation5 + $0x1c8] sm:$0xf]
        %v781 = vld [vmem:[#allocation5 + $0x1cc] sm:$0xf]
        %v782 = vld [vmem:[#allocation5 + $0x1d0] sm:$0xf]
        %v783 = vld [vmem:[#allocation5 + $0x1d4] sm:$0xf]
        %v784 = vld [vmem:[#allocation5 + $0x1d8] sm:$0xf]
        %v785 = vld [vmem:[#allocation5 + $0x1dc] sm:$0xf]
        %v786 = vld [vmem:[#allocation5 + $0x1e0] sm:$0xf]
        %v787 = vld [vmem:[#allocation5 + $0x1e4] sm:$0xf]
        %v788 = vld [vmem:[#allocation5 + $0x1e8] sm:$0xf]
        %v789 = vld [vmem:[#allocation5 + $0x1ec] sm:$0xf]
        %v790 = vld [vmem:[#allocation5 + $0x1f0] sm:$0xf]
        %v791 = vld [vmem:[#allocation5 + $0x1f4] sm:$0xf]
        %v792 = vld [vmem:[#allocation5 + $0x1f8] sm:$0xf]
        %v793 = vld [vmem:[#allocation5 + $0x1fc] sm:$0xf]
        %v794 = vld [vmem:[#allocation5 + $0x200] sm:$0xf]
        %v795 = vld [vmem:[#allocation5 + $0x204] sm:$0xf]
        %v796 = vld [vmem:[#allocation5 + $0x208] sm:$0xf]
        %v797 = vld [vmem:[#allocation5 + $0x20c] sm:$0xf]
        %v798 = vld [vmem:[#allocation5 + $0x210] sm:$0xf]
        %v799 = vld [vmem:[#allocation5 + $0x214] sm:$0xf]
        %v800 = vld [vmem:[#allocation5 + $0x218] sm:$0xf]
        %v801 = vld [vmem:[#allocation5 + $0x21c] sm:$0xf]
        %v802 = vld [vmem:[#allocation5 + $0x220] sm:$0xf]
        %v803 = vld [vmem:[#allocation5 + $0x224] sm:$0xf]
        %v804 = vld [vmem:[#allocation5 + $0x228] sm:$0xf]
        %v805 = vld [vmem:[#allocation5 + $0x22c] sm:$0xf]
        %v806 = vld [vmem:[#allocation5 + $0x230] sm:$0xf]
        %v807 = vld [vmem:[#allocation5 + $0x234] sm:$0xf]
        %v808 = vld [vmem:[#allocation5 + $0x238] sm:$0xf]
        %v809 = vld [vmem:[#allocation5 + $0x23c] sm:$0xf]
        %v810 = vld [vmem:[#allocation5 + $0x240] sm:$0xf]
        %v811 = vld [vmem:[#allocation5 + $0x244] sm:$0xf]
        %v812 = vld [vmem:[#allocation5 + $0x248] sm:$0xf]
        %v813 = vld [vmem:[#allocation5 + $0x24c] sm:$0xf]
        %v814 = vld [vmem:[#allocation5 + $0x250] sm:$0xf]
        %v815 = vld [vmem:[#allocation5 + $0x254] sm:$0xf]
        %v816 = vld [vmem:[#allocation5 + $0x258] sm:$0xf]
        %v817 = vld [vmem:[#allocation5 + $0x25c] sm:$0xf]
        %v818 = vld [vmem:[#allocation5 + $0x260] sm:$0xf]
        %v819 = vld [vmem:[#allocation5 + $0x264] sm:$0xf]
        %v820 = vld [vmem:[#allocation5 + $0x268] sm:$0xf]
        %v821 = vld [vmem:[#allocation5 + $0x26c] sm:$0xf]
        %v822 = vld [vmem:[#allocation5 + $0x270] sm:$0xf]
        %v823 = vld [vmem:[#allocation5 + $0x274] sm:$0xf]
        %v824 = vld [vmem:[#allocation5 + $0x278] sm:$0xf]
        %v825 = vld [vmem:[#allocation5 + $0x27c] sm:$0xf]
        %v826 = vld [vmem:[#allocation5 + $0x280] sm:$0xf]
        %v827 = vld [vmem:[#allocation5 + $0x284] sm:$0xf]
        %v828 = vld [vmem:[#allocation5 + $0x288] sm:$0xf]
        %v829 = vld [vmem:[#allocation5 + $0x28c] sm:$0xf]
        %v830 = vld [vmem:[#allocation5 + $0x290] sm:$0xf]
        %v831 = vld [vmem:[#allocation5 + $0x294] sm:$0xf]
        %v832 = vld [vmem:[#allocation5 + $0x298] sm:$0xf]
        %v833 = vld [vmem:[#allocation5 + $0x29c] sm:$0xf]
        %v834 = vld [vmem:[#allocation5 + $0x2a0] sm:$0xf]
        %v835 = vld [vmem:[#allocation5 + $0x2a4] sm:$0xf]
        %v836 = vld [vmem:[#allocation5 + $0x2a8] sm:$0xf]
        %v837 = vld [vmem:[#allocation5 + $0x2ac] sm:$0xf]
        %v838 = vld [vmem:[#allocation5 + $0x2b0] sm:$0xf]
        %v839 = vld [vmem:[#allocation5 + $0x2b4] sm:$0xf]
        %v840 = vld [vmem:[#allocation5 + $0x2b8] sm:$0xf]
        %v841 = vld [vmem:[#allocation5 + $0x2bc] sm:$0xf]
        %v842 = vld [vmem:[#allocation5 + $0x2c0] sm:$0xf]
        %v843 = vld [vmem:[#allocation5 + $0x2c4] sm:$0xf]
        %v844 = vld [vmem:[#allocation5 + $0x2c8] sm:$0xf]
        %v845 = vld [vmem:[#allocation5 + $0x2cc] sm:$0xf]
        %v846 = vld [vmem:[#allocation5 + $0x2d0] sm:$0xf]
        %v847 = vld [vmem:[#allocation5 + $0x2d4] sm:$0xf]
        %v848 = vld [vmem:[#allocation5 + $0x2d8] sm:$0xf]
        %v849 = vld [vmem:[#allocation5 + $0x2dc] sm:$0xf]
        %v850 = vld [vmem:[#allocation5 + $0x2e0] sm:$0xf]
        %v851 = vld [vmem:[#allocation5 + $0x2e4] sm:$0xf]
        %v852 = vld [vmem:[#allocation5 + $0x2e8] sm:$0xf]
        %v853 = vld [vmem:[#allocation5 + $0x2ec] sm:$0xf]
        %v854 = vld [vmem:[#allocation5 + $0x2f0] sm:$0xf]
        %v855 = vld [vmem:[#allocation5 + $0x2f4] sm:$0xf]
        %v856 = vld [vmem:[#allocation5 + $0x2f8] sm:$0xf]
        %v857 = vld [vmem:[#allocation5 + $0x2fc] sm:$0xf]
        %v858 = vld [vmem:[#allocation5 + $0x300] sm:$0xf]
        %v859 = vld [vmem:[#allocation5 + $0x304] sm:$0xf]
        %v860 = vld [vmem:[#allocation5 + $0x308] sm:$0xf]
        %v861 = vld [vmem:[#allocation5 + $0x30c] sm:$0xf]
        %v862 = vld [vmem:[#allocation5 + $0x310] sm:$0xf]
        %v863 = vld [vmem:[#allocation5 + $0x314] sm:$0xf]
        %v864 = vld [vmem:[#allocation5 + $0x318] sm:$0xf]
        %v865 = vld [vmem:[#allocation5 + $0x31c] sm:$0xf]
        %v866 = vld [vmem:[#allocation5 + $0x320] sm:$0xf]
        %v867 = vld [vmem:[#allocation5 + $0x324] sm:$0xf]
        %v868 = vld [vmem:[#allocation5 + $0x328] sm:$0xf]
        %v869 = vld [vmem:[#allocation5 + $0x32c] sm:$0xf]
        %v870 = vld [vmem:[#allocation5 + $0x330] sm:$0xf]
        %v871 = vld [vmem:[#allocation5 + $0x334] sm:$0xf]
        %v872 = vld [vmem:[#allocation5 + $0x338] sm:$0xf]
        %v873 = vld [vmem:[#allocation5 + $0x33c] sm:$0xf]
        %v874 = vld [vmem:[#allocation5 + $0x340] sm:$0xf]
        %v875 = vld [vmem:[#allocation5 + $0x344] sm:$0xf]
        %v876 = vld [vmem:[#allocation5 + $0x348] sm:$0xf]
        %v877 = vld [vmem:[#allocation5 + $0x34c] sm:$0xf]
        %v878 = vld [vmem:[#allocation5 + $0x350] sm:$0xf]
        %v879 = vld [vmem:[#allocation5 + $0x354] sm:$0xf]
        %v880 = vld [vmem:[#allocation5 + $0x358] sm:$0xf]
        %v881 = vld [vmem:[#allocation5 + $0x35c] sm:$0xf]
        %v882 = vld [vmem:[#allocation5 + $0x360] sm:$0xf]
        %v883 = vld [vmem:[#allocation5 + $0x364] sm:$0xf]
        %v884 = vld [vmem:[#allocation5 + $0x368] sm:$0xf]
        %v885 = vld [vmem:[#allocation5 + $0x36c] sm:$0xf]
        %v886 = vld [vmem:[#allocation5 + $0x370] sm:$0xf]
        %v887 = vld [vmem:[#allocation5 + $0x374] sm:$0xf]
        %v888 = vld [vmem:[#allocation5 + $0x378] sm:$0xf]
        %v889 = vld [vmem:[#allocation5 + $0x37c] sm:$0xf]
        %v890 = vld [vmem:[#allocation5 + $0x380] sm:$0xf]
        %v891 = vld [vmem:[#allocation5 + $0x384] sm:$0xf]
        %v892 = vld [vmem:[#allocation5 + $0x388] sm:$0xf]
        %v893 = vld [vmem:[#allocation5 + $0x38c] sm:$0xf]
        %v894 = vld [vmem:[#allocation5 + $0x390] sm:$0xf]
        %v895 = vld [vmem:[#allocation5 + $0x394] sm:$0xf]
        %v896 = vld [vmem:[#allocation5 + $0x398] sm:$0xf]
        %v897 = vld [vmem:[#allocation5 + $0x39c] sm:$0xf]
        %v898 = vld [vmem:[#allocation5 + $0x3a0] sm:$0xf]
        %v899 = vld [vmem:[#allocation5 + $0x3a4] sm:$0xf]
        %v900 = vld [vmem:[#allocation5 + $0x3a8] sm:$0xf]
        %v901 = vld [vmem:[#allocation5 + $0x3ac] sm:$0xf]
        %v902 = vld [vmem:[#allocation5 + $0x3b0] sm:$0xf]
        %v903 = vld [vmem:[#allocation5 + $0x3b4] sm:$0xf]
        %v904 = vld [vmem:[#allocation5 + $0x3b8] sm:$0xf]
        %v905 = vld [vmem:[#allocation5 + $0x3bc] sm:$0xf]
        %v906 = vld [vmem:[#allocation5 + $0x3c0] sm:$0xf]
        %v907 = vld [vmem:[#allocation5 + $0x3c4] sm:$0xf]
        %v908 = vld [vmem:[#allocation5 + $0x3c8] sm:$0xf]
        %v909 = vld [vmem:[#allocation5 + $0x3cc] sm:$0xf]
        %v910 = vld [vmem:[#allocation5 + $0x3d0] sm:$0xf]
        %v911 = vld [vmem:[#allocation5 + $0x3d4] sm:$0xf]
        %v912 = vld [vmem:[#allocation5 + $0x3d8] sm:$0xf]
        %v913 = vld [vmem:[#allocation5 + $0x3dc] sm:$0xf]
        %v914 = vld [vmem:[#allocation5 + $0x3e0] sm:$0xf]
        %v915 = vld [vmem:[#allocation5 + $0x3e4] sm:$0xf]
        %v916 = vld [vmem:[#allocation5 + $0x3e8] sm:$0xf]
        %v917 = vld [vmem:[#allocation5 + $0x3ec] sm:$0xf]
        %v918 = vld [vmem:[#allocation5 + $0x3f0] sm:$0xf]
        %v919 = vld [vmem:[#allocation5 + $0x3f4] sm:$0xf]
        %v920 = vld [vmem:[#allocation5 + $0x3f8] sm:$0xf]
        %v921 = vld [vmem:[#allocation5 + $0x3fc] sm:$0xf]
        %v922 = vld [vmem:[#allocation5 + $0x400] sm:$0xf]
        %v923 = vld [vmem:[#allocation5 + $0x404] sm:$0xf]
        %v924 = vld [vmem:[#allocation5 + $0x408] sm:$0xf]
        %v925 = vld [vmem:[#allocation5 + $0x40c] sm:$0xf]
        %v926 = vld [vmem:[#allocation5 + $0x410] sm:$0xf]
        %v927 = vld [vmem:[#allocation5 + $0x414] sm:$0xf]
        %v928 = vld [vmem:[#allocation5 + $0x418] sm:$0xf]
        %v929 = vld [vmem:[#allocation5 + $0x41c] sm:$0xf]
        %v930 = vld [vmem:[#allocation5 + $0x420] sm:$0xf]
        %v931 = vld [vmem:[#allocation5 + $0x424] sm:$0xf]
        %v932 = vld [vmem:[#allocation5 + $0x428] sm:$0xf]
        %v933 = vld [vmem:[#allocation5 + $0x42c] sm:$0xf]
        %v934 = vld [vmem:[#allocation5 + $0x430] sm:$0xf]
        %v935 = vld [vmem:[#allocation5 + $0x434] sm:$0xf]
        %v936 = vld [vmem:[#allocation5 + $0x438] sm:$0xf]
        %v937 = vld [vmem:[#allocation5 + $0x43c] sm:$0xf]
        %v938 = vld [vmem:[#allocation5 + $0x440] sm:$0xf]
        %v939 = vld [vmem:[#allocation5 + $0x444] sm:$0xf]
        %v940 = vld [vmem:[#allocation5 + $0x448] sm:$0xf]
        %v941 = vld [vmem:[#allocation5 + $0x44c] sm:$0xf]
        %v942 = vld [vmem:[#allocation5 + $0x450] sm:$0xf]
        %v943 = vld [vmem:[#allocation5 + $0x454] sm:$0xf]
        %v944 = vld [vmem:[#allocation5 + $0x458] sm:$0xf]
        %v945 = vld [vmem:[#allocation5 + $0x45c] sm:$0xf]
        %v946 = vld [vmem:[#allocation5 + $0x460] sm:$0xf]
        %v947 = vld [vmem:[#allocation5 + $0x464] sm:$0xf]
        %v948 = vld [vmem:[#allocation5 + $0x468] sm:$0xf]
        %v949 = vld [vmem:[#allocation5 + $0x46c] sm:$0xf]
        %v950 = vld [vmem:[#allocation5 + $0x470] sm:$0xf]
        %v951 = vld [vmem:[#allocation5 + $0x474] sm:$0xf]
        %v952 = vld [vmem:[#allocation5 + $0x478] sm:$0xf]
        %v953 = vld [vmem:[#allocation5 + $0x47c] sm:$0xf]
        %v954 = vld [vmem:[#allocation5 + $0x480] sm:$0xf]
        %v955 = vld [vmem:[#allocation5 + $0x484] sm:$0xf]
        %v956 = vld [vmem:[#allocation5 + $0x488] sm:$0xf]
        %v957 = vld [vmem:[#allocation5 + $0x48c] sm:$0xf]
        %v958 = vld [vmem:[#allocation5 + $0x490] sm:$0xf]
        %v959 = vld [vmem:[#allocation5 + $0x494] sm:$0xf]
        %v960 = vld [vmem:[#allocation5 + $0x498] sm:$0xf]
        %v961 = vld [vmem:[#allocation5 + $0x49c] sm:$0xf]
        %v962 = vld [vmem:[#allocation5 + $0x4a0] sm:$0xf]
        %v963 = vld [vmem:[#allocation5 + $0x4a4] sm:$0xf]
        %v964 = vld [vmem:[#allocation5 + $0x4a8] sm:$0xf]
        %v965 = vld [vmem:[#allocation5 + $0x4ac] sm:$0xf]
        %v966 = vld [vmem:[#allocation5 + $0x4b0] sm:$0xf]
        %v967 = vld [vmem:[#allocation5 + $0x4b4] sm:$0xf]
        %v968 = vld [vmem:[#allocation5 + $0x4b8] sm:$0xf]
        %v969 = vld [vmem:[#allocation5 + $0x4bc] sm:$0xf]
        %v970 = vld [vmem:[#allocation5 + $0x4c0] sm:$0xf]
        %v971 = vld [vmem:[#allocation5 + $0x4c4] sm:$0xf]
        %v972 = vld [vmem:[#allocation5 + $0x4c8] sm:$0xf]
        %v973 = vld [vmem:[#allocation5 + $0x4cc] sm:$0xf]
        %v974 = vld [vmem:[#allocation5 + $0x4d0] sm:$0xf]
        %v975 = vld [vmem:[#allocation5 + $0x4d4] sm:$0xf]
        %v976 = vld [vmem:[#allocation5 + $0x4d8] sm:$0xf]
        %v977 = vld [vmem:[#allocation5 + $0x4dc] sm:$0xf]
        %v978 = vld [vmem:[#allocation5 + $0x4e0] sm:$0xf]
        %v979 = vld [vmem:[#allocation5 + $0x4e4] sm:$0xf]
        %v980 = vld [vmem:[#allocation5 + $0x4e8] sm:$0xf]
        %v981 = vld [vmem:[#allocation5 + $0x4ec] sm:$0xf]
        %v982 = vld [vmem:[#allocation5 + $0x4f0] sm:$0xf]
        %v983 = vld [vmem:[#allocation5 + $0x4f4] sm:$0xf]
        %v984 = vld [vmem:[#allocation5 + $0x4f8] sm:$0xf]
        %v985 = vld [vmem:[#allocation5 + $0x4fc] sm:$0xf]
        %v986 = vld [vmem:[#allocation5 + $0x500] sm:$0xf]
        %v987 = vld [vmem:[#allocation5 + $0x504] sm:$0xf]
        %v988 = vld [vmem:[#allocation5 + $0x508] sm:$0xf]
        %v989 = vld [vmem:[#allocation5 + $0x50c] sm:$0xf]
        %v990 = vld [vmem:[#allocation5 + $0x510] sm:$0xf]
        %v991 = vld [vmem:[#allocation5 + $0x514] sm:$0xf]
        %v992 = vld [vmem:[#allocation5 + $0x518] sm:$0xf]
        %v993 = vld [vmem:[#allocation5 + $0x51c] sm:$0xf]
        %v994 = vld [vmem:[#allocation5 + $0x520] sm:$0xf]
        %v995 = vld [vmem:[#allocation5 + $0x524] sm:$0xf]
        %v996 = vld [vmem:[#allocation5 + $0x528] sm:$0xf]
        %v997 = vld [vmem:[#allocation5 + $0x52c] sm:$0xf]
        %v998 = vld [vmem:[#allocation5 + $0x530] sm:$0xf]
        %v999 = vld [vmem:[#allocation5 + $0x534] sm:$0xf]
        %v1000 = vld [vmem:[#allocation5 + $0x538] sm:$0xf]
        %v1001 = vld [vmem:[#allocation5 + $0x53c] sm:$0xf]
        %v1002 = vld [vmem:[#allocation5 + $0x540] sm:$0xf]
        %v1003 = vld [vmem:[#allocation5 + $0x544] sm:$0xf]
        %v1004 = vld [vmem:[#allocation5 + $0x548] sm:$0xf]
        %v1005 = vld [vmem:[#allocation5 + $0x54c] sm:$0xf]
        %v1006 = vld [vmem:[#allocation5 + $0x550] sm:$0xf]
        %v1007 = vld [vmem:[#allocation5 + $0x554] sm:$0xf]
        %v1008 = vld [vmem:[#allocation5 + $0x558] sm:$0xf]
        %v1009 = vld [vmem:[#allocation5 + $0x55c] sm:$0xf]
        %v1010 = vld [vmem:[#allocation5 + $0x560] sm:$0xf]
        %v1011 = vld [vmem:[#allocation5 + $0x564] sm:$0xf]
        %v1012 = vld [vmem:[#allocation5 + $0x568] sm:$0xf]
        %v1013 = vld [vmem:[#allocation5 + $0x56c] sm:$0xf]
        %v1014 = vld [vmem:[#allocation5 + $0x570] sm:$0xf]
        %v1015 = vld [vmem:[#allocation5 + $0x574] sm:$0xf]
        %v1016 = vld [vmem:[#allocation5 + $0x578] sm:$0xf]
        %v1017 = vld [vmem:[#allocation5 + $0x57c] sm:$0xf]
        %v1018 = vld [vmem:[#allocation5 + $0x580] sm:$0xf]
        %v1019 = vld [vmem:[#allocation5 + $0x584] sm:$0xf]
        %v1020 = vld [vmem:[#allocation5 + $0x588] sm:$0xf]
        %v1021 = vld [vmem:[#allocation5 + $0x58c] sm:$0xf]
        %v1022 = vld [vmem:[#allocation5 + $0x590] sm:$0xf]
        %v1023 = vld [vmem:[#allocation5 + $0x594] sm:$0xf]
        %v1024 = vld [vmem:[#allocation5 + $0x598] sm:$0xf]
        %v1025 = vld [vmem:[#allocation5 + $0x59c] sm:$0xf]
        %v1026 = vld [vmem:[#allocation5 + $0x5a0] sm:$0xf]
        %v1027 = vld [vmem:[#allocation5 + $0x5a4] sm:$0xf]
        %v1028 = vld [vmem:[#allocation5 + $0x5a8] sm:$0xf]
        %v1029 = vld [vmem:[#allocation5 + $0x5ac] sm:$0xf]
        %v1030 = vld [vmem:[#allocation5 + $0x5b0] sm:$0xf]
        %v1031 = vld [vmem:[#allocation5 + $0x5b4] sm:$0xf]
        %v1032 = vld [vmem:[#allocation5 + $0x5b8] sm:$0xf]
        %v1033 = vld [vmem:[#allocation5 + $0x5bc] sm:$0xf]
        %v1034 = vld [vmem:[#allocation5 + $0x5c0] sm:$0xf]
        %v1035 = vld [vmem:[#allocation5 + $0x5c4] sm:$0xf]
        %v1036 = vld [vmem:[#allocation5 + $0x5c8] sm:$0xf]
        %v1037 = vld [vmem:[#allocation5 + $0x5cc] sm:$0xf]
        %v1038 = vld [vmem:[#allocation5 + $0x5d0] sm:$0xf]
        %v1039 = vld [vmem:[#allocation5 + $0x5d4] sm:$0xf]
        %v1040 = vld [vmem:[#allocation5 + $0x5d8] sm:$0xf]
        %v1041 = vld [vmem:[#allocation5 + $0x5dc] sm:$0xf]
        %v1042 = vld [vmem:[#allocation5 + $0x5e0] sm:$0xf]
        %v1043 = vld [vmem:[#allocation5 + $0x5e4] sm:$0xf]
        %v1044 = vld [vmem:[#allocation5 + $0x5e8] sm:$0xf]
        %v1045 = vld [vmem:[#allocation5 + $0x5ec] sm:$0xf]
        %v1046 = vld [vmem:[#allocation5 + $0x5f0] sm:$0xf]
        %v1047 = vld [vmem:[#allocation5 + $0x5f4] sm:$0xf]
        %v1048 = vld [vmem:[#allocation5 + $0x5f8] sm:$0xf]
        %v1049 = vld [vmem:[#allocation5 + $0x5fc] sm:$0xf]
        %v1050 = vld [vmem:[#allocation5 + $0x600] sm:$0xf]
        %v1051 = vld [vmem:[#allocation5 + $0x604] sm:$0xf]
        %v1052 = vld [vmem:[#allocation5 + $0x608] sm:$0xf]
        %v1053 = vld [vmem:[#allocation5 + $0x60c] sm:$0xf]
        %v1054 = vld [vmem:[#allocation5 + $0x610] sm:$0xf]
        %v1055 = vld [vmem:[#allocation5 + $0x614] sm:$0xf]
        %v1056 = vld [vmem:[#allocation5 + $0x618] sm:$0xf]
        %v1057 = vld [vmem:[#allocation5 + $0x61c] sm:$0xf]
        %v1058 = vld [vmem:[#allocation5 + $0x620] sm:$0xf]
        %v1059 = vld [vmem:[#allocation5 + $0x624] sm:$0xf]
        %v1060 = vld [vmem:[#allocation5 + $0x628] sm:$0xf]
        %v1061 = vld [vmem:[#allocation5 + $0x62c] sm:$0xf]
        %v1062 = vld [vmem:[#allocation5 + $0x630] sm:$0xf]
        %v1063 = vld [vmem:[#allocation5 + $0x634] sm:$0xf]
        %v1064 = vld [vmem:[#allocation5 + $0x638] sm:$0xf]
        %v1065 = vld [vmem:[#allocation5 + $0x63c] sm:$0xf]
        %v1066 = vld [vmem:[#allocation5 + $0x640] sm:$0xf]
        %v1067 = vld [vmem:[#allocation5 + $0x644] sm:$0xf]
        %v1068 = vld [vmem:[#allocation5 + $0x648] sm:$0xf]
        %v1069 = vld [vmem:[#allocation5 + $0x64c] sm:$0xf]
        %v1070 = vld [vmem:[#allocation5 + $0x650] sm:$0xf]
        %v1071 = vld [vmem:[#allocation5 + $0x654] sm:$0xf]
        %v1072 = vld [vmem:[#allocation5 + $0x658] sm:$0xf]
        %v1073 = vld [vmem:[#allocation5 + $0x65c] sm:$0xf]
        %v1074 = vld [vmem:[#allocation5 + $0x660] sm:$0xf]
        %v1075 = vld [vmem:[#allocation5 + $0x664] sm:$0xf]
        %v1076 = vld [vmem:[#allocation5 + $0x668] sm:$0xf]
        %v1077 = vld [vmem:[#allocation5 + $0x66c] sm:$0xf]
        %v1078 = vld [vmem:[#allocation5 + $0x670] sm:$0xf]
        %v1079 = vld [vmem:[#allocation5 + $0x674] sm:$0xf]
        %v1080 = vld [vmem:[#allocation5 + $0x678] sm:$0xf]
        %v1081 = vld [vmem:[#allocation5 + $0x67c] sm:$0xf]
        %v1082 = vld [vmem:[#allocation5 + $0x680] sm:$0xf]
        %v1083 = vld [vmem:[#allocation5 + $0x684] sm:$0xf]
        %v1084 = vld [vmem:[#allocation5 + $0x688] sm:$0xf]
        %v1085 = vld [vmem:[#allocation5 + $0x68c] sm:$0xf]
        %v1086 = vld [vmem:[#allocation5 + $0x690] sm:$0xf]
        %v1087 = vld [vmem:[#allocation5 + $0x694] sm:$0xf]
        %v1088 = vld [vmem:[#allocation5 + $0x698] sm:$0xf]
        %v1089 = vld [vmem:[#allocation5 + $0x69c] sm:$0xf]
        %v1090 = vld [vmem:[#allocation5 + $0x6a0] sm:$0xf]
        %v1091 = vld [vmem:[#allocation5 + $0x6a4] sm:$0xf]
        %v1092 = vld [vmem:[#allocation5 + $0x6a8] sm:$0xf]
        %v1093 = vld [vmem:[#allocation5 + $0x6ac] sm:$0xf]
        %v1094 = vld [vmem:[#allocation5 + $0x6b0] sm:$0xf]
        %v1095 = vld [vmem:[#allocation5 + $0x6b4] sm:$0xf]
        %v1096 = vld [vmem:[#allocation5 + $0x6b8] sm:$0xf]
        %v1097 = vld [vmem:[#allocation5 + $0x6bc] sm:$0xf]
        %v1098 = vld [vmem:[#allocation5 + $0x6c0] sm:$0xf]
        %v1099 = vld [vmem:[#allocation5 + $0x6c4] sm:$0xf]
        %v1100 = vld [vmem:[#allocation5 + $0x6c8] sm:$0xf]
        %v1101 = vld [vmem:[#allocation5 + $0x6cc] sm:$0xf]
        %v1102 = vld [vmem:[#allocation5 + $0x6d0] sm:$0xf]
        %v1103 = vld [vmem:[#allocation5 + $0x6d4] sm:$0xf]
        %v1104 = vld [vmem:[#allocation5 + $0x6d8] sm:$0xf]
        %v1105 = vld [vmem:[#allocation5 + $0x6dc] sm:$0xf]
        %v1106 = vld [vmem:[#allocation5 + $0x6e0] sm:$0xf]
        %v1107 = vld [vmem:[#allocation5 + $0x6e4] sm:$0xf]
        %v1108 = vld [vmem:[#allocation5 + $0x6e8] sm:$0xf]
        %v1109 = vld [vmem:[#allocation5 + $0x6ec] sm:$0xf]
        %v1110 = vld [vmem:[#allocation5 + $0x6f0] sm:$0xf]
        %v1111 = vld [vmem:[#allocation5 + $0x6f4] sm:$0xf]
        %v1112 = vld [vmem:[#allocation5 + $0x6f8] sm:$0xf]
        %v1113 = vld [vmem:[#allocation5 + $0x6fc] sm:$0xf]
        %v1114 = vld [vmem:[#allocation5 + $0x700] sm:$0xf]
        %v1115 = vld [vmem:[#allocation5 + $0x704] sm:$0xf]
        %v1116 = vld [vmem:[#allocation5 + $0x708] sm:$0xf]
        %v1117 = vld [vmem:[#allocation5 + $0x70c] sm:$0xf]
        %v1118 = vld [vmem:[#allocation5 + $0x710] sm:$0xf]
        %v1119 = vld [vmem:[#allocation5 + $0x714] sm:$0xf]
        %v1120 = vld [vmem:[#allocation5 + $0x718] sm:$0xf]
        %v1121 = vld [vmem:[#allocation5 + $0x71c] sm:$0xf]
        %v1122 = vld [vmem:[#allocation5 + $0x720] sm:$0xf]
        %v1123 = vld [vmem:[#allocation5 + $0x724] sm:$0xf]
        %v1124 = vld [vmem:[#allocation5 + $0x728] sm:$0xf]
        %v1125 = vld [vmem:[#allocation5 + $0x72c] sm:$0xf]
        %v1126 = vld [vmem:[#allocation5 + $0x730] sm:$0xf]
        %v1127 = vld [vmem:[#allocation5 + $0x734] sm:$0xf]
        %v1128 = vld [vmem:[#allocation5 + $0x738] sm:$0xf]
        %v1129 = vld [vmem:[#allocation5 + $0x73c] sm:$0xf]
        %v1130 = vld [vmem:[#allocation5 + $0x740] sm:$0xf]
        %v1131 = vld [vmem:[#allocation5 + $0x744] sm:$0xf]
        %v1132 = vld [vmem:[#allocation5 + $0x748] sm:$0xf]
        %v1133 = vld [vmem:[#allocation5 + $0x74c] sm:$0xf]
        %v1134 = vld [vmem:[#allocation5 + $0x750] sm:$0xf]
        %v1135 = vld [vmem:[#allocation5 + $0x754] sm:$0xf]
        %v1136 = vld [vmem:[#allocation5 + $0x758] sm:$0xf]
        %v1137 = vld [vmem:[#allocation5 + $0x75c] sm:$0xf]
        %v1138 = vld [vmem:[#allocation5 + $0x760] sm:$0xf]
        %v1139 = vld [vmem:[#allocation5 + $0x764] sm:$0xf]
        %v1140 = vld [vmem:[#allocation5 + $0x768] sm:$0xf]
        %v1141 = vld [vmem:[#allocation5 + $0x76c] sm:$0xf]
        %v1142 = vld [vmem:[#allocation5 + $0x770] sm:$0xf]
        %v1143 = vld [vmem:[#allocation5 + $0x774] sm:$0xf]
        %v1144 = vld [vmem:[#allocation5 + $0x778] sm:$0xf]
        %v1145 = vld [vmem:[#allocation5 + $0x77c] sm:$0xf]
        %v1146 = vld [vmem:[#allocation5 + $0x780] sm:$0xf]
        %v1147 = vld [vmem:[#allocation5 + $0x784] sm:$0xf]
        %v1148 = vld [vmem:[#allocation5 + $0x788] sm:$0xf]
        %v1149 = vld [vmem:[#allocation5 + $0x78c] sm:$0xf]
        %v1150 = vld [vmem:[#allocation5 + $0x790] sm:$0xf]
        %v1151 = vld [vmem:[#allocation5 + $0x794] sm:$0xf]
        %v1152 = vld [vmem:[#allocation5 + $0x798] sm:$0xf]
        %v1153 = vld [vmem:[#allocation5 + $0x79c] sm:$0xf]
        %v1154 = vld [vmem:[#allocation5 + $0x7a0] sm:$0xf]
        %v1155 = vld [vmem:[#allocation5 + $0x7a4] sm:$0xf]
        %v1156 = vld [vmem:[#allocation5 + $0x7a8] sm:$0xf]
        %v1157 = vld [vmem:[#allocation5 + $0x7ac] sm:$0xf]
        %v1158 = vld [vmem:[#allocation5 + $0x7b0] sm:$0xf]
        %v1159 = vld [vmem:[#allocation5 + $0x7b4] sm:$0xf]
        %v1160 = vld [vmem:[#allocation5 + $0x7b8] sm:$0xf]
        %v1161 = vld [vmem:[#allocation5 + $0x7bc] sm:$0xf]
        %v1162 = vld [vmem:[#allocation5 + $0x7c0] sm:$0xf]
        %v1163 = vld [vmem:[#allocation5 + $0x7c4] sm:$0xf]
        %v1164 = vld [vmem:[#allocation5 + $0x7c8] sm:$0xf]
        %v1165 = vld [vmem:[#allocation5 + $0x7cc] sm:$0xf]
        %v1166 = vld [vmem:[#allocation5 + $0x7d0] sm:$0xf]
        %v1167 = vld [vmem:[#allocation5 + $0x7d4] sm:$0xf]
        %v1168 = vld [vmem:[#allocation5 + $0x7d8] sm:$0xf]
        %v1169 = vld [vmem:[#allocation5 + $0x7dc] sm:$0xf]
        %v1170 = vld [vmem:[#allocation5 + $0x7e0] sm:$0xf]
        %v1171 = vld [vmem:[#allocation5 + $0x7e4] sm:$0xf]
        %v1172 = vld [vmem:[#allocation5 + $0x7e8] sm:$0xf]
        %v1173 = vld [vmem:[#allocation5 + $0x7ec] sm:$0xf]
        %v1174 = vld [vmem:[#allocation5 + $0x7f0] sm:$0xf]
        %v1175 = vld [vmem:[#allocation5 + $0x7f4] sm:$0xf]
        %v1176 = vld [vmem:[#allocation5 + $0x7f8] sm:$0xf]
        %v1177 = vld [vmem:[#allocation5 + $0x7fc] sm:$0xf]
        %v1178 = vld [vmem:[#allocation5 + $0x800] sm:$0xf]
        %v1179 = vld [vmem:[#allocation5 + $0x804] sm:$0xf]
        %v1180 = vld [vmem:[#allocation5 + $0x808] sm:$0xf]
        %v1181 = vld [vmem:[#allocation5 + $0x80c] sm:$0xf]
        %v1182 = vld [vmem:[#allocation5 + $0x810] sm:$0xf]
        %v1183 = vld [vmem:[#allocation5 + $0x814] sm:$0xf]
        %v1184 = vld [vmem:[#allocation5 + $0x818] sm:$0xf]
        %v1185 = vld [vmem:[#allocation5 + $0x81c] sm:$0xf]
        %v1186 = vld [vmem:[#allocation5 + $0x820] sm:$0xf]
        %v1187 = vld [vmem:[#allocation5 + $0x824] sm:$0xf]
        %v1188 = vld [vmem:[#allocation5 + $0x828] sm:$0xf]
        %v1189 = vld [vmem:[#allocation5 + $0x82c] sm:$0xf]
        %v1190 = vld [vmem:[#allocation5 + $0x830] sm:$0xf]
        %v1191 = vld [vmem:[#allocation5 + $0x834] sm:$0xf]
        %v1192 = vld [vmem:[#allocation5 + $0x838] sm:$0xf]
        %v1193 = vld [vmem:[#allocation5 + $0x83c] sm:$0xf]
        %v1194 = vld [vmem:[#allocation5 + $0x840] sm:$0xf]
        %v1195 = vld [vmem:[#allocation5 + $0x844] sm:$0xf]
        %v1196 = vld [vmem:[#allocation5 + $0x848] sm:$0xf]
        %v1197 = vld [vmem:[#allocation5 + $0x84c] sm:$0xf]
        %v1198 = vld [vmem:[#allocation5 + $0x850] sm:$0xf]
        %v1199 = vld [vmem:[#allocation5 + $0x854] sm:$0xf]
        %v1200 = vld [vmem:[#allocation5 + $0x858] sm:$0xf]
        %v1201 = vld [vmem:[#allocation5 + $0x85c] sm:$0xf]
        %v1202 = vld [vmem:[#allocation5 + $0x860] sm:$0xf]
        %v1203 = vld [vmem:[#allocation5 + $0x864] sm:$0xf]
        %v1204 = vld [vmem:[#allocation5 + $0x868] sm:$0xf]
        %v1205 = vld [vmem:[#allocation5 + $0x86c] sm:$0xf]
        %v1206 = vld [vmem:[#allocation5 + $0x870] sm:$0xf]
        %v1207 = vld [vmem:[#allocation5 + $0x874] sm:$0xf]
        %v1208 = vld [vmem:[#allocation5 + $0x878] sm:$0xf]
        %v1209 = vld [vmem:[#allocation5 + $0x87c] sm:$0xf]
        %v1210 = vld [vmem:[#allocation5 + $0x880] sm:$0xf]
        %v1211 = vld [vmem:[#allocation5 + $0x884] sm:$0xf]
        %v1212 = vld [vmem:[#allocation5 + $0x888] sm:$0xf]
        %v1213 = vld [vmem:[#allocation5 + $0x88c] sm:$0xf]
        %v1214 = vld [vmem:[#allocation5 + $0x890] sm:$0xf]
        %v1215 = vld [vmem:[#allocation5 + $0x894] sm:$0xf]
        %v1216 = vld [vmem:[#allocation5 + $0x898] sm:$0xf]
        %v1217 = vld [vmem:[#allocation5 + $0x89c] sm:$0xf]
        %v1218 = vld [vmem:[#allocation5 + $0x8a0] sm:$0xf]
        %v1219 = vld [vmem:[#allocation5 + $0x8a4] sm:$0xf]
        %v1220 = vld [vmem:[#allocation5 + $0x8a8] sm:$0xf]
        %v1221 = vld [vmem:[#allocation5 + $0x8ac] sm:$0xf]
        %v1222 = vld [vmem:[#allocation5 + $0x8b0] sm:$0xf]
        %v1223 = vld [vmem:[#allocation5 + $0x8b4] sm:$0xf]
        %v1224 = vld [vmem:[#allocation5 + $0x8b8] sm:$0xf]
        %v1225 = vld [vmem:[#allocation5 + $0x8bc] sm:$0xf]
        %v1226 = vld [vmem:[#allocation5 + $0x8c0] sm:$0xf]
        %v1227 = vld [vmem:[#allocation5 + $0x8c4] sm:$0xf]
        %v1228 = vld [vmem:[#allocation5 + $0x8c8] sm:$0xf]
        %v1229 = vld [vmem:[#allocation5 + $0x8cc] sm:$0xf]
        %v1230 = vld [vmem:[#allocation5 + $0x8d0] sm:$0xf]
        %v1231 = vld [vmem:[#allocation5 + $0x8d4] sm:$0xf]
        %v1232 = vld [vmem:[#allocation5 + $0x8d8] sm:$0xf]
        %v1233 = vld [vmem:[#allocation5 + $0x8dc] sm:$0xf]
        %v1234 = vld [vmem:[#allocation5 + $0x8e0] sm:$0xf]
        %v1235 = vld [vmem:[#allocation5 + $0x8e4] sm:$0xf]
        %v1236 = vld [vmem:[#allocation5 + $0x8e8] sm:$0xf]
        %v1237 = vld [vmem:[#allocation5 + $0x8ec] sm:$0xf]
        %v1238 = vld [vmem:[#allocation5 + $0x8f0] sm:$0xf]
        %v1239 = vld [vmem:[#allocation5 + $0x8f4] sm:$0xf]
        %v1240 = vld [vmem:[#allocation5 + $0x8f8] sm:$0xf]
        %v1241 = vld [vmem:[#allocation5 + $0x8fc] sm:$0xf]
        %v1242 = vld [vmem:[#allocation5 + $0x900] sm:$0xf]
        %v1243 = vld [vmem:[#allocation5 + $0x904] sm:$0xf]
        %v1244 = vld [vmem:[#allocation5 + $0x908] sm:$0xf]
        %v1245 = vld [vmem:[#allocation5 + $0x90c] sm:$0xf]
        %v1246 = vld [vmem:[#allocation5 + $0x910] sm:$0xf]
        %v1247 = vld [vmem:[#allocation5 + $0x914] sm:$0xf]
        %v1248 = vld [vmem:[#allocation5 + $0x918] sm:$0xf]
        %v1249 = vld [vmem:[#allocation5 + $0x91c] sm:$0xf]
        %v1250 = vld [vmem:[#allocation5 + $0x920] sm:$0xf]
        %v1251 = vld [vmem:[#allocation5 + $0x924] sm:$0xf]
        %v1252 = vld [vmem:[#allocation5 + $0x928] sm:$0xf]
        %v1253 = vld [vmem:[#allocation5 + $0x92c] sm:$0xf]
        %v1254 = vld [vmem:[#allocation5 + $0x930] sm:$0xf]
        %v1255 = vld [vmem:[#allocation5 + $0x934] sm:$0xf]
        %v1256 = vld [vmem:[#allocation5 + $0x938] sm:$0xf]
        %v1257 = vld [vmem:[#allocation5 + $0x93c] sm:$0xf]
        %v1258 = vld [vmem:[#allocation5 + $0x940] sm:$0xf]
        %v1259 = vld [vmem:[#allocation5 + $0x944] sm:$0xf]
        %v1260 = vld [vmem:[#allocation5 + $0x948] sm:$0xf]
        %v1261 = vld [vmem:[#allocation5 + $0x94c] sm:$0xf]
        %v1262 = vld [vmem:[#allocation5 + $0x950] sm:$0xf]
        %v1263 = vld [vmem:[#allocation5 + $0x954] sm:$0xf]
        %v1264 = vld [vmem:[#allocation5 + $0x958] sm:$0xf]
        %v1265 = vld [vmem:[#allocation5 + $0x95c] sm:$0xf]
        %v1266 = vld [vmem:[#allocation5 + $0x960] sm:$0xf]
        %v1267 = vld [vmem:[#allocation5 + $0x964] sm:$0xf]
        %v1268 = vld [vmem:[#allocation5 + $0x968] sm:$0xf]
        %v1269 = vld [vmem:[#allocation5 + $0x96c] sm:$0xf]
        %v1270 = vld [vmem:[#allocation5 + $0x970] sm:$0xf]
        %v1271 = vld [vmem:[#allocation5 + $0x974] sm:$0xf]
        %v1272 = vld [vmem:[#allocation5 + $0x978] sm:$0xf]
        %v1273 = vld [vmem:[#allocation5 + $0x97c] sm:$0xf]
        %v1274 = vld [vmem:[#allocation5 + $0x980] sm:$0xf]
        %v1275 = vld [vmem:[#allocation5 + $0x984] sm:$0xf]
        %v1276 = vld [vmem:[#allocation5 + $0x988] sm:$0xf]
        %v1277 = vld [vmem:[#allocation5 + $0x98c] sm:$0xf]
        %v1278 = vld [vmem:[#allocation5 + $0x990] sm:$0xf]
        %v1279 = vld [vmem:[#allocation5 + $0x994] sm:$0xf]
        %v1280 = vld [vmem:[#allocation5 + $0x998] sm:$0xf]
        %v1281 = vld [vmem:[#allocation5 + $0x99c] sm:$0xf]
        %v1282 = vld [vmem:[#allocation5 + $0x9a0] sm:$0xf]
        %v1283 = vld [vmem:[#allocation5 + $0x9a4] sm:$0xf]
        %v1284 = vld [vmem:[#allocation5 + $0x9a8] sm:$0xf]
        %v1285 = vld [vmem:[#allocation5 + $0x9ac] sm:$0xf]
        %v1286 = vld [vmem:[#allocation5 + $0x9b0] sm:$0xf]
        %v1287 = vld [vmem:[#allocation5 + $0x9b4] sm:$0xf]
        %v1288 = vld [vmem:[#allocation5 + $0x9b8] sm:$0xf]
        %v1289 = vld [vmem:[#allocation5 + $0x9bc] sm:$0xf]
        %v1290 = vld [vmem:[#allocation5 + $0x9c0] sm:$0xf]
        %v1291 = vld [vmem:[#allocation5 + $0x9c4] sm:$0xf]
        %v1292 = vld [vmem:[#allocation5 + $0x9c8] sm:$0xf]
        %v1293 = vld [vmem:[#allocation5 + $0x9cc] sm:$0xf]
        %v1294 = vld [vmem:[#allocation5 + $0x9d0] sm:$0xf]
        %v1295 = vld [vmem:[#allocation5 + $0x9d4] sm:$0xf]
        %v1296 = vld [vmem:[#allocation5 + $0x9d8] sm:$0xf]
        %v1297 = vld [vmem:[#allocation5 + $0x9dc] sm:$0xf]
        %v1298 = vld [vmem:[#allocation5 + $0x9e0] sm:$0xf]
        %v1299 = vld [vmem:[#allocation5 + $0x9e4] sm:$0xf]
        %v1300 = vld [vmem:[#allocation5 + $0x9e8] sm:$0xf]
        %v1301 = vld [vmem:[#allocation5 + $0x9ec] sm:$0xf]
        %v1302 = vld [vmem:[#allocation5 + $0x9f0] sm:$0xf]
        %v1303 = vld [vmem:[#allocation5 + $0x9f4] sm:$0xf]
        %v1304 = vld [vmem:[#allocation5 + $0x9f8] sm:$0xf]
        %v1305 = vld [vmem:[#allocation5 + $0x9fc] sm:$0xf]
        %v1306 = vld [vmem:[#allocation5 + $0xa00] sm:$0xf]
        %v1307 = vld [vmem:[#allocation5 + $0xa04] sm:$0xf]
        %v1308 = vld [vmem:[#allocation5 + $0xa08] sm:$0xf]
        %v1309 = vld [vmem:[#allocation5 + $0xa0c] sm:$0xf]
        %v1310 = vld [vmem:[#allocation5 + $0xa10] sm:$0xf]
        %v1311 = vld [vmem:[#allocation5 + $0xa14] sm:$0xf]
        %v1312 = vld [vmem:[#allocation5 + $0xa18] sm:$0xf]
        %v1313 = vld [vmem:[#allocation5 + $0xa1c] sm:$0xf]
        %v1314 = vld [vmem:[#allocation5 + $0xa20] sm:$0xf]
        %v1315 = vld [vmem:[#allocation5 + $0xa24] sm:$0xf]
        %v1316 = vld [vmem:[#allocation5 + $0xa28] sm:$0xf]
        %v1317 = vld [vmem:[#allocation5 + $0xa2c] sm:$0xf]
        %v1318 = vld [vmem:[#allocation5 + $0xa30] sm:$0xf]
        %v1319 = vld [vmem:[#allocation5 + $0xa34] sm:$0xf]
        %v1320 = vld [vmem:[#allocation5 + $0xa38] sm:$0xf]
        %v1321 = vld [vmem:[#allocation5 + $0xa3c] sm:$0xf]
        %v1322 = vld [vmem:[#allocation5 + $0xa40] sm:$0xf]
        %v1323 = vld [vmem:[#allocation5 + $0xa44] sm:$0xf]
        %v1324 = vld [vmem:[#allocation5 + $0xa48] sm:$0xf]
        %v1325 = vld [vmem:[#allocation5 + $0xa4c] sm:$0xf]
        %v1326 = vld [vmem:[#allocation5 + $0xa50] sm:$0xf]
        %v1327 = vld [vmem:[#allocation5 + $0xa54] sm:$0xf]
        %v1328 = vld [vmem:[#allocation5 + $0xa58] sm:$0xf]
        %v1329 = vld [vmem:[#allocation5 + $0xa5c] sm:$0xf]
        %v1330 = vld [vmem:[#allocation5 + $0xa60] sm:$0xf]
        %v1331 = vld [vmem:[#allocation5 + $0xa64] sm:$0xf]
        %v1332 = vld [vmem:[#allocation5 + $0xa68] sm:$0xf]
        %v1333 = vld [vmem:[#allocation5 + $0xa6c] sm:$0xf]
        %v1334 = vld [vmem:[#allocation5 + $0xa70] sm:$0xf]
        %v1335 = vld [vmem:[#allocation5 + $0xa74] sm:$0xf]
        %v1336 = vld [vmem:[#allocation5 + $0xa78] sm:$0xf]
        %v1337 = vld [vmem:[#allocation5 + $0xa7c] sm:$0xf]
        %v1338 = vld [vmem:[#allocation5 + $0xa80] sm:$0xf]
        %v1339 = vld [vmem:[#allocation5 + $0xa84] sm:$0xf]
        %v1340 = vld [vmem:[#allocation5 + $0xa88] sm:$0xf]
        %v1341 = vld [vmem:[#allocation5 + $0xa8c] sm:$0xf]
        %v1342 = vld [vmem:[#allocation5 + $0xa90] sm:$0xf]
        %v1343 = vld [vmem:[#allocation5 + $0xa94] sm:$0xf]
        %v1344 = vld [vmem:[#allocation5 + $0xa98] sm:$0xf]
        %v1345 = vld [vmem:[#allocation5 + $0xa9c] sm:$0xf]
        %v1346 = vld [vmem:[#allocation5 + $0xaa0] sm:$0xf]
        %v1347 = vld [vmem:[#allocation5 + $0xaa4] sm:$0xf]
        %v1348 = vld [vmem:[#allocation5 + $0xaa8] sm:$0xf]
        %v1349 = vld [vmem:[#allocation5 + $0xaac] sm:$0xf]
        %v1350 = vld [vmem:[#allocation5 + $0xab0] sm:$0xf]
        %v1351 = vld [vmem:[#allocation5 + $0xab4] sm:$0xf]
        %v1352 = vld [vmem:[#allocation5 + $0xab8] sm:$0xf]
        %v1353 = vld [vmem:[#allocation5 + $0xabc] sm:$0xf]
        %v1354 = vld [vmem:[#allocation5 + $0xac0] sm:$0xf]
        %v1355 = vld [vmem:[#allocation5 + $0xac4] sm:$0xf]
        %v1356 = vld [vmem:[#allocation5 + $0xac8] sm:$0xf]
        %v1357 = vld [vmem:[#allocation5 + $0xacc] sm:$0xf]
        %v1358 = vld [vmem:[#allocation5 + $0xad0] sm:$0xf]
        %v1359 = vld [vmem:[#allocation5 + $0xad4] sm:$0xf]
        %v1360 = vld [vmem:[#allocation5 + $0xad8] sm:$0xf]
        %v1361 = vld [vmem:[#allocation5 + $0xadc] sm:$0xf]
        %v1362 = vld [vmem:[#allocation5 + $0xae0] sm:$0xf]
        %v1363 = vld [vmem:[#allocation5 + $0xae4] sm:$0xf]
        %v1364 = vld [vmem:[#allocation5 + $0xae8] sm:$0xf]
        %v1365 = vld [vmem:[#allocation5 + $0xaec] sm:$0xf]
        %v1366 = vld [vmem:[#allocation5 + $0xaf0] sm:$0xf]
        %v1367 = vld [vmem:[#allocation5 + $0xaf4] sm:$0xf]
        %v1368 = vld [vmem:[#allocation5 + $0xaf8] sm:$0xf]
        %v1369 = vld [vmem:[#allocation5 + $0xafc] sm:$0xf]
        %v1370 = vld [vmem:[#allocation5 + $0xb00] sm:$0xf]
        %v1371 = vld [vmem:[#allocation5 + $0xb04] sm:$0xf]
        %v1372 = vld [vmem:[#allocation5 + $0xb08] sm:$0xf]
        %v1373 = vld [vmem:[#allocation5 + $0xb0c] sm:$0xf]
        %v1374 = vld [vmem:[#allocation5 + $0xb10] sm:$0xf]
        %v1375 = vld [vmem:[#allocation5 + $0xb14] sm:$0xf]
        %v1376 = vld [vmem:[#allocation5 + $0xb18] sm:$0xf]
        %v1377 = vld [vmem:[#allocation5 + $0xb1c] sm:$0xf]
        %v1378 = vld [vmem:[#allocation5 + $0xb20] sm:$0xf]
        %v1379 = vld [vmem:[#allocation5 + $0xb24] sm:$0xf]
        %v1380 = vld [vmem:[#allocation5 + $0xb28] sm:$0xf]
        %v1381 = vld [vmem:[#allocation5 + $0xb2c] sm:$0xf]
        %v1382 = vld [vmem:[#allocation5 + $0xb30] sm:$0xf]
        %v1383 = vld [vmem:[#allocation5 + $0xb34] sm:$0xf]
        %v1384 = vld [vmem:[#allocation5 + $0xb38] sm:$0xf]
        %v1385 = vld [vmem:[#allocation5 + $0xb3c] sm:$0xf]
        %v1386 = vld [vmem:[#allocation5 + $0xb40] sm:$0xf]
        %v1387 = vld [vmem:[#allocation5 + $0xb44] sm:$0xf]
        %v1388 = vld [vmem:[#allocation5 + $0xb48] sm:$0xf]
        %v1389 = vld [vmem:[#allocation5 + $0xb4c] sm:$0xf]
        %v1390 = vld [vmem:[#allocation5 + $0xb50] sm:$0xf]
        %v1391 = vld [vmem:[#allocation5 + $0xb54] sm:$0xf]
        %v1392 = vld [vmem:[#allocation5 + $0xb58] sm:$0xf]
        %v1393 = vld [vmem:[#allocation5 + $0xb5c] sm:$0xf]
        %v1394 = vld [vmem:[#allocation5 + $0xb60] sm:$0xf]
        %v1395 = vld [vmem:[#allocation5 + $0xb64] sm:$0xf]
        %v1396 = vld [vmem:[#allocation5 + $0xb68] sm:$0xf]
        %v1397 = vld [vmem:[#allocation5 + $0xb6c] sm:$0xf]
        %v1398 = vld [vmem:[#allocation5 + $0xb70] sm:$0xf]
        %v1399 = vld [vmem:[#allocation5 + $0xb74] sm:$0xf]
        %v1400 = vld [vmem:[#allocation5 + $0xb78] sm:$0xf]
        %v1401 = vld [vmem:[#allocation5 + $0xb7c] sm:$0xf]
        %v1402 = vld [vmem:[#allocation5 + $0xb80] sm:$0xf]
        %v1403 = vld [vmem:[#allocation5 + $0xb84] sm:$0xf]
        %v1404 = vld [vmem:[#allocation5 + $0xb88] sm:$0xf]
        %v1405 = vld [vmem:[#allocation5 + $0xb8c] sm:$0xf]
        %v1406 = vld [vmem:[#allocation5 + $0xb90] sm:$0xf]
        %v1407 = vld [vmem:[#allocation5 + $0xb94] sm:$0xf]
        %v1408 = vld [vmem:[#allocation5 + $0xb98] sm:$0xf]
        %v1409 = vld [vmem:[#allocation5 + $0xb9c] sm:$0xf]
        %v1410 = vld [vmem:[#allocation5 + $0xba0] sm:$0xf]
        %v1411 = vld [vmem:[#allocation5 + $0xba4] sm:$0xf]
        %v1412 = vld [vmem:[#allocation5 + $0xba8] sm:$0xf]
        %v1413 = vld [vmem:[#allocation5 + $0xbac] sm:$0xf]
        %v1414 = vld [vmem:[#allocation5 + $0xbb0] sm:$0xf]
        %v1415 = vld [vmem:[#allocation5 + $0xbb4] sm:$0xf]
        %v1416 = vld [vmem:[#allocation5 + $0xbb8] sm:$0xf]
        %v1417 = vld [vmem:[#allocation5 + $0xbbc] sm:$0xf]
        %v1418 = vld [vmem:[#allocation5 + $0xbc0] sm:$0xf]
        %v1419 = vld [vmem:[#allocation5 + $0xbc4] sm:$0xf]
        %v1420 = vld [vmem:[#allocation5 + $0xbc8] sm:$0xf]
        %v1421 = vld [vmem:[#allocation5 + $0xbcc] sm:$0xf]
        %v1422 = vld [vmem:[#allocation5 + $0xbd0] sm:$0xf]
        %v1423 = vld [vmem:[#allocation5 + $0xbd4] sm:$0xf]
        %v1424 = vld [vmem:[#allocation5 + $0xbd8] sm:$0xf]
        %v1425 = vld [vmem:[#allocation5 + $0xbdc] sm:$0xf]
        %v1426 = vld [vmem:[#allocation5 + $0xbe0] sm:$0xf]
        %v1427 = vld [vmem:[#allocation5 + $0xbe4] sm:$0xf]
        %v1428 = vld [vmem:[#allocation5 + $0xbe8] sm:$0xf]
        %v1429 = vld [vmem:[#allocation5 + $0xbec] sm:$0xf]
        %v1430 = vld [vmem:[#allocation5 + $0xbf0] sm:$0xf]
        %v1431 = vld [vmem:[#allocation5 + $0xbf4] sm:$0xf]
        %v1432 = vld [vmem:[#allocation5 + $0xbf8] sm:$0xf]
        %v1433 = vld [vmem:[#allocation5 + $0xbfc] sm:$0xf]
        %v1434 = vld [vmem:[#allocation5 + $0xc00] sm:$0xf]
        %v1435 = vld [vmem:[#allocation5 + $0xc04] sm:$0xf]
        %v1436 = vld [vmem:[#allocation5 + $0xc08] sm:$0xf]
        %v1437 = vld [vmem:[#allocation5 + $0xc0c] sm:$0xf]
        %v1438 = vld [vmem:[#allocation5 + $0xc10] sm:$0xf]
        %v1439 = vld [vmem:[#allocation5 + $0xc14] sm:$0xf]
        %v1440 = vld [vmem:[#allocation5 + $0xc18] sm:$0xf]
        %v1441 = vld [vmem:[#allocation5 + $0xc1c] sm:$0xf]
        %v1442 = vld [vmem:[#allocation5 + $0xc20] sm:$0xf]
        %v1443 = vld [vmem:[#allocation5 + $0xc24] sm:$0xf]
        %v1444 = vld [vmem:[#allocation5 + $0xc28] sm:$0xf]
        %v1445 = vld [vmem:[#allocation5 + $0xc2c] sm:$0xf]
        %v1446 = vld [vmem:[#allocation5 + $0xc30] sm:$0xf]
        %v1447 = vld [vmem:[#allocation5 + $0xc34] sm:$0xf]
        %v1448 = vld [vmem:[#allocation5 + $0xc38] sm:$0xf]
        %v1449 = vld [vmem:[#allocation5 + $0xc3c] sm:$0xf]
        %v1450 = vld [vmem:[#allocation5 + $0xc40] sm:$0xf]
        %v1451 = vld [vmem:[#allocation5 + $0xc44] sm:$0xf]
        %v1452 = vld [vmem:[#allocation5 + $0xc48] sm:$0xf]
        %v1453 = vld [vmem:[#allocation5 + $0xc4c] sm:$0xf]
        %v1454 = vld [vmem:[#allocation5 + $0xc50] sm:$0xf]
        %v1455 = vld [vmem:[#allocation5 + $0xc54] sm:$0xf]
        %v1456 = vld [vmem:[#allocation5 + $0xc58] sm:$0xf]
        %v1457 = vld [vmem:[#allocation5 + $0xc5c] sm:$0xf]
        %v1458 = vld [vmem:[#allocation5 + $0xc60] sm:$0xf]
        %v1459 = vld [vmem:[#allocation5 + $0xc64] sm:$0xf]
        %v1460 = vld [vmem:[#allocation5 + $0xc68] sm:$0xf]
        %v1461 = vld [vmem:[#allocation5 + $0xc6c] sm:$0xf]
        %v1462 = vld [vmem:[#allocation5 + $0xc70] sm:$0xf]
        %v1463 = vld [vmem:[#allocation5 + $0xc74] sm:$0xf]
        %v1464 = vld [vmem:[#allocation5 + $0xc78] sm:$0xf]
        %v1465 = vld [vmem:[#allocation5 + $0xc7c] sm:$0xf]
        %v1466 = vld [vmem:[#allocation5 + $0xc80] sm:$0xf]
        %v1467 = vld [vmem:[#allocation5 + $0xc84] sm:$0xf]
        %v1468 = vld [vmem:[#allocation5 + $0xc88] sm:$0xf]
        %v1469 = vld [vmem:[#allocation5 + $0xc8c] sm:$0xf]
        %v1470 = vld [vmem:[#allocation5 + $0xc90] sm:$0xf]
        %v1471 = vld [vmem:[#allocation5 + $0xc94] sm:$0xf]
        %v1472 = vld [vmem:[#allocation5 + $0xc98] sm:$0xf]
        %v1473 = vld [vmem:[#allocation5 + $0xc9c] sm:$0xf]
        %v1474 = vld [vmem:[#allocation5 + $0xca0] sm:$0xf]
        %v1475 = vld [vmem:[#allocation5 + $0xca4] sm:$0xf]
        %v1476 = vld [vmem:[#allocation5 + $0xca8] sm:$0xf]
        %v1477 = vld [vmem:[#allocation5 + $0xcac] sm:$0xf]
        %v1478 = vld [vmem:[#allocation5 + $0xcb0] sm:$0xf]
        %v1479 = vld [vmem:[#allocation5 + $0xcb4] sm:$0xf]
        %v1480 = vld [vmem:[#allocation5 + $0xcb8] sm:$0xf]
        %v1481 = vld [vmem:[#allocation5 + $0xcbc] sm:$0xf]
        %v1482 = vld [vmem:[#allocation5 + $0xcc0] sm:$0xf]
        %v1483 = vld [vmem:[#allocation5 + $0xcc4] sm:$0xf]
        %v1484 = vld [vmem:[#allocation5 + $0xcc8] sm:$0xf]
        %v1485 = vld [vmem:[#allocation5 + $0xccc] sm:$0xf]
        %v1486 = vld [vmem:[#allocation5 + $0xcd0] sm:$0xf]
        %v1487 = vld [vmem:[#allocation5 + $0xcd4] sm:$0xf]
        %v1488 = vld [vmem:[#allocation5 + $0xcd8] sm:$0xf]
        %v1489 = vld [vmem:[#allocation5 + $0xcdc] sm:$0xf]
        %v1490 = vld [vmem:[#allocation5 + $0xce0] sm:$0xf]
        %v1491 = vld [vmem:[#allocation5 + $0xce4] sm:$0xf]
        %v1492 = vld [vmem:[#allocation5 + $0xce8] sm:$0xf]
        %v1493 = vld [vmem:[#allocation5 + $0xcec] sm:$0xf]
        %v1494 = vld [vmem:[#allocation5 + $0xcf0] sm:$0xf]
        %v1495 = vld [vmem:[#allocation5 + $0xcf4] sm:$0xf]
        %v1496 = vld [vmem:[#allocation5 + $0xcf8] sm:$0xf]
        %v1497 = vld [vmem:[#allocation5 + $0xcfc] sm:$0xf]
        %v1498 = vld [vmem:[#allocation5 + $0xd00] sm:$0xf]
        %v1499 = vld [vmem:[#allocation5 + $0xd04] sm:$0xf]
        %v1500 = vld [vmem:[#allocation5 + $0xd08] sm:$0xf]
        %v1501 = vld [vmem:[#allocation5 + $0xd0c] sm:$0xf]
        %v1502 = vld [vmem:[#allocation5 + $0xd10] sm:$0xf]
        %v1503 = vld [vmem:[#allocation5 + $0xd14] sm:$0xf]
        %v1504 = vld [vmem:[#allocation5 + $0xd18] sm:$0xf]
        %v1505 = vld [vmem:[#allocation5 + $0xd1c] sm:$0xf]
        %v1506 = vld [vmem:[#allocation5 + $0xd20] sm:$0xf]
        %v1507 = vld [vmem:[#allocation5 + $0xd24] sm:$0xf]
        %v1508 = vld [vmem:[#allocation5 + $0xd28] sm:$0xf]
        %v1509 = vld [vmem:[#allocation5 + $0xd2c] sm:$0xf]
        %v1510 = vld [vmem:[#allocation5 + $0xd30] sm:$0xf]
        %v1511 = vld [vmem:[#allocation5 + $0xd34] sm:$0xf]
        %v1512 = vld [vmem:[#allocation5 + $0xd38] sm:$0xf]
        %v1513 = vld [vmem:[#allocation5 + $0xd3c] sm:$0xf]
        %v1514 = vld [vmem:[#allocation5 + $0xd40] sm:$0xf]
        %v1515 = vld [vmem:[#allocation5 + $0xd44] sm:$0xf]
        %v1516 = vld [vmem:[#allocation5 + $0xd48] sm:$0xf]
        %v1517 = vld [vmem:[#allocation5 + $0xd4c] sm:$0xf]
        %v1518 = vld [vmem:[#allocation5 + $0xd50] sm:$0xf]
        %v1519 = vld [vmem:[#allocation5 + $0xd54] sm:$0xf]
        %v1520 = vld [vmem:[#allocation5 + $0xd58] sm:$0xf]
        %v1521 = vld [vmem:[#allocation5 + $0xd5c] sm:$0xf]
        %v1522 = vld [vmem:[#allocation5 + $0xd60] sm:$0xf]
        %v1523 = vld [vmem:[#allocation5 + $0xd64] sm:$0xf]
        %v1524 = vld [vmem:[#allocation5 + $0xd68] sm:$0xf]
        %v1525 = vld [vmem:[#allocation5 + $0xd6c] sm:$0xf]
        %v1526 = vld [vmem:[#allocation5 + $0xd70] sm:$0xf]
        %v1527 = vld [vmem:[#allocation5 + $0xd74] sm:$0xf]
        %v1528 = vld [vmem:[#allocation5 + $0xd78] sm:$0xf]
        %v1529 = vld [vmem:[#allocation5 + $0xd7c] sm:$0xf]
        %v1530 = vld [vmem:[#allocation5 + $0xd80] sm:$0xf]
        %v1531 = vld [vmem:[#allocation5 + $0xd84] sm:$0xf]
        %v1532 = vld [vmem:[#allocation5 + $0xd88] sm:$0xf]
        %v1533 = vld [vmem:[#allocation5 + $0xd8c] sm:$0xf]
        %v1534 = vld [vmem:[#allocation5 + $0xd90] sm:$0xf]
        %v1535 = vld [vmem:[#allocation5 + $0xd94] sm:$0xf]
        %v1536 = vld [vmem:[#allocation5 + $0xd98] sm:$0xf]
        %v1537 = vld [vmem:[#allocation5 + $0xd9c] sm:$0xf]
        %v1538 = vld [vmem:[#allocation5 + $0xda0] sm:$0xf]
        %v1539 = vld [vmem:[#allocation5 + $0xda4] sm:$0xf]
        %v1540 = vld [vmem:[#allocation5 + $0xda8] sm:$0xf]
        %v1541 = vld [vmem:[#allocation5 + $0xdac] sm:$0xf]
        %v1542 = vld [vmem:[#allocation5 + $0xdb0] sm:$0xf]
        %v1543 = vld [vmem:[#allocation5 + $0xdb4] sm:$0xf]
        %v1544 = vld [vmem:[#allocation5 + $0xdb8] sm:$0xf]
        %v1545 = vld [vmem:[#allocation5 + $0xdbc] sm:$0xf]
        %v1546 = vld [vmem:[#allocation5 + $0xdc0] sm:$0xf]
        %v1547 = vld [vmem:[#allocation5 + $0xdc4] sm:$0xf]
        %v1548 = vld [vmem:[#allocation5 + $0xdc8] sm:$0xf]
        %v1549 = vld [vmem:[#allocation5 + $0xdcc] sm:$0xf]
        %v1550 = vld [vmem:[#allocation5 + $0xdd0] sm:$0xf]
        %v1551 = vld [vmem:[#allocation5 + $0xdd4] sm:$0xf]
        %v1552 = vld [vmem:[#allocation5 + $0xdd8] sm:$0xf]
        %v1553 = vld [vmem:[#allocation5 + $0xddc] sm:$0xf]
        %v1554 = vld [vmem:[#allocation5 + $0xde0] sm:$0xf]
        %v1555 = vld [vmem:[#allocation5 + $0xde4] sm:$0xf]
        %v1556 = vld [vmem:[#allocation5 + $0xde8] sm:$0xf]
        %v1557 = vld [vmem:[#allocation5 + $0xdec] sm:$0xf]
        %v1558 = vld [vmem:[#allocation5 + $0xdf0] sm:$0xf]
        %v1559 = vld [vmem:[#allocation5 + $0xdf4] sm:$0xf]
        %v1560 = vld [vmem:[#allocation5 + $0xdf8] sm:$0xf]
        %v1561 = vld [vmem:[#allocation5 + $0xdfc] sm:$0xf]
        %v1562 = vld [vmem:[#allocation5 + $0xe00] sm:$0xf]
        %v1563 = vld [vmem:[#allocation5 + $0xe04] sm:$0xf]
        %v1564 = vld [vmem:[#allocation5 + $0xe08] sm:$0xf]
        %v1565 = vld [vmem:[#allocation5 + $0xe0c] sm:$0xf]
        %v1566 = vld [vmem:[#allocation5 + $0xe10] sm:$0xf]
        %v1567 = vld [vmem:[#allocation5 + $0xe14] sm:$0xf]
        %v1568 = vld [vmem:[#allocation5 + $0xe18] sm:$0xf]
        %v1569 = vld [vmem:[#allocation5 + $0xe1c] sm:$0xf]
        %v1570 = vld [vmem:[#allocation5 + $0xe20] sm:$0xf]
        %v1571 = vld [vmem:[#allocation5 + $0xe24] sm:$0xf]
        %v1572 = vld [vmem:[#allocation5 + $0xe28] sm:$0xf]
        %v1573 = vld [vmem:[#allocation5 + $0xe2c] sm:$0xf]
        %v1574 = vld [vmem:[#allocation5 + $0xe30] sm:$0xf]
        %v1575 = vld [vmem:[#allocation5 + $0xe34] sm:$0xf]
        %v1576 = vld [vmem:[#allocation5 + $0xe38] sm:$0xf]
        %v1577 = vld [vmem:[#allocation5 + $0xe3c] sm:$0xf]
        %v1578 = vld [vmem:[#allocation5 + $0xe40] sm:$0xf]
        %v1579 = vld [vmem:[#allocation5 + $0xe44] sm:$0xf]
        %v1580 = vld [vmem:[#allocation5 + $0xe48] sm:$0xf]
        %v1581 = vld [vmem:[#allocation5 + $0xe4c] sm:$0xf]
        %v1582 = vld [vmem:[#allocation5 + $0xe50] sm:$0xf]
        %v1583 = vld [vmem:[#allocation5 + $0xe54] sm:$0xf]
        %v1584 = vld [vmem:[#allocation5 + $0xe58] sm:$0xf]
        %v1585 = vld [vmem:[#allocation5 + $0xe5c] sm:$0xf]
        %v1586 = vld [vmem:[#allocation5 + $0xe60] sm:$0xf]
        %v1587 = vld [vmem:[#allocation5 + $0xe64] sm:$0xf]
        %v1588 = vld [vmem:[#allocation5 + $0xe68] sm:$0xf]
        %v1589 = vld [vmem:[#allocation5 + $0xe6c] sm:$0xf]
        %v1590 = vld [vmem:[#allocation5 + $0xe70] sm:$0xf]
        %v1591 = vld [vmem:[#allocation5 + $0xe74] sm:$0xf]
        %v1592 = vld [vmem:[#allocation5 + $0xe78] sm:$0xf]
        %v1593 = vld [vmem:[#allocation5 + $0xe7c] sm:$0xf]
        %v1594 = vld [vmem:[#allocation5 + $0xe80] sm:$0xf]
        %v1595 = vld [vmem:[#allocation5 + $0xe84] sm:$0xf]
        %v1596 = vld [vmem:[#allocation5 + $0xe88] sm:$0xf]
        %v1597 = vld [vmem:[#allocation5 + $0xe8c] sm:$0xf]
        %v1598 = vld [vmem:[#allocation5 + $0xe90] sm:$0xf]
        %v1599 = vld [vmem:[#allocation5 + $0xe94] sm:$0xf]
        %v1600 = vld [vmem:[#allocation5 + $0xe98] sm:$0xf]
        %v1601 = vld [vmem:[#allocation5 + $0xe9c] sm:$0xf]
        %v1602 = vld [vmem:[#allocation5 + $0xea0] sm:$0xf]
        %v1603 = vld [vmem:[#allocation5 + $0xea4] sm:$0xf]
        %v1604 = vld [vmem:[#allocation5 + $0xea8] sm:$0xf]
        %v1605 = vld [vmem:[#allocation5 + $0xeac] sm:$0xf]
        %v1606 = vld [vmem:[#allocation5 + $0xeb0] sm:$0xf]
        %v1607 = vld [vmem:[#allocation5 + $0xeb4] sm:$0xf]
        %v1608 = vld [vmem:[#allocation5 + $0xeb8] sm:$0xf]
        %v1609 = vld [vmem:[#allocation5 + $0xebc] sm:$0xf]
        %v1610 = vld [vmem:[#allocation5 + $0xec0] sm:$0xf]
        %v1611 = vld [vmem:[#allocation5 + $0xec4] sm:$0xf]
        %v1612 = vld [vmem:[#allocation5 + $0xec8] sm:$0xf]
        %v1613 = vld [vmem:[#allocation5 + $0xecc] sm:$0xf]
        %v1614 = vld [vmem:[#allocation5 + $0xed0] sm:$0xf]
        %v1615 = vld [vmem:[#allocation5 + $0xed4] sm:$0xf]
        %v1616 = vld [vmem:[#allocation5 + $0xed8] sm:$0xf]
        %v1617 = vld [vmem:[#allocation5 + $0xedc] sm:$0xf]
        %v1618 = vld [vmem:[#allocation5 + $0xee0] sm:$0xf]
        %v1619 = vld [vmem:[#allocation5 + $0xee4] sm:$0xf]
        %v1620 = vld [vmem:[#allocation5 + $0xee8] sm:$0xf]
        %v1621 = vld [vmem:[#allocation5 + $0xeec] sm:$0xf]
        %v1622 = vld [vmem:[#allocation5 + $0xef0] sm:$0xf]
        %v1623 = vld [vmem:[#allocation5 + $0xef4] sm:$0xf]
        %v1624 = vld [vmem:[#allocation5 + $0xef8] sm:$0xf]
        %v1625 = vld [vmem:[#allocation5 + $0xefc] sm:$0xf]
        %v1626 = vld [vmem:[#allocation5 + $0xf00] sm:$0xf]
        %v1627 = vld [vmem:[#allocation5 + $0xf04] sm:$0xf]
        %v1628 = vld [vmem:[#allocation5 + $0xf08] sm:$0xf]
        %v1629 = vld [vmem:[#allocation5 + $0xf0c] sm:$0xf]
        %v1630 = vld [vmem:[#allocation5 + $0xf10] sm:$0xf]
        %v1631 = vld [vmem:[#allocation5 + $0xf14] sm:$0xf]
        %v1632 = vld [vmem:[#allocation5 + $0xf18] sm:$0xf]
        %v1633 = vld [vmem:[#allocation5 + $0xf1c] sm:$0xf]
        %v1634 = vld [vmem:[#allocation5 + $0xf20] sm:$0xf]
        %v1635 = vld [vmem:[#allocation5 + $0xf24] sm:$0xf]
        %v1636 = vld [vmem:[#allocation5 + $0xf28] sm:$0xf]
        %v1637 = vld [vmem:[#allocation5 + $0xf2c] sm:$0xf]
        %v1638 = vld [vmem:[#allocation5 + $0xf30] sm:$0xf]
        %v1639 = vld [vmem:[#allocation5 + $0xf34] sm:$0xf]
        %v1640 = vld [vmem:[#allocation5 + $0xf38] sm:$0xf]
        %v1641 = vld [vmem:[#allocation5 + $0xf3c] sm:$0xf]
        %v1642 = vld [vmem:[#allocation5 + $0xf40] sm:$0xf]
        %v1643 = vld [vmem:[#allocation5 + $0xf44] sm:$0xf]
        %v1644 = vld [vmem:[#allocation5 + $0xf48] sm:$0xf]
        %v1645 = vld [vmem:[#allocation5 + $0xf4c] sm:$0xf]
        %v1646 = vld [vmem:[#allocation5 + $0xf50] sm:$0xf]
        %v1647 = vld [vmem:[#allocation5 + $0xf54] sm:$0xf]
        %v1648 = vld [vmem:[#allocation5 + $0xf58] sm:$0xf]
        %v1649 = vld [vmem:[#allocation5 + $0xf5c] sm:$0xf]
        %v1650 = vld [vmem:[#allocation5 + $0xf60] sm:$0xf]
        %v1651 = vld [vmem:[#allocation5 + $0xf64] sm:$0xf]
        %v1652 = vld [vmem:[#allocation5 + $0xf68] sm:$0xf]
        %v1653 = vld [vmem:[#allocation5 + $0xf6c] sm:$0xf]
        %v1654 = vld [vmem:[#allocation5 + $0xf70] sm:$0xf]
        %v1655 = vld [vmem:[#allocation5 + $0xf74] sm:$0xf]
        %v1656 = vld [vmem:[#allocation5 + $0xf78] sm:$0xf]
        %v1657 = vld [vmem:[#allocation5 + $0xf7c] sm:$0xf]
        %v1658 = vld [vmem:[#allocation5 + $0xf80] sm:$0xf]
        %v1659 = vld [vmem:[#allocation5 + $0xf84] sm:$0xf]
        %v1660 = vld [vmem:[#allocation5 + $0xf88] sm:$0xf]
        %v1661 = vld [vmem:[#allocation5 + $0xf8c] sm:$0xf]
        %v1662 = vld [vmem:[#allocation5 + $0xf90] sm:$0xf]
        %v1663 = vld [vmem:[#allocation5 + $0xf94] sm:$0xf]
        %v1664 = vld [vmem:[#allocation5 + $0xf98] sm:$0xf]
        %v1665 = vld [vmem:[#allocation5 + $0xf9c] sm:$0xf]
        %v1666 = vld [vmem:[#allocation5 + $0xfa0] sm:$0xf]
        %v1667 = vld [vmem:[#allocation5 + $0xfa4] sm:$0xf]
        %v1668 = vld [vmem:[#allocation5 + $0xfa8] sm:$0xf]
        %v1669 = vld [vmem:[#allocation5 + $0xfac] sm:$0xf]
        %v1670 = vld [vmem:[#allocation5 + $0xfb0] sm:$0xf]
        %v1671 = vld [vmem:[#allocation5 + $0xfb4] sm:$0xf]
        %v1672 = vld [vmem:[#allocation5 + $0xfb8] sm:$0xf]
        %v1673 = vld [vmem:[#allocation5 + $0xfbc] sm:$0xf]
        %v1674 = vld [vmem:[#allocation5 + $0xfc0] sm:$0xf]
        %v1675 = vld [vmem:[#allocation5 + $0xfc4] sm:$0xf]
        %v1676 = vld [vmem:[#allocation5 + $0xfc8] sm:$0xf]
        %v1677 = vld [vmem:[#allocation5 + $0xfcc] sm:$0xf]
        %v1678 = vld [vmem:[#allocation5 + $0xfd0] sm:$0xf]
        %v1679 = vld [vmem:[#allocation5 + $0xfd4] sm:$0xf]
        %v1680 = vld [vmem:[#allocation5 + $0xfd8] sm:$0xf]
        %v1681 = vld [vmem:[#allocation5 + $0xfdc] sm:$0xf]
        %v1682 = vld [vmem:[#allocation5 + $0xfe0] sm:$0xf]
        %v1683 = vld [vmem:[#allocation5 + $0xfe4] sm:$0xf]
        %v1684 = vld [vmem:[#allocation5 + $0xfe8] sm:$0xf]
        %v1685 = vld [vmem:[#allocation5 + $0xfec] sm:$0xf]
        %v1686 = vld [vmem:[#allocation5 + $0xff0] sm:$0xf]
        %v1687 = vld [vmem:[#allocation5 + $0xff4] sm:$0xf]
        %v1688 = vld [vmem:[#allocation5 + $0xff8] sm:$0xf]
        %v1689 = vld [vmem:[#allocation5 + $0xffc] sm:$0xf]
        %v1690 = vld [vmem:[#allocation5 + $0x1000] sm:$0xf]
        %v1691 = vld [vmem:[#allocation5 + $0x1004] sm:$0xf]
        %v1692 = vld [vmem:[#allocation5 + $0x1008] sm:$0xf]
        %v1693 = vld [vmem:[#allocation5 + $0x100c] sm:$0xf]
        %v1694 = vld [vmem:[#allocation5 + $0x1010] sm:$0xf]
        %v1695 = vld [vmem:[#allocation5 + $0x1014] sm:$0xf]
        %v1696 = vld [vmem:[#allocation5 + $0x1018] sm:$0xf]
        %v1697 = vld [vmem:[#allocation5 + $0x101c] sm:$0xf]
        %v1698 = vld [vmem:[#allocation5 + $0x1020] sm:$0xf]
        %v1699 = vld [vmem:[#allocation5 + $0x1024] sm:$0xf]
        %v1700 = vld [vmem:[#allocation5 + $0x1028] sm:$0xf]
        %v1701 = vld [vmem:[#allocation5 + $0x102c] sm:$0xf]
        %v1702 = vld [vmem:[#allocation5 + $0x1030] sm:$0xf]
        %v1703 = vld [vmem:[#allocation5 + $0x1034] sm:$0xf]
        %v1704 = vld [vmem:[#allocation5 + $0x1038] sm:$0xf]
        %v1705 = vld [vmem:[#allocation5 + $0x103c] sm:$0xf]
        %v1706 = vld [vmem:[#allocation5 + $0x1040] sm:$0xf]
        %v1707 = vld [vmem:[#allocation5 + $0x1044] sm:$0xf]
        %v1708 = vld [vmem:[#allocation5 + $0x1048] sm:$0xf]
        %v1709 = vld [vmem:[#allocation5 + $0x104c] sm:$0xf]
        %v1710 = vld [vmem:[#allocation5 + $0x1050] sm:$0xf]
        %v1711 = vld [vmem:[#allocation5 + $0x1054] sm:$0xf]
        %v1712 = vld [vmem:[#allocation5 + $0x1058] sm:$0xf]
        %v1713 = vld [vmem:[#allocation5 + $0x105c] sm:$0xf]
        %v1714 = vld [vmem:[#allocation5 + $0x1060] sm:$0xf]
        %v1715 = vld [vmem:[#allocation5 + $0x1064] sm:$0xf]
        %v1716 = vld [vmem:[#allocation5 + $0x1068] sm:$0xf]
        %v1717 = vld [vmem:[#allocation5 + $0x106c] sm:$0xf]
        %v1718 = vld [vmem:[#allocation5 + $0x1070] sm:$0xf]
        %v1719 = vld [vmem:[#allocation5 + $0x1074] sm:$0xf]
        %v1720 = vld [vmem:[#allocation5 + $0x1078] sm:$0xf]
        %v1721 = vld [vmem:[#allocation5 + $0x107c] sm:$0xf]
        %v1722 = vld [vmem:[#allocation5 + $0x1080] sm:$0xf]
        %v1723 = vld [vmem:[#allocation5 + $0x1084] sm:$0xf]
        %v1724 = vld [vmem:[#allocation5 + $0x1088] sm:$0xf]
        %v1725 = vld [vmem:[#allocation5 + $0x108c] sm:$0xf]
        %v1726 = vld [vmem:[#allocation5 + $0x1090] sm:$0xf]
        %v1727 = vld [vmem:[#allocation5 + $0x1094] sm:$0xf]
        %v1728 = vld [vmem:[#allocation5 + $0x1098] sm:$0xf]
        %v1729 = vld [vmem:[#allocation5 + $0x109c] sm:$0xf]
        %v1730 = vld [vmem:[#allocation5 + $0x10a0] sm:$0xf]
        %v1731 = vld [vmem:[#allocation5 + $0x10a4] sm:$0xf]
        %v1732 = vld [vmem:[#allocation5 + $0x10a8] sm:$0xf]
        %v1733 = vld [vmem:[#allocation5 + $0x10ac] sm:$0xf]
        %v1734 = vld [vmem:[#allocation5 + $0x10b0] sm:$0xf]
        %v1735 = vld [vmem:[#allocation5 + $0x10b4] sm:$0xf]
        %v1736 = vld [vmem:[#allocation5 + $0x10b8] sm:$0xf]
        %v1737 = vld [vmem:[#allocation5 + $0x10bc] sm:$0xf]
        %v1738 = vld [vmem:[#allocation5 + $0x10c0] sm:$0xf]
        %v1739 = vld [vmem:[#allocation5 + $0x10c4] sm:$0xf]
        %v1740 = vld [vmem:[#allocation5 + $0x10c8] sm:$0xf]
        %v1741 = vld [vmem:[#allocation5 + $0x10cc] sm:$0xf]
        %v1742 = vld [vmem:[#allocation5 + $0x10d0] sm:$0xf]
        %v1743 = vld [vmem:[#allocation5 + $0x10d4] sm:$0xf]
        %v1744 = vld [vmem:[#allocation5 + $0x10d8] sm:$0xf]
        %v1745 = vld [vmem:[#allocation5 + $0x10dc] sm:$0xf]
        %v1746 = vld [vmem:[#allocation5 + $0x10e0] sm:$0xf]
        %v1747 = vld [vmem:[#allocation5 + $0x10e4] sm:$0xf]
        %v1748 = vld [vmem:[#allocation5 + $0x10e8] sm:$0xf]
        %v1749 = vld [vmem:[#allocation5 + $0x10ec] sm:$0xf]
        %v1750 = vld [vmem:[#allocation5 + $0x10f0] sm:$0xf]
        %v1751 = vld [vmem:[#allocation5 + $0x10f4] sm:$0xf]
        %v1752 = vld [vmem:[#allocation5 + $0x10f8] sm:$0xf]
        %v1753 = vld [vmem:[#allocation5 + $0x10fc] sm:$0xf]
        %v1754 = vld [vmem:[#allocation5 + $0x1100] sm:$0xf]
        %v1755 = vld [vmem:[#allocation5 + $0x1104] sm:$0xf]
        %v1756 = vld [vmem:[#allocation5 + $0x1108] sm:$0xf]
        %v1757 = vld [vmem:[#allocation5 + $0x110c] sm:$0xf]
        %v1758 = vld [vmem:[#allocation5 + $0x1110] sm:$0xf]
        %v1759 = vld [vmem:[#allocation5 + $0x1114] sm:$0xf]
        %v1760 = vld [vmem:[#allocation5 + $0x1118] sm:$0xf]
        %v1761 = vld [vmem:[#allocation5 + $0x111c] sm:$0xf]
        %v1762 = vld [vmem:[#allocation5 + $0x1120] sm:$0xf]
        %v1763 = vld [vmem:[#allocation5 + $0x1124] sm:$0xf]
        %v1764 = vld [vmem:[#allocation5 + $0x1128] sm:$0xf]
        %v1765 = vld [vmem:[#allocation5 + $0x112c] sm:$0xf]
        %v1766 = vld [vmem:[#allocation5 + $0x1130] sm:$0xf]
        %v1767 = vld [vmem:[#allocation5 + $0x1134] sm:$0xf]
        %v1768 = vld [vmem:[#allocation5 + $0x1138] sm:$0xf]
        %v1769 = vld [vmem:[#allocation5 + $0x113c] sm:$0xf]
        %v1770 = vld [vmem:[#allocation5 + $0x1140] sm:$0xf]
        %v1771 = vld [vmem:[#allocation5 + $0x1144] sm:$0xf]
        %v1772 = vld [vmem:[#allocation5 + $0x1148] sm:$0xf]
        %v1773 = vld [vmem:[#allocation5 + $0x114c] sm:$0xf]
        %v1774 = vld [vmem:[#allocation5 + $0x1150] sm:$0xf]
        %v1775 = vld [vmem:[#allocation5 + $0x1154] sm:$0xf]
        %v1776 = vld [vmem:[#allocation5 + $0x1158] sm:$0xf]
        %v1777 = vld [vmem:[#allocation5 + $0x115c] sm:$0xf]
        %v1778 = vld [vmem:[#allocation5 + $0x1160] sm:$0xf]
        %v1779 = vld [vmem:[#allocation5 + $0x1164] sm:$0xf]
        %v1780 = vld [vmem:[#allocation5 + $0x1168] sm:$0xf]
        %v1781 = vld [vmem:[#allocation5 + $0x116c] sm:$0xf]
        %v1782 = vld [vmem:[#allocation5 + $0x1170] sm:$0xf]
        %v1783 = vld [vmem:[#allocation5 + $0x1174] sm:$0xf]
        %v1784 = vld [vmem:[#allocation5 + $0x1178] sm:$0xf]
        %v1785 = vld [vmem:[#allocation5 + $0x117c] sm:$0xf]
        %v1786 = vld [vmem:[#allocation5 + $0x1180] sm:$0xf]
        %v1787 = vld [vmem:[#allocation5 + $0x1184] sm:$0xf]
        %v1788 = vld [vmem:[#allocation5 + $0x1188] sm:$0xf]
        %v1789 = vld [vmem:[#allocation5 + $0x118c] sm:$0xf]
        %v1790 = vld [vmem:[#allocation5 + $0x1190] sm:$0xf]
        %v1791 = vld [vmem:[#allocation5 + $0x1194] sm:$0xf]
        %v1792 = vld [vmem:[#allocation5 + $0x1198] sm:$0xf]
        %v1793 = vld [vmem:[#allocation5 + $0x119c] sm:$0xf]
        %v1794 = vld [vmem:[#allocation5 + $0x11a0] sm:$0xf]
        %v1795 = vld [vmem:[#allocation5 + $0x11a4] sm:$0xf]
        %v1796 = vld [vmem:[#allocation5 + $0x11a8] sm:$0xf]
        %v1797 = vld [vmem:[#allocation5 + $0x11ac] sm:$0xf]
        %v1798 = vld [vmem:[#allocation5 + $0x11b0] sm:$0xf]
        %v1799 = vld [vmem:[#allocation5 + $0x11b4] sm:$0xf]
        %v1800 = vld [vmem:[#allocation5 + $0x11b8] sm:$0xf]
        %v1801 = vld [vmem:[#allocation5 + $0x11bc] sm:$0xf]
        %v1802 = vld [vmem:[#allocation5 + $0x11c0] sm:$0xf]
        %v1803 = vld [vmem:[#allocation5 + $0x11c4] sm:$0xf]
        %v1804 = vld [vmem:[#allocation5 + $0x11c8] sm:$0xf]
        %v1805 = vld [vmem:[#allocation5 + $0x11cc] sm:$0xf]
        %v1806 = vld [vmem:[#allocation5 + $0x11d0] sm:$0xf]
        %v1807 = vld [vmem:[#allocation5 + $0x11d4] sm:$0xf]
        %v1808 = vld [vmem:[#allocation5 + $0x11d8] sm:$0xf]
        %v1809 = vld [vmem:[#allocation5 + $0x11dc] sm:$0xf]
        %v1810 = vld [vmem:[#allocation5 + $0x11e0] sm:$0xf]
        %v1811 = vld [vmem:[#allocation5 + $0x11e4] sm:$0xf]
        %v1812 = vld [vmem:[#allocation5 + $0x11e8] sm:$0xf]
        %v1813 = vld [vmem:[#allocation5 + $0x11ec] sm:$0xf]
        %v1814 = vld [vmem:[#allocation5 + $0x11f0] sm:$0xf]
        %v1815 = vld [vmem:[#allocation5 + $0x11f4] sm:$0xf]
        %v1816 = vld [vmem:[#allocation5 + $0x11f8] sm:$0xf]
        %v1817 = vld [vmem:[#allocation5 + $0x11fc] sm:$0xf]
        %v1818 = vld [vmem:[#allocation7] sm:$0x1]
        %v1820 = vlaneseq
        %v1821 = vshrl.u32 %v1820, 7
        %v1822 = vsub.s32 0, %v1821
        %v1823 = vrot.slane %v1818, %v1822
        %v1897 = vunpack.c.l.b16 %v594
        %v1898 = vunpack.c.h.b16 %v594
        %v1899 = vunpack.c.l.b16 %v595
        %v1900 = vunpack.c.h.b16 %v595
        %v1901 = vunpack.c.l.b16 %v596
        %v1902 = vunpack.c.h.b16 %v596
        %v1903 = vunpack.c.l.b16 %v597
        %v1904 = vunpack.c.h.b16 %v597
        %v1905 = vunpack.c.l.b16 %v598
        %v1906 = vunpack.c.h.b16 %v598
        %v1907 = vunpack.c.l.b16 %v599
        %v1908 = vunpack.c.h.b16 %v599
        %v1909 = vunpack.c.l.b16 %v600
        %v1910 = vunpack.c.h.b16 %v600
        %v1911 = vunpack.c.l.b16 %v601
        %v1912 = vunpack.c.h.b16 %v601
        %v1913 = vunpack.c.l.b16 %v602
        %v1914 = vunpack.c.h.b16 %v602
        %v1915 = vunpack.c.l.b16 %v603
        %v1916 = vunpack.c.h.b16 %v603
        %v1917 = vunpack.c.l.b16 %v604
        %v1918 = vunpack.c.h.b16 %v604
        %v1919 = vunpack.c.l.b16 %v605
        %v1920 = vunpack.c.h.b16 %v605
        %v1921 = vunpack.c.l.b16 %v606
        %v1922 = vunpack.c.h.b16 %v606
        %v1923 = vunpack.c.l.b16 %v607
        %v1924 = vunpack.c.h.b16 %v607
        %v1925 = vunpack.c.l.b16 %v608
        %v1926 = vunpack.c.h.b16 %v608
        %v1927 = vunpack.c.l.b16 %v609
        %v1928 = vunpack.c.h.b16 %v609
        %v1929 = vunpack.c.l.b16 %v610
        %v1930 = vunpack.c.h.b16 %v610
        %v1931 = vunpack.c.l.b16 %v611
        %v1932 = vunpack.c.h.b16 %v611
        %v1933 = vunpack.c.l.b16 %v612
        %v1934 = vunpack.c.h.b16 %v612
        %v1935 = vunpack.c.l.b16 %v613
        %v1936 = vunpack.c.h.b16 %v613
        %v1937 = vunpack.c.l.b16 %v614
        %v1938 = vunpack.c.h.b16 %v614
        %v1939 = vunpack.c.l.b16 %v615
        %v1940 = vunpack.c.h.b16 %v615
        %v1941 = vunpack.c.l.b16 %v616
        %v1942 = vunpack.c.h.b16 %v616
        %v1943 = vunpack.c.l.b16 %v617
        %v1944 = vunpack.c.h.b16 %v617
        %v1945 = vunpack.c.l.b16 %v618
        %v1946 = vunpack.c.h.b16 %v618
        %v1947 = vunpack.c.l.b16 %v619
        %v1948 = vunpack.c.h.b16 %v619
        %v1949 = vunpack.c.l.b16 %v620
        %v1950 = vunpack.c.h.b16 %v620
        %v1951 = vunpack.c.l.b16 %v621
        %v1952 = vunpack.c.h.b16 %v621
        %v1953 = vunpack.c.l.b16 %v622
        %v1954 = vunpack.c.h.b16 %v622
        %v1955 = vunpack.c.l.b16 %v623
        %v1956 = vunpack.c.h.b16 %v623
        %v1957 = vunpack.c.l.b16 %v624
        %v1958 = vunpack.c.h.b16 %v624
        %v1959 = vunpack.c.l.b16 %v625
        %v1960 = vunpack.c.h.b16 %v625
        %v1961 = vunpack.c.l.b16 %v626
        %v1962 = vunpack.c.h.b16 %v626
        %v1963 = vunpack.c.l.b16 %v627
        %v1964 = vunpack.c.h.b16 %v627
        %v1965 = vunpack.c.l.b16 %v628
        %v1966 = vunpack.c.h.b16 %v628
        %v1967 = vunpack.c.l.b16 %v629
        %v1968 = vunpack.c.h.b16 %v629
        %v1969 = vunpack.c.l.b16 %v630
        %v1970 = vunpack.c.h.b16 %v630
        %v1971 = vunpack.c.l.b16 %v631
        %v1972 = vunpack.c.h.b16 %v631
        %v1973 = vunpack.c.l.b16 %v632
        %v1974 = vunpack.c.h.b16 %v632
        %v1975 = vunpack.c.l.b16 %v633
        %v1976 = vunpack.c.h.b16 %v633
        %v1977 = vunpack.c.l.b16 %v634
        %v1978 = vunpack.c.h.b16 %v634
        %v1979 = vunpack.c.l.b16 %v635
        %v1980 = vunpack.c.h.b16 %v635
        %v1981 = vunpack.c.l.b16 %v636
        %v1982 = vunpack.c.h.b16 %v636
        %v1983 = vunpack.c.l.b16 %v637
        %v1984 = vunpack.c.h.b16 %v637
        %v1985 = vunpack.c.l.b16 %v638
        %v1986 = vunpack.c.h.b16 %v638
        %v1987 = vunpack.c.l.b16 %v639
        %v1988 = vunpack.c.h.b16 %v639
        %v1989 = vunpack.c.l.b16 %v640
        %v1990 = vunpack.c.h.b16 %v640
        %v1991 = vunpack.c.l.b16 %v641
        %v1992 = vunpack.c.h.b16 %v641
        %v1993 = vunpack.c.l.b16 %v642
        %v1994 = vunpack.c.h.b16 %v642
        %v1995 = vunpack.c.l.b16 %v643
        %v1996 = vunpack.c.h.b16 %v643
        %v1997 = vunpack.c.l.b16 %v644
        %v1998 = vunpack.c.h.b16 %v644
        %v1999 = vunpack.c.l.b16 %v645
        %v2000 = vunpack.c.h.b16 %v645
        %v2001 = vunpack.c.l.b16 %v646
        %v2002 = vunpack.c.h.b16 %v646
        %v2003 = vunpack.c.l.b16 %v647
        %v2004 = vunpack.c.h.b16 %v647
        %v2005 = vunpack.c.l.b16 %v648
        %v2006 = vunpack.c.h.b16 %v648
        %v2007 = vunpack.c.l.b16 %v649
        %v2008 = vunpack.c.h.b16 %v649
        %v2009 = vunpack.c.l.b16 %v650
        %v2010 = vunpack.c.h.b16 %v650
        %v2011 = vunpack.c.l.b16 %v651
        %v2012 = vunpack.c.h.b16 %v651
        %v2013 = vunpack.c.l.b16 %v652
        %v2014 = vunpack.c.h.b16 %v652
        %v2015 = vunpack.c.l.b16 %v653
        %v2016 = vunpack.c.h.b16 %v653
        %v2017 = vunpack.c.l.b16 %v654
        %v2018 = vunpack.c.h.b16 %v654
        %v2019 = vunpack.c.l.b16 %v655
        %v2020 = vunpack.c.h.b16 %v655
        %v2021 = vunpack.c.l.b16 %v656
        %v2022 = vunpack.c.h.b16 %v656
        %v2023 = vunpack.c.l.b16 %v657
        %v2024 = vunpack.c.h.b16 %v657
        %v2025 = vunpack.c.l.b16 %v658
        %v2026 = vunpack.c.h.b16 %v658
        %v2027 = vunpack.c.l.b16 %v659
        %v2028 = vunpack.c.h.b16 %v659
        %v2029 = vunpack.c.l.b16 %v660
        %v2030 = vunpack.c.h.b16 %v660
        %v2031 = vunpack.c.l.b16 %v661
        %v2032 = vunpack.c.h.b16 %v661
        %v2033 = vunpack.c.l.b16 %v662
        %v2034 = vunpack.c.h.b16 %v662
        %v2035 = vunpack.c.l.b16 %v663
        %v2036 = vunpack.c.h.b16 %v663
        %v2037 = vunpack.c.l.b16 %v664
        %v2038 = vunpack.c.h.b16 %v664
        %v2039 = vunpack.c.l.b16 %v665
        %v2040 = vunpack.c.h.b16 %v665
        %v2041 = vpack.c.b16 %v1969, %v1897
        %v2042 = vpack.c.b16 %v1970, %v1898
        %v2043 = vpack.c.b16 %v1971, %v1899
        %v2044 = vpack.c.b16 %v1972, %v1900
        %v2045 = vpack.c.b16 %v1973, %v1901
        %v2046 = vpack.c.b16 %v1974, %v1902
        %v2047 = vpack.c.b16 %v1975, %v1903
        %v2048 = vpack.c.b16 %v1976, %v1904
        %v2049 = vpack.c.b16 %v1977, %v1905
        %v2050 = vpack.c.b16 %v1978, %v1906
        %v2051 = vpack.c.b16 %v1979, %v1907
        %v2052 = vpack.c.b16 %v1980, %v1908
        %v2053 = vpack.c.b16 %v1981, %v1909
        %v2054 = vpack.c.b16 %v1982, %v1910
        %v2055 = vpack.c.b16 %v1983, %v1911
        %v2056 = vpack.c.b16 %v1984, %v1912
        %v2057 = vpack.c.b16 %v1985, %v1913
        %v2058 = vpack.c.b16 %v1986, %v1914
        %v2059 = vpack.c.b16 %v1987, %v1915
        %v2060 = vpack.c.b16 %v1988, %v1916
        %v2061 = vpack.c.b16 %v1989, %v1917
        %v2062 = vpack.c.b16 %v1990, %v1918
        %v2063 = vpack.c.b16 %v1991, %v1919
        %v2064 = vpack.c.b16 %v1992, %v1920
        %v2065 = vpack.c.b16 %v1993, %v1921
        %v2066 = vpack.c.b16 %v1994, %v1922
        %v2067 = vpack.c.b16 %v1995, %v1923
        %v2068 = vpack.c.b16 %v1996, %v1924
        %v2069 = vpack.c.b16 %v1997, %v1925
        %v2070 = vpack.c.b16 %v1998, %v1926
        %v2071 = vpack.c.b16 %v1999, %v1927
        %v2072 = vpack.c.b16 %v2000, %v1928
        %v2073 = vpack.c.b16 %v2001, %v1929
        %v2074 = vpack.c.b16 %v2002, %v1930
        %v2075 = vpack.c.b16 %v2003, %v1931
        %v2076 = vpack.c.b16 %v2004, %v1932
        %v2077 = vpack.c.b16 %v2005, %v1933
        %v2078 = vpack.c.b16 %v2006, %v1934
        %v2079 = vpack.c.b16 %v2007, %v1935
        %v2080 = vpack.c.b16 %v2008, %v1936
        %v2081 = vpack.c.b16 %v2009, %v1937
        %v2082 = vpack.c.b16 %v2010, %v1938
        %v2083 = vpack.c.b16 %v2011, %v1939
        %v2084 = vpack.c.b16 %v2012, %v1940
        %v2085 = vpack.c.b16 %v2013, %v1941
        %v2086 = vpack.c.b16 %v2014, %v1942
        %v2087 = vpack.c.b16 %v2015, %v1943
        %v2088 = vpack.c.b16 %v2016, %v1944
        %v2089 = vpack.c.b16 %v2017, %v1945
        %v2090 = vpack.c.b16 %v2018, %v1946
        %v2091 = vpack.c.b16 %v2019, %v1947
        %v2092 = vpack.c.b16 %v2020, %v1948
        %v2093 = vpack.c.b16 %v2021, %v1949
        %v2094 = vpack.c.b16 %v2022, %v1950
        %v2095 = vpack.c.b16 %v2023, %v1951
        %v2096 = vpack.c.b16 %v2024, %v1952
        %v2097 = vpack.c.b16 %v2025, %v1953
        %v2098 = vpack.c.b16 %v2026, %v1954
        %v2099 = vpack.c.b16 %v2027, %v1955
        %v2100 = vpack.c.b16 %v2028, %v1956
        %v2101 = vpack.c.b16 %v2029, %v1957
        %v2102 = vpack.c.b16 %v2030, %v1958
        %v2103 = vpack.c.b16 %v2031, %v1959
        %v2104 = vpack.c.b16 %v2032, %v1960
        %v2105 = vpack.c.b16 %v2033, %v1961
        %v2106 = vpack.c.b16 %v2034, %v1962
        %v2107 = vpack.c.b16 %v2035, %v1963
        %v2108 = vpack.c.b16 %v2036, %v1964
        %v2109 = vpack.c.b16 %v2037, %v1965
        %v2110 = vpack.c.b16 %v2038, %v1966
        %v2111 = vpack.c.b16 %v2039, %v1967
        %v2112 = vpack.c.b16 %v2040, %v1968
        %v3337 = vunpack.c.l.b16 %v666
        %v3338 = vunpack.c.l.b16 %v667
        %v3339 = vunpack.c.l.b16 %v668
        %v3340 = vunpack.c.l.b16 %v669
        %v3341 = vunpack.c.l.b16 %v670
        %v3342 = vunpack.c.l.b16 %v671
        %v3343 = vunpack.c.l.b16 %v672
        %v3344 = vunpack.c.l.b16 %v673
        %v3345 = vunpack.c.l.b16 %v674
        %v3346 = vunpack.c.l.b16 %v675
        %v3347 = vunpack.c.l.b16 %v676
        %v3348 = vunpack.c.l.b16 %v677
        %v3349 = vunpack.c.l.b16 %v678
        %v3350 = vunpack.c.l.b16 %v679
        %v3351 = vunpack.c.l.b16 %v680
        %v3352 = vunpack.c.l.b16 %v681
        %v3353 = vunpack.c.l.b16 %v682
        %v3354 = vunpack.c.l.b16 %v683
        %v3355 = vunpack.c.l.b16 %v684
        %v3356 = vunpack.c.l.b16 %v685
        %v3357 = vunpack.c.l.b16 %v686
        %v3358 = vunpack.c.l.b16 %v687
        %v3359 = vunpack.c.l.b16 %v688
        %v3360 = vunpack.c.l.b16 %v689
        %v3361 = vunpack.c.l.b16 %v690
        %v3362 = vunpack.c.l.b16 %v691
        %v3363 = vunpack.c.l.b16 %v692
        %v3364 = vunpack.c.l.b16 %v693
        %v3365 = vunpack.c.l.b16 %v694
        %v3366 = vunpack.c.l.b16 %v695
        %v3367 = vunpack.c.l.b16 %v696
        %v3368 = vunpack.c.l.b16 %v697
        %v3369 = vunpack.c.l.b16 %v698
        %v3370 = vunpack.c.l.b16 %v699
        %v3371 = vunpack.c.l.b16 %v700
        %v3372 = vunpack.c.l.b16 %v701
        %v3373 = vunpack.c.l.b16 %v702
        %v3374 = vunpack.c.l.b16 %v703
        %v3375 = vunpack.c.l.b16 %v704
        %v3376 = vunpack.c.l.b16 %v705
        %v3377 = vunpack.c.l.b16 %v706
        %v3378 = vunpack.c.l.b16 %v707
        %v3379 = vunpack.c.l.b16 %v708
        %v3380 = vunpack.c.l.b16 %v709
        %v3381 = vunpack.c.l.b16 %v710
        %v3382 = vunpack.c.l.b16 %v711
        %v3383 = vunpack.c.l.b16 %v712
        %v3384 = vunpack.c.l.b16 %v713
        %v3385 = vunpack.c.l.b16 %v714
        %v3386 = vunpack.c.l.b16 %v715
        %v3387 = vunpack.c.l.b16 %v716
        %v3388 = vunpack.c.l.b16 %v717
        %v3389 = vunpack.c.l.b16 %v718
        %v3390 = vunpack.c.l.b16 %v719
        %v3391 = vunpack.c.l.b16 %v720
        %v3392 = vunpack.c.l.b16 %v721
        %v3393 = vunpack.c.l.b16 %v722
        %v3394 = vunpack.c.l.b16 %v723
        %v3395 = vunpack.c.l.b16 %v724
        %v3396 = vunpack.c.l.b16 %v725
        %v3397 = vunpack.c.l.b16 %v726
        %v3398 = vunpack.c.l.b16 %v727
        %v3399 = vunpack.c.l.b16 %v728
        %v3400 = vunpack.c.l.b16 %v729
        %v3401 = vunpack.c.l.b16 %v730
        %v3402 = vunpack.c.l.b16 %v731
        %v3403 = vunpack.c.l.b16 %v732
        %v3404 = vunpack.c.l.b16 %v733
        %v3405 = vunpack.c.l.b16 %v734
        %v3406 = vunpack.c.l.b16 %v735
        %v3407 = vunpack.c.l.b16 %v736
        %v3408 = vunpack.c.l.b16 %v737
        %v3409 = vunpack.c.l.b16 %v738
        %v3410 = vunpack.c.l.b16 %v739
        %v3411 = vunpack.c.l.b16 %v740
        %v3412 = vunpack.c.l.b16 %v741
        %v3413 = vunpack.c.l.b16 %v742
        %v3414 = vunpack.c.l.b16 %v743
        %v3415 = vunpack.c.l.b16 %v744
        %v3416 = vunpack.c.l.b16 %v745
        %v3417 = vunpack.c.l.b16 %v746
        %v3418 = vunpack.c.l.b16 %v747
        %v3419 = vunpack.c.l.b16 %v748
        %v3420 = vunpack.c.l.b16 %v749
        %v3421 = vunpack.c.l.b16 %v750
        %v3422 = vunpack.c.l.b16 %v751
        %v3423 = vunpack.c.l.b16 %v752
        %v3424 = vunpack.c.l.b16 %v753
        %v3425 = vunpack.c.l.b16 %v754
        %v3426 = vunpack.c.l.b16 %v755
        %v3427 = vunpack.c.l.b16 %v756
        %v3428 = vunpack.c.l.b16 %v757
        %v3429 = vunpack.c.l.b16 %v758
        %v3430 = vunpack.c.l.b16 %v759
        %v3431 = vunpack.c.l.b16 %v760
        %v3432 = vunpack.c.l.b16 %v761
        %v3433 = vunpack.c.l.b16 %v762
        %v3434 = vunpack.c.l.b16 %v763
        %v3435 = vunpack.c.l.b16 %v764
        %v3436 = vunpack.c.l.b16 %v765
        %v3437 = vunpack.c.l.b16 %v766
        %v3438 = vunpack.c.l.b16 %v767
        %v3439 = vunpack.c.l.b16 %v768
        %v3440 = vunpack.c.l.b16 %v769
        %v3441 = vunpack.c.l.b16 %v770
        %v3442 = vunpack.c.l.b16 %v771
        %v3443 = vunpack.c.l.b16 %v772
        %v3444 = vunpack.c.l.b16 %v773
        %v3445 = vunpack.c.l.b16 %v774
        %v3446 = vunpack.c.l.b16 %v775
        %v3447 = vunpack.c.l.b16 %v776
        %v3448 = vunpack.c.l.b16 %v777
        %v3449 = vunpack.c.l.b16 %v778
        %v3450 = vunpack.c.l.b16 %v779
        %v3451 = vunpack.c.l.b16 %v780
        %v3452 = vunpack.c.l.b16 %v781
        %v3453 = vunpack.c.l.b16 %v782
        %v3454 = vunpack.c.l.b16 %v783
        %v3455 = vunpack.c.l.b16 %v784
        %v3456 = vunpack.c.l.b16 %v785
        %v3457 = vunpack.c.l.b16 %v786
        %v3458 = vunpack.c.l.b16 %v787
        %v3459 = vunpack.c.l.b16 %v788
        %v3460 = vunpack.c.l.b16 %v789
        %v3461 = vunpack.c.l.b16 %v790
        %v3462 = vunpack.c.l.b16 %v791
        %v3463 = vunpack.c.l.b16 %v792
        %v3464 = vunpack.c.l.b16 %v793
        %v3465 = vunpack.c.l.b16 %v794
        %v3466 = vunpack.c.l.b16 %v795
        %v3467 = vunpack.c.l.b16 %v796
        %v3468 = vunpack.c.l.b16 %v797
        %v3469 = vunpack.c.l.b16 %v798
        %v3470 = vunpack.c.l.b16 %v799
        %v3471 = vunpack.c.l.b16 %v800
        %v3472 = vunpack.c.l.b16 %v801
        %v3473 = vunpack.c.l.b16 %v802
        %v3474 = vunpack.c.l.b16 %v803
        %v3475 = vunpack.c.l.b16 %v804
        %v3476 = vunpack.c.l.b16 %v805
        %v3477 = vunpack.c.l.b16 %v806
        %v3478 = vunpack.c.l.b16 %v807
        %v3479 = vunpack.c.l.b16 %v808
        %v3480 = vunpack.c.l.b16 %v809
        %v3481 = vunpack.c.l.b16 %v810
        %v3482 = vunpack.c.l.b16 %v811
        %v3483 = vunpack.c.l.b16 %v812
        %v3484 = vunpack.c.l.b16 %v813
        %v3485 = vunpack.c.l.b16 %v814
        %v3486 = vunpack.c.l.b16 %v815
        %v3487 = vunpack.c.l.b16 %v816
        %v3488 = vunpack.c.l.b16 %v817
        %v3489 = vunpack.c.l.b16 %v818
        %v3490 = vunpack.c.l.b16 %v819
        %v3491 = vunpack.c.l.b16 %v820
        %v3492 = vunpack.c.l.b16 %v821
        %v3493 = vunpack.c.l.b16 %v822
        %v3494 = vunpack.c.l.b16 %v823
        %v3495 = vunpack.c.l.b16 %v824
        %v3496 = vunpack.c.l.b16 %v825
        %v3497 = vunpack.c.l.b16 %v826
        %v3498 = vunpack.c.l.b16 %v827
        %v3499 = vunpack.c.l.b16 %v828
        %v3500 = vunpack.c.l.b16 %v829
        %v3501 = vunpack.c.l.b16 %v830
        %v3502 = vunpack.c.l.b16 %v831
        %v3503 = vunpack.c.l.b16 %v832
        %v3504 = vunpack.c.l.b16 %v833
        %v3505 = vunpack.c.l.b16 %v834
        %v3506 = vunpack.c.l.b16 %v835
        %v3507 = vunpack.c.l.b16 %v836
        %v3508 = vunpack.c.l.b16 %v837
        %v3509 = vunpack.c.l.b16 %v838
        %v3510 = vunpack.c.l.b16 %v839
        %v3511 = vunpack.c.l.b16 %v840
        %v3512 = vunpack.c.l.b16 %v841
        %v3513 = vunpack.c.l.b16 %v842
        %v3514 = vunpack.c.l.b16 %v843
        %v3515 = vunpack.c.l.b16 %v844
        %v3516 = vunpack.c.l.b16 %v845
        %v3517 = vunpack.c.l.b16 %v846
        %v3518 = vunpack.c.l.b16 %v847
        %v3519 = vunpack.c.l.b16 %v848
        %v3520 = vunpack.c.l.b16 %v849
        %v3521 = vunpack.c.l.b16 %v850
        %v3522 = vunpack.c.l.b16 %v851
        %v3523 = vunpack.c.l.b16 %v852
        %v3524 = vunpack.c.l.b16 %v853
        %v3525 = vunpack.c.l.b16 %v854
        %v3526 = vunpack.c.l.b16 %v855
        %v3527 = vunpack.c.l.b16 %v856
        %v3528 = vunpack.c.l.b16 %v857
        %v3529 = vunpack.c.l.b16 %v858
        %v3530 = vunpack.c.l.b16 %v859
        %v3531 = vunpack.c.l.b16 %v860
        %v3532 = vunpack.c.l.b16 %v861
        %v3533 = vunpack.c.l.b16 %v862
        %v3534 = vunpack.c.l.b16 %v863
        %v3535 = vunpack.c.l.b16 %v864
        %v3536 = vunpack.c.l.b16 %v865
        %v3537 = vunpack.c.l.b16 %v866
        %v3538 = vunpack.c.l.b16 %v867
        %v3539 = vunpack.c.l.b16 %v868
        %v3540 = vunpack.c.l.b16 %v869
        %v3541 = vunpack.c.l.b16 %v870
        %v3542 = vunpack.c.l.b16 %v871
        %v3543 = vunpack.c.l.b16 %v872
        %v3544 = vunpack.c.l.b16 %v873
        %v3545 = vunpack.c.l.b16 %v874
        %v3546 = vunpack.c.l.b16 %v875
        %v3547 = vunpack.c.l.b16 %v876
        %v3548 = vunpack.c.l.b16 %v877
        %v3549 = vunpack.c.l.b16 %v878
        %v3550 = vunpack.c.l.b16 %v879
        %v3551 = vunpack.c.l.b16 %v880
        %v3552 = vunpack.c.l.b16 %v881
        %v3553 = vunpack.c.l.b16 %v882
        %v3554 = vunpack.c.l.b16 %v883
        %v3555 = vunpack.c.l.b16 %v884
        %v3556 = vunpack.c.l.b16 %v885
        %v3557 = vunpack.c.l.b16 %v886
        %v3558 = vunpack.c.l.b16 %v887
        %v3559 = vunpack.c.l.b16 %v888
        %v3560 = vunpack.c.l.b16 %v889
        %v3561 = vunpack.c.l.b16 %v890
        %v3562 = vunpack.c.l.b16 %v891
        %v3563 = vunpack.c.l.b16 %v892
        %v3564 = vunpack.c.l.b16 %v893
        %v3565 = vunpack.c.l.b16 %v894
        %v3566 = vunpack.c.l.b16 %v895
        %v3567 = vunpack.c.l.b16 %v896
        %v3568 = vunpack.c.l.b16 %v897
        %v3569 = vunpack.c.l.b16 %v898
        %v3570 = vunpack.c.l.b16 %v899
        %v3571 = vunpack.c.l.b16 %v900
        %v3572 = vunpack.c.l.b16 %v901
        %v3573 = vunpack.c.l.b16 %v902
        %v3574 = vunpack.c.l.b16 %v903
        %v3575 = vunpack.c.l.b16 %v904
        %v3576 = vunpack.c.l.b16 %v905
        %v3577 = vunpack.c.l.b16 %v906
        %v3578 = vunpack.c.l.b16 %v907
        %v3579 = vunpack.c.l.b16 %v908
        %v3580 = vunpack.c.l.b16 %v909
        %v3581 = vunpack.c.l.b16 %v910
        %v3582 = vunpack.c.l.b16 %v911
        %v3583 = vunpack.c.l.b16 %v912
        %v3584 = vunpack.c.l.b16 %v913
        %v3585 = vunpack.c.l.b16 %v914
        %v3586 = vunpack.c.l.b16 %v915
        %v3587 = vunpack.c.l.b16 %v916
        %v3588 = vunpack.c.l.b16 %v917
        %v3589 = vunpack.c.l.b16 %v918
        %v3590 = vunpack.c.l.b16 %v919
        %v3591 = vunpack.c.l.b16 %v920
        %v3592 = vunpack.c.l.b16 %v921
        %v3593 = vunpack.c.l.b16 %v922
        %v3594 = vunpack.c.l.b16 %v923
        %v3595 = vunpack.c.l.b16 %v924
        %v3596 = vunpack.c.l.b16 %v925
        %v3597 = vunpack.c.l.b16 %v926
        %v3598 = vunpack.c.l.b16 %v927
        %v3599 = vunpack.c.l.b16 %v928
        %v3600 = vunpack.c.l.b16 %v929
        %v3601 = vunpack.c.l.b16 %v930
        %v3602 = vunpack.c.l.b16 %v931
        %v3603 = vunpack.c.l.b16 %v932
        %v3604 = vunpack.c.l.b16 %v933
        %v3605 = vunpack.c.l.b16 %v934
        %v3606 = vunpack.c.l.b16 %v935
        %v3607 = vunpack.c.l.b16 %v936
        %v3608 = vunpack.c.l.b16 %v937
        %v3609 = vunpack.c.l.b16 %v938
        %v3610 = vunpack.c.l.b16 %v939
        %v3611 = vunpack.c.l.b16 %v940
        %v3612 = vunpack.c.l.b16 %v941
        %v3613 = vunpack.c.l.b16 %v942
        %v3614 = vunpack.c.l.b16 %v943
        %v3615 = vunpack.c.l.b16 %v944
        %v3616 = vunpack.c.l.b16 %v945
        %v3617 = vunpack.c.l.b16 %v946
        %v3618 = vunpack.c.l.b16 %v947
        %v3619 = vunpack.c.l.b16 %v948
        %v3620 = vunpack.c.l.b16 %v949
        %v3621 = vunpack.c.l.b16 %v950
        %v3622 = vunpack.c.l.b16 %v951
        %v3623 = vunpack.c.l.b16 %v952
        %v3624 = vunpack.c.l.b16 %v953
        %v3625 = vunpack.c.l.b16 %v954
        %v3626 = vunpack.c.l.b16 %v955
        %v3627 = vunpack.c.l.b16 %v956
        %v3628 = vunpack.c.l.b16 %v957
        %v3629 = vunpack.c.l.b16 %v958
        %v3630 = vunpack.c.l.b16 %v959
        %v3631 = vunpack.c.l.b16 %v960
        %v3632 = vunpack.c.l.b16 %v961
        %v3633 = vunpack.c.l.b16 %v962
        %v3634 = vunpack.c.l.b16 %v963
        %v3635 = vunpack.c.l.b16 %v964
        %v3636 = vunpack.c.l.b16 %v965
        %v3637 = vunpack.c.l.b16 %v966
        %v3638 = vunpack.c.l.b16 %v967
        %v3639 = vunpack.c.l.b16 %v968
        %v3640 = vunpack.c.l.b16 %v969
        %v3641 = vunpack.c.l.b16 %v970
        %v3642 = vunpack.c.l.b16 %v971
        %v3643 = vunpack.c.l.b16 %v972
        %v3644 = vunpack.c.l.b16 %v973
        %v3645 = vunpack.c.l.b16 %v974
        %v3646 = vunpack.c.l.b16 %v975
        %v3647 = vunpack.c.l.b16 %v976
        %v3648 = vunpack.c.l.b16 %v977
        %v3649 = vunpack.c.l.b16 %v978
        %v3650 = vunpack.c.l.b16 %v979
        %v3651 = vunpack.c.l.b16 %v980
        %v3652 = vunpack.c.l.b16 %v981
        %v3653 = vunpack.c.l.b16 %v982
        %v3654 = vunpack.c.l.b16 %v983
        %v3655 = vunpack.c.l.b16 %v984
        %v3656 = vunpack.c.l.b16 %v985
        %v3657 = vunpack.c.l.b16 %v986
        %v3658 = vunpack.c.l.b16 %v987
        %v3659 = vunpack.c.l.b16 %v988
        %v3660 = vunpack.c.l.b16 %v989
        %v3661 = vunpack.c.l.b16 %v990
        %v3662 = vunpack.c.l.b16 %v991
        %v3663 = vunpack.c.l.b16 %v992
        %v3664 = vunpack.c.l.b16 %v993
        %v3665 = vunpack.c.l.b16 %v994
        %v3666 = vunpack.c.l.b16 %v995
        %v3667 = vunpack.c.l.b16 %v996
        %v3668 = vunpack.c.l.b16 %v997
        %v3669 = vunpack.c.l.b16 %v998
        %v3670 = vunpack.c.l.b16 %v999
        %v3671 = vunpack.c.l.b16 %v1000
        %v3672 = vunpack.c.l.b16 %v1001
        %v3673 = vunpack.c.l.b16 %v1002
        %v3674 = vunpack.c.l.b16 %v1003
        %v3675 = vunpack.c.l.b16 %v1004
        %v3676 = vunpack.c.l.b16 %v1005
        %v3677 = vunpack.c.l.b16 %v1006
        %v3678 = vunpack.c.l.b16 %v1007
        %v3679 = vunpack.c.l.b16 %v1008
        %v3680 = vunpack.c.l.b16 %v1009
        %v3681 = vunpack.c.l.b16 %v1010
        %v3682 = vunpack.c.l.b16 %v1011
        %v3683 = vunpack.c.l.b16 %v1012
        %v3684 = vunpack.c.l.b16 %v1013
        %v3685 = vunpack.c.l.b16 %v1014
        %v3686 = vunpack.c.l.b16 %v1015
        %v3687 = vunpack.c.l.b16 %v1016
        %v3688 = vunpack.c.l.b16 %v1017
        %v3689 = vunpack.c.l.b16 %v1018
        %v3690 = vunpack.c.l.b16 %v1019
        %v3691 = vunpack.c.l.b16 %v1020
        %v3692 = vunpack.c.l.b16 %v1021
        %v3693 = vunpack.c.l.b16 %v1022
        %v3694 = vunpack.c.l.b16 %v1023
        %v3695 = vunpack.c.l.b16 %v1024
        %v3696 = vunpack.c.l.b16 %v1025
        %v3697 = vunpack.c.l.b16 %v1026
        %v3698 = vunpack.c.l.b16 %v1027
        %v3699 = vunpack.c.l.b16 %v1028
        %v3700 = vunpack.c.l.b16 %v1029
        %v3701 = vunpack.c.l.b16 %v1030
        %v3702 = vunpack.c.l.b16 %v1031
        %v3703 = vunpack.c.l.b16 %v1032
        %v3704 = vunpack.c.l.b16 %v1033
        %v3705 = vunpack.c.l.b16 %v1034
        %v3706 = vunpack.c.l.b16 %v1035
        %v3707 = vunpack.c.l.b16 %v1036
        %v3708 = vunpack.c.l.b16 %v1037
        %v3709 = vunpack.c.l.b16 %v1038
        %v3710 = vunpack.c.l.b16 %v1039
        %v3711 = vunpack.c.l.b16 %v1040
        %v3712 = vunpack.c.l.b16 %v1041
        %v3713 = vunpack.c.l.b16 %v1042
        %v3714 = vunpack.c.l.b16 %v1043
        %v3715 = vunpack.c.l.b16 %v1044
        %v3716 = vunpack.c.l.b16 %v1045
        %v3717 = vunpack.c.l.b16 %v1046
        %v3718 = vunpack.c.l.b16 %v1047
        %v3719 = vunpack.c.l.b16 %v1048
        %v3720 = vunpack.c.l.b16 %v1049
        %v3721 = vunpack.c.l.b16 %v1050
        %v3722 = vunpack.c.l.b16 %v1051
        %v3723 = vunpack.c.l.b16 %v1052
        %v3724 = vunpack.c.l.b16 %v1053
        %v3725 = vunpack.c.l.b16 %v1054
        %v3726 = vunpack.c.l.b16 %v1055
        %v3727 = vunpack.c.l.b16 %v1056
        %v3728 = vunpack.c.l.b16 %v1057
        %v3729 = vunpack.c.l.b16 %v1058
        %v3730 = vunpack.c.l.b16 %v1059
        %v3731 = vunpack.c.l.b16 %v1060
        %v3732 = vunpack.c.l.b16 %v1061
        %v3733 = vunpack.c.l.b16 %v1062
        %v3734 = vunpack.c.l.b16 %v1063
        %v3735 = vunpack.c.l.b16 %v1064
        %v3736 = vunpack.c.l.b16 %v1065
        %v3737 = vunpack.c.l.b16 %v1066
        %v3738 = vunpack.c.l.b16 %v1067
        %v3739 = vunpack.c.l.b16 %v1068
        %v3740 = vunpack.c.l.b16 %v1069
        %v3741 = vunpack.c.l.b16 %v1070
        %v3742 = vunpack.c.l.b16 %v1071
        %v3743 = vunpack.c.l.b16 %v1072
        %v3744 = vunpack.c.l.b16 %v1073
        %v3745 = vunpack.c.l.b16 %v1074
        %v3746 = vunpack.c.l.b16 %v1075
        %v3747 = vunpack.c.l.b16 %v1076
        %v3748 = vunpack.c.l.b16 %v1077
        %v3749 = vunpack.c.l.b16 %v1078
        %v3750 = vunpack.c.l.b16 %v1079
        %v3751 = vunpack.c.l.b16 %v1080
        %v3752 = vunpack.c.l.b16 %v1081
        %v3753 = vunpack.c.l.b16 %v1082
        %v3754 = vunpack.c.l.b16 %v1083
        %v3755 = vunpack.c.l.b16 %v1084
        %v3756 = vunpack.c.l.b16 %v1085
        %v3757 = vunpack.c.l.b16 %v1086
        %v3758 = vunpack.c.l.b16 %v1087
        %v3759 = vunpack.c.l.b16 %v1088
        %v3760 = vunpack.c.l.b16 %v1089
        %v3761 = vunpack.c.l.b16 %v1090
        %v3762 = vunpack.c.l.b16 %v1091
        %v3763 = vunpack.c.l.b16 %v1092
        %v3764 = vunpack.c.l.b16 %v1093
        %v3765 = vunpack.c.l.b16 %v1094
        %v3766 = vunpack.c.l.b16 %v1095
        %v3767 = vunpack.c.l.b16 %v1096
        %v3768 = vunpack.c.l.b16 %v1097
        %v3769 = vunpack.c.l.b16 %v1098
        %v3770 = vunpack.c.l.b16 %v1099
        %v3771 = vunpack.c.l.b16 %v1100
        %v3772 = vunpack.c.l.b16 %v1101
        %v3773 = vunpack.c.l.b16 %v1102
        %v3774 = vunpack.c.l.b16 %v1103
        %v3775 = vunpack.c.l.b16 %v1104
        %v3776 = vunpack.c.l.b16 %v1105
        %v3777 = vunpack.c.l.b16 %v1106
        %v3778 = vunpack.c.l.b16 %v1107
        %v3779 = vunpack.c.l.b16 %v1108
        %v3780 = vunpack.c.l.b16 %v1109
        %v3781 = vunpack.c.l.b16 %v1110
        %v3782 = vunpack.c.l.b16 %v1111
        %v3783 = vunpack.c.l.b16 %v1112
        %v3784 = vunpack.c.l.b16 %v1113
        %v3785 = vunpack.c.l.b16 %v1114
        %v3786 = vunpack.c.l.b16 %v1115
        %v3787 = vunpack.c.l.b16 %v1116
        %v3788 = vunpack.c.l.b16 %v1117
        %v3789 = vunpack.c.l.b16 %v1118
        %v3790 = vunpack.c.l.b16 %v1119
        %v3791 = vunpack.c.l.b16 %v1120
        %v3792 = vunpack.c.l.b16 %v1121
        %v3793 = vunpack.c.l.b16 %v1122
        %v3794 = vunpack.c.l.b16 %v1123
        %v3795 = vunpack.c.l.b16 %v1124
        %v3796 = vunpack.c.l.b16 %v1125
        %v3797 = vunpack.c.l.b16 %v1126
        %v3798 = vunpack.c.l.b16 %v1127
        %v3799 = vunpack.c.l.b16 %v1128
        %v3800 = vunpack.c.l.b16 %v1129
        %v3801 = vunpack.c.l.b16 %v1130
        %v3802 = vunpack.c.l.b16 %v1131
        %v3803 = vunpack.c.l.b16 %v1132
        %v3804 = vunpack.c.l.b16 %v1133
        %v3805 = vunpack.c.l.b16 %v1134
        %v3806 = vunpack.c.l.b16 %v1135
        %v3807 = vunpack.c.l.b16 %v1136
        %v3808 = vunpack.c.l.b16 %v1137
        %v3809 = vunpack.c.l.b16 %v1138
        %v3810 = vunpack.c.l.b16 %v1139
        %v3811 = vunpack.c.l.b16 %v1140
        %v3812 = vunpack.c.l.b16 %v1141
        %v3813 = vunpack.c.l.b16 %v1142
        %v3814 = vunpack.c.l.b16 %v1143
        %v3815 = vunpack.c.l.b16 %v1144
        %v3816 = vunpack.c.l.b16 %v1145
        %v3817 = vunpack.c.l.b16 %v1146
        %v3818 = vunpack.c.l.b16 %v1147
        %v3819 = vunpack.c.l.b16 %v1148
        %v3820 = vunpack.c.l.b16 %v1149
        %v3821 = vunpack.c.l.b16 %v1150
        %v3822 = vunpack.c.l.b16 %v1151
        %v3823 = vunpack.c.l.b16 %v1152
        %v3824 = vunpack.c.l.b16 %v1153
        %v3825 = vunpack.c.l.b16 %v1154
        %v3826 = vunpack.c.l.b16 %v1155
        %v3827 = vunpack.c.l.b16 %v1156
        %v3828 = vunpack.c.l.b16 %v1157
        %v3829 = vunpack.c.l.b16 %v1158
        %v3830 = vunpack.c.l.b16 %v1159
        %v3831 = vunpack.c.l.b16 %v1160
        %v3832 = vunpack.c.l.b16 %v1161
        %v3833 = vunpack.c.l.b16 %v1162
        %v3834 = vunpack.c.l.b16 %v1163
        %v3835 = vunpack.c.l.b16 %v1164
        %v3836 = vunpack.c.l.b16 %v1165
        %v3837 = vunpack.c.l.b16 %v1166
        %v3838 = vunpack.c.l.b16 %v1167
        %v3839 = vunpack.c.l.b16 %v1168
        %v3840 = vunpack.c.l.b16 %v1169
        %v3841 = vunpack.c.l.b16 %v1170
        %v3842 = vunpack.c.l.b16 %v1171
        %v3843 = vunpack.c.l.b16 %v1172
        %v3844 = vunpack.c.l.b16 %v1173
        %v3845 = vunpack.c.l.b16 %v1174
        %v3846 = vunpack.c.l.b16 %v1175
        %v3847 = vunpack.c.l.b16 %v1176
        %v3848 = vunpack.c.l.b16 %v1177
        %v3849 = vunpack.c.l.b16 %v1178
        %v3850 = vunpack.c.l.b16 %v1179
        %v3851 = vunpack.c.l.b16 %v1180
        %v3852 = vunpack.c.l.b16 %v1181
        %v3853 = vunpack.c.l.b16 %v1182
        %v3854 = vunpack.c.l.b16 %v1183
        %v3855 = vunpack.c.l.b16 %v1184
        %v3856 = vunpack.c.l.b16 %v1185
        %v3857 = vunpack.c.l.b16 %v1186
        %v3858 = vunpack.c.l.b16 %v1187
        %v3859 = vunpack.c.l.b16 %v1188
        %v3860 = vunpack.c.l.b16 %v1189
        %v3861 = vunpack.c.l.b16 %v1190
        %v3862 = vunpack.c.l.b16 %v1191
        %v3863 = vunpack.c.l.b16 %v1192
        %v3864 = vunpack.c.l.b16 %v1193
        %v3865 = vunpack.c.l.b16 %v1194
        %v3866 = vunpack.c.l.b16 %v1195
        %v3867 = vunpack.c.l.b16 %v1196
        %v3868 = vunpack.c.l.b16 %v1197
        %v3869 = vunpack.c.l.b16 %v1198
        %v3870 = vunpack.c.l.b16 %v1199
        %v3871 = vunpack.c.l.b16 %v1200
        %v3872 = vunpack.c.l.b16 %v1201
        %v3873 = vunpack.c.l.b16 %v1202
        %v3874 = vunpack.c.l.b16 %v1203
        %v3875 = vunpack.c.l.b16 %v1204
        %v3876 = vunpack.c.l.b16 %v1205
        %v3877 = vunpack.c.l.b16 %v1206
        %v3878 = vunpack.c.l.b16 %v1207
        %v3879 = vunpack.c.l.b16 %v1208
        %v3880 = vunpack.c.l.b16 %v1209
        %v3881 = vunpack.c.l.b16 %v1210
        %v3882 = vunpack.c.l.b16 %v1211
        %v3883 = vunpack.c.l.b16 %v1212
        %v3884 = vunpack.c.l.b16 %v1213
        %v3885 = vunpack.c.l.b16 %v1214
        %v3886 = vunpack.c.l.b16 %v1215
        %v3887 = vunpack.c.l.b16 %v1216
        %v3888 = vunpack.c.l.b16 %v1217
        %v3889 = vunpack.c.l.b16 %v1218
        %v3890 = vunpack.c.l.b16 %v1219
        %v3891 = vunpack.c.l.b16 %v1220
        %v3892 = vunpack.c.l.b16 %v1221
        %v3893 = vunpack.c.l.b16 %v1222
        %v3894 = vunpack.c.l.b16 %v1223
        %v3895 = vunpack.c.l.b16 %v1224
        %v3896 = vunpack.c.l.b16 %v1225
        %v3897 = vunpack.c.l.b16 %v1226
        %v3898 = vunpack.c.l.b16 %v1227
        %v3899 = vunpack.c.l.b16 %v1228
        %v3900 = vunpack.c.l.b16 %v1229
        %v3901 = vunpack.c.l.b16 %v1230
        %v3902 = vunpack.c.l.b16 %v1231
        %v3903 = vunpack.c.l.b16 %v1232
        %v3904 = vunpack.c.l.b16 %v1233
        %v3905 = vunpack.c.l.b16 %v1234
        %v3906 = vunpack.c.l.b16 %v1235
        %v3907 = vunpack.c.l.b16 %v1236
        %v3908 = vunpack.c.l.b16 %v1237
        %v3909 = vunpack.c.l.b16 %v1238
        %v3910 = vunpack.c.l.b16 %v1239
        %v3911 = vunpack.c.l.b16 %v1240
        %v3912 = vunpack.c.l.b16 %v1241
        %v3913 = vunpack.c.l.b16 %v1242
        %v3914 = vunpack.c.l.b16 %v1243
        %v3915 = vunpack.c.l.b16 %v1244
        %v3916 = vunpack.c.l.b16 %v1245
        %v3917 = vunpack.c.l.b16 %v1246
        %v3918 = vunpack.c.l.b16 %v1247
        %v3919 = vunpack.c.l.b16 %v1248
        %v3920 = vunpack.c.l.b16 %v1249
        %v3921 = vunpack.c.l.b16 %v1250
        %v3922 = vunpack.c.l.b16 %v1251
        %v3923 = vunpack.c.l.b16 %v1252
        %v3924 = vunpack.c.l.b16 %v1253
        %v3925 = vunpack.c.l.b16 %v1254
        %v3926 = vunpack.c.l.b16 %v1255
        %v3927 = vunpack.c.l.b16 %v1256
        %v3928 = vunpack.c.l.b16 %v1257
        %v3929 = vunpack.c.l.b16 %v1258
        %v3930 = vunpack.c.l.b16 %v1259
        %v3931 = vunpack.c.l.b16 %v1260
        %v3932 = vunpack.c.l.b16 %v1261
        %v3933 = vunpack.c.l.b16 %v1262
        %v3934 = vunpack.c.l.b16 %v1263
        %v3935 = vunpack.c.l.b16 %v1264
        %v3936 = vunpack.c.l.b16 %v1265
        %v3937 = vunpack.c.l.b16 %v1266
        %v3938 = vunpack.c.l.b16 %v1267
        %v3939 = vunpack.c.l.b16 %v1268
        %v3940 = vunpack.c.l.b16 %v1269
        %v3941 = vunpack.c.l.b16 %v1270
        %v3942 = vunpack.c.l.b16 %v1271
        %v3943 = vunpack.c.l.b16 %v1272
        %v3944 = vunpack.c.l.b16 %v1273
        %v3945 = vunpack.c.l.b16 %v1274
        %v3946 = vunpack.c.l.b16 %v1275
        %v3947 = vunpack.c.l.b16 %v1276
        %v3948 = vunpack.c.l.b16 %v1277
        %v3949 = vunpack.c.l.b16 %v1278
        %v3950 = vunpack.c.l.b16 %v1279
        %v3951 = vunpack.c.l.b16 %v1280
        %v3952 = vunpack.c.l.b16 %v1281
        %v3953 = vunpack.c.l.b16 %v1282
        %v3954 = vunpack.c.l.b16 %v1283
        %v3955 = vunpack.c.l.b16 %v1284
        %v3956 = vunpack.c.l.b16 %v1285
        %v3957 = vunpack.c.l.b16 %v1286
        %v3958 = vunpack.c.l.b16 %v1287
        %v3959 = vunpack.c.l.b16 %v1288
        %v3960 = vunpack.c.l.b16 %v1289
        %v3961 = vunpack.c.l.b16 %v1290
        %v3962 = vunpack.c.l.b16 %v1291
        %v3963 = vunpack.c.l.b16 %v1292
        %v3964 = vunpack.c.l.b16 %v1293
        %v3965 = vunpack.c.l.b16 %v1294
        %v3966 = vunpack.c.l.b16 %v1295
        %v3967 = vunpack.c.l.b16 %v1296
        %v3968 = vunpack.c.l.b16 %v1297
        %v3969 = vunpack.c.l.b16 %v1298
        %v3970 = vunpack.c.l.b16 %v1299
        %v3971 = vunpack.c.l.b16 %v1300
        %v3972 = vunpack.c.l.b16 %v1301
        %v3973 = vunpack.c.l.b16 %v1302
        %v3974 = vunpack.c.l.b16 %v1303
        %v3975 = vunpack.c.l.b16 %v1304
        %v3976 = vunpack.c.l.b16 %v1305
        %v3977 = vunpack.c.l.b16 %v1306
        %v3978 = vunpack.c.l.b16 %v1307
        %v3979 = vunpack.c.l.b16 %v1308
        %v3980 = vunpack.c.l.b16 %v1309
        %v3981 = vunpack.c.l.b16 %v1310
        %v3982 = vunpack.c.l.b16 %v1311
        %v3983 = vunpack.c.l.b16 %v1312
        %v3984 = vunpack.c.l.b16 %v1313
        %v3985 = vunpack.c.l.b16 %v1314
        %v3986 = vunpack.c.l.b16 %v1315
        %v3987 = vunpack.c.l.b16 %v1316
        %v3988 = vunpack.c.l.b16 %v1317
        %v3989 = vunpack.c.l.b16 %v1318
        %v3990 = vunpack.c.l.b16 %v1319
        %v3991 = vunpack.c.l.b16 %v1320
        %v3992 = vunpack.c.l.b16 %v1321
        %v3993 = vunpack.c.l.b16 %v1322
        %v3994 = vunpack.c.l.b16 %v1323
        %v3995 = vunpack.c.l.b16 %v1324
        %v3996 = vunpack.c.l.b16 %v1325
        %v3997 = vunpack.c.l.b16 %v1326
        %v3998 = vunpack.c.l.b16 %v1327
        %v3999 = vunpack.c.l.b16 %v1328
        %v4000 = vunpack.c.l.b16 %v1329
        %v4001 = vunpack.c.l.b16 %v1330
        %v4002 = vunpack.c.l.b16 %v1331
        %v4003 = vunpack.c.l.b16 %v1332
        %v4004 = vunpack.c.l.b16 %v1333
        %v4005 = vunpack.c.l.b16 %v1334
        %v4006 = vunpack.c.l.b16 %v1335
        %v4007 = vunpack.c.l.b16 %v1336
        %v4008 = vunpack.c.l.b16 %v1337
        %v4009 = vunpack.c.l.b16 %v1338
        %v4010 = vunpack.c.l.b16 %v1339
        %v4011 = vunpack.c.l.b16 %v1340
        %v4012 = vunpack.c.l.b16 %v1341
        %v4013 = vunpack.c.l.b16 %v1342
        %v4014 = vunpack.c.l.b16 %v1343
        %v4015 = vunpack.c.l.b16 %v1344
        %v4016 = vunpack.c.l.b16 %v1345
        %v4017 = vunpack.c.l.b16 %v1346
        %v4018 = vunpack.c.l.b16 %v1347
        %v4019 = vunpack.c.l.b16 %v1348
        %v4020 = vunpack.c.l.b16 %v1349
        %v4021 = vunpack.c.l.b16 %v1350
        %v4022 = vunpack.c.l.b16 %v1351
        %v4023 = vunpack.c.l.b16 %v1352
        %v4024 = vunpack.c.l.b16 %v1353
        %v4025 = vunpack.c.l.b16 %v1354
        %v4026 = vunpack.c.l.b16 %v1355
        %v4027 = vunpack.c.l.b16 %v1356
        %v4028 = vunpack.c.l.b16 %v1357
        %v4029 = vunpack.c.l.b16 %v1358
        %v4030 = vunpack.c.l.b16 %v1359
        %v4031 = vunpack.c.l.b16 %v1360
        %v4032 = vunpack.c.l.b16 %v1361
        %v4033 = vunpack.c.l.b16 %v1362
        %v4034 = vunpack.c.l.b16 %v1363
        %v4035 = vunpack.c.l.b16 %v1364
        %v4036 = vunpack.c.l.b16 %v1365
        %v4037 = vunpack.c.l.b16 %v1366
        %v4038 = vunpack.c.l.b16 %v1367
        %v4039 = vunpack.c.l.b16 %v1368
        %v4040 = vunpack.c.l.b16 %v1369
        %v4041 = vunpack.c.l.b16 %v1370
        %v4042 = vunpack.c.l.b16 %v1371
        %v4043 = vunpack.c.l.b16 %v1372
        %v4044 = vunpack.c.l.b16 %v1373
        %v4045 = vunpack.c.l.b16 %v1374
        %v4046 = vunpack.c.l.b16 %v1375
        %v4047 = vunpack.c.l.b16 %v1376
        %v4048 = vunpack.c.l.b16 %v1377
        %v4049 = vunpack.c.l.b16 %v1378
        %v4050 = vunpack.c.l.b16 %v1379
        %v4051 = vunpack.c.l.b16 %v1380
        %v4052 = vunpack.c.l.b16 %v1381
        %v4053 = vunpack.c.l.b16 %v1382
        %v4054 = vunpack.c.l.b16 %v1383
        %v4055 = vunpack.c.l.b16 %v1384
        %v4056 = vunpack.c.l.b16 %v1385
        %v4057 = vunpack.c.l.b16 %v1386
        %v4058 = vunpack.c.l.b16 %v1387
        %v4059 = vunpack.c.l.b16 %v1388
        %v4060 = vunpack.c.l.b16 %v1389
        %v4061 = vunpack.c.l.b16 %v1390
        %v4062 = vunpack.c.l.b16 %v1391
        %v4063 = vunpack.c.l.b16 %v1392
        %v4064 = vunpack.c.l.b16 %v1393
        %v4065 = vunpack.c.l.b16 %v1394
        %v4066 = vunpack.c.l.b16 %v1395
        %v4067 = vunpack.c.l.b16 %v1396
        %v4068 = vunpack.c.l.b16 %v1397
        %v4069 = vunpack.c.l.b16 %v1398
        %v4070 = vunpack.c.l.b16 %v1399
        %v4071 = vunpack.c.l.b16 %v1400
        %v4072 = vunpack.c.l.b16 %v1401
        %v4073 = vunpack.c.l.b16 %v1402
        %v4074 = vunpack.c.l.b16 %v1403
        %v4075 = vunpack.c.l.b16 %v1404
        %v4076 = vunpack.c.l.b16 %v1405
        %v4077 = vunpack.c.l.b16 %v1406
        %v4078 = vunpack.c.l.b16 %v1407
        %v4079 = vunpack.c.l.b16 %v1408
        %v4080 = vunpack.c.l.b16 %v1409
        %v4081 = vunpack.c.l.b16 %v1410
        %v4082 = vunpack.c.l.b16 %v1411
        %v4083 = vunpack.c.l.b16 %v1412
        %v4084 = vunpack.c.l.b16 %v1413
        %v4085 = vunpack.c.l.b16 %v1414
        %v4086 = vunpack.c.l.b16 %v1415
        %v4087 = vunpack.c.l.b16 %v1416
        %v4088 = vunpack.c.l.b16 %v1417
        %v4089 = vunpack.c.l.b16 %v1418
        %v4090 = vunpack.c.l.b16 %v1419
        %v4091 = vunpack.c.l.b16 %v1420
        %v4092 = vunpack.c.l.b16 %v1421
        %v4093 = vunpack.c.l.b16 %v1422
        %v4094 = vunpack.c.l.b16 %v1423
        %v4095 = vunpack.c.l.b16 %v1424
        %v4096 = vunpack.c.l.b16 %v1425
        %v4097 = vunpack.c.l.b16 %v1426
        %v4098 = vunpack.c.l.b16 %v1427
        %v4099 = vunpack.c.l.b16 %v1428
        %v4100 = vunpack.c.l.b16 %v1429
        %v4101 = vunpack.c.l.b16 %v1430
        %v4102 = vunpack.c.l.b16 %v1431
        %v4103 = vunpack.c.l.b16 %v1432
        %v4104 = vunpack.c.l.b16 %v1433
        %v4105 = vunpack.c.l.b16 %v1434
        %v4106 = vunpack.c.l.b16 %v1435
        %v4107 = vunpack.c.l.b16 %v1436
        %v4108 = vunpack.c.l.b16 %v1437
        %v4109 = vunpack.c.l.b16 %v1438
        %v4110 = vunpack.c.l.b16 %v1439
        %v4111 = vunpack.c.l.b16 %v1440
        %v4112 = vunpack.c.l.b16 %v1441
        %v4113 = vunpack.c.l.b16 %v1442
        %v4114 = vunpack.c.l.b16 %v1443
        %v4115 = vunpack.c.l.b16 %v1444
        %v4116 = vunpack.c.l.b16 %v1445
        %v4117 = vunpack.c.l.b16 %v1446
        %v4118 = vunpack.c.l.b16 %v1447
        %v4119 = vunpack.c.l.b16 %v1448
        %v4120 = vunpack.c.l.b16 %v1449
        %v4121 = vunpack.c.l.b16 %v1450
        %v4122 = vunpack.c.l.b16 %v1451
        %v4123 = vunpack.c.l.b16 %v1452
        %v4124 = vunpack.c.l.b16 %v1453
        %v4125 = vunpack.c.l.b16 %v1454
        %v4126 = vunpack.c.l.b16 %v1455
        %v4127 = vunpack.c.l.b16 %v1456
        %v4128 = vunpack.c.l.b16 %v1457
        %v4129 = vunpack.c.l.b16 %v1458
        %v4130 = vunpack.c.l.b16 %v1459
        %v4131 = vunpack.c.l.b16 %v1460
        %v4132 = vunpack.c.l.b16 %v1461
        %v4133 = vunpack.c.l.b16 %v1462
        %v4134 = vunpack.c.l.b16 %v1463
        %v4135 = vunpack.c.l.b16 %v1464
        %v4136 = vunpack.c.l.b16 %v1465
        %v4137 = vunpack.c.l.b16 %v1466
        %v4138 = vunpack.c.l.b16 %v1467
        %v4139 = vunpack.c.l.b16 %v1468
        %v4140 = vunpack.c.l.b16 %v1469
        %v4141 = vunpack.c.l.b16 %v1470
        %v4142 = vunpack.c.l.b16 %v1471
        %v4143 = vunpack.c.l.b16 %v1472
        %v4144 = vunpack.c.l.b16 %v1473
        %v4145 = vunpack.c.l.b16 %v1474
        %v4146 = vunpack.c.l.b16 %v1475
        %v4147 = vunpack.c.l.b16 %v1476
        %v4148 = vunpack.c.l.b16 %v1477
        %v4149 = vunpack.c.l.b16 %v1478
        %v4150 = vunpack.c.l.b16 %v1479
        %v4151 = vunpack.c.l.b16 %v1480
        %v4152 = vunpack.c.l.b16 %v1481
        %v4153 = vunpack.c.l.b16 %v1482
        %v4154 = vunpack.c.l.b16 %v1483
        %v4155 = vunpack.c.l.b16 %v1484
        %v4156 = vunpack.c.l.b16 %v1485
        %v4157 = vunpack.c.l.b16 %v1486
        %v4158 = vunpack.c.l.b16 %v1487
        %v4159 = vunpack.c.l.b16 %v1488
        %v4160 = vunpack.c.l.b16 %v1489
        %v4161 = vunpack.c.l.b16 %v1490
        %v4162 = vunpack.c.l.b16 %v1491
        %v4163 = vunpack.c.l.b16 %v1492
        %v4164 = vunpack.c.l.b16 %v1493
        %v4165 = vunpack.c.l.b16 %v1494
        %v4166 = vunpack.c.l.b16 %v1495
        %v4167 = vunpack.c.l.b16 %v1496
        %v4168 = vunpack.c.l.b16 %v1497
        %v4169 = vunpack.c.l.b16 %v1498
        %v4170 = vunpack.c.l.b16 %v1499
        %v4171 = vunpack.c.l.b16 %v1500
        %v4172 = vunpack.c.l.b16 %v1501
        %v4173 = vunpack.c.l.b16 %v1502
        %v4174 = vunpack.c.l.b16 %v1503
        %v4175 = vunpack.c.l.b16 %v1504
        %v4176 = vunpack.c.l.b16 %v1505
        %v4177 = vunpack.c.l.b16 %v1506
        %v4178 = vunpack.c.l.b16 %v1507
        %v4179 = vunpack.c.l.b16 %v1508
        %v4180 = vunpack.c.l.b16 %v1509
        %v4181 = vunpack.c.l.b16 %v1510
        %v4182 = vunpack.c.l.b16 %v1511
        %v4183 = vunpack.c.l.b16 %v1512
        %v4184 = vunpack.c.l.b16 %v1513
        %v4185 = vunpack.c.l.b16 %v1514
        %v4186 = vunpack.c.l.b16 %v1515
        %v4187 = vunpack.c.l.b16 %v1516
        %v4188 = vunpack.c.l.b16 %v1517
        %v4189 = vunpack.c.l.b16 %v1518
        %v4190 = vunpack.c.l.b16 %v1519
        %v4191 = vunpack.c.l.b16 %v1520
        %v4192 = vunpack.c.l.b16 %v1521
        %v4193 = vunpack.c.l.b16 %v1522
        %v4194 = vunpack.c.l.b16 %v1523
        %v4195 = vunpack.c.l.b16 %v1524
        %v4196 = vunpack.c.l.b16 %v1525
        %v4197 = vunpack.c.l.b16 %v1526
        %v4198 = vunpack.c.l.b16 %v1527
        %v4199 = vunpack.c.l.b16 %v1528
        %v4200 = vunpack.c.l.b16 %v1529
        %v4201 = vunpack.c.l.b16 %v1530
        %v4202 = vunpack.c.l.b16 %v1531
        %v4203 = vunpack.c.l.b16 %v1532
        %v4204 = vunpack.c.l.b16 %v1533
        %v4205 = vunpack.c.l.b16 %v1534
        %v4206 = vunpack.c.l.b16 %v1535
        %v4207 = vunpack.c.l.b16 %v1536
        %v4208 = vunpack.c.l.b16 %v1537
        %v4209 = vunpack.c.l.b16 %v1538
        %v4210 = vunpack.c.l.b16 %v1539
        %v4211 = vunpack.c.l.b16 %v1540
        %v4212 = vunpack.c.l.b16 %v1541
        %v4213 = vunpack.c.l.b16 %v1542
        %v4214 = vunpack.c.l.b16 %v1543
        %v4215 = vunpack.c.l.b16 %v1544
        %v4216 = vunpack.c.l.b16 %v1545
        %v4217 = vunpack.c.l.b16 %v1546
        %v4218 = vunpack.c.l.b16 %v1547
        %v4219 = vunpack.c.l.b16 %v1548
        %v4220 = vunpack.c.l.b16 %v1549
        %v4221 = vunpack.c.l.b16 %v1550
        %v4222 = vunpack.c.l.b16 %v1551
        %v4223 = vunpack.c.l.b16 %v1552
        %v4224 = vunpack.c.l.b16 %v1553
        %v4225 = vunpack.c.l.b16 %v1554
        %v4226 = vunpack.c.l.b16 %v1555
        %v4227 = vunpack.c.l.b16 %v1556
        %v4228 = vunpack.c.l.b16 %v1557
        %v4229 = vunpack.c.l.b16 %v1558
        %v4230 = vunpack.c.l.b16 %v1559
        %v4231 = vunpack.c.l.b16 %v1560
        %v4232 = vunpack.c.l.b16 %v1561
        %v4233 = vunpack.c.l.b16 %v1562
        %v4234 = vunpack.c.l.b16 %v1563
        %v4235 = vunpack.c.l.b16 %v1564
        %v4236 = vunpack.c.l.b16 %v1565
        %v4237 = vunpack.c.l.b16 %v1566
        %v4238 = vunpack.c.l.b16 %v1567
        %v4239 = vunpack.c.l.b16 %v1568
        %v4240 = vunpack.c.l.b16 %v1569
        %v4241 = vunpack.c.l.b16 %v1570
        %v4242 = vunpack.c.l.b16 %v1571
        %v4243 = vunpack.c.l.b16 %v1572
        %v4244 = vunpack.c.l.b16 %v1573
        %v4245 = vunpack.c.l.b16 %v1574
        %v4246 = vunpack.c.l.b16 %v1575
        %v4247 = vunpack.c.l.b16 %v1576
        %v4248 = vunpack.c.l.b16 %v1577
        %v4249 = vunpack.c.l.b16 %v1578
        %v4250 = vunpack.c.l.b16 %v1579
        %v4251 = vunpack.c.l.b16 %v1580
        %v4252 = vunpack.c.l.b16 %v1581
        %v4253 = vunpack.c.l.b16 %v1582
        %v4254 = vunpack.c.l.b16 %v1583
        %v4255 = vunpack.c.l.b16 %v1584
        %v4256 = vunpack.c.l.b16 %v1585
        %v4257 = vunpack.c.l.b16 %v1586
        %v4258 = vunpack.c.l.b16 %v1587
        %v4259 = vunpack.c.l.b16 %v1588
        %v4260 = vunpack.c.l.b16 %v1589
        %v4261 = vunpack.c.l.b16 %v1590
        %v4262 = vunpack.c.l.b16 %v1591
        %v4263 = vunpack.c.l.b16 %v1592
        %v4264 = vunpack.c.l.b16 %v1593
        %v4265 = vunpack.c.l.b16 %v1594
        %v4266 = vunpack.c.l.b16 %v1595
        %v4267 = vunpack.c.l.b16 %v1596
        %v4268 = vunpack.c.l.b16 %v1597
        %v4269 = vunpack.c.l.b16 %v1598
        %v4270 = vunpack.c.l.b16 %v1599
        %v4271 = vunpack.c.l.b16 %v1600
        %v4272 = vunpack.c.l.b16 %v1601
        %v4273 = vunpack.c.l.b16 %v1602
        %v4274 = vunpack.c.l.b16 %v1603
        %v4275 = vunpack.c.l.b16 %v1604
        %v4276 = vunpack.c.l.b16 %v1605
        %v4277 = vunpack.c.l.b16 %v1606
        %v4278 = vunpack.c.l.b16 %v1607
        %v4279 = vunpack.c.l.b16 %v1608
        %v4280 = vunpack.c.l.b16 %v1609
        %v4281 = vunpack.c.l.b16 %v1610
        %v4282 = vunpack.c.l.b16 %v1611
        %v4283 = vunpack.c.l.b16 %v1612
        %v4284 = vunpack.c.l.b16 %v1613
        %v4285 = vunpack.c.l.b16 %v1614
        %v4286 = vunpack.c.l.b16 %v1615
        %v4287 = vunpack.c.l.b16 %v1616
        %v4288 = vunpack.c.l.b16 %v1617
        %v4289 = vunpack.c.l.b16 %v1618
        %v4290 = vunpack.c.l.b16 %v1619
        %v4291 = vunpack.c.l.b16 %v1620
        %v4292 = vunpack.c.l.b16 %v1621
        %v4293 = vunpack.c.l.b16 %v1622
        %v4294 = vunpack.c.l.b16 %v1623
        %v4295 = vunpack.c.l.b16 %v1624
        %v4296 = vunpack.c.l.b16 %v1625
        %v4297 = vunpack.c.l.b16 %v1626
        %v4298 = vunpack.c.l.b16 %v1627
        %v4299 = vunpack.c.l.b16 %v1628
        %v4300 = vunpack.c.l.b16 %v1629
        %v4301 = vunpack.c.l.b16 %v1630
        %v4302 = vunpack.c.l.b16 %v1631
        %v4303 = vunpack.c.l.b16 %v1632
        %v4304 = vunpack.c.l.b16 %v1633
        %v4305 = vunpack.c.l.b16 %v1634
        %v4306 = vunpack.c.l.b16 %v1635
        %v4307 = vunpack.c.l.b16 %v1636
        %v4308 = vunpack.c.l.b16 %v1637
        %v4309 = vunpack.c.l.b16 %v1638
        %v4310 = vunpack.c.l.b16 %v1639
        %v4311 = vunpack.c.l.b16 %v1640
        %v4312 = vunpack.c.l.b16 %v1641
        %v4313 = vunpack.c.l.b16 %v1642
        %v4314 = vunpack.c.l.b16 %v1643
        %v4315 = vunpack.c.l.b16 %v1644
        %v4316 = vunpack.c.l.b16 %v1645
        %v4317 = vunpack.c.l.b16 %v1646
        %v4318 = vunpack.c.l.b16 %v1647
        %v4319 = vunpack.c.l.b16 %v1648
        %v4320 = vunpack.c.l.b16 %v1649
        %v4321 = vunpack.c.l.b16 %v1650
        %v4322 = vunpack.c.l.b16 %v1651
        %v4323 = vunpack.c.l.b16 %v1652
        %v4324 = vunpack.c.l.b16 %v1653
        %v4325 = vunpack.c.l.b16 %v1654
        %v4326 = vunpack.c.l.b16 %v1655
        %v4327 = vunpack.c.l.b16 %v1656
        %v4328 = vunpack.c.l.b16 %v1657
        %v4329 = vunpack.c.l.b16 %v1658
        %v4330 = vunpack.c.l.b16 %v1659
        %v4331 = vunpack.c.l.b16 %v1660
        %v4332 = vunpack.c.l.b16 %v1661
        %v4333 = vunpack.c.l.b16 %v1662
        %v4334 = vunpack.c.l.b16 %v1663
        %v4335 = vunpack.c.l.b16 %v1664
        %v4336 = vunpack.c.l.b16 %v1665
        %v4337 = vunpack.c.l.b16 %v1666
        %v4338 = vunpack.c.l.b16 %v1667
        %v4339 = vunpack.c.l.b16 %v1668
        %v4340 = vunpack.c.l.b16 %v1669
        %v4341 = vunpack.c.l.b16 %v1670
        %v4342 = vunpack.c.l.b16 %v1671
        %v4343 = vunpack.c.l.b16 %v1672
        %v4344 = vunpack.c.l.b16 %v1673
        %v4345 = vunpack.c.l.b16 %v1674
        %v4346 = vunpack.c.l.b16 %v1675
        %v4347 = vunpack.c.l.b16 %v1676
        %v4348 = vunpack.c.l.b16 %v1677
        %v4349 = vunpack.c.l.b16 %v1678
        %v4350 = vunpack.c.l.b16 %v1679
        %v4351 = vunpack.c.l.b16 %v1680
        %v4352 = vunpack.c.l.b16 %v1681
        %v4353 = vunpack.c.l.b16 %v1682
        %v4354 = vunpack.c.l.b16 %v1683
        %v4355 = vunpack.c.l.b16 %v1684
        %v4356 = vunpack.c.l.b16 %v1685
        %v4357 = vunpack.c.l.b16 %v1686
        %v4358 = vunpack.c.l.b16 %v1687
        %v4359 = vunpack.c.l.b16 %v1688
        %v4360 = vunpack.c.l.b16 %v1689
        %v4361 = vunpack.c.l.b16 %v1690
        %v4362 = vunpack.c.l.b16 %v1691
        %v4363 = vunpack.c.l.b16 %v1692
        %v4364 = vunpack.c.l.b16 %v1693
        %v4365 = vunpack.c.l.b16 %v1694
        %v4366 = vunpack.c.l.b16 %v1695
        %v4367 = vunpack.c.l.b16 %v1696
        %v4368 = vunpack.c.l.b16 %v1697
        %v4369 = vunpack.c.l.b16 %v1698
        %v4370 = vunpack.c.l.b16 %v1699
        %v4371 = vunpack.c.l.b16 %v1700
        %v4372 = vunpack.c.l.b16 %v1701
        %v4373 = vunpack.c.l.b16 %v1702
        %v4374 = vunpack.c.l.b16 %v1703
        %v4375 = vunpack.c.l.b16 %v1704
        %v4376 = vunpack.c.l.b16 %v1705
        %v4377 = vunpack.c.l.b16 %v1706
        %v4378 = vunpack.c.l.b16 %v1707
        %v4379 = vunpack.c.l.b16 %v1708
        %v4380 = vunpack.c.l.b16 %v1709
        %v4381 = vunpack.c.l.b16 %v1710
        %v4382 = vunpack.c.l.b16 %v1711
        %v4383 = vunpack.c.l.b16 %v1712
        %v4384 = vunpack.c.l.b16 %v1713
        %v4385 = vunpack.c.l.b16 %v1714
        %v4386 = vunpack.c.l.b16 %v1715
        %v4387 = vunpack.c.l.b16 %v1716
        %v4388 = vunpack.c.l.b16 %v1717
        %v4389 = vunpack.c.l.b16 %v1718
        %v4390 = vunpack.c.l.b16 %v1719
        %v4391 = vunpack.c.l.b16 %v1720
        %v4392 = vunpack.c.l.b16 %v1721
        %v4393 = vunpack.c.l.b16 %v1722
        %v4394 = vunpack.c.l.b16 %v1723
        %v4395 = vunpack.c.l.b16 %v1724
        %v4396 = vunpack.c.l.b16 %v1725
        %v4397 = vunpack.c.l.b16 %v1726
        %v4398 = vunpack.c.l.b16 %v1727
        %v4399 = vunpack.c.l.b16 %v1728
        %v4400 = vunpack.c.l.b16 %v1729
        %v4401 = vunpack.c.l.b16 %v1730
        %v4402 = vunpack.c.l.b16 %v1731
        %v4403 = vunpack.c.l.b16 %v1732
        %v4404 = vunpack.c.l.b16 %v1733
        %v4405 = vunpack.c.l.b16 %v1734
        %v4406 = vunpack.c.l.b16 %v1735
        %v4407 = vunpack.c.l.b16 %v1736
        %v4408 = vunpack.c.l.b16 %v1737
        %v4409 = vunpack.c.l.b16 %v1738
        %v4410 = vunpack.c.l.b16 %v1739
        %v4411 = vunpack.c.l.b16 %v1740
        %v4412 = vunpack.c.l.b16 %v1741
        %v4413 = vunpack.c.l.b16 %v1742
        %v4414 = vunpack.c.l.b16 %v1743
        %v4415 = vunpack.c.l.b16 %v1744
        %v4416 = vunpack.c.l.b16 %v1745
        %v4417 = vunpack.c.l.b16 %v1746
        %v4418 = vunpack.c.l.b16 %v1747
        %v4419 = vunpack.c.l.b16 %v1748
        %v4420 = vunpack.c.l.b16 %v1749
        %v4421 = vunpack.c.l.b16 %v1750
        %v4422 = vunpack.c.l.b16 %v1751
        %v4423 = vunpack.c.l.b16 %v1752
        %v4424 = vunpack.c.l.b16 %v1753
        %v4425 = vunpack.c.l.b16 %v1754
        %v4426 = vunpack.c.l.b16 %v1755
        %v4427 = vunpack.c.l.b16 %v1756
        %v4428 = vunpack.c.l.b16 %v1757
        %v4429 = vunpack.c.l.b16 %v1758
        %v4430 = vunpack.c.l.b16 %v1759
        %v4431 = vunpack.c.l.b16 %v1760
        %v4432 = vunpack.c.l.b16 %v1761
        %v4433 = vunpack.c.l.b16 %v1762
        %v4434 = vunpack.c.l.b16 %v1763
        %v4435 = vunpack.c.l.b16 %v1764
        %v4436 = vunpack.c.l.b16 %v1765
        %v4437 = vunpack.c.l.b16 %v1766
        %v4438 = vunpack.c.l.b16 %v1767
        %v4439 = vunpack.c.l.b16 %v1768
        %v4440 = vunpack.c.l.b16 %v1769
        %v4441 = vunpack.c.l.b16 %v1770
        %v4442 = vunpack.c.l.b16 %v1771
        %v4443 = vunpack.c.l.b16 %v1772
        %v4444 = vunpack.c.l.b16 %v1773
        %v4445 = vunpack.c.l.b16 %v1774
        %v4446 = vunpack.c.l.b16 %v1775
        %v4447 = vunpack.c.l.b16 %v1776
        %v4448 = vunpack.c.l.b16 %v1777
        %v4449 = vunpack.c.l.b16 %v1778
        %v4450 = vunpack.c.l.b16 %v1779
        %v4451 = vunpack.c.l.b16 %v1780
        %v4452 = vunpack.c.l.b16 %v1781
        %v4453 = vunpack.c.l.b16 %v1782
        %v4454 = vunpack.c.l.b16 %v1783
        %v4455 = vunpack.c.l.b16 %v1784
        %v4456 = vunpack.c.l.b16 %v1785
        %v4457 = vunpack.c.l.b16 %v1786
        %v4458 = vunpack.c.l.b16 %v1787
        %v4459 = vunpack.c.l.b16 %v1788
        %v4460 = vunpack.c.l.b16 %v1789
        %v4461 = vunpack.c.l.b16 %v1790
        %v4462 = vunpack.c.l.b16 %v1791
        %v4463 = vunpack.c.l.b16 %v1792
        %v4464 = vunpack.c.l.b16 %v1793
        %v4465 = vunpack.c.l.b16 %v1794
        %v4466 = vunpack.c.l.b16 %v1795
        %v4467 = vunpack.c.l.b16 %v1796
        %v4468 = vunpack.c.l.b16 %v1797
        %v4469 = vunpack.c.l.b16 %v1798
        %v4470 = vunpack.c.l.b16 %v1799
        %v4471 = vunpack.c.l.b16 %v1800
        %v4472 = vunpack.c.l.b16 %v1801
        %v4473 = vunpack.c.l.b16 %v1802
        %v4474 = vunpack.c.l.b16 %v1803
        %v4475 = vunpack.c.l.b16 %v1804
        %v4476 = vunpack.c.l.b16 %v1805
        %v4477 = vunpack.c.l.b16 %v1806
        %v4478 = vunpack.c.l.b16 %v1807
        %v4479 = vunpack.c.l.b16 %v1808
        %v4480 = vunpack.c.l.b16 %v1809
        %v4481 = vunpack.c.l.b16 %v1810
        %v4482 = vunpack.c.l.b16 %v1811
        %v4483 = vunpack.c.l.b16 %v1812
        %v4484 = vunpack.c.l.b16 %v1813
        %v4485 = vunpack.c.l.b16 %v1814
        %v4486 = vunpack.c.l.b16 %v1815
        %v4487 = vunpack.c.l.b16 %v1816
        %v4488 = vunpack.c.l.b16 %v1817
        %v4489 = vpack.c.b16 %v3338, %v3337
        %v4490 = vpack.c.b16 %v3340, %v3339
        %v4491 = vpack.c.b16 %v3342, %v3341
        %v4492 = vpack.c.b16 %v3344, %v3343
        %v4493 = vpack.c.b16 %v3346, %v3345
        %v4494 = vpack.c.b16 %v3348, %v3347
        %v4495 = vpack.c.b16 %v3350, %v3349
        %v4496 = vpack.c.b16 %v3352, %v3351
        %v4497 = vpack.c.b16 %v3354, %v3353
        %v4498 = vpack.c.b16 %v3356, %v3355
        %v4499 = vpack.c.b16 %v3358, %v3357
        %v4500 = vpack.c.b16 %v3360, %v3359
        %v4501 = vpack.c.b16 %v3362, %v3361
        %v4502 = vpack.c.b16 %v3364, %v3363
        %v4503 = vpack.c.b16 %v3366, %v3365
        %v4504 = vpack.c.b16 %v3368, %v3367
        %v4505 = vpack.c.b16 %v3370, %v3369
        %v4506 = vpack.c.b16 %v3372, %v3371
        %v4507 = vpack.c.b16 %v3374, %v3373
        %v4508 = vpack.c.b16 %v3376, %v3375
        %v4509 = vpack.c.b16 %v3378, %v3377
        %v4510 = vpack.c.b16 %v3380, %v3379
        %v4511 = vpack.c.b16 %v3382, %v3381
        %v4512 = vpack.c.b16 %v3384, %v3383
        %v4513 = vpack.c.b16 %v3386, %v3385
        %v4514 = vpack.c.b16 %v3388, %v3387
        %v4515 = vpack.c.b16 %v3390, %v3389
        %v4516 = vpack.c.b16 %v3392, %v3391
        %v4517 = vpack.c.b16 %v3394, %v3393
        %v4518 = vpack.c.b16 %v3396, %v3395
        %v4519 = vpack.c.b16 %v3398, %v3397
        %v4520 = vpack.c.b16 %v3400, %v3399
        %v4521 = vpack.c.b16 %v3402, %v3401
        %v4522 = vpack.c.b16 %v3404, %v3403
        %v4523 = vpack.c.b16 %v3406, %v3405
        %v4524 = vpack.c.b16 %v3408, %v3407
        %v4525 = vpack.c.b16 %v3410, %v3409
        %v4526 = vpack.c.b16 %v3412, %v3411
        %v4527 = vpack.c.b16 %v3414, %v3413
        %v4528 = vpack.c.b16 %v3416, %v3415
        %v4529 = vpack.c.b16 %v3418, %v3417
        %v4530 = vpack.c.b16 %v3420, %v3419
        %v4531 = vpack.c.b16 %v3422, %v3421
        %v4532 = vpack.c.b16 %v3424, %v3423
        %v4533 = vpack.c.b16 %v3426, %v3425
        %v4534 = vpack.c.b16 %v3428, %v3427
        %v4535 = vpack.c.b16 %v3430, %v3429
        %v4536 = vpack.c.b16 %v3432, %v3431
        %v4537 = vpack.c.b16 %v3434, %v3433
        %v4538 = vpack.c.b16 %v3436, %v3435
        %v4539 = vpack.c.b16 %v3438, %v3437
        %v4540 = vpack.c.b16 %v3440, %v3439
        %v4541 = vpack.c.b16 %v3442, %v3441
        %v4542 = vpack.c.b16 %v3444, %v3443
        %v4543 = vpack.c.b16 %v3446, %v3445
        %v4544 = vpack.c.b16 %v3448, %v3447
        %v4545 = vpack.c.b16 %v3450, %v3449
        %v4546 = vpack.c.b16 %v3452, %v3451
        %v4547 = vpack.c.b16 %v3454, %v3453
        %v4548 = vpack.c.b16 %v3456, %v3455
        %v4549 = vpack.c.b16 %v3458, %v3457
        %v4550 = vpack.c.b16 %v3460, %v3459
        %v4551 = vpack.c.b16 %v3462, %v3461
        %v4552 = vpack.c.b16 %v3464, %v3463
        %v4553 = vpack.c.b16 %v3466, %v3465
        %v4554 = vpack.c.b16 %v3468, %v3467
        %v4555 = vpack.c.b16 %v3470, %v3469
        %v4556 = vpack.c.b16 %v3472, %v3471
        %v4557 = vpack.c.b16 %v3474, %v3473
        %v4558 = vpack.c.b16 %v3476, %v3475
        %v4559 = vpack.c.b16 %v3478, %v3477
        %v4560 = vpack.c.b16 %v3480, %v3479
        %v4561 = vpack.c.b16 %v3482, %v3481
        %v4562 = vpack.c.b16 %v3484, %v3483
        %v4563 = vpack.c.b16 %v3486, %v3485
        %v4564 = vpack.c.b16 %v3488, %v3487
        %v4565 = vpack.c.b16 %v3490, %v3489
        %v4566 = vpack.c.b16 %v3492, %v3491
        %v4567 = vpack.c.b16 %v3494, %v3493
        %v4568 = vpack.c.b16 %v3496, %v3495
        %v4569 = vpack.c.b16 %v3498, %v3497
        %v4570 = vpack.c.b16 %v3500, %v3499
        %v4571 = vpack.c.b16 %v3502, %v3501
        %v4572 = vpack.c.b16 %v3504, %v3503
        %v4573 = vpack.c.b16 %v3506, %v3505
        %v4574 = vpack.c.b16 %v3508, %v3507
        %v4575 = vpack.c.b16 %v3510, %v3509
        %v4576 = vpack.c.b16 %v3512, %v3511
        %v4577 = vpack.c.b16 %v3514, %v3513
        %v4578 = vpack.c.b16 %v3516, %v3515
        %v4579 = vpack.c.b16 %v3518, %v3517
        %v4580 = vpack.c.b16 %v3520, %v3519
        %v4581 = vpack.c.b16 %v3522, %v3521
        %v4582 = vpack.c.b16 %v3524, %v3523
        %v4583 = vpack.c.b16 %v3526, %v3525
        %v4584 = vpack.c.b16 %v3528, %v3527
        %v4585 = vpack.c.b16 %v3530, %v3529
        %v4586 = vpack.c.b16 %v3532, %v3531
        %v4587 = vpack.c.b16 %v3534, %v3533
        %v4588 = vpack.c.b16 %v3536, %v3535
        %v4589 = vpack.c.b16 %v3538, %v3537
        %v4590 = vpack.c.b16 %v3540, %v3539
        %v4591 = vpack.c.b16 %v3542, %v3541
        %v4592 = vpack.c.b16 %v3544, %v3543
        %v4593 = vpack.c.b16 %v3546, %v3545
        %v4594 = vpack.c.b16 %v3548, %v3547
        %v4595 = vpack.c.b16 %v3550, %v3549
        %v4596 = vpack.c.b16 %v3552, %v3551
        %v4597 = vpack.c.b16 %v3554, %v3553
        %v4598 = vpack.c.b16 %v3556, %v3555
        %v4599 = vpack.c.b16 %v3558, %v3557
        %v4600 = vpack.c.b16 %v3560, %v3559
        %v4601 = vpack.c.b16 %v3562, %v3561
        %v4602 = vpack.c.b16 %v3564, %v3563
        %v4603 = vpack.c.b16 %v3566, %v3565
        %v4604 = vpack.c.b16 %v3568, %v3567
        %v4605 = vpack.c.b16 %v3570, %v3569
        %v4606 = vpack.c.b16 %v3572, %v3571
        %v4607 = vpack.c.b16 %v3574, %v3573
        %v4608 = vpack.c.b16 %v3576, %v3575
        %v4609 = vpack.c.b16 %v3578, %v3577
        %v4610 = vpack.c.b16 %v3580, %v3579
        %v4611 = vpack.c.b16 %v3582, %v3581
        %v4612 = vpack.c.b16 %v3584, %v3583
        %v4613 = vpack.c.b16 %v3586, %v3585
        %v4614 = vpack.c.b16 %v3588, %v3587
        %v4615 = vpack.c.b16 %v3590, %v3589
        %v4616 = vpack.c.b16 %v3592, %v3591
        %v4617 = vpack.c.b16 %v3594, %v3593
        %v4618 = vpack.c.b16 %v3596, %v3595
        %v4619 = vpack.c.b16 %v3598, %v3597
        %v4620 = vpack.c.b16 %v3600, %v3599
        %v4621 = vpack.c.b16 %v3602, %v3601
        %v4622 = vpack.c.b16 %v3604, %v3603
        %v4623 = vpack.c.b16 %v3606, %v3605
        %v4624 = vpack.c.b16 %v3608, %v3607
        %v4625 = vpack.c.b16 %v3610, %v3609
        %v4626 = vpack.c.b16 %v3612, %v3611
        %v4627 = vpack.c.b16 %v3614, %v3613
        %v4628 = vpack.c.b16 %v3616, %v3615
        %v4629 = vpack.c.b16 %v3618, %v3617
        %v4630 = vpack.c.b16 %v3620, %v3619
        %v4631 = vpack.c.b16 %v3622, %v3621
        %v4632 = vpack.c.b16 %v3624, %v3623
        %v4633 = vpack.c.b16 %v3626, %v3625
        %v4634 = vpack.c.b16 %v3628, %v3627
        %v4635 = vpack.c.b16 %v3630, %v3629
        %v4636 = vpack.c.b16 %v3632, %v3631
        %v4637 = vpack.c.b16 %v3634, %v3633
        %v4638 = vpack.c.b16 %v3636, %v3635
        %v4639 = vpack.c.b16 %v3638, %v3637
        %v4640 = vpack.c.b16 %v3640, %v3639
        %v4641 = vpack.c.b16 %v3642, %v3641
        %v4642 = vpack.c.b16 %v3644, %v3643
        %v4643 = vpack.c.b16 %v3646, %v3645
        %v4644 = vpack.c.b16 %v3648, %v3647
        %v4645 = vpack.c.b16 %v3650, %v3649
        %v4646 = vpack.c.b16 %v3652, %v3651
        %v4647 = vpack.c.b16 %v3654, %v3653
        %v4648 = vpack.c.b16 %v3656, %v3655
        %v4649 = vpack.c.b16 %v3658, %v3657
        %v4650 = vpack.c.b16 %v3660, %v3659
        %v4651 = vpack.c.b16 %v3662, %v3661
        %v4652 = vpack.c.b16 %v3664, %v3663
        %v4653 = vpack.c.b16 %v3666, %v3665
        %v4654 = vpack.c.b16 %v3668, %v3667
        %v4655 = vpack.c.b16 %v3670, %v3669
        %v4656 = vpack.c.b16 %v3672, %v3671
        %v4657 = vpack.c.b16 %v3674, %v3673
        %v4658 = vpack.c.b16 %v3676, %v3675
        %v4659 = vpack.c.b16 %v3678, %v3677
        %v4660 = vpack.c.b16 %v3680, %v3679
        %v4661 = vpack.c.b16 %v3682, %v3681
        %v4662 = vpack.c.b16 %v3684, %v3683
        %v4663 = vpack.c.b16 %v3686, %v3685
        %v4664 = vpack.c.b16 %v3688, %v3687
        %v4665 = vpack.c.b16 %v3690, %v3689
        %v4666 = vpack.c.b16 %v3692, %v3691
        %v4667 = vpack.c.b16 %v3694, %v3693
        %v4668 = vpack.c.b16 %v3696, %v3695
        %v4669 = vpack.c.b16 %v3698, %v3697
        %v4670 = vpack.c.b16 %v3700, %v3699
        %v4671 = vpack.c.b16 %v3702, %v3701
        %v4672 = vpack.c.b16 %v3704, %v3703
        %v4673 = vpack.c.b16 %v3706, %v3705
        %v4674 = vpack.c.b16 %v3708, %v3707
        %v4675 = vpack.c.b16 %v3710, %v3709
        %v4676 = vpack.c.b16 %v3712, %v3711
        %v4677 = vpack.c.b16 %v3714, %v3713
        %v4678 = vpack.c.b16 %v3716, %v3715
        %v4679 = vpack.c.b16 %v3718, %v3717
        %v4680 = vpack.c.b16 %v3720, %v3719
        %v4681 = vpack.c.b16 %v3722, %v3721
        %v4682 = vpack.c.b16 %v3724, %v3723
        %v4683 = vpack.c.b16 %v3726, %v3725
        %v4684 = vpack.c.b16 %v3728, %v3727
        %v4685 = vpack.c.b16 %v3730, %v3729
        %v4686 = vpack.c.b16 %v3732, %v3731
        %v4687 = vpack.c.b16 %v3734, %v3733
        %v4688 = vpack.c.b16 %v3736, %v3735
        %v4689 = vpack.c.b16 %v3738, %v3737
        %v4690 = vpack.c.b16 %v3740, %v3739
        %v4691 = vpack.c.b16 %v3742, %v3741
        %v4692 = vpack.c.b16 %v3744, %v3743
        %v4693 = vpack.c.b16 %v3746, %v3745
        %v4694 = vpack.c.b16 %v3748, %v3747
        %v4695 = vpack.c.b16 %v3750, %v3749
        %v4696 = vpack.c.b16 %v3752, %v3751
        %v4697 = vpack.c.b16 %v3754, %v3753
        %v4698 = vpack.c.b16 %v3756, %v3755
        %v4699 = vpack.c.b16 %v3758, %v3757
        %v4700 = vpack.c.b16 %v3760, %v3759
        %v4701 = vpack.c.b16 %v3762, %v3761
        %v4702 = vpack.c.b16 %v3764, %v3763
        %v4703 = vpack.c.b16 %v3766, %v3765
        %v4704 = vpack.c.b16 %v3768, %v3767
        %v4705 = vpack.c.b16 %v3770, %v3769
        %v4706 = vpack.c.b16 %v3772, %v3771
        %v4707 = vpack.c.b16 %v3774, %v3773
        %v4708 = vpack.c.b16 %v3776, %v3775
        %v4709 = vpack.c.b16 %v3778, %v3777
        %v4710 = vpack.c.b16 %v3780, %v3779
        %v4711 = vpack.c.b16 %v3782, %v3781
        %v4712 = vpack.c.b16 %v3784, %v3783
        %v4713 = vpack.c.b16 %v3786, %v3785
        %v4714 = vpack.c.b16 %v3788, %v3787
        %v4715 = vpack.c.b16 %v3790, %v3789
        %v4716 = vpack.c.b16 %v3792, %v3791
        %v4717 = vpack.c.b16 %v3794, %v3793
        %v4718 = vpack.c.b16 %v3796, %v3795
        %v4719 = vpack.c.b16 %v3798, %v3797
        %v4720 = vpack.c.b16 %v3800, %v3799
        %v4721 = vpack.c.b16 %v3802, %v3801
        %v4722 = vpack.c.b16 %v3804, %v3803
        %v4723 = vpack.c.b16 %v3806, %v3805
        %v4724 = vpack.c.b16 %v3808, %v3807
        %v4725 = vpack.c.b16 %v3810, %v3809
        %v4726 = vpack.c.b16 %v3812, %v3811
        %v4727 = vpack.c.b16 %v3814, %v3813
        %v4728 = vpack.c.b16 %v3816, %v3815
        %v4729 = vpack.c.b16 %v3818, %v3817
        %v4730 = vpack.c.b16 %v3820, %v3819
        %v4731 = vpack.c.b16 %v3822, %v3821
        %v4732 = vpack.c.b16 %v3824, %v3823
        %v4733 = vpack.c.b16 %v3826, %v3825
        %v4734 = vpack.c.b16 %v3828, %v3827
        %v4735 = vpack.c.b16 %v3830, %v3829
        %v4736 = vpack.c.b16 %v3832, %v3831
        %v4737 = vpack.c.b16 %v3834, %v3833
        %v4738 = vpack.c.b16 %v3836, %v3835
        %v4739 = vpack.c.b16 %v3838, %v3837
        %v4740 = vpack.c.b16 %v3840, %v3839
        %v4741 = vpack.c.b16 %v3842, %v3841
        %v4742 = vpack.c.b16 %v3844, %v3843
        %v4743 = vpack.c.b16 %v3846, %v3845
        %v4744 = vpack.c.b16 %v3848, %v3847
        %v4745 = vpack.c.b16 %v3850, %v3849
        %v4746 = vpack.c.b16 %v3852, %v3851
        %v4747 = vpack.c.b16 %v3854, %v3853
        %v4748 = vpack.c.b16 %v3856, %v3855
        %v4749 = vpack.c.b16 %v3858, %v3857
        %v4750 = vpack.c.b16 %v3860, %v3859
        %v4751 = vpack.c.b16 %v3862, %v3861
        %v4752 = vpack.c.b16 %v3864, %v3863
        %v4753 = vpack.c.b16 %v3866, %v3865
        %v4754 = vpack.c.b16 %v3868, %v3867
        %v4755 = vpack.c.b16 %v3870, %v3869
        %v4756 = vpack.c.b16 %v3872, %v3871
        %v4757 = vpack.c.b16 %v3874, %v3873
        %v4758 = vpack.c.b16 %v3876, %v3875
        %v4759 = vpack.c.b16 %v3878, %v3877
        %v4760 = vpack.c.b16 %v3880, %v3879
        %v4761 = vpack.c.b16 %v3882, %v3881
        %v4762 = vpack.c.b16 %v3884, %v3883
        %v4763 = vpack.c.b16 %v3886, %v3885
        %v4764 = vpack.c.b16 %v3888, %v3887
        %v4765 = vpack.c.b16 %v3890, %v3889
        %v4766 = vpack.c.b16 %v3892, %v3891
        %v4767 = vpack.c.b16 %v3894, %v3893
        %v4768 = vpack.c.b16 %v3896, %v3895
        %v4769 = vpack.c.b16 %v3898, %v3897
        %v4770 = vpack.c.b16 %v3900, %v3899
        %v4771 = vpack.c.b16 %v3902, %v3901
        %v4772 = vpack.c.b16 %v3904, %v3903
        %v4773 = vpack.c.b16 %v3906, %v3905
        %v4774 = vpack.c.b16 %v3908, %v3907
        %v4775 = vpack.c.b16 %v3910, %v3909
        %v4776 = vpack.c.b16 %v3912, %v3911
        %v4777 = vpack.c.b16 %v3914, %v3913
        %v4778 = vpack.c.b16 %v3916, %v3915
        %v4779 = vpack.c.b16 %v3918, %v3917
        %v4780 = vpack.c.b16 %v3920, %v3919
        %v4781 = vpack.c.b16 %v3922, %v3921
        %v4782 = vpack.c.b16 %v3924, %v3923
        %v4783 = vpack.c.b16 %v3926, %v3925
        %v4784 = vpack.c.b16 %v3928, %v3927
        %v4785 = vpack.c.b16 %v3930, %v3929
        %v4786 = vpack.c.b16 %v3932, %v3931
        %v4787 = vpack.c.b16 %v3934, %v3933
        %v4788 = vpack.c.b16 %v3936, %v3935
        %v4789 = vpack.c.b16 %v3938, %v3937
        %v4790 = vpack.c.b16 %v3940, %v3939
        %v4791 = vpack.c.b16 %v3942, %v3941
        %v4792 = vpack.c.b16 %v3944, %v3943
        %v4793 = vpack.c.b16 %v3946, %v3945
        %v4794 = vpack.c.b16 %v3948, %v3947
        %v4795 = vpack.c.b16 %v3950, %v3949
        %v4796 = vpack.c.b16 %v3952, %v3951
        %v4797 = vpack.c.b16 %v3954, %v3953
        %v4798 = vpack.c.b16 %v3956, %v3955
        %v4799 = vpack.c.b16 %v3958, %v3957
        %v4800 = vpack.c.b16 %v3960, %v3959
        %v4801 = vpack.c.b16 %v3962, %v3961
        %v4802 = vpack.c.b16 %v3964, %v3963
        %v4803 = vpack.c.b16 %v3966, %v3965
        %v4804 = vpack.c.b16 %v3968, %v3967
        %v4805 = vpack.c.b16 %v3970, %v3969
        %v4806 = vpack.c.b16 %v3972, %v3971
        %v4807 = vpack.c.b16 %v3974, %v3973
        %v4808 = vpack.c.b16 %v3976, %v3975
        %v4809 = vpack.c.b16 %v3978, %v3977
        %v4810 = vpack.c.b16 %v3980, %v3979
        %v4811 = vpack.c.b16 %v3982, %v3981
        %v4812 = vpack.c.b16 %v3984, %v3983
        %v4813 = vpack.c.b16 %v3986, %v3985
        %v4814 = vpack.c.b16 %v3988, %v3987
        %v4815 = vpack.c.b16 %v3990, %v3989
        %v4816 = vpack.c.b16 %v3992, %v3991
        %v4817 = vpack.c.b16 %v3994, %v3993
        %v4818 = vpack.c.b16 %v3996, %v3995
        %v4819 = vpack.c.b16 %v3998, %v3997
        %v4820 = vpack.c.b16 %v4000, %v3999
        %v4821 = vpack.c.b16 %v4002, %v4001
        %v4822 = vpack.c.b16 %v4004, %v4003
        %v4823 = vpack.c.b16 %v4006, %v4005
        %v4824 = vpack.c.b16 %v4008, %v4007
        %v4825 = vpack.c.b16 %v4010, %v4009
        %v4826 = vpack.c.b16 %v4012, %v4011
        %v4827 = vpack.c.b16 %v4014, %v4013
        %v4828 = vpack.c.b16 %v4016, %v4015
        %v4829 = vpack.c.b16 %v4018, %v4017
        %v4830 = vpack.c.b16 %v4020, %v4019
        %v4831 = vpack.c.b16 %v4022, %v4021
        %v4832 = vpack.c.b16 %v4024, %v4023
        %v4833 = vpack.c.b16 %v4026, %v4025
        %v4834 = vpack.c.b16 %v4028, %v4027
        %v4835 = vpack.c.b16 %v4030, %v4029
        %v4836 = vpack.c.b16 %v4032, %v4031
        %v4837 = vpack.c.b16 %v4034, %v4033
        %v4838 = vpack.c.b16 %v4036, %v4035
        %v4839 = vpack.c.b16 %v4038, %v4037
        %v4840 = vpack.c.b16 %v4040, %v4039
        %v4841 = vpack.c.b16 %v4042, %v4041
        %v4842 = vpack.c.b16 %v4044, %v4043
        %v4843 = vpack.c.b16 %v4046, %v4045
        %v4844 = vpack.c.b16 %v4048, %v4047
        %v4845 = vpack.c.b16 %v4050, %v4049
        %v4846 = vpack.c.b16 %v4052, %v4051
        %v4847 = vpack.c.b16 %v4054, %v4053
        %v4848 = vpack.c.b16 %v4056, %v4055
        %v4849 = vpack.c.b16 %v4058, %v4057
        %v4850 = vpack.c.b16 %v4060, %v4059
        %v4851 = vpack.c.b16 %v4062, %v4061
        %v4852 = vpack.c.b16 %v4064, %v4063
        %v4853 = vpack.c.b16 %v4066, %v4065
        %v4854 = vpack.c.b16 %v4068, %v4067
        %v4855 = vpack.c.b16 %v4070, %v4069
        %v4856 = vpack.c.b16 %v4072, %v4071
        %v4857 = vpack.c.b16 %v4074, %v4073
        %v4858 = vpack.c.b16 %v4076, %v4075
        %v4859 = vpack.c.b16 %v4078, %v4077
        %v4860 = vpack.c.b16 %v4080, %v4079
        %v4861 = vpack.c.b16 %v4082, %v4081
        %v4862 = vpack.c.b16 %v4084, %v4083
        %v4863 = vpack.c.b16 %v4086, %v4085
        %v4864 = vpack.c.b16 %v4088, %v4087
        %v4865 = vpack.c.b16 %v4090, %v4089
        %v4866 = vpack.c.b16 %v4092, %v4091
        %v4867 = vpack.c.b16 %v4094, %v4093
        %v4868 = vpack.c.b16 %v4096, %v4095
        %v4869 = vpack.c.b16 %v4098, %v4097
        %v4870 = vpack.c.b16 %v4100, %v4099
        %v4871 = vpack.c.b16 %v4102, %v4101
        %v4872 = vpack.c.b16 %v4104, %v4103
        %v4873 = vpack.c.b16 %v4106, %v4105
        %v4874 = vpack.c.b16 %v4108, %v4107
        %v4875 = vpack.c.b16 %v4110, %v4109
        %v4876 = vpack.c.b16 %v4112, %v4111
        %v4877 = vpack.c.b16 %v4114, %v4113
        %v4878 = vpack.c.b16 %v4116, %v4115
        %v4879 = vpack.c.b16 %v4118, %v4117
        %v4880 = vpack.c.b16 %v4120, %v4119
        %v4881 = vpack.c.b16 %v4122, %v4121
        %v4882 = vpack.c.b16 %v4124, %v4123
        %v4883 = vpack.c.b16 %v4126, %v4125
        %v4884 = vpack.c.b16 %v4128, %v4127
        %v4885 = vpack.c.b16 %v4130, %v4129
        %v4886 = vpack.c.b16 %v4132, %v4131
        %v4887 = vpack.c.b16 %v4134, %v4133
        %v4888 = vpack.c.b16 %v4136, %v4135
        %v4889 = vpack.c.b16 %v4138, %v4137
        %v4890 = vpack.c.b16 %v4140, %v4139
        %v4891 = vpack.c.b16 %v4142, %v4141
        %v4892 = vpack.c.b16 %v4144, %v4143
        %v4893 = vpack.c.b16 %v4146, %v4145
        %v4894 = vpack.c.b16 %v4148, %v4147
        %v4895 = vpack.c.b16 %v4150, %v4149
        %v4896 = vpack.c.b16 %v4152, %v4151
        %v4897 = vpack.c.b16 %v4154, %v4153
        %v4898 = vpack.c.b16 %v4156, %v4155
        %v4899 = vpack.c.b16 %v4158, %v4157
        %v4900 = vpack.c.b16 %v4160, %v4159
        %v4901 = vpack.c.b16 %v4162, %v4161
        %v4902 = vpack.c.b16 %v4164, %v4163
        %v4903 = vpack.c.b16 %v4166, %v4165
        %v4904 = vpack.c.b16 %v4168, %v4167
        %v4905 = vpack.c.b16 %v4170, %v4169
        %v4906 = vpack.c.b16 %v4172, %v4171
        %v4907 = vpack.c.b16 %v4174, %v4173
        %v4908 = vpack.c.b16 %v4176, %v4175
        %v4909 = vpack.c.b16 %v4178, %v4177
        %v4910 = vpack.c.b16 %v4180, %v4179
        %v4911 = vpack.c.b16 %v4182, %v4181
        %v4912 = vpack.c.b16 %v4184, %v4183
        %v4913 = vpack.c.b16 %v4186, %v4185
        %v4914 = vpack.c.b16 %v4188, %v4187
        %v4915 = vpack.c.b16 %v4190, %v4189
        %v4916 = vpack.c.b16 %v4192, %v4191
        %v4917 = vpack.c.b16 %v4194, %v4193
        %v4918 = vpack.c.b16 %v4196, %v4195
        %v4919 = vpack.c.b16 %v4198, %v4197
        %v4920 = vpack.c.b16 %v4200, %v4199
        %v4921 = vpack.c.b16 %v4202, %v4201
        %v4922 = vpack.c.b16 %v4204, %v4203
        %v4923 = vpack.c.b16 %v4206, %v4205
        %v4924 = vpack.c.b16 %v4208, %v4207
        %v4925 = vpack.c.b16 %v4210, %v4209
        %v4926 = vpack.c.b16 %v4212, %v4211
        %v4927 = vpack.c.b16 %v4214, %v4213
        %v4928 = vpack.c.b16 %v4216, %v4215
        %v4929 = vpack.c.b16 %v4218, %v4217
        %v4930 = vpack.c.b16 %v4220, %v4219
        %v4931 = vpack.c.b16 %v4222, %v4221
        %v4932 = vpack.c.b16 %v4224, %v4223
        %v4933 = vpack.c.b16 %v4226, %v4225
        %v4934 = vpack.c.b16 %v4228, %v4227
        %v4935 = vpack.c.b16 %v4230, %v4229
        %v4936 = vpack.c.b16 %v4232, %v4231
        %v4937 = vpack.c.b16 %v4234, %v4233
        %v4938 = vpack.c.b16 %v4236, %v4235
        %v4939 = vpack.c.b16 %v4238, %v4237
        %v4940 = vpack.c.b16 %v4240, %v4239
        %v4941 = vpack.c.b16 %v4242, %v4241
        %v4942 = vpack.c.b16 %v4244, %v4243
        %v4943 = vpack.c.b16 %v4246, %v4245
        %v4944 = vpack.c.b16 %v4248, %v4247
        %v4945 = vpack.c.b16 %v4250, %v4249
        %v4946 = vpack.c.b16 %v4252, %v4251
        %v4947 = vpack.c.b16 %v4254, %v4253
        %v4948 = vpack.c.b16 %v4256, %v4255
        %v4949 = vpack.c.b16 %v4258, %v4257
        %v4950 = vpack.c.b16 %v4260, %v4259
        %v4951 = vpack.c.b16 %v4262, %v4261
        %v4952 = vpack.c.b16 %v4264, %v4263
        %v4953 = vpack.c.b16 %v4266, %v4265
        %v4954 = vpack.c.b16 %v4268, %v4267
        %v4955 = vpack.c.b16 %v4270, %v4269
        %v4956 = vpack.c.b16 %v4272, %v4271
        %v4957 = vpack.c.b16 %v4274, %v4273
        %v4958 = vpack.c.b16 %v4276, %v4275
        %v4959 = vpack.c.b16 %v4278, %v4277
        %v4960 = vpack.c.b16 %v4280, %v4279
        %v4961 = vpack.c.b16 %v4282, %v4281
        %v4962 = vpack.c.b16 %v4284, %v4283
        %v4963 = vpack.c.b16 %v4286, %v4285
        %v4964 = vpack.c.b16 %v4288, %v4287
        %v4965 = vpack.c.b16 %v4290, %v4289
        %v4966 = vpack.c.b16 %v4292, %v4291
        %v4967 = vpack.c.b16 %v4294, %v4293
        %v4968 = vpack.c.b16 %v4296, %v4295
        %v4969 = vpack.c.b16 %v4298, %v4297
        %v4970 = vpack.c.b16 %v4300, %v4299
        %v4971 = vpack.c.b16 %v4302, %v4301
        %v4972 = vpack.c.b16 %v4304, %v4303
        %v4973 = vpack.c.b16 %v4306, %v4305
        %v4974 = vpack.c.b16 %v4308, %v4307
        %v4975 = vpack.c.b16 %v4310, %v4309
        %v4976 = vpack.c.b16 %v4312, %v4311
        %v4977 = vpack.c.b16 %v4314, %v4313
        %v4978 = vpack.c.b16 %v4316, %v4315
        %v4979 = vpack.c.b16 %v4318, %v4317
        %v4980 = vpack.c.b16 %v4320, %v4319
        %v4981 = vpack.c.b16 %v4322, %v4321
        %v4982 = vpack.c.b16 %v4324, %v4323
        %v4983 = vpack.c.b16 %v4326, %v4325
        %v4984 = vpack.c.b16 %v4328, %v4327
        %v4985 = vpack.c.b16 %v4330, %v4329
        %v4986 = vpack.c.b16 %v4332, %v4331
        %v4987 = vpack.c.b16 %v4334, %v4333
        %v4988 = vpack.c.b16 %v4336, %v4335
        %v4989 = vpack.c.b16 %v4338, %v4337
        %v4990 = vpack.c.b16 %v4340, %v4339
        %v4991 = vpack.c.b16 %v4342, %v4341
        %v4992 = vpack.c.b16 %v4344, %v4343
        %v4993 = vpack.c.b16 %v4346, %v4345
        %v4994 = vpack.c.b16 %v4348, %v4347
        %v4995 = vpack.c.b16 %v4350, %v4349
        %v4996 = vpack.c.b16 %v4352, %v4351
        %v4997 = vpack.c.b16 %v4354, %v4353
        %v4998 = vpack.c.b16 %v4356, %v4355
        %v4999 = vpack.c.b16 %v4358, %v4357
        %v5000 = vpack.c.b16 %v4360, %v4359
        %v5001 = vpack.c.b16 %v4362, %v4361
        %v5002 = vpack.c.b16 %v4364, %v4363
        %v5003 = vpack.c.b16 %v4366, %v4365
        %v5004 = vpack.c.b16 %v4368, %v4367
        %v5005 = vpack.c.b16 %v4370, %v4369
        %v5006 = vpack.c.b16 %v4372, %v4371
        %v5007 = vpack.c.b16 %v4374, %v4373
        %v5008 = vpack.c.b16 %v4376, %v4375
        %v5009 = vpack.c.b16 %v4378, %v4377
        %v5010 = vpack.c.b16 %v4380, %v4379
        %v5011 = vpack.c.b16 %v4382, %v4381
        %v5012 = vpack.c.b16 %v4384, %v4383
        %v5013 = vpack.c.b16 %v4386, %v4385
        %v5014 = vpack.c.b16 %v4388, %v4387
        %v5015 = vpack.c.b16 %v4390, %v4389
        %v5016 = vpack.c.b16 %v4392, %v4391
        %v5017 = vpack.c.b16 %v4394, %v4393
        %v5018 = vpack.c.b16 %v4396, %v4395
        %v5019 = vpack.c.b16 %v4398, %v4397
        %v5020 = vpack.c.b16 %v4400, %v4399
        %v5021 = vpack.c.b16 %v4402, %v4401
        %v5022 = vpack.c.b16 %v4404, %v4403
        %v5023 = vpack.c.b16 %v4406, %v4405
        %v5024 = vpack.c.b16 %v4408, %v4407
        %v5025 = vpack.c.b16 %v4410, %v4409
        %v5026 = vpack.c.b16 %v4412, %v4411
        %v5027 = vpack.c.b16 %v4414, %v4413
        %v5028 = vpack.c.b16 %v4416, %v4415
        %v5029 = vpack.c.b16 %v4418, %v4417
        %v5030 = vpack.c.b16 %v4420, %v4419
        %v5031 = vpack.c.b16 %v4422, %v4421
        %v5032 = vpack.c.b16 %v4424, %v4423
        %v5033 = vpack.c.b16 %v4426, %v4425
        %v5034 = vpack.c.b16 %v4428, %v4427
        %v5035 = vpack.c.b16 %v4430, %v4429
        %v5036 = vpack.c.b16 %v4432, %v4431
        %v5037 = vpack.c.b16 %v4434, %v4433
        %v5038 = vpack.c.b16 %v4436, %v4435
        %v5039 = vpack.c.b16 %v4438, %v4437
        %v5040 = vpack.c.b16 %v4440, %v4439
        %v5041 = vpack.c.b16 %v4442, %v4441
        %v5042 = vpack.c.b16 %v4444, %v4443
        %v5043 = vpack.c.b16 %v4446, %v4445
        %v5044 = vpack.c.b16 %v4448, %v4447
        %v5045 = vpack.c.b16 %v4450, %v4449
        %v5046 = vpack.c.b16 %v4452, %v4451
        %v5047 = vpack.c.b16 %v4454, %v4453
        %v5048 = vpack.c.b16 %v4456, %v4455
        %v5049 = vpack.c.b16 %v4458, %v4457
        %v5050 = vpack.c.b16 %v4460, %v4459
        %v5051 = vpack.c.b16 %v4462, %v4461
        %v5052 = vpack.c.b16 %v4464, %v4463
        %v5053 = vpack.c.b16 %v4466, %v4465
        %v5054 = vpack.c.b16 %v4468, %v4467
        %v5055 = vpack.c.b16 %v4470, %v4469
        %v5056 = vpack.c.b16 %v4472, %v4471
        %v5057 = vpack.c.b16 %v4474, %v4473
        %v5058 = vpack.c.b16 %v4476, %v4475
        %v5059 = vpack.c.b16 %v4478, %v4477
        %v5060 = vpack.c.b16 %v4480, %v4479
        %v5061 = vpack.c.b16 %v4482, %v4481
        %v5062 = vpack.c.b16 %v4484, %v4483
        %v5063 = vpack.c.b16 %v4486, %v4485
        %v5064 = vpack.c.b16 %v4488, %v4487
        %5641 = vmatprep.subr.bf16.mxu0 0
        %5642 = vmatpush1.bf16.msra.mxu0 %v4489
        %5643 = vmatprep.subr.bf16.mxu0 0
        %5644 = vmatpush1.bf16.msra.mxu0 %v4490
        %5645 = vmatprep.subr.bf16.mxu0 0
        %5646 = vmatpush1.bf16.msra.mxu0 %v4491
        %5647 = vmatprep.subr.bf16.mxu0 0
        %5648 = vmatpush1.bf16.msra.mxu0 %v4492
        %5649 = vmatprep.subr.bf16.mxu0 0
        %5650 = vmatpush1.bf16.msra.mxu0 %v4493
        %5651 = vmatprep.subr.bf16.mxu0 0
        %5652 = vmatpush1.bf16.msra.mxu0 %v4494
        %5653 = vmatprep.subr.bf16.mxu0 0
        %5654 = vmatpush1.bf16.msra.mxu0 %v4495
        %5655 = vmatprep.subr.bf16.mxu0 0
        %5656 = vmatpush1.bf16.msra.mxu0 %v4496
        %5657 = vmatprep.subr.bf16.mxu0 0
        %5658 = vmatpush1.bf16.msra.mxu0 %v4497
        %5659 = vmatprep.subr.bf16.mxu0 0
        %5660 = vmatpush1.bf16.msra.mxu0 %v4498
        %5661 = vmatprep.subr.bf16.mxu0 0
        %5662 = vmatpush1.bf16.msra.mxu0 %v4499
        %5663 = vmatprep.subr.bf16.mxu0 0
        %5664 = vmatpush1.bf16.msra.mxu0 %v4500
        %5665 = vmatprep.subr.bf16.mxu0 0
        %5666 = vmatpush1.bf16.msra.mxu0 %v4501
        %5667 = vmatprep.subr.bf16.mxu0 0
        %5668 = vmatpush1.bf16.msra.mxu0 %v4502
        %5669 = vmatprep.subr.bf16.mxu0 0
        %5670 = vmatpush1.bf16.msra.mxu0 %v4503
        %5671 = vmatprep.subr.bf16.mxu0 0
        %5672 = vmatpush1.bf16.msra.mxu0 %v4504
        %5673 = vmatprep.mubr.bf16.mxu0 %v2042
        %5674 = vmatmul.mubr.bf16.gmra.mrb[0].mxu0 %v2041
        %v5675 = vpop.f32.mrb[0].mxu0
        %v5676 = vadd.f32 %v1823, %v5675
        %v5677 = vpop.f32.mrb[0].mxu0
        %v5678 = vpop.f32.mrb[0].mxu0
        %v5679 = vadd.f32 %v1823, %v5678
        %v5680 = vpop.f32.mrb[0].mxu0
        %5681 = vdwg.mxu0
        %5682 = vmatprep.subr.bf16.mxu0 0
        %5683 = vmatpush1.bf16.msra.mxu0 %v4505
        %5684 = vmatprep.subr.bf16.mxu0 0
        %5685 = vmatpush1.bf16.msra.mxu0 %v4506
        %5686 = vmatprep.subr.bf16.mxu0 0
        %5687 = vmatpush1.bf16.msra.mxu0 %v4507
        %5688 = vmatprep.subr.bf16.mxu0 0
        %5689 = vmatpush1.bf16.msra.mxu0 %v4508
        %5690 = vmatprep.subr.bf16.mxu0 0
        %5691 = vmatpush1.bf16.msra.mxu0 %v4509
        %5692 = vmatprep.subr.bf16.mxu0 0
        %5693 = vmatpush1.bf16.msra.mxu0 %v4510
        %5694 = vmatprep.subr.bf16.mxu0 0
        %5695 = vmatpush1.bf16.msra.mxu0 %v4511
        %5696 = vmatprep.subr.bf16.mxu0 0
        %5697 = vmatpush1.bf16.msra.mxu0 %v4512
        %5698 = vmatprep.subr.bf16.mxu0 0
        %5699 = vmatpush1.bf16.msra.mxu0 %v4513
        %5700 = vmatprep.subr.bf16.mxu0 0
        %5701 = vmatpush1.bf16.msra.mxu0 %v4514
        %5702 = vmatprep.subr.bf16.mxu0 0
        %5703 = vmatpush1.bf16.msra.mxu0 %v4515
        %5704 = vmatprep.subr.bf16.mxu0 0
        %5705 = vmatpush1.bf16.msra.mxu0 %v4516
        %5706 = vmatprep.subr.bf16.mxu0 0
        %5707 = vmatpush1.bf16.msra.mxu0 %v4517
        %5708 = vmatprep.subr.bf16.mxu0 0
        %5709 = vmatpush1.bf16.msra.mxu0 %v4518
        %5710 = vmatprep.subr.bf16.mxu0 0
        %5711 = vmatpush1.bf16.msra.mxu0 %v4519
        %5712 = vmatprep.subr.bf16.mxu0 0
        %5713 = vmatpush1.bf16.msra.mxu0 %v4520
        %5714 = vmatprep.mubr.bf16.mxu0 %v2044
        %5715 = vmatmul.mubr.bf16.gmra.mrb[0].mxu0 %v2043
        %v5716 = vpop.f32.mrb[0].mxu0
        %v5717 = vadd.f32 %v5676, %v5716
        %v5718 = vpop.f32.mrb[0].mxu0
        %v5719 = vpop.f32.mrb[0].mxu0
        %v5720 = vadd.f32 %v5679, %v5719
        %v5721 = vpop.f32.mrb[0].mxu0
        %5722 = vdwg.mxu0
        %5723 = vmatprep.subr.bf16.mxu0 0
        %5724 = vmatpush1.bf16.msra.mxu0 %v4521
        %5725 = vmatprep.subr.bf16.mxu0 0
        %5726 = vmatpush1.bf16.msra.mxu0 %v4522
        %5727 = vmatprep.subr.bf16.mxu0 0
        %5728 = vmatpush1.bf16.msra.mxu0 %v4523
        %5729 = vmatprep.subr.bf16.mxu0 0
        %5730 = vmatpush1.bf16.msra.mxu0 %v4524
        %5731 = vmatprep.subr.bf16.mxu0 0
        %5732 = vmatpush1.bf16.msra.mxu0 %v4525
        %5733 = vmatprep.subr.bf16.mxu0 0
        %5734 = vmatpush1.bf16.msra.mxu0 %v4526
        %5735 = vmatprep.subr.bf16.mxu0 0
        %5736 = vmatpush1.bf16.msra.mxu0 %v4527
        %5737 = vmatprep.subr.bf16.mxu0 0
        %5738 = vmatpush1.bf16.msra.mxu0 %v4528
        %5739 = vmatprep.subr.bf16.mxu0 0
        %5740 = vmatpush1.bf16.msra.mxu0 %v4529
        %5741 = vmatprep.subr.bf16.mxu0 0
        %5742 = vmatpush1.bf16.msra.mxu0 %v4530
        %5743 = vmatprep.subr.bf16.mxu0 0
        %5744 = vmatpush1.bf16.msra.mxu0 %v4531
        %5745 = vmatprep.subr.bf16.mxu0 0
        %5746 = vmatpush1.bf16.msra.mxu0 %v4532
        %5747 = vmatprep.subr.bf16.mxu0 0
        %5748 = vmatpush1.bf16.msra.mxu0 %v4533
        %5749 = vmatprep.subr.bf16.mxu0 0
        %5750 = vmatpush1.bf16.msra.mxu0 %v4534
        %5751 = vmatprep.subr.bf16.mxu0 0
        %5752 = vmatpush1.bf16.msra.mxu0 %v4535
        %5753 = vmatprep.subr.bf16.mxu0 0
        %5754 = vmatpush1.bf16.msra.mxu0 %v4536
        %5755 = vmatprep.mubr.bf16.mxu0 %v2046
        %5756 = vmatmul.mubr.bf16.gmra.mrb[0].mxu0 %v2045
        %v5757 = vpop.f32.mrb[0].mxu0
        %v5758 = vadd.f32 %v5717, %v5757
        %v5759 = vpop.f32.mrb[0].mxu0
        %v5760 = vpop.f32.mrb[0].mxu0
        %v5761 = vadd.f32 %v5720, %v5760
        %v5762 = vpop.f32.mrb[0].mxu0
        %5763 = vdwg.mxu0
        %5764 = vmatprep.subr.bf16.mxu0 0
        %5765 = vmatpush1.bf16.msra.mxu0 %v4537
        %5766 = vmatprep.subr.bf16.mxu0 0
        %5767 = vmatpush1.bf16.msra.mxu0 %v4538
        %5768 = vmatprep.subr.bf16.mxu0 0
        %5769 = vmatpush1.bf16.msra.mxu0 %v4539
        %5770 = vmatprep.subr.bf16.mxu0 0
        %5771 = vmatpush1.bf16.msra.mxu0 %v4540
        %5772 = vmatprep.subr.bf16.mxu0 0
        %5773 = vmatpush1.bf16.msra.mxu0 %v4541
        %5774 = vmatprep.subr.bf16.mxu0 0
        %5775 = vmatpush1.bf16.msra.mxu0 %v4542
        %5776 = vmatprep.subr.bf16.mxu0 0
        %5777 = vmatpush1.bf16.msra.mxu0 %v4543
        %5778 = vmatprep.subr.bf16.mxu0 0
        %5779 = vmatpush1.bf16.msra.mxu0 %v4544
        %5780 = vmatprep.subr.bf16.mxu0 0
        %5781 = vmatpush1.bf16.msra.mxu0 %v4545
        %5782 = vmatprep.subr.bf16.mxu0 0
        %5783 = vmatpush1.bf16.msra.mxu0 %v4546
        %5784 = vmatprep.subr.bf16.mxu0 0
        %5785 = vmatpush1.bf16.msra.mxu0 %v4547
        %5786 = vmatprep.subr.bf16.mxu0 0
        %5787 = vmatpush1.bf16.msra.mxu0 %v4548
        %5788 = vmatprep.subr.bf16.mxu0 0
        %5789 = vmatpush1.bf16.msra.mxu0 %v4549
        %5790 = vmatprep.subr.bf16.mxu0 0
        %5791 = vmatpush1.bf16.msra.mxu0 %v4550
        %5792 = vmatprep.subr.bf16.mxu0 0
        %5793 = vmatpush1.bf16.msra.mxu0 %v4551
        %5794 = vmatprep.subr.bf16.mxu0 0
        %5795 = vmatpush1.bf16.msra.mxu0 %v4552
        %5796 = vmatprep.mubr.bf16.mxu0 %v2048
        %5797 = vmatmul.mubr.bf16.gmra.mrb[0].mxu0 %v2047
        %v5798 = vpop.f32.mrb[0].mxu0
        %v5799 = vadd.f32 %v5758, %v5798
        %v5800 = vpop.f32.mrb[0].mxu0
        %v5801 = vpop.f32.mrb[0].mxu0
        %v5802 = vadd.f32 %v5761, %v5801
        %v5803 = vpop.f32.mrb[0].mxu0
        %5804 = vdwg.mxu0
        %5805 = vmatprep.subr.bf16.mxu0 0
        %5806 = vmatpush1.bf16.msra.mxu0 %v4553
        %5807 = vmatprep.subr.bf16.mxu0 0
        %5808 = vmatpush1.bf16.msra.mxu0 %v4554
        %5809 = vmatprep.subr.bf16.mxu0 0
        %5810 = vmatpush1.bf16.msra.mxu0 %v4555
        %5811 = vmatprep.subr.bf16.mxu0 0
        %5812 = vmatpush1.bf16.msra.mxu0 %v4556
        %5813 = vmatprep.subr.bf16.mxu0 0
        %5814 = vmatpush1.bf16.msra.mxu0 %v4557
        %5815 = vmatprep.subr.bf16.mxu0 0
        %5816 = vmatpush1.bf16.msra.mxu0 %v4558
        %5817 = vmatprep.subr.bf16.mxu0 0
        %5818 = vmatpush1.bf16.msra.mxu0 %v4559
        %5819 = vmatprep.subr.bf16.mxu0 0
        %5820 = vmatpush1.bf16.msra.mxu0 %v4560
        %5821 = vmatprep.subr.bf16.mxu0 0
        %5822 = vmatpush1.bf16.msra.mxu0 %v4561
        %5823 = vmatprep.subr.bf16.mxu0 0
        %5824 = vmatpush1.bf16.msra.mxu0 %v4562
        %5825 = vmatprep.subr.bf16.mxu0 0
        %5826 = vmatpush1.bf16.msra.mxu0 %v4563
        %5827 = vmatprep.subr.bf16.mxu0 0
        %5828 = vmatpush1.bf16.msra.mxu0 %v4564
        %5829 = vmatprep.subr.bf16.mxu0 0
        %5830 = vmatpush1.bf16.msra.mxu0 %v4565
        %5831 = vmatprep.subr.bf16.mxu0 0
        %5832 = vmatpush1.bf16.msra.mxu0 %v4566
        %5833 = vmatprep.subr.bf16.mxu0 0
        %5834 = vmatpush1.bf16.msra.mxu0 %v4567
        %5835 = vmatprep.subr.bf16.mxu0 0
        %5836 = vmatpush1.bf16.msra.mxu0 %v4568
        %5837 = vmatprep.mubr.bf16.mxu0 %v2050
        %5838 = vmatmul.mubr.bf16.gmra.mrb[0].mxu0 %v2049
        %v5839 = vpop.f32.mrb[0].mxu0
        %v5840 = vadd.f32 %v5799, %v5839
        %v5841 = vpop.f32.mrb[0].mxu0
        %v5842 = vpop.f32.mrb[0].mxu0
        %v5843 = vadd.f32 %v5802, %v5842
        %v5844 = vpop.f32.mrb[0].mxu0
        %5845 = vdwg.mxu0
        %5846 = vmatprep.subr.bf16.mxu0 0
        %5847 = vmatpush1.bf16.msra.mxu0 %v4569
        %5848 = vmatprep.subr.bf16.mxu0 0
        %5849 = vmatpush1.bf16.msra.mxu0 %v4570
        %5850 = vmatprep.subr.bf16.mxu0 0
        %5851 = vmatpush1.bf16.msra.mxu0 %v4571
        %5852 = vmatprep.subr.bf16.mxu0 0
        %5853 = vmatpush1.bf16.msra.mxu0 %v4572
        %5854 = vmatprep.subr.bf16.mxu0 0
        %5855 = vmatpush1.bf16.msra.mxu0 %v4573
        %5856 = vmatprep.subr.bf16.mxu0 0
        %5857 = vmatpush1.bf16.msra.mxu0 %v4574
        %5858 = vmatprep.subr.bf16.mxu0 0
        %5859 = vmatpush1.bf16.msra.mxu0 %v4575
        %5860 = vmatprep.subr.bf16.mxu0 0
        %5861 = vmatpush1.bf16.msra.mxu0 %v4576
        %5862 = vmatprep.subr.bf16.mxu0 0
        %5863 = vmatpush1.bf16.msra.mxu0 %v4577
        %5864 = vmatprep.subr.bf16.mxu0 0
        %5865 = vmatpush1.bf16.msra.mxu0 %v4578
        %5866 = vmatprep.subr.bf16.mxu0 0
        %5867 = vmatpush1.bf16.msra.mxu0 %v4579
        %5868 = vmatprep.subr.bf16.mxu0 0
        %5869 = vmatpush1.bf16.msra.mxu0 %v4580
        %5870 = vmatprep.subr.bf16.mxu0 0
        %5871 = vmatpush1.bf16.msra.mxu0 %v4581
        %5872 = vmatprep.subr.bf16.mxu0 0
        %5873 = vmatpush1.bf16.msra.mxu0 %v4582
        %5874 = vmatprep.subr.bf16.mxu0 0
        %5875 = vmatpush1.bf16.msra.mxu0 %v4583
        %5876 = vmatprep.subr.bf16.mxu0 0
        %5877 = vmatpush1.bf16.msra.mxu0 %v4584
        %5878 = vmatprep.mubr.bf16.mxu0 %v2052
        %5879 = vmatmul.mubr.bf16.gmra.mrb[0].mxu0 %v2051
        %v5880 = vpop.f32.mrb[0].mxu0
        %v5881 = vadd.f32 %v5840, %v5880
        %v5882 = vpop.f32.mrb[0].mxu0
        %v5883 = vpop.f32.mrb[0].mxu0
        %v5884 = vadd.f32 %v5843, %v5883
        %v5885 = vpop.f32.mrb[0].mxu0
        %5886 = vdwg.mxu0
        %5887 = vmatprep.subr.bf16.mxu0 0
        %5888 = vmatpush1.bf16.msra.mxu0 %v4585
        %5889 = vmatprep.subr.bf16.mxu0 0
        %5890 = vmatpush1.bf16.msra.mxu0 %v4586
        %5891 = vmatprep.subr.bf16.mxu0 0
        %5892 = vmatpush1.bf16.msra.mxu0 %v4587
        %5893 = vmatprep.subr.bf16.mxu0 0
        %5894 = vmatpush1.bf16.msra.mxu0 %v4588
        %5895 = vmatprep.subr.bf16.mxu0 0
        %5896 = vmatpush1.bf16.msra.mxu0 %v4589
        %5897 = vmatprep.subr.bf16.mxu0 0
        %5898 = vmatpush1.bf16.msra.mxu0 %v4590
        %5899 = vmatprep.subr.bf16.mxu0 0
        %5900 = vmatpush1.bf16.msra.mxu0 %v4591
        %5901 = vmatprep.subr.bf16.mxu0 0
        %5902 = vmatpush1.bf16.msra.mxu0 %v4592
        %5903 = vmatprep.subr.bf16.mxu0 0
        %5904 = vmatpush1.bf16.msra.mxu0 %v4593
        %5905 = vmatprep.subr.bf16.mxu0 0
        %5906 = vmatpush1.bf16.msra.mxu0 %v4594
        %5907 = vmatprep.subr.bf16.mxu0 0
        %5908 = vmatpush1.bf16.msra.mxu0 %v4595
        %5909 = vmatprep.subr.bf16.mxu0 0
        %5910 = vmatpush1.bf16.msra.mxu0 %v4596
        %5911 = vmatprep.subr.bf16.mxu0 0
        %5912 = vmatpush1.bf16.msra.mxu0 %v4597
        %5913 = vmatprep.subr.bf16.mxu0 0
        %5914 = vmatpush1.bf16.msra.mxu0 %v4598
        %5915 = vmatprep.subr.bf16.mxu0 0
        %5916 = vmatpush1.bf16.msra.mxu0 %v4599
        %5917 = vmatprep.subr.bf16.mxu0 0
        %5918 = vmatpush1.bf16.msra.mxu0 %v4600
        %5919 = vmatprep.mubr.bf16.mxu0 %v2054
        %5920 = vmatmul.mubr.bf16.gmra.mrb[0].mxu0 %v2053
        %v5921 = vpop.f32.mrb[0].mxu0
        %v5922 = vadd.f32 %v5881, %v5921
        %v5923 = vpop.f32.mrb[0].mxu0
        %v5924 = vpop.f32.mrb[0].mxu0
        %v5925 = vadd.f32 %v5884, %v5924
        %v5926 = vpop.f32.mrb[0].mxu0
        %5927 = vdwg.mxu0
        %5928 = vmatprep.subr.bf16.mxu0 0
        %5929 = vmatpush1.bf16.msra.mxu0 %v4601
        %5930 = vmatprep.subr.bf16.mxu0 0
        %5931 = vmatpush1.bf16.msra.mxu0 %v4602
        %5932 = vmatprep.subr.bf16.mxu0 0
        %5933 = vmatpush1.bf16.msra.mxu0 %v4603
        %5934 = vmatprep.subr.bf16.mxu0 0
        %5935 = vmatpush1.bf16.msra.mxu0 %v4604
        %5936 = vmatprep.subr.bf16.mxu0 0
        %5937 = vmatpush1.bf16.msra.mxu0 %v4605
        %5938 = vmatprep.subr.bf16.mxu0 0
        %5939 = vmatpush1.bf16.msra.mxu0 %v4606
        %5940 = vmatprep.subr.bf16.mxu0 0
        %5941 = vmatpush1.bf16.msra.mxu0 %v4607
        %5942 = vmatprep.subr.bf16.mxu0 0
        %5943 = vmatpush1.bf16.msra.mxu0 %v4608
        %5944 = vmatprep.subr.bf16.mxu0 0
        %5945 = vmatpush1.bf16.msra.mxu0 %v4609
        %5946 = vmatprep.subr.bf16.mxu0 0
        %5947 = vmatpush1.bf16.msra.mxu0 %v4610
        %5948 = vmatprep.subr.bf16.mxu0 0
        %5949 = vmatpush1.bf16.msra.mxu0 %v4611
        %5950 = vmatprep.subr.bf16.mxu0 0
        %5951 = vmatpush1.bf16.msra.mxu0 %v4612
        %5952 = vmatprep.subr.bf16.mxu0 0
        %5953 = vmatpush1.bf16.msra.mxu0 %v4613
        %5954 = vmatprep.subr.bf16.mxu0 0
        %5955 = vmatpush1.bf16.msra.mxu0 %v4614
        %5956 = vmatprep.subr.bf16.mxu0 0
        %5957 = vmatpush1.bf16.msra.mxu0 %v4615
        %5958 = vmatprep.subr.bf16.mxu0 0
        %5959 = vmatpush1.bf16.msra.mxu0 %v4616
        %5960 = vmatprep.mubr.bf16.mxu0 %v2056
        %5961 = vmatmul.mubr.bf16.gmra.mrb[0].mxu0 %v2055
        %v5962 = vpop.f32.mrb[0].mxu0
        %v5963 = vadd.f32 %v5922, %v5962
        %v5964 = vpop.f32.mrb[0].mxu0
        %v5965 = vpop.f32.mrb[0].mxu0
        %v5966 = vadd.f32 %v5925, %v5965
        %v5967 = vpop.f32.mrb[0].mxu0
        %5968 = vdwg.mxu0
        %5969 = vmatprep.subr.bf16.mxu0 0
        %5970 = vmatpush1.bf16.msra.mxu0 %v4617
        %5971 = vmatprep.subr.bf16.mxu0 0
        %5972 = vmatpush1.bf16.msra.mxu0 %v4618
        %5973 = vmatprep.subr.bf16.mxu0 0
        %5974 = vmatpush1.bf16.msra.mxu0 %v4619
        %5975 = vmatprep.subr.bf16.mxu0 0
        %5976 = vmatpush1.bf16.msra.mxu0 %v4620
        %5977 = vmatprep.subr.bf16.mxu0 0
        %5978 = vmatpush1.bf16.msra.mxu0 %v4621
        %5979 = vmatprep.subr.bf16.mxu0 0
        %5980 = vmatpush1.bf16.msra.mxu0 %v4622
        %5981 = vmatprep.subr.bf16.mxu0 0
        %5982 = vmatpush1.bf16.msra.mxu0 %v4623
        %5983 = vmatprep.subr.bf16.mxu0 0
        %5984 = vmatpush1.bf16.msra.mxu0 %v4624
        %5985 = vmatprep.subr.bf16.mxu0 0
        %5986 = vmatpush1.bf16.msra.mxu0 %v4625
        %5987 = vmatprep.subr.bf16.mxu0 0
        %5988 = vmatpush1.bf16.msra.mxu0 %v4626
        %5989 = vmatprep.subr.bf16.mxu0 0
        %5990 = vmatpush1.bf16.msra.mxu0 %v4627
        %5991 = vmatprep.subr.bf16.mxu0 0
        %5992 = vmatpush1.bf16.msra.mxu0 %v4628
        %5993 = vmatprep.subr.bf16.mxu0 0
        %5994 = vmatpush1.bf16.msra.mxu0 %v4629
        %5995 = vmatprep.subr.bf16.mxu0 0
        %5996 = vmatpush1.bf16.msra.mxu0 %v4630
        %5997 = vmatprep.subr.bf16.mxu0 0
        %5998 = vmatpush1.bf16.msra.mxu0 %v4631
        %5999 = vmatprep.subr.bf16.mxu0 0
        %6000 = vmatpush1.bf16.msra.mxu0 %v4632
        %6001 = vmatprep.mubr.bf16.mxu0 %v2058
        %6002 = vmatmul.mubr.bf16.gmra.mrb[0].mxu0 %v2057
        %v6003 = vpop.f32.mrb[0].mxu0
        %v6004 = vadd.f32 %v5963, %v6003
        %v6005 = vpop.f32.mrb[0].mxu0
        %v6006 = vpop.f32.mrb[0].mxu0
        %v6007 = vadd.f32 %v5966, %v6006
        %v6008 = vpop.f32.mrb[0].mxu0
        %6009 = vdwg.mxu0
        %6010 = vmatprep.subr.bf16.mxu0 0
        %6011 = vmatpush1.bf16.msra.mxu0 %v4633
        %6012 = vmatprep.subr.bf16.mxu0 0
        %6013 = vmatpush1.bf16.msra.mxu0 %v4634
        %6014 = vmatprep.subr.bf16.mxu0 0
        %6015 = vmatpush1.bf16.msra.mxu0 %v4635
        %6016 = vmatprep.subr.bf16.mxu0 0
        %6017 = vmatpush1.bf16.msra.mxu0 %v4636
        %6018 = vmatprep.subr.bf16.mxu0 0
        %6019 = vmatpush1.bf16.msra.mxu0 %v4637
        %6020 = vmatprep.subr.bf16.mxu0 0
        %6021 = vmatpush1.bf16.msra.mxu0 %v4638
        %6022 = vmatprep.subr.bf16.mxu0 0
        %6023 = vmatpush1.bf16.msra.mxu0 %v4639
        %6024 = vmatprep.subr.bf16.mxu0 0
        %6025 = vmatpush1.bf16.msra.mxu0 %v4640
        %6026 = vmatprep.subr.bf16.mxu0 0
        %6027 = vmatpush1.bf16.msra.mxu0 %v4641
        %6028 = vmatprep.subr.bf16.mxu0 0
        %6029 = vmatpush1.bf16.msra.mxu0 %v4642
        %6030 = vmatprep.subr.bf16.mxu0 0
        %6031 = vmatpush1.bf16.msra.mxu0 %v4643
        %6032 = vmatprep.subr.bf16.mxu0 0
        %6033 = vmatpush1.bf16.msra.mxu0 %v4644
        %6034 = vmatprep.subr.bf16.mxu0 0
        %6035 = vmatpush1.bf16.msra.mxu0 %v4645
        %6036 = vmatprep.subr.bf16.mxu0 0
        %6037 = vmatpush1.bf16.msra.mxu0 %v4646
        %6038 = vmatprep.subr.bf16.mxu0 0
        %6039 = vmatpush1.bf16.msra.mxu0 %v4647
        %6040 = vmatprep.subr.bf16.mxu0 0
        %6041 = vmatpush1.bf16.msra.mxu0 %v4648
        %6042 = vmatprep.mubr.bf16.mxu0 %v2060
        %6043 = vmatmul.mubr.bf16.gmra.mrb[0].mxu0 %v2059
        %v6044 = vpop.f32.mrb[0].mxu0
        %v6045 = vadd.f32 %v6004, %v6044
        %v6046 = vpop.f32.mrb[0].mxu0
        %v6047 = vpop.f32.mrb[0].mxu0
        %v6048 = vadd.f32 %v6007, %v6047
        %v6049 = vpop.f32.mrb[0].mxu0
        %6050 = vdwg.mxu0
        %6051 = vmatprep.subr.bf16.mxu0 0
        %6052 = vmatpush1.bf16.msra.mxu0 %v4649
        %6053 = vmatprep.subr.bf16.mxu0 0
        %6054 = vmatpush1.bf16.msra.mxu0 %v4650
        %6055 = vmatprep.subr.bf16.mxu0 0
        %6056 = vmatpush1.bf16.msra.mxu0 %v4651
        %6057 = vmatprep.subr.bf16.mxu0 0
        %6058 = vmatpush1.bf16.msra.mxu0 %v4652
        %6059 = vmatprep.subr.bf16.mxu0 0
        %6060 = vmatpush1.bf16.msra.mxu0 %v4653
        %6061 = vmatprep.subr.bf16.mxu0 0
        %6062 = vmatpush1.bf16.msra.mxu0 %v4654
        %6063 = vmatprep.subr.bf16.mxu0 0
        %6064 = vmatpush1.bf16.msra.mxu0 %v4655
        %6065 = vmatprep.subr.bf16.mxu0 0
        %6066 = vmatpush1.bf16.msra.mxu0 %v4656
        %6067 = vmatprep.subr.bf16.mxu0 0
        %6068 = vmatpush1.bf16.msra.mxu0 %v4657
        %6069 = vmatprep.subr.bf16.mxu0 0
        %6070 = vmatpush1.bf16.msra.mxu0 %v4658
        %6071 = vmatprep.subr.bf16.mxu0 0
        %6072 = vmatpush1.bf16.msra.mxu0 %v4659
        %6073 = vmatprep.subr.bf16.mxu0 0
        %6074 = vmatpush1.bf16.msra.mxu0 %v4660
        %6075 = vmatprep.subr.bf16.mxu0 0
        %6076 = vmatpush1.bf16.msra.mxu0 %v4661
        %6077 = vmatprep.subr.bf16.mxu0 0
        %6078 = vmatpush1.bf16.msra.mxu0 %v4662
        %6079 = vmatprep.subr.bf16.mxu0 0
        %6080 = vmatpush1.bf16.msra.mxu0 %v4663
        %6081 = vmatprep.subr.bf16.mxu0 0
        %6082 = vmatpush1.bf16.msra.mxu0 %v4664
        %6083 = vmatprep.mubr.bf16.mxu0 %v2062
        %6084 = vmatmul.mubr.bf16.gmra.mrb[0].mxu0 %v2061
        %v6085 = vpop.f32.mrb[0].mxu0
        %v6086 = vadd.f32 %v6045, %v6085
        %v6087 = vpop.f32.mrb[0].mxu0
        %v6088 = vpop.f32.mrb[0].mxu0
        %v6089 = vadd.f32 %v6048, %v6088
        %v6090 = vpop.f32.mrb[0].mxu0
        %6091 = vdwg.mxu0
        %6092 = vmatprep.subr.bf16.mxu0 0
        %6093 = vmatpush1.bf16.msra.mxu0 %v4665
        %6094 = vmatprep.subr.bf16.mxu0 0
        %6095 = vmatpush1.bf16.msra.mxu0 %v4666
        %6096 = vmatprep.subr.bf16.mxu0 0
        %6097 = vmatpush1.bf16.msra.mxu0 %v4667
        %6098 = vmatprep.subr.bf16.mxu0 0
        %6099 = vmatpush1.bf16.msra.mxu0 %v4668
        %6100 = vmatprep.subr.bf16.mxu0 0
        %6101 = vmatpush1.bf16.msra.mxu0 %v4669
        %6102 = vmatprep.subr.bf16.mxu0 0
        %6103 = vmatpush1.bf16.msra.mxu0 %v4670
        %6104 = vmatprep.subr.bf16.mxu0 0
        %6105 = vmatpush1.bf16.msra.mxu0 %v4671
        %6106 = vmatprep.subr.bf16.mxu0 0
        %6107 = vmatpush1.bf16.msra.mxu0 %v4672
        %6108 = vmatprep.subr.bf16.mxu0 0
        %6109 = vmatpush1.bf16.msra.mxu0 %v4673
        %6110 = vmatprep.subr.bf16.mxu0 0
        %6111 = vmatpush1.bf16.msra.mxu0 %v4674
        %6112 = vmatprep.subr.bf16.mxu0 0
        %6113 = vmatpush1.bf16.msra.mxu0 %v4675
        %6114 = vmatprep.subr.bf16.mxu0 0
        %6115 = vmatpush1.bf16.msra.mxu0 %v4676
        %6116 = vmatprep.subr.bf16.mxu0 0
        %6117 = vmatpush1.bf16.msra.mxu0 %v4677
        %6118 = vmatprep.subr.bf16.mxu0 0
        %6119 = vmatpush1.bf16.msra.mxu0 %v4678
        %6120 = vmatprep.subr.bf16.mxu0 0
        %6121 = vmatpush1.bf16.msra.mxu0 %v4679
        %6122 = vmatprep.subr.bf16.mxu0 0
        %6123 = vmatpush1.bf16.msra.mxu0 %v4680
        %6124 = vmatprep.mubr.bf16.mxu0 %v2064
        %6125 = vmatmul.mubr.bf16.gmra.mrb[0].mxu0 %v2063
        %v6126 = vpop.f32.mrb[0].mxu0
        %v6127 = vadd.f32 %v6086, %v6126
        %v6128 = vpop.f32.mrb[0].mxu0
        %v6129 = vpop.f32.mrb[0].mxu0
        %v6130 = vadd.f32 %v6089, %v6129
        %v6131 = vpop.f32.mrb[0].mxu0
        %6132 = vdwg.mxu0
        %6133 = vmatprep.subr.bf16.mxu0 0
        %6134 = vmatpush1.bf16.msra.mxu0 %v4681
        %6135 = vmatprep.subr.bf16.mxu0 0
        %6136 = vmatpush1.bf16.msra.mxu0 %v4682
        %6137 = vmatprep.subr.bf16.mxu0 0
        %6138 = vmatpush1.bf16.msra.mxu0 %v4683
        %6139 = vmatprep.subr.bf16.mxu0 0
        %6140 = vmatpush1.bf16.msra.mxu0 %v4684
        %6141 = vmatprep.subr.bf16.mxu0 0
        %6142 = vmatpush1.bf16.msra.mxu0 %v4685
        %6143 = vmatprep.subr.bf16.mxu0 0
        %6144 = vmatpush1.bf16.msra.mxu0 %v4686
        %6145 = vmatprep.subr.bf16.mxu0 0
        %6146 = vmatpush1.bf16.msra.mxu0 %v4687
        %6147 = vmatprep.subr.bf16.mxu0 0
        %6148 = vmatpush1.bf16.msra.mxu0 %v4688
        %6149 = vmatprep.subr.bf16.mxu0 0
        %6150 = vmatpush1.bf16.msra.mxu0 %v4689
        %6151 = vmatprep.subr.bf16.mxu0 0
        %6152 = vmatpush1.bf16.msra.mxu0 %v4690
        %6153 = vmatprep.subr.bf16.mxu0 0
        %6154 = vmatpush1.bf16.msra.mxu0 %v4691
        %6155 = vmatprep.subr.bf16.mxu0 0
        %6156 = vmatpush1.bf16.msra.mxu0 %v4692
        %6157 = vmatprep.subr.bf16.mxu0 0
        %6158 = vmatpush1.bf16.msra.mxu0 %v4693
        %6159 = vmatprep.subr.bf16.mxu0 0
        %6160 = vmatpush1.bf16.msra.mxu0 %v4694
        %6161 = vmatprep.subr.bf16.mxu0 0
        %6162 = vmatpush1.bf16.msra.mxu0 %v4695
        %6163 = vmatprep.subr.bf16.mxu0 0
        %6164 = vmatpush1.bf16.msra.mxu0 %v4696
        %6165 = vmatprep.mubr.bf16.mxu0 %v2066
        %6166 = vmatmul.mubr.bf16.gmra.mrb[0].mxu0 %v2065
        %v6167 = vpop.f32.mrb[0].mxu0
        %v6168 = vadd.f32 %v6127, %v6167
        %v6169 = vpop.f32.mrb[0].mxu0
        %v6170 = vpop.f32.mrb[0].mxu0
        %v6171 = vadd.f32 %v6130, %v6170
        %v6172 = vpop.f32.mrb[0].mxu0
        %6173 = vdwg.mxu0
        %6174 = vmatprep.subr.bf16.mxu0 0
        %6175 = vmatpush1.bf16.msra.mxu0 %v4697
        %6176 = vmatprep.subr.bf16.mxu0 0
        %6177 = vmatpush1.bf16.msra.mxu0 %v4698
        %6178 = vmatprep.subr.bf16.mxu0 0
        %6179 = vmatpush1.bf16.msra.mxu0 %v4699
        %6180 = vmatprep.subr.bf16.mxu0 0
        %6181 = vmatpush1.bf16.msra.mxu0 %v4700
        %6182 = vmatprep.subr.bf16.mxu0 0
        %6183 = vmatpush1.bf16.msra.mxu0 %v4701
        %6184 = vmatprep.subr.bf16.mxu0 0
        %6185 = vmatpush1.bf16.msra.mxu0 %v4702
        %6186 = vmatprep.subr.bf16.mxu0 0
        %6187 = vmatpush1.bf16.msra.mxu0 %v4703
        %6188 = vmatprep.subr.bf16.mxu0 0
        %6189 = vmatpush1.bf16.msra.mxu0 %v4704
        %6190 = vmatprep.subr.bf16.mxu0 0
        %6191 = vmatpush1.bf16.msra.mxu0 %v4705
        %6192 = vmatprep.subr.bf16.mxu0 0
        %6193 = vmatpush1.bf16.msra.mxu0 %v4706
        %6194 = vmatprep.subr.bf16.mxu0 0
        %6195 = vmatpush1.bf16.msra.mxu0 %v4707
        %6196 = vmatprep.subr.bf16.mxu0 0
        %6197 = vmatpush1.bf16.msra.mxu0 %v4708
        %6198 = vmatprep.subr.bf16.mxu0 0
        %6199 = vmatpush1.bf16.msra.mxu0 %v4709
        %6200 = vmatprep.subr.bf16.mxu0 0
        %6201 = vmatpush1.bf16.msra.mxu0 %v4710
        %6202 = vmatprep.subr.bf16.mxu0 0
        %6203 = vmatpush1.bf16.msra.mxu0 %v4711
        %6204 = vmatprep.subr.bf16.mxu0 0
        %6205 = vmatpush1.bf16.msra.mxu0 %v4712
        %6206 = vmatprep.mubr.bf16.mxu0 %v2068
        %6207 = vmatmul.mubr.bf16.gmra.mrb[0].mxu0 %v2067
        %v6208 = vpop.f32.mrb[0].mxu0
        %v6209 = vadd.f32 %v6168, %v6208
        %v6210 = vpop.f32.mrb[0].mxu0
        %v6211 = vpop.f32.mrb[0].mxu0
        %v6212 = vadd.f32 %v6171, %v6211
        %v6213 = vpop.f32.mrb[0].mxu0
        %6214 = vdwg.mxu0
        %6215 = vmatprep.subr.bf16.mxu0 0
        %6216 = vmatpush1.bf16.msra.mxu0 %v4713
        %6217 = vmatprep.subr.bf16.mxu0 0
        %6218 = vmatpush1.bf16.msra.mxu0 %v4714
        %6219 = vmatprep.subr.bf16.mxu0 0
        %6220 = vmatpush1.bf16.msra.mxu0 %v4715
        %6221 = vmatprep.subr.bf16.mxu0 0
        %6222 = vmatpush1.bf16.msra.mxu0 %v4716
        %6223 = vmatprep.subr.bf16.mxu0 0
        %6224 = vmatpush1.bf16.msra.mxu0 %v4717
        %6225 = vmatprep.subr.bf16.mxu0 0
        %6226 = vmatpush1.bf16.msra.mxu0 %v4718
        %6227 = vmatprep.subr.bf16.mxu0 0
        %6228 = vmatpush1.bf16.msra.mxu0 %v4719
        %6229 = vmatprep.subr.bf16.mxu0 0
        %6230 = vmatpush1.bf16.msra.mxu0 %v4720
        %6231 = vmatprep.subr.bf16.mxu0 0
        %6232 = vmatpush1.bf16.msra.mxu0 %v4721
        %6233 = vmatprep.subr.bf16.mxu0 0
        %6234 = vmatpush1.bf16.msra.mxu0 %v4722
        %6235 = vmatprep.subr.bf16.mxu0 0
        %6236 = vmatpush1.bf16.msra.mxu0 %v4723
        %6237 = vmatprep.subr.bf16.mxu0 0
        %6238 = vmatpush1.bf16.msra.mxu0 %v4724
        %6239 = vmatprep.subr.bf16.mxu0 0
        %6240 = vmatpush1.bf16.msra.mxu0 %v4725
        %6241 = vmatprep.subr.bf16.mxu0 0
        %6242 = vmatpush1.bf16.msra.mxu0 %v4726
        %6243 = vmatprep.subr.bf16.mxu0 0
        %6244 = vmatpush1.bf16.msra.mxu0 %v4727
        %6245 = vmatprep.subr.bf16.mxu0 0
        %6246 = vmatpush1.bf16.msra.mxu0 %v4728
        %6247 = vmatprep.mubr.bf16.mxu0 %v2070
        %6248 = vmatmul.mubr.bf16.gmra.mrb[0].mxu0 %v2069
        %v6249 = vpop.f32.mrb[0].mxu0
        %v6250 = vadd.f32 %v6209, %v6249
        %v6251 = vpop.f32.mrb[0].mxu0
        %v6252 = vpop.f32.mrb[0].mxu0
        %v6253 = vadd.f32 %v6212, %v6252
        %v6254 = vpop.f32.mrb[0].mxu0
        %6255 = vdwg.mxu0
        %6256 = vmatprep.subr.bf16.mxu0 0
        %6257 = vmatpush1.bf16.msra.mxu0 %v4729
        %6258 = vmatprep.subr.bf16.mxu0 0
        %6259 = vmatpush1.bf16.msra.mxu0 %v4730
        %6260 = vmatprep.subr.bf16.mxu0 0
        %6261 = vmatpush1.bf16.msra.mxu0 %v4731
        %6262 = vmatprep.subr.bf16.mxu0 0
        %6263 = vmatpush1.bf16.msra.mxu0 %v4732
        %6264 = vmatprep.subr.bf16.mxu0 0
        %6265 = vmatpush1.bf16.msra.mxu0 %v4733
        %6266 = vmatprep.subr.bf16.mxu0 0
        %6267 = vmatpush1.bf16.msra.mxu0 %v4734
        %6268 = vmatprep.subr.bf16.mxu0 0
        %6269 = vmatpush1.bf16.msra.mxu0 %v4735
        %6270 = vmatprep.subr.bf16.mxu0 0
        %6271 = vmatpush1.bf16.msra.mxu0 %v4736
        %6272 = vmatprep.subr.bf16.mxu0 0
        %6273 = vmatpush1.bf16.msra.mxu0 %v4737
        %6274 = vmatprep.subr.bf16.mxu0 0
        %6275 = vmatpush1.bf16.msra.mxu0 %v4738
        %6276 = vmatprep.subr.bf16.mxu0 0
        %6277 = vmatpush1.bf16.msra.mxu0 %v4739
        %6278 = vmatprep.subr.bf16.mxu0 0
        %6279 = vmatpush1.bf16.msra.mxu0 %v4740
        %6280 = vmatprep.subr.bf16.mxu0 0
        %6281 = vmatpush1.bf16.msra.mxu0 %v4741
        %6282 = vmatprep.subr.bf16.mxu0 0
        %6283 = vmatpush1.bf16.msra.mxu0 %v4742
        %6284 = vmatprep.subr.bf16.mxu0 0
        %6285 = vmatpush1.bf16.msra.mxu0 %v4743
        %6286 = vmatprep.subr.bf16.mxu0 0
        %6287 = vmatpush1.bf16.msra.mxu0 %v4744
        %6288 = vmatprep.mubr.bf16.mxu0 %v2072
        %6289 = vmatmul.mubr.bf16.gmra.mrb[0].mxu0 %v2071
        %v6290 = vpop.f32.mrb[0].mxu0
        %v6291 = vadd.f32 %v6250, %v6290
        %v6292 = vpop.f32.mrb[0].mxu0
        %v6293 = vpop.f32.mrb[0].mxu0
        %v6294 = vadd.f32 %v6253, %v6293
        %v6295 = vpop.f32.mrb[0].mxu0
        %6296 = vdwg.mxu0
        %6297 = vmatprep.subr.bf16.mxu0 0
        %6298 = vmatpush1.bf16.msra.mxu0 %v4745
        %6299 = vmatprep.subr.bf16.mxu0 0
        %6300 = vmatpush1.bf16.msra.mxu0 %v4746
        %6301 = vmatprep.subr.bf16.mxu0 0
        %6302 = vmatpush1.bf16.msra.mxu0 %v4747
        %6303 = vmatprep.subr.bf16.mxu0 0
        %6304 = vmatpush1.bf16.msra.mxu0 %v4748
        %6305 = vmatprep.subr.bf16.mxu0 0
        %6306 = vmatpush1.bf16.msra.mxu0 %v4749
        %6307 = vmatprep.subr.bf16.mxu0 0
        %6308 = vmatpush1.bf16.msra.mxu0 %v4750
        %6309 = vmatprep.subr.bf16.mxu0 0
        %6310 = vmatpush1.bf16.msra.mxu0 %v4751
        %6311 = vmatprep.subr.bf16.mxu0 0
        %6312 = vmatpush1.bf16.msra.mxu0 %v4752
        %6313 = vmatprep.subr.bf16.mxu0 0
        %6314 = vmatpush1.bf16.msra.mxu0 %v4753
        %6315 = vmatprep.subr.bf16.mxu0 0
        %6316 = vmatpush1.bf16.msra.mxu0 %v4754
        %6317 = vmatprep.subr.bf16.mxu0 0
        %6318 = vmatpush1.bf16.msra.mxu0 %v4755
        %6319 = vmatprep.subr.bf16.mxu0 0
        %6320 = vmatpush1.bf16.msra.mxu0 %v4756
        %6321 = vmatprep.subr.bf16.mxu0 0
        %6322 = vmatpush1.bf16.msra.mxu0 %v4757
        %6323 = vmatprep.subr.bf16.mxu0 0
        %6324 = vmatpush1.bf16.msra.mxu0 %v4758
        %6325 = vmatprep.subr.bf16.mxu0 0
        %6326 = vmatpush1.bf16.msra.mxu0 %v4759
        %6327 = vmatprep.subr.bf16.mxu0 0
        %6328 = vmatpush1.bf16.msra.mxu0 %v4760
        %6329 = vmatprep.mubr.bf16.mxu0 %v2074
        %6330 = vmatmul.mubr.bf16.gmra.mrb[0].mxu0 %v2073
        %v6331 = vpop.f32.mrb[0].mxu0
        %v6332 = vadd.f32 %v6291, %v6331
        %v6333 = vpop.f32.mrb[0].mxu0
        %v6334 = vpop.f32.mrb[0].mxu0
        %v6335 = vadd.f32 %v6294, %v6334
        %v6336 = vpop.f32.mrb[0].mxu0
        %6337 = vdwg.mxu0
        %6338 = vmatprep.subr.bf16.mxu0 0
        %6339 = vmatpush1.bf16.msra.mxu0 %v4761
        %6340 = vmatprep.subr.bf16.mxu0 0
        %6341 = vmatpush1.bf16.msra.mxu0 %v4762
        %6342 = vmatprep.subr.bf16.mxu0 0
        %6343 = vmatpush1.bf16.msra.mxu0 %v4763
        %6344 = vmatprep.subr.bf16.mxu0 0
        %6345 = vmatpush1.bf16.msra.mxu0 %v4764
        %6346 = vmatprep.subr.bf16.mxu0 0
        %6347 = vmatpush1.bf16.msra.mxu0 %v4765
        %6348 = vmatprep.subr.bf16.mxu0 0
        %6349 = vmatpush1.bf16.msra.mxu0 %v4766
        %6350 = vmatprep.subr.bf16.mxu0 0
        %6351 = vmatpush1.bf16.msra.mxu0 %v4767
        %6352 = vmatprep.subr.bf16.mxu0 0
        %6353 = vmatpush1.bf16.msra.mxu0 %v4768
        %6354 = vmatprep.subr.bf16.mxu0 0
        %6355 = vmatpush1.bf16.msra.mxu0 %v4769
        %6356 = vmatprep.subr.bf16.mxu0 0
        %6357 = vmatpush1.bf16.msra.mxu0 %v4770
        %6358 = vmatprep.subr.bf16.mxu0 0
        %6359 = vmatpush1.bf16.msra.mxu0 %v4771
        %6360 = vmatprep.subr.bf16.mxu0 0
        %6361 = vmatpush1.bf16.msra.mxu0 %v4772
        %6362 = vmatprep.subr.bf16.mxu0 0
        %6363 = vmatpush1.bf16.msra.mxu0 %v4773
        %6364 = vmatprep.subr.bf16.mxu0 0
        %6365 = vmatpush1.bf16.msra.mxu0 %v4774
        %6366 = vmatprep.subr.bf16.mxu0 0
        %6367 = vmatpush1.bf16.msra.mxu0 %v4775
        %6368 = vmatprep.subr.bf16.mxu0 0
        %6369 = vmatpush1.bf16.msra.mxu0 %v4776
        %6370 = vmatprep.mubr.bf16.mxu0 %v2076
        %6371 = vmatmul.mubr.bf16.gmra.mrb[0].mxu0 %v2075
        %v6372 = vpop.f32.mrb[0].mxu0
        %v6373 = vadd.f32 %v6332, %v6372
        %v6374 = vpop.f32.mrb[0].mxu0
        %v6375 = vpop.f32.mrb[0].mxu0
        %v6376 = vadd.f32 %v6335, %v6375
        %v6377 = vpop.f32.mrb[0].mxu0
        %6378 = vdwg.mxu0
        %6379 = vmatprep.subr.bf16.mxu0 0
        %6380 = vmatpush1.bf16.msra.mxu0 %v4777
        %6381 = vmatprep.subr.bf16.mxu0 0
        %6382 = vmatpush1.bf16.msra.mxu0 %v4778
        %6383 = vmatprep.subr.bf16.mxu0 0
        %6384 = vmatpush1.bf16.msra.mxu0 %v4779
        %6385 = vmatprep.subr.bf16.mxu0 0
        %6386 = vmatpush1.bf16.msra.mxu0 %v4780
        %6387 = vmatprep.subr.bf16.mxu0 0
        %6388 = vmatpush1.bf16.msra.mxu0 %v4781
        %6389 = vmatprep.subr.bf16.mxu0 0
        %6390 = vmatpush1.bf16.msra.mxu0 %v4782
        %6391 = vmatprep.subr.bf16.mxu0 0
        %6392 = vmatpush1.bf16.msra.mxu0 %v4783
        %6393 = vmatprep.subr.bf16.mxu0 0
        %6394 = vmatpush1.bf16.msra.mxu0 %v4784
        %6395 = vmatprep.subr.bf16.mxu0 0
        %6396 = vmatpush1.bf16.msra.mxu0 %v4785
        %6397 = vmatprep.subr.bf16.mxu0 0
        %6398 = vmatpush1.bf16.msra.mxu0 %v4786
        %6399 = vmatprep.subr.bf16.mxu0 0
        %6400 = vmatpush1.bf16.msra.mxu0 %v4787
        %6401 = vmatprep.subr.bf16.mxu0 0
        %6402 = vmatpush1.bf16.msra.mxu0 %v4788
        %6403 = vmatprep.subr.bf16.mxu0 0
        %6404 = vmatpush1.bf16.msra.mxu0 %v4789
        %6405 = vmatprep.subr.bf16.mxu0 0
        %6406 = vmatpush1.bf16.msra.mxu0 %v4790
        %6407 = vmatprep.subr.bf16.mxu0 0
        %6408 = vmatpush1.bf16.msra.mxu0 %v4791
        %6409 = vmatprep.subr.bf16.mxu0 0
        %6410 = vmatpush1.bf16.msra.mxu0 %v4792
        %6411 = vmatprep.mubr.bf16.mxu0 %v2078
        %6412 = vmatmul.mubr.bf16.gmra.mrb[0].mxu0 %v2077
        %v6413 = vpop.f32.mrb[0].mxu0
        %v6414 = vadd.f32 %v6373, %v6413
        %v6415 = vpop.f32.mrb[0].mxu0
        %v6416 = vpop.f32.mrb[0].mxu0
        %v6417 = vadd.f32 %v6376, %v6416
        %v6418 = vpop.f32.mrb[0].mxu0
        %6419 = vdwg.mxu0
        %6420 = vmatprep.subr.bf16.mxu0 0
        %6421 = vmatpush1.bf16.msra.mxu0 %v4793
        %6422 = vmatprep.subr.bf16.mxu0 0
        %6423 = vmatpush1.bf16.msra.mxu0 %v4794
        %6424 = vmatprep.subr.bf16.mxu0 0
        %6425 = vmatpush1.bf16.msra.mxu0 %v4795
        %6426 = vmatprep.subr.bf16.mxu0 0
        %6427 = vmatpush1.bf16.msra.mxu0 %v4796
        %6428 = vmatprep.subr.bf16.mxu0 0
        %6429 = vmatpush1.bf16.msra.mxu0 %v4797
        %6430 = vmatprep.subr.bf16.mxu0 0
        %6431 = vmatpush1.bf16.msra.mxu0 %v4798
        %6432 = vmatprep.subr.bf16.mxu0 0
        %6433 = vmatpush1.bf16.msra.mxu0 %v4799
        %6434 = vmatprep.subr.bf16.mxu0 0
        %6435 = vmatpush1.bf16.msra.mxu0 %v4800
        %6436 = vmatprep.subr.bf16.mxu0 0
        %6437 = vmatpush1.bf16.msra.mxu0 %v4801
        %6438 = vmatprep.subr.bf16.mxu0 0
        %6439 = vmatpush1.bf16.msra.mxu0 %v4802
        %6440 = vmatprep.subr.bf16.mxu0 0
        %6441 = vmatpush1.bf16.msra.mxu0 %v4803
        %6442 = vmatprep.subr.bf16.mxu0 0
        %6443 = vmatpush1.bf16.msra.mxu0 %v4804
        %6444 = vmatprep.subr.bf16.mxu0 0
        %6445 = vmatpush1.bf16.msra.mxu0 %v4805
        %6446 = vmatprep.subr.bf16.mxu0 0
        %6447 = vmatpush1.bf16.msra.mxu0 %v4806
        %6448 = vmatprep.subr.bf16.mxu0 0
        %6449 = vmatpush1.bf16.msra.mxu0 %v4807
        %6450 = vmatprep.subr.bf16.mxu0 0
        %6451 = vmatpush1.bf16.msra.mxu0 %v4808
        %6452 = vmatprep.mubr.bf16.mxu0 %v2080
        %6453 = vmatmul.mubr.bf16.gmra.mrb[0].mxu0 %v2079
        %v6454 = vpop.f32.mrb[0].mxu0
        %v6455 = vadd.f32 %v6414, %v6454
        %v6456 = vpop.f32.mrb[0].mxu0
        %v6457 = vpop.f32.mrb[0].mxu0
        %v6458 = vadd.f32 %v6417, %v6457
        %v6459 = vpop.f32.mrb[0].mxu0
        %6460 = vdwg.mxu0
        %6461 = vmatprep.subr.bf16.mxu0 0
        %6462 = vmatpush1.bf16.msra.mxu0 %v4809
        %6463 = vmatprep.subr.bf16.mxu0 0
        %6464 = vmatpush1.bf16.msra.mxu0 %v4810
        %6465 = vmatprep.subr.bf16.mxu0 0
        %6466 = vmatpush1.bf16.msra.mxu0 %v4811
        %6467 = vmatprep.subr.bf16.mxu0 0
        %6468 = vmatpush1.bf16.msra.mxu0 %v4812
        %6469 = vmatprep.subr.bf16.mxu0 0
        %6470 = vmatpush1.bf16.msra.mxu0 %v4813
        %6471 = vmatprep.subr.bf16.mxu0 0
        %6472 = vmatpush1.bf16.msra.mxu0 %v4814
        %6473 = vmatprep.subr.bf16.mxu0 0
        %6474 = vmatpush1.bf16.msra.mxu0 %v4815
        %6475 = vmatprep.subr.bf16.mxu0 0
        %6476 = vmatpush1.bf16.msra.mxu0 %v4816
        %6477 = vmatprep.subr.bf16.mxu0 0
        %6478 = vmatpush1.bf16.msra.mxu0 %v4817
        %6479 = vmatprep.subr.bf16.mxu0 0
        %6480 = vmatpush1.bf16.msra.mxu0 %v4818
        %6481 = vmatprep.subr.bf16.mxu0 0
        %6482 = vmatpush1.bf16.msra.mxu0 %v4819
        %6483 = vmatprep.subr.bf16.mxu0 0
        %6484 = vmatpush1.bf16.msra.mxu0 %v4820
        %6485 = vmatprep.subr.bf16.mxu0 0
        %6486 = vmatpush1.bf16.msra.mxu0 %v4821
        %6487 = vmatprep.subr.bf16.mxu0 0
        %6488 = vmatpush1.bf16.msra.mxu0 %v4822
        %6489 = vmatprep.subr.bf16.mxu0 0
        %6490 = vmatpush1.bf16.msra.mxu0 %v4823
        %6491 = vmatprep.subr.bf16.mxu0 0
        %6492 = vmatpush1.bf16.msra.mxu0 %v4824
        %6493 = vmatprep.mubr.bf16.mxu0 %v2082
        %6494 = vmatmul.mubr.bf16.gmra.mrb[0].mxu0 %v2081
        %v6495 = vpop.f32.mrb[0].mxu0
        %v6496 = vadd.f32 %v6455, %v6495
        %v6497 = vpop.f32.mrb[0].mxu0
        %v6498 = vpop.f32.mrb[0].mxu0
        %v6499 = vadd.f32 %v6458, %v6498
        %v6500 = vpop.f32.mrb[0].mxu0
        %6501 = vdwg.mxu0
        %6502 = vmatprep.subr.bf16.mxu0 0
        %6503 = vmatpush1.bf16.msra.mxu0 %v4825
        %6504 = vmatprep.subr.bf16.mxu0 0
        %6505 = vmatpush1.bf16.msra.mxu0 %v4826
        %6506 = vmatprep.subr.bf16.mxu0 0
        %6507 = vmatpush1.bf16.msra.mxu0 %v4827
        %6508 = vmatprep.subr.bf16.mxu0 0
        %6509 = vmatpush1.bf16.msra.mxu0 %v4828
        %6510 = vmatprep.subr.bf16.mxu0 0
        %6511 = vmatpush1.bf16.msra.mxu0 %v4829
        %6512 = vmatprep.subr.bf16.mxu0 0
        %6513 = vmatpush1.bf16.msra.mxu0 %v4830
        %6514 = vmatprep.subr.bf16.mxu0 0
        %6515 = vmatpush1.bf16.msra.mxu0 %v4831
        %6516 = vmatprep.subr.bf16.mxu0 0
        %6517 = vmatpush1.bf16.msra.mxu0 %v4832
        %6518 = vmatprep.subr.bf16.mxu0 0
        %6519 = vmatpush1.bf16.msra.mxu0 %v4833
        %6520 = vmatprep.subr.bf16.mxu0 0
        %6521 = vmatpush1.bf16.msra.mxu0 %v4834
        %6522 = vmatprep.subr.bf16.mxu0 0
        %6523 = vmatpush1.bf16.msra.mxu0 %v4835
        %6524 = vmatprep.subr.bf16.mxu0 0
        %6525 = vmatpush1.bf16.msra.mxu0 %v4836
        %6526 = vmatprep.subr.bf16.mxu0 0
        %6527 = vmatpush1.bf16.msra.mxu0 %v4837
        %6528 = vmatprep.subr.bf16.mxu0 0
        %6529 = vmatpush1.bf16.msra.mxu0 %v4838
        %6530 = vmatprep.subr.bf16.mxu0 0
        %6531 = vmatpush1.bf16.msra.mxu0 %v4839
        %6532 = vmatprep.subr.bf16.mxu0 0
        %6533 = vmatpush1.bf16.msra.mxu0 %v4840
        %6534 = vmatprep.mubr.bf16.mxu0 %v2084
        %6535 = vmatmul.mubr.bf16.gmra.mrb[0].mxu0 %v2083
        %v6536 = vpop.f32.mrb[0].mxu0
        %v6537 = vadd.f32 %v6496, %v6536
        %v6538 = vpop.f32.mrb[0].mxu0
        %v6539 = vpop.f32.mrb[0].mxu0
        %v6540 = vadd.f32 %v6499, %v6539
        %v6541 = vpop.f32.mrb[0].mxu0
        %6542 = vdwg.mxu0
        %6543 = vmatprep.subr.bf16.mxu0 0
        %6544 = vmatpush1.bf16.msra.mxu0 %v4841
        %6545 = vmatprep.subr.bf16.mxu0 0
        %6546 = vmatpush1.bf16.msra.mxu0 %v4842
        %6547 = vmatprep.subr.bf16.mxu0 0
        %6548 = vmatpush1.bf16.msra.mxu0 %v4843
        %6549 = vmatprep.subr.bf16.mxu0 0
        %6550 = vmatpush1.bf16.msra.mxu0 %v4844
        %6551 = vmatprep.subr.bf16.mxu0 0
        %6552 = vmatpush1.bf16.msra.mxu0 %v4845
        %6553 = vmatprep.subr.bf16.mxu0 0
        %6554 = vmatpush1.bf16.msra.mxu0 %v4846
        %6555 = vmatprep.subr.bf16.mxu0 0
        %6556 = vmatpush1.bf16.msra.mxu0 %v4847
        %6557 = vmatprep.subr.bf16.mxu0 0
        %6558 = vmatpush1.bf16.msra.mxu0 %v4848
        %6559 = vmatprep.subr.bf16.mxu0 0
        %6560 = vmatpush1.bf16.msra.mxu0 %v4849
        %6561 = vmatprep.subr.bf16.mxu0 0
        %6562 = vmatpush1.bf16.msra.mxu0 %v4850
        %6563 = vmatprep.subr.bf16.mxu0 0
        %6564 = vmatpush1.bf16.msra.mxu0 %v4851
        %6565 = vmatprep.subr.bf16.mxu0 0
        %6566 = vmatpush1.bf16.msra.mxu0 %v4852
        %6567 = vmatprep.subr.bf16.mxu0 0
        %6568 = vmatpush1.bf16.msra.mxu0 %v4853
        %6569 = vmatprep.subr.bf16.mxu0 0
        %6570 = vmatpush1.bf16.msra.mxu0 %v4854
        %6571 = vmatprep.subr.bf16.mxu0 0
        %6572 = vmatpush1.bf16.msra.mxu0 %v4855
        %6573 = vmatprep.subr.bf16.mxu0 0
        %6574 = vmatpush1.bf16.msra.mxu0 %v4856
        %6575 = vmatprep.mubr.bf16.mxu0 %v2086
        %6576 = vmatmul.mubr.bf16.gmra.mrb[0].mxu0 %v2085
        %v6577 = vpop.f32.mrb[0].mxu0
        %v6578 = vadd.f32 %v6537, %v6577
        %v6579 = vpop.f32.mrb[0].mxu0
        %v6580 = vpop.f32.mrb[0].mxu0
        %v6581 = vadd.f32 %v6540, %v6580
        %v6582 = vpop.f32.mrb[0].mxu0
        %6583 = vdwg.mxu0
        %6584 = vmatprep.subr.bf16.mxu0 0
        %6585 = vmatpush1.bf16.msra.mxu0 %v4857
        %6586 = vmatprep.subr.bf16.mxu0 0
        %6587 = vmatpush1.bf16.msra.mxu0 %v4858
        %6588 = vmatprep.subr.bf16.mxu0 0
        %6589 = vmatpush1.bf16.msra.mxu0 %v4859
        %6590 = vmatprep.subr.bf16.mxu0 0
        %6591 = vmatpush1.bf16.msra.mxu0 %v4860
        %6592 = vmatprep.subr.bf16.mxu0 0
        %6593 = vmatpush1.bf16.msra.mxu0 %v4861
        %6594 = vmatprep.subr.bf16.mxu0 0
        %6595 = vmatpush1.bf16.msra.mxu0 %v4862
        %6596 = vmatprep.subr.bf16.mxu0 0
        %6597 = vmatpush1.bf16.msra.mxu0 %v4863
        %6598 = vmatprep.subr.bf16.mxu0 0
        %6599 = vmatpush1.bf16.msra.mxu0 %v4864
        %6600 = vmatprep.subr.bf16.mxu0 0
        %6601 = vmatpush1.bf16.msra.mxu0 %v4865
        %6602 = vmatprep.subr.bf16.mxu0 0
        %6603 = vmatpush1.bf16.msra.mxu0 %v4866
        %6604 = vmatprep.subr.bf16.mxu0 0
        %6605 = vmatpush1.bf16.msra.mxu0 %v4867
        %6606 = vmatprep.subr.bf16.mxu0 0
        %6607 = vmatpush1.bf16.msra.mxu0 %v4868
        %6608 = vmatprep.subr.bf16.mxu0 0
        %6609 = vmatpush1.bf16.msra.mxu0 %v4869
        %6610 = vmatprep.subr.bf16.mxu0 0
        %6611 = vmatpush1.bf16.msra.mxu0 %v4870
        %6612 = vmatprep.subr.bf16.mxu0 0
        %6613 = vmatpush1.bf16.msra.mxu0 %v4871
        %6614 = vmatprep.subr.bf16.mxu0 0
        %6615 = vmatpush1.bf16.msra.mxu0 %v4872
        %6616 = vmatprep.mubr.bf16.mxu0 %v2088
        %6617 = vmatmul.mubr.bf16.gmra.mrb[0].mxu0 %v2087
        %v6618 = vpop.f32.mrb[0].mxu0
        %v6619 = vadd.f32 %v6578, %v6618
        %v6620 = vpop.f32.mrb[0].mxu0
        %v6621 = vpop.f32.mrb[0].mxu0
        %v6622 = vadd.f32 %v6581, %v6621
        %v6623 = vpop.f32.mrb[0].mxu0
        %6624 = vdwg.mxu0
        %6625 = vmatprep.subr.bf16.mxu0 0
        %6626 = vmatpush1.bf16.msra.mxu0 %v4873
        %6627 = vmatprep.subr.bf16.mxu0 0
        %6628 = vmatpush1.bf16.msra.mxu0 %v4874
        %6629 = vmatprep.subr.bf16.mxu0 0
        %6630 = vmatpush1.bf16.msra.mxu0 %v4875
        %6631 = vmatprep.subr.bf16.mxu0 0
        %6632 = vmatpush1.bf16.msra.mxu0 %v4876
        %6633 = vmatprep.subr.bf16.mxu0 0
        %6634 = vmatpush1.bf16.msra.mxu0 %v4877
        %6635 = vmatprep.subr.bf16.mxu0 0
        %6636 = vmatpush1.bf16.msra.mxu0 %v4878
        %6637 = vmatprep.subr.bf16.mxu0 0
        %6638 = vmatpush1.bf16.msra.mxu0 %v4879
        %6639 = vmatprep.subr.bf16.mxu0 0
        %6640 = vmatpush1.bf16.msra.mxu0 %v4880
        %6641 = vmatprep.subr.bf16.mxu0 0
        %6642 = vmatpush1.bf16.msra.mxu0 %v4881
        %6643 = vmatprep.subr.bf16.mxu0 0
        %6644 = vmatpush1.bf16.msra.mxu0 %v4882
        %6645 = vmatprep.subr.bf16.mxu0 0
        %6646 = vmatpush1.bf16.msra.mxu0 %v4883
        %6647 = vmatprep.subr.bf16.mxu0 0
        %6648 = vmatpush1.bf16.msra.mxu0 %v4884
        %6649 = vmatprep.subr.bf16.mxu0 0
        %6650 = vmatpush1.bf16.msra.mxu0 %v4885
        %6651 = vmatprep.subr.bf16.mxu0 0
        %6652 = vmatpush1.bf16.msra.mxu0 %v4886
        %6653 = vmatprep.subr.bf16.mxu0 0
        %6654 = vmatpush1.bf16.msra.mxu0 %v4887
        %6655 = vmatprep.subr.bf16.mxu0 0
        %6656 = vmatpush1.bf16.msra.mxu0 %v4888
        %6657 = vmatprep.mubr.bf16.mxu0 %v2090
        %6658 = vmatmul.mubr.bf16.gmra.mrb[0].mxu0 %v2089
        %v6659 = vpop.f32.mrb[0].mxu0
        %v6660 = vadd.f32 %v6619, %v6659
        %v6661 = vpop.f32.mrb[0].mxu0
        %v6662 = vpop.f32.mrb[0].mxu0
        %v6663 = vadd.f32 %v6622, %v6662
        %v6664 = vpop.f32.mrb[0].mxu0
        %6665 = vdwg.mxu0
        %6666 = vmatprep.subr.bf16.mxu0 0
        %6667 = vmatpush1.bf16.msra.mxu0 %v4889
        %6668 = vmatprep.subr.bf16.mxu0 0
        %6669 = vmatpush1.bf16.msra.mxu0 %v4890
        %6670 = vmatprep.subr.bf16.mxu0 0
        %6671 = vmatpush1.bf16.msra.mxu0 %v4891
        %6672 = vmatprep.subr.bf16.mxu0 0
        %6673 = vmatpush1.bf16.msra.mxu0 %v4892
        %6674 = vmatprep.subr.bf16.mxu0 0
        %6675 = vmatpush1.bf16.msra.mxu0 %v4893
        %6676 = vmatprep.subr.bf16.mxu0 0
        %6677 = vmatpush1.bf16.msra.mxu0 %v4894
        %6678 = vmatprep.subr.bf16.mxu0 0
        %6679 = vmatpush1.bf16.msra.mxu0 %v4895
        %6680 = vmatprep.subr.bf16.mxu0 0
        %6681 = vmatpush1.bf16.msra.mxu0 %v4896
        %6682 = vmatprep.subr.bf16.mxu0 0
        %6683 = vmatpush1.bf16.msra.mxu0 %v4897
        %6684 = vmatprep.subr.bf16.mxu0 0
        %6685 = vmatpush1.bf16.msra.mxu0 %v4898
        %6686 = vmatprep.subr.bf16.mxu0 0
        %6687 = vmatpush1.bf16.msra.mxu0 %v4899
        %6688 = vmatprep.subr.bf16.mxu0 0
        %6689 = vmatpush1.bf16.msra.mxu0 %v4900
        %6690 = vmatprep.subr.bf16.mxu0 0
        %6691 = vmatpush1.bf16.msra.mxu0 %v4901
        %6692 = vmatprep.subr.bf16.mxu0 0
        %6693 = vmatpush1.bf16.msra.mxu0 %v4902
        %6694 = vmatprep.subr.bf16.mxu0 0
        %6695 = vmatpush1.bf16.msra.mxu0 %v4903
        %6696 = vmatprep.subr.bf16.mxu0 0
        %6697 = vmatpush1.bf16.msra.mxu0 %v4904
        %6698 = vmatprep.mubr.bf16.mxu0 %v2092
        %6699 = vmatmul.mubr.bf16.gmra.mrb[0].mxu0 %v2091
        %v6700 = vpop.f32.mrb[0].mxu0
        %v6701 = vadd.f32 %v6660, %v6700
        %v6702 = vpop.f32.mrb[0].mxu0
        %v6703 = vpop.f32.mrb[0].mxu0
        %v6704 = vadd.f32 %v6663, %v6703
        %v6705 = vpop.f32.mrb[0].mxu0
        %6706 = vdwg.mxu0
        %6707 = vmatprep.subr.bf16.mxu0 0
        %6708 = vmatpush1.bf16.msra.mxu0 %v4905
        %6709 = vmatprep.subr.bf16.mxu0 0
        %6710 = vmatpush1.bf16.msra.mxu0 %v4906
        %6711 = vmatprep.subr.bf16.mxu0 0
        %6712 = vmatpush1.bf16.msra.mxu0 %v4907
        %6713 = vmatprep.subr.bf16.mxu0 0
        %6714 = vmatpush1.bf16.msra.mxu0 %v4908
        %6715 = vmatprep.subr.bf16.mxu0 0
        %6716 = vmatpush1.bf16.msra.mxu0 %v4909
        %6717 = vmatprep.subr.bf16.mxu0 0
        %6718 = vmatpush1.bf16.msra.mxu0 %v4910
        %6719 = vmatprep.subr.bf16.mxu0 0
        %6720 = vmatpush1.bf16.msra.mxu0 %v4911
        %6721 = vmatprep.subr.bf16.mxu0 0
        %6722 = vmatpush1.bf16.msra.mxu0 %v4912
        %6723 = vmatprep.subr.bf16.mxu0 0
        %6724 = vmatpush1.bf16.msra.mxu0 %v4913
        %6725 = vmatprep.subr.bf16.mxu0 0
        %6726 = vmatpush1.bf16.msra.mxu0 %v4914
        %6727 = vmatprep.subr.bf16.mxu0 0
        %6728 = vmatpush1.bf16.msra.mxu0 %v4915
        %6729 = vmatprep.subr.bf16.mxu0 0
        %6730 = vmatpush1.bf16.msra.mxu0 %v4916
        %6731 = vmatprep.subr.bf16.mxu0 0
        %6732 = vmatpush1.bf16.msra.mxu0 %v4917
        %6733 = vmatprep.subr.bf16.mxu0 0
        %6734 = vmatpush1.bf16.msra.mxu0 %v4918
        %6735 = vmatprep.subr.bf16.mxu0 0
        %6736 = vmatpush1.bf16.msra.mxu0 %v4919
        %6737 = vmatprep.subr.bf16.mxu0 0
        %6738 = vmatpush1.bf16.msra.mxu0 %v4920
        %6739 = vmatprep.mubr.bf16.mxu0 %v2094
        %6740 = vmatmul.mubr.bf16.gmra.mrb[0].mxu0 %v2093
        %v6741 = vpop.f32.mrb[0].mxu0
        %v6742 = vadd.f32 %v6701, %v6741
        %v6743 = vpop.f32.mrb[0].mxu0
        %v6744 = vpop.f32.mrb[0].mxu0
        %v6745 = vadd.f32 %v6704, %v6744
        %v6746 = vpop.f32.mrb[0].mxu0
        %6747 = vdwg.mxu0
        %6748 = vmatprep.subr.bf16.mxu0 0
        %6749 = vmatpush1.bf16.msra.mxu0 %v4921
        %6750 = vmatprep.subr.bf16.mxu0 0
        %6751 = vmatpush1.bf16.msra.mxu0 %v4922
        %6752 = vmatprep.subr.bf16.mxu0 0
        %6753 = vmatpush1.bf16.msra.mxu0 %v4923
        %6754 = vmatprep.subr.bf16.mxu0 0
        %6755 = vmatpush1.bf16.msra.mxu0 %v4924
        %6756 = vmatprep.subr.bf16.mxu0 0
        %6757 = vmatpush1.bf16.msra.mxu0 %v4925
        %6758 = vmatprep.subr.bf16.mxu0 0
        %6759 = vmatpush1.bf16.msra.mxu0 %v4926
        %6760 = vmatprep.subr.bf16.mxu0 0
        %6761 = vmatpush1.bf16.msra.mxu0 %v4927
        %6762 = vmatprep.subr.bf16.mxu0 0
        %6763 = vmatpush1.bf16.msra.mxu0 %v4928
        %6764 = vmatprep.subr.bf16.mxu0 0
        %6765 = vmatpush1.bf16.msra.mxu0 %v4929
        %6766 = vmatprep.subr.bf16.mxu0 0
        %6767 = vmatpush1.bf16.msra.mxu0 %v4930
        %6768 = vmatprep.subr.bf16.mxu0 0
        %6769 = vmatpush1.bf16.msra.mxu0 %v4931
        %6770 = vmatprep.subr.bf16.mxu0 0
        %6771 = vmatpush1.bf16.msra.mxu0 %v4932
        %6772 = vmatprep.subr.bf16.mxu0 0
        %6773 = vmatpush1.bf16.msra.mxu0 %v4933
        %6774 = vmatprep.subr.bf16.mxu0 0
        %6775 = vmatpush1.bf16.msra.mxu0 %v4934
        %6776 = vmatprep.subr.bf16.mxu0 0
        %6777 = vmatpush1.bf16.msra.mxu0 %v4935
        %6778 = vmatprep.subr.bf16.mxu0 0
        %6779 = vmatpush1.bf16.msra.mxu0 %v4936
        %6780 = vmatprep.mubr.bf16.mxu0 %v2096
        %6781 = vmatmul.mubr.bf16.gmra.mrb[0].mxu0 %v2095
        %v6782 = vpop.f32.mrb[0].mxu0
        %v6783 = vadd.f32 %v6742, %v6782
        %v6784 = vpop.f32.mrb[0].mxu0
        %v6785 = vpop.f32.mrb[0].mxu0
        %v6786 = vadd.f32 %v6745, %v6785
        %v6787 = vpop.f32.mrb[0].mxu0
        %6788 = vdwg.mxu0
        %6789 = vmatprep.subr.bf16.mxu0 0
        %6790 = vmatpush1.bf16.msra.mxu0 %v4937
        %6791 = vmatprep.subr.bf16.mxu0 0
        %6792 = vmatpush1.bf16.msra.mxu0 %v4938
        %6793 = vmatprep.subr.bf16.mxu0 0
        %6794 = vmatpush1.bf16.msra.mxu0 %v4939
        %6795 = vmatprep.subr.bf16.mxu0 0
        %6796 = vmatpush1.bf16.msra.mxu0 %v4940
        %6797 = vmatprep.subr.bf16.mxu0 0
        %6798 = vmatpush1.bf16.msra.mxu0 %v4941
        %6799 = vmatprep.subr.bf16.mxu0 0
        %6800 = vmatpush1.bf16.msra.mxu0 %v4942
        %6801 = vmatprep.subr.bf16.mxu0 0
        %6802 = vmatpush1.bf16.msra.mxu0 %v4943
        %6803 = vmatprep.subr.bf16.mxu0 0
        %6804 = vmatpush1.bf16.msra.mxu0 %v4944
        %6805 = vmatprep.subr.bf16.mxu0 0
        %6806 = vmatpush1.bf16.msra.mxu0 %v4945
        %6807 = vmatprep.subr.bf16.mxu0 0
        %6808 = vmatpush1.bf16.msra.mxu0 %v4946
        %6809 = vmatprep.subr.bf16.mxu0 0
        %6810 = vmatpush1.bf16.msra.mxu0 %v4947
        %6811 = vmatprep.subr.bf16.mxu0 0
        %6812 = vmatpush1.bf16.msra.mxu0 %v4948
        %6813 = vmatprep.subr.bf16.mxu0 0
        %6814 = vmatpush1.bf16.msra.mxu0 %v4949
        %6815 = vmatprep.subr.bf16.mxu0 0
        %6816 = vmatpush1.bf16.msra.mxu0 %v4950
        %6817 = vmatprep.subr.bf16.mxu0 0
        %6818 = vmatpush1.bf16.msra.mxu0 %v4951
        %6819 = vmatprep.subr.bf16.mxu0 0
        %6820 = vmatpush1.bf16.msra.mxu0 %v4952
        %6821 = vmatprep.mubr.bf16.mxu0 %v2098
        %6822 = vmatmul.mubr.bf16.gmra.mrb[0].mxu0 %v2097
        %v6823 = vpop.f32.mrb[0].mxu0
        %v6824 = vadd.f32 %v6783, %v6823
        %v6825 = vpop.f32.mrb[0].mxu0
        %v6826 = vpop.f32.mrb[0].mxu0
        %v6827 = vadd.f32 %v6786, %v6826
        %v6828 = vpop.f32.mrb[0].mxu0
        %6829 = vdwg.mxu0
        %6830 = vmatprep.subr.bf16.mxu0 0
        %6831 = vmatpush1.bf16.msra.mxu0 %v4953
        %6832 = vmatprep.subr.bf16.mxu0 0
        %6833 = vmatpush1.bf16.msra.mxu0 %v4954
        %6834 = vmatprep.subr.bf16.mxu0 0
        %6835 = vmatpush1.bf16.msra.mxu0 %v4955
        %6836 = vmatprep.subr.bf16.mxu0 0
        %6837 = vmatpush1.bf16.msra.mxu0 %v4956
        %6838 = vmatprep.subr.bf16.mxu0 0
        %6839 = vmatpush1.bf16.msra.mxu0 %v4957
        %6840 = vmatprep.subr.bf16.mxu0 0
        %6841 = vmatpush1.bf16.msra.mxu0 %v4958
        %6842 = vmatprep.subr.bf16.mxu0 0
        %6843 = vmatpush1.bf16.msra.mxu0 %v4959
        %6844 = vmatprep.subr.bf16.mxu0 0
        %6845 = vmatpush1.bf16.msra.mxu0 %v4960
        %6846 = vmatprep.subr.bf16.mxu0 0
        %6847 = vmatpush1.bf16.msra.mxu0 %v4961
        %6848 = vmatprep.subr.bf16.mxu0 0
        %6849 = vmatpush1.bf16.msra.mxu0 %v4962
        %6850 = vmatprep.subr.bf16.mxu0 0
        %6851 = vmatpush1.bf16.msra.mxu0 %v4963
        %6852 = vmatprep.subr.bf16.mxu0 0
        %6853 = vmatpush1.bf16.msra.mxu0 %v4964
        %6854 = vmatprep.subr.bf16.mxu0 0
        %6855 = vmatpush1.bf16.msra.mxu0 %v4965
        %6856 = vmatprep.subr.bf16.mxu0 0
        %6857 = vmatpush1.bf16.msra.mxu0 %v4966
        %6858 = vmatprep.subr.bf16.mxu0 0
        %6859 = vmatpush1.bf16.msra.mxu0 %v4967
        %6860 = vmatprep.subr.bf16.mxu0 0
        %6861 = vmatpush1.bf16.msra.mxu0 %v4968
        %6862 = vmatprep.mubr.bf16.mxu0 %v2100
        %6863 = vmatmul.mubr.bf16.gmra.mrb[0].mxu0 %v2099
        %v6864 = vpop.f32.mrb[0].mxu0
        %v6865 = vadd.f32 %v6824, %v6864
        %v6866 = vpop.f32.mrb[0].mxu0
        %v6867 = vpop.f32.mrb[0].mxu0
        %v6868 = vadd.f32 %v6827, %v6867
        %v6869 = vpop.f32.mrb[0].mxu0
        %6870 = vdwg.mxu0
        %6871 = vmatprep.subr.bf16.mxu0 0
        %6872 = vmatpush1.bf16.msra.mxu0 %v4969
        %6873 = vmatprep.subr.bf16.mxu0 0
        %6874 = vmatpush1.bf16.msra.mxu0 %v4970
        %6875 = vmatprep.subr.bf16.mxu0 0
        %6876 = vmatpush1.bf16.msra.mxu0 %v4971
        %6877 = vmatprep.subr.bf16.mxu0 0
        %6878 = vmatpush1.bf16.msra.mxu0 %v4972
        %6879 = vmatprep.subr.bf16.mxu0 0
        %6880 = vmatpush1.bf16.msra.mxu0 %v4973
        %6881 = vmatprep.subr.bf16.mxu0 0
        %6882 = vmatpush1.bf16.msra.mxu0 %v4974
        %6883 = vmatprep.subr.bf16.mxu0 0
        %6884 = vmatpush1.bf16.msra.mxu0 %v4975
        %6885 = vmatprep.subr.bf16.mxu0 0
        %6886 = vmatpush1.bf16.msra.mxu0 %v4976
        %6887 = vmatprep.subr.bf16.mxu0 0
        %6888 = vmatpush1.bf16.msra.mxu0 %v4977
        %6889 = vmatprep.subr.bf16.mxu0 0
        %6890 = vmatpush1.bf16.msra.mxu0 %v4978
        %6891 = vmatprep.subr.bf16.mxu0 0
        %6892 = vmatpush1.bf16.msra.mxu0 %v4979
        %6893 = vmatprep.subr.bf16.mxu0 0
        %6894 = vmatpush1.bf16.msra.mxu0 %v4980
        %6895 = vmatprep.subr.bf16.mxu0 0
        %6896 = vmatpush1.bf16.msra.mxu0 %v4981
        %6897 = vmatprep.subr.bf16.mxu0 0
        %6898 = vmatpush1.bf16.msra.mxu0 %v4982
        %6899 = vmatprep.subr.bf16.mxu0 0
        %6900 = vmatpush1.bf16.msra.mxu0 %v4983
        %6901 = vmatprep.subr.bf16.mxu0 0
        %6902 = vmatpush1.bf16.msra.mxu0 %v4984
        %6903 = vmatprep.mubr.bf16.mxu0 %v2102
        %6904 = vmatmul.mubr.bf16.gmra.mrb[0].mxu0 %v2101
        %v6905 = vpop.f32.mrb[0].mxu0
        %v6906 = vadd.f32 %v6865, %v6905
        %v6907 = vpop.f32.mrb[0].mxu0
        %v6908 = vpop.f32.mrb[0].mxu0
        %v6909 = vadd.f32 %v6868, %v6908
        %v6910 = vpop.f32.mrb[0].mxu0
        %6911 = vdwg.mxu0
        %6912 = vmatprep.subr.bf16.mxu0 0
        %6913 = vmatpush1.bf16.msra.mxu0 %v4985
        %6914 = vmatprep.subr.bf16.mxu0 0
        %6915 = vmatpush1.bf16.msra.mxu0 %v4986
        %6916 = vmatprep.subr.bf16.mxu0 0
        %6917 = vmatpush1.bf16.msra.mxu0 %v4987
        %6918 = vmatprep.subr.bf16.mxu0 0
        %6919 = vmatpush1.bf16.msra.mxu0 %v4988
        %6920 = vmatprep.subr.bf16.mxu0 0
        %6921 = vmatpush1.bf16.msra.mxu0 %v4989
        %6922 = vmatprep.subr.bf16.mxu0 0
        %6923 = vmatpush1.bf16.msra.mxu0 %v4990
        %6924 = vmatprep.subr.bf16.mxu0 0
        %6925 = vmatpush1.bf16.msra.mxu0 %v4991
        %6926 = vmatprep.subr.bf16.mxu0 0
        %6927 = vmatpush1.bf16.msra.mxu0 %v4992
        %6928 = vmatprep.subr.bf16.mxu0 0
        %6929 = vmatpush1.bf16.msra.mxu0 %v4993
        %6930 = vmatprep.subr.bf16.mxu0 0
        %6931 = vmatpush1.bf16.msra.mxu0 %v4994
        %6932 = vmatprep.subr.bf16.mxu0 0
        %6933 = vmatpush1.bf16.msra.mxu0 %v4995
        %6934 = vmatprep.subr.bf16.mxu0 0
        %6935 = vmatpush1.bf16.msra.mxu0 %v4996
        %6936 = vmatprep.subr.bf16.mxu0 0
        %6937 = vmatpush1.bf16.msra.mxu0 %v4997
        %6938 = vmatprep.subr.bf16.mxu0 0
        %6939 = vmatpush1.bf16.msra.mxu0 %v4998
        %6940 = vmatprep.subr.bf16.mxu0 0
        %6941 = vmatpush1.bf16.msra.mxu0 %v4999
        %6942 = vmatprep.subr.bf16.mxu0 0
        %6943 = vmatpush1.bf16.msra.mxu0 %v5000
        %6944 = vmatprep.mubr.bf16.mxu0 %v2104
        %6945 = vmatmul.mubr.bf16.gmra.mrb[0].mxu0 %v2103
        %v6946 = vpop.f32.mrb[0].mxu0
        %v6947 = vadd.f32 %v6906, %v6946
        %v6948 = vpop.f32.mrb[0].mxu0
        %v6949 = vpop.f32.mrb[0].mxu0
        %v6950 = vadd.f32 %v6909, %v6949
        %v6951 = vpop.f32.mrb[0].mxu0
        %6952 = vdwg.mxu0
        %6953 = vmatprep.subr.bf16.mxu0 0
        %6954 = vmatpush1.bf16.msra.mxu0 %v5001
        %6955 = vmatprep.subr.bf16.mxu0 0
        %6956 = vmatpush1.bf16.msra.mxu0 %v5002
        %6957 = vmatprep.subr.bf16.mxu0 0
        %6958 = vmatpush1.bf16.msra.mxu0 %v5003
        %6959 = vmatprep.subr.bf16.mxu0 0
        %6960 = vmatpush1.bf16.msra.mxu0 %v5004
        %6961 = vmatprep.subr.bf16.mxu0 0
        %6962 = vmatpush1.bf16.msra.mxu0 %v5005
        %6963 = vmatprep.subr.bf16.mxu0 0
        %6964 = vmatpush1.bf16.msra.mxu0 %v5006
        %6965 = vmatprep.subr.bf16.mxu0 0
        %6966 = vmatpush1.bf16.msra.mxu0 %v5007
        %6967 = vmatprep.subr.bf16.mxu0 0
        %6968 = vmatpush1.bf16.msra.mxu0 %v5008
        %6969 = vmatprep.subr.bf16.mxu0 0
        %6970 = vmatpush1.bf16.msra.mxu0 %v5009
        %6971 = vmatprep.subr.bf16.mxu0 0
        %6972 = vmatpush1.bf16.msra.mxu0 %v5010
        %6973 = vmatprep.subr.bf16.mxu0 0
        %6974 = vmatpush1.bf16.msra.mxu0 %v5011
        %6975 = vmatprep.subr.bf16.mxu0 0
        %6976 = vmatpush1.bf16.msra.mxu0 %v5012
        %6977 = vmatprep.subr.bf16.mxu0 0
        %6978 = vmatpush1.bf16.msra.mxu0 %v5013
        %6979 = vmatprep.subr.bf16.mxu0 0
        %6980 = vmatpush1.bf16.msra.mxu0 %v5014
        %6981 = vmatprep.subr.bf16.mxu0 0
        %6982 = vmatpush1.bf16.msra.mxu0 %v5015
        %6983 = vmatprep.subr.bf16.mxu0 0
        %6984 = vmatpush1.bf16.msra.mxu0 %v5016
        %6985 = vmatprep.mubr.bf16.mxu0 %v2106
        %6986 = vmatmul.mubr.bf16.gmra.mrb[0].mxu0 %v2105
        %v6987 = vpop.f32.mrb[0].mxu0
        %v6988 = vadd.f32 %v6947, %v6987
        %v6989 = vpop.f32.mrb[0].mxu0
        %v6990 = vpop.f32.mrb[0].mxu0
        %v6991 = vadd.f32 %v6950, %v6990
        %v6992 = vpop.f32.mrb[0].mxu0
        %6993 = vdwg.mxu0
        %6994 = vmatprep.subr.bf16.mxu0 0
        %6995 = vmatpush1.bf16.msra.mxu0 %v5017
        %6996 = vmatprep.subr.bf16.mxu0 0
        %6997 = vmatpush1.bf16.msra.mxu0 %v5018
        %6998 = vmatprep.subr.bf16.mxu0 0
        %6999 = vmatpush1.bf16.msra.mxu0 %v5019
        %7000 = vmatprep.subr.bf16.mxu0 0
        %7001 = vmatpush1.bf16.msra.mxu0 %v5020
        %7002 = vmatprep.subr.bf16.mxu0 0
        %7003 = vmatpush1.bf16.msra.mxu0 %v5021
        %7004 = vmatprep.subr.bf16.mxu0 0
        %7005 = vmatpush1.bf16.msra.mxu0 %v5022
        %7006 = vmatprep.subr.bf16.mxu0 0
        %7007 = vmatpush1.bf16.msra.mxu0 %v5023
        %7008 = vmatprep.subr.bf16.mxu0 0
        %7009 = vmatpush1.bf16.msra.mxu0 %v5024
        %7010 = vmatprep.subr.bf16.mxu0 0
        %7011 = vmatpush1.bf16.msra.mxu0 %v5025
        %7012 = vmatprep.subr.bf16.mxu0 0
        %7013 = vmatpush1.bf16.msra.mxu0 %v5026
        %7014 = vmatprep.subr.bf16.mxu0 0
        %7015 = vmatpush1.bf16.msra.mxu0 %v5027
        %7016 = vmatprep.subr.bf16.mxu0 0
        %7017 = vmatpush1.bf16.msra.mxu0 %v5028
        %7018 = vmatprep.subr.bf16.mxu0 0
        %7019 = vmatpush1.bf16.msra.mxu0 %v5029
        %7020 = vmatprep.subr.bf16.mxu0 0
        %7021 = vmatpush1.bf16.msra.mxu0 %v5030
        %7022 = vmatprep.subr.bf16.mxu0 0
        %7023 = vmatpush1.bf16.msra.mxu0 %v5031
        %7024 = vmatprep.subr.bf16.mxu0 0
        %7025 = vmatpush1.bf16.msra.mxu0 %v5032
        %7026 = vmatprep.mubr.bf16.mxu0 %v2108
        %7027 = vmatmul.mubr.bf16.gmra.mrb[0].mxu0 %v2107
        %v7028 = vpop.f32.mrb[0].mxu0
        %v7029 = vadd.f32 %v6988, %v7028
        %v7030 = vpop.f32.mrb[0].mxu0
        %v7031 = vpop.f32.mrb[0].mxu0
        %v7032 = vadd.f32 %v6991, %v7031
        %v7033 = vpop.f32.mrb[0].mxu0
        %7034 = vdwg.mxu0
        %7035 = vmatprep.subr.bf16.mxu0 0
        %7036 = vmatpush1.bf16.msra.mxu0 %v5033
        %7037 = vmatprep.subr.bf16.mxu0 0
        %7038 = vmatpush1.bf16.msra.mxu0 %v5034
        %7039 = vmatprep.subr.bf16.mxu0 0
        %7040 = vmatpush1.bf16.msra.mxu0 %v5035
        %7041 = vmatprep.subr.bf16.mxu0 0
        %7042 = vmatpush1.bf16.msra.mxu0 %v5036
        %7043 = vmatprep.subr.bf16.mxu0 0
        %7044 = vmatpush1.bf16.msra.mxu0 %v5037
        %7045 = vmatprep.subr.bf16.mxu0 0
        %7046 = vmatpush1.bf16.msra.mxu0 %v5038
        %7047 = vmatprep.subr.bf16.mxu0 0
        %7048 = vmatpush1.bf16.msra.mxu0 %v5039
        %7049 = vmatprep.subr.bf16.mxu0 0
        %7050 = vmatpush1.bf16.msra.mxu0 %v5040
        %7051 = vmatprep.subr.bf16.mxu0 0
        %7052 = vmatpush1.bf16.msra.mxu0 %v5041
        %7053 = vmatprep.subr.bf16.mxu0 0
        %7054 = vmatpush1.bf16.msra.mxu0 %v5042
        %7055 = vmatprep.subr.bf16.mxu0 0
        %7056 = vmatpush1.bf16.msra.mxu0 %v5043
        %7057 = vmatprep.subr.bf16.mxu0 0
        %7058 = vmatpush1.bf16.msra.mxu0 %v5044
        %7059 = vmatprep.subr.bf16.mxu0 0
        %7060 = vmatpush1.bf16.msra.mxu0 %v5045
        %7061 = vmatprep.subr.bf16.mxu0 0
        %7062 = vmatpush1.bf16.msra.mxu0 %v5046
        %7063 = vmatprep.subr.bf16.mxu0 0
        %7064 = vmatpush1.bf16.msra.mxu0 %v5047
        %7065 = vmatprep.subr.bf16.mxu0 0
        %7066 = vmatpush1.bf16.msra.mxu0 %v5048
        %7067 = vmatprep.mubr.bf16.mxu0 %v2110
        %7068 = vmatmul.mubr.bf16.gmra.mrb[0].mxu0 %v2109
        %v7069 = vpop.f32.mrb[0].mxu0
        %v7070 = vadd.f32 %v7029, %v7069
        %v7071 = vpop.f32.mrb[0].mxu0
        %v7072 = vpop.f32.mrb[0].mxu0
        %v7073 = vadd.f32 %v7032, %v7072
        %v7074 = vpop.f32.mrb[0].mxu0
        %7075 = vdwg.mxu0
        %7076 = vmatprep.subr.bf16.mxu0 0
        %7077 = vmatpush1.bf16.msra.mxu0 %v5049
        %7078 = vmatprep.subr.bf16.mxu0 0
        %7079 = vmatpush1.bf16.msra.mxu0 %v5050
        %7080 = vmatprep.subr.bf16.mxu0 0
        %7081 = vmatpush1.bf16.msra.mxu0 %v5051
        %7082 = vmatprep.subr.bf16.mxu0 0
        %7083 = vmatpush1.bf16.msra.mxu0 %v5052
        %7084 = vmatprep.subr.bf16.mxu0 0
        %7085 = vmatpush1.bf16.msra.mxu0 %v5053
        %7086 = vmatprep.subr.bf16.mxu0 0
        %7087 = vmatpush1.bf16.msra.mxu0 %v5054
        %7088 = vmatprep.subr.bf16.mxu0 0
        %7089 = vmatpush1.bf16.msra.mxu0 %v5055
        %7090 = vmatprep.subr.bf16.mxu0 0
        %7091 = vmatpush1.bf16.msra.mxu0 %v5056
        %7092 = vmatprep.subr.bf16.mxu0 0
        %7093 = vmatpush1.bf16.msra.mxu0 %v5057
        %7094 = vmatprep.subr.bf16.mxu0 0
        %7095 = vmatpush1.bf16.msra.mxu0 %v5058
        %7096 = vmatprep.subr.bf16.mxu0 0
        %7097 = vmatpush1.bf16.msra.mxu0 %v5059
        %7098 = vmatprep.subr.bf16.mxu0 0
        %7099 = vmatpush1.bf16.msra.mxu0 %v5060
        %7100 = vmatprep.subr.bf16.mxu0 0
        %7101 = vmatpush1.bf16.msra.mxu0 %v5061
        %7102 = vmatprep.subr.bf16.mxu0 0
        %7103 = vmatpush1.bf16.msra.mxu0 %v5062
        %7104 = vmatprep.subr.bf16.mxu0 0
        %7105 = vmatpush1.bf16.msra.mxu0 %v5063
        %7106 = vmatprep.subr.bf16.mxu0 0
        %7107 = vmatpush1.bf16.msra.mxu0 %v5064
        %7108 = vmatprep.mubr.bf16.mxu0 %v2112
        %7109 = vmatmul.mubr.bf16.gmra.mrb[0].mxu0 %v2111
        %v7110 = vpop.f32.mrb[0].mxu0
        %v7111 = vadd.f32 %v7070, %v7110
        %v7112 = vpop.f32.mrb[0].mxu0
        %v7113 = vpop.f32.mrb[0].mxu0
        %v7114 = vadd.f32 %v7073, %v7113
        %v7115 = vpop.f32.mrb[0].mxu0
        %7116 = vdwg.mxu0
        %v7117 = vxor.u32 %v7111, 2147483648
        %v7118 = vxor.u32 %v7114, 2147483648
        %v7119 = vmul.f32 %v7117, 1.442695
        %v7120 = vpow.pop %v7119
        %v7121 = vmul.f32 %v7118, 1.442695
        %v7122 = vpow.pop %v7121
        %v7123 = vadd.f32 %v7120, 1.0
        %v7124 = vadd.f32 %v7122, 1.0
        %v7125 = vrcp.pop %v7123
        %v7126 = vmul.f32 1.0, %v7125
        %v7127 = vrcp.pop %v7124
        %v7128 = vmul.f32 1.0, %v7127
        %v7129 = vmul.f32 %v7111, %v7126
        %v7130 = vmul.f32 %v7114, %v7128
        %v7131 = vpack.c.bf16 %v7130, %v7129
        %v7132 = vld [vmem:[%s3] sm:$0xf]
        %v7133 = vld [vmem:[%s3 + $0x4] sm:$0xf]
        %v7134 = vld [vmem:[%s3 + $0x8] sm:$0xf]
        %v7135 = vld [vmem:[%s3 + $0xc] sm:$0xf]
        %v7136 = vld [vmem:[%s3 + $0x10] sm:$0xf]
        %v7137 = vld [vmem:[%s3 + $0x14] sm:$0xf]
        %v7138 = vld [vmem:[%s3 + $0x18] sm:$0xf]
        %v7139 = vld [vmem:[%s3 + $0x1c] sm:$0xf]
        %v7140 = vld [vmem:[%s3 + $0x20] sm:$0xf]
        %v7141 = vld [vmem:[%s3 + $0x24] sm:$0xf]
        %v7142 = vld [vmem:[%s3 + $0x28] sm:$0xf]
        %v7143 = vld [vmem:[%s3 + $0x2c] sm:$0xf]
        %v7144 = vld [vmem:[%s3 + $0x30] sm:$0xf]
        %v7145 = vld [vmem:[%s3 + $0x34] sm:$0xf]
        %v7146 = vld [vmem:[%s3 + $0x38] sm:$0xf]
        %v7147 = vld [vmem:[%s3 + $0x3c] sm:$0xf]
        %v7148 = vld [vmem:[#allocation8] sm:$0x1]
        %v7150 = vlaneseq
        %v7151 = vshrl.u32 %v7150, 7
        %v7152 = vsub.s32 0, %v7151
        %v7153 = vrot.slane %v7148, %v7152
        %v7171 = vunpack.c.l.b16 %v7132
        %v7172 = vunpack.c.l.b16 %v7133
        %v7173 = vunpack.c.l.b16 %v7134
        %v7174 = vunpack.c.l.b16 %v7135
        %v7175 = vunpack.c.l.b16 %v7136
        %v7176 = vunpack.c.l.b16 %v7137
        %v7177 = vunpack.c.l.b16 %v7138
        %v7178 = vunpack.c.l.b16 %v7139
        %v7179 = vunpack.c.l.b16 %v7140
        %v7180 = vunpack.c.l.b16 %v7141
        %v7181 = vunpack.c.l.b16 %v7142
        %v7182 = vunpack.c.l.b16 %v7143
        %v7183 = vunpack.c.l.b16 %v7144
        %v7184 = vunpack.c.l.b16 %v7145
        %v7185 = vunpack.c.l.b16 %v7146
        %v7186 = vunpack.c.l.b16 %v7147
        %v7187 = vpack.c.b16 %v7172, %v7171
        %v7188 = vpack.c.b16 %v7174, %v7173
        %v7189 = vpack.c.b16 %v7176, %v7175
        %v7190 = vpack.c.b16 %v7178, %v7177
        %v7191 = vpack.c.b16 %v7180, %v7179
        %v7192 = vpack.c.b16 %v7182, %v7181
        %v7193 = vpack.c.b16 %v7184, %v7183
        %v7194 = vpack.c.b16 %v7186, %v7185
        %7203 = vmatprep.subr.bf16.mxu0 0
        %7204 = vmatpush1.bf16.msra.mxu0 %v7187
        %7205 = vmatprep.subr.bf16.mxu0 0
        %7206 = vmatpush1.bf16.msra.mxu0 %v7188
        %7207 = vmatprep.subr.bf16.mxu0 0
        %7208 = vmatpush1.bf16.msra.mxu0 %v7189
        %7209 = vmatprep.subr.bf16.mxu0 0
        %7210 = vmatpush1.bf16.msra.mxu0 %v7190
        %7211 = vmatprep.subr.bf16.mxu0 0
        %7212 = vmatpush1.bf16.msra.mxu0 %v7191
        %7213 = vmatprep.subr.bf16.mxu0 0
        %7214 = vmatpush1.bf16.msra.mxu0 %v7192
        %7215 = vmatprep.subr.bf16.mxu0 0
        %7216 = vmatpush1.bf16.msra.mxu0 %v7193
        %7217 = vmatprep.subr.bf16.mxu0 0
        %7218 = vmatpush1.bf16.msra.mxu0 %v7194
        %7219 = vmatprep.subr.bf16.mxu0 0
        %7220 = vmatpush1.bf16.msra.mxu0 0
        %7221 = vmatprep.subr.bf16.mxu0 0
        %7222 = vmatpush1.bf16.msra.mxu0 0
        %7223 = vmatprep.subr.bf16.mxu0 0
        %7224 = vmatpush1.bf16.msra.mxu0 0
        %7225 = vmatprep.subr.bf16.mxu0 0
        %7226 = vmatpush1.bf16.msra.mxu0 0
        %7227 = vmatprep.subr.bf16.mxu0 0
        %7228 = vmatpush1.bf16.msra.mxu0 0
        %7229 = vmatprep.subr.bf16.mxu0 0
        %7230 = vmatpush1.bf16.msra.mxu0 0
        %7231 = vmatprep.subr.bf16.mxu0 0
        %7232 = vmatpush1.bf16.msra.mxu0 0
        %7233 = vmatprep.subr.bf16.mxu0 0
        %7234 = vmatpush1.bf16.msra.mxu0 0
        %7235 = vmatprep.mubr.bf16.mxu0 0
        %7236 = vmatmul.mubr.bf16.gmra.mrb[0].mxu0 %v7131
        %v7237 = vpop.f32.mrb[0].mxu0
        %v7238 = vadd.f32 %v7153, %v7237
        %v7239 = vpop.f32.mrb[0].mxu0
        %v7240 = vpop.f32.mrb[0].mxu0
        %v7241 = vadd.f32 %v7153, %v7240
        %v7242 = vpop.f32.mrb[0].mxu0
        %7243 = vdwg.mxu0
        %v7244 = vxor.u32 %v7238, 2147483648
        %v7245 = vxor.u32 %v7241, 2147483648
        %v7246 = vmul.f32 %v7244, 1.442695
        %v7247 = vpow.pop %v7246
        %v7248 = vmul.f32 %v7245, 1.442695
        %v7249 = vpow.pop %v7248
        %v7250 = vadd.f32 %v7247, 1.0
        %v7251 = vadd.f32 %v7249, 1.0
        %v7252 = vrcp.pop %v7250
        %v7253 = vmul.f32 1.0, %v7252
        %v7254 = vrcp.pop %v7251
        %v7255 = vmul.f32 1.0, %v7254
        %v7256 = vmul.f32 %v7238, %v7253
        %v7257 = vmul.f32 %v7241, %v7255
        %v7258 = vpack.c.bf16 %v7257, %v7256
        %v7259 = vld [vmem:[%s5] sm:$0xf]
        %v7260 = vld [vmem:[%s5 + $0x4] sm:$0xf]
        %v7261 = vld [vmem:[%s5 + $0x8] sm:$0xf]
        %v7262 = vld [vmem:[%s5 + $0xc] sm:$0xf]
        %v7263 = vld [vmem:[%s5 + $0x10] sm:$0xf]
        %v7264 = vld [vmem:[%s5 + $0x14] sm:$0xf]
        %v7265 = vld [vmem:[%s5 + $0x18] sm:$0xf]
        %v7266 = vld [vmem:[%s5 + $0x1c] sm:$0xf]
        %v7267 = vld [vmem:[#allocation10] sm:$0x1]
        %v7269 = vlaneseq
        %v7270 = vshrl.u32 %v7269, 7
        %v7271 = vsub.s32 0, %v7270
        %v7272 = vrot.slane %v7267, %v7271
        %v7282 = vunpack.c.l.b16 %v7259
        %v7283 = vunpack.c.l.b16 %v7260
        %v7284 = vunpack.c.l.b16 %v7261
        %v7285 = vunpack.c.l.b16 %v7262
        %v7286 = vunpack.c.l.b16 %v7263
        %v7287 = vunpack.c.l.b16 %v7264
        %v7288 = vunpack.c.l.b16 %v7265
        %v7289 = vunpack.c.l.b16 %v7266
        %v7290 = vpack.c.b16 %v7283, %v7282
        %v7291 = vpack.c.b16 %v7285, %v7284
        %v7292 = vpack.c.b16 %v7287, %v7286
        %v7293 = vpack.c.b16 %v7289, %v7288
        %vm7298 = vcmask 523264
        %v7300 = vsel %vm7298, %v7258, 0
        %7302 = vmatprep.subr.bf16.mxu0 0
        %7303 = vmatpush1.bf16.msra.mxu0 %v7290
        %7304 = vmatprep.subr.bf16.mxu0 0
        %7305 = vmatpush1.bf16.msra.mxu0 %v7291
        %7306 = vmatprep.subr.bf16.mxu0 0
        %7307 = vmatpush1.bf16.msra.mxu0 %v7292
        %7308 = vmatprep.subr.bf16.mxu0 0
        %7309 = vmatpush1.bf16.msra.mxu0 %v7293
        %7310 = vmatprep.subr.bf16.mxu0 0
        %7311 = vmatpush1.bf16.msra.mxu0 0
        %7312 = vmatprep.subr.bf16.mxu0 0
        %7313 = vmatpush1.bf16.msra.mxu0 0
        %7314 = vmatprep.subr.bf16.mxu0 0
        %7315 = vmatpush1.bf16.msra.mxu0 0
        %7316 = vmatprep.subr.bf16.mxu0 0
        %7317 = vmatpush1.bf16.msra.mxu0 0
        %7318 = vmatprep.subr.bf16.mxu0 0
        %7319 = vmatpush1.bf16.msra.mxu0 0
        %7320 = vmatprep.subr.bf16.mxu0 0
        %7321 = vmatpush1.bf16.msra.mxu0 0
        %7322 = vmatprep.subr.bf16.mxu0 0
        %7323 = vmatpush1.bf16.msra.mxu0 0
        %7324 = vmatprep.subr.bf16.mxu0 0
        %7325 = vmatpush1.bf16.msra.mxu0 0
        %7326 = vmatprep.subr.bf16.mxu0 0
        %7327 = vmatpush1.bf16.msra.mxu0 0
        %7328 = vmatprep.subr.bf16.mxu0 0
        %7329 = vmatpush1.bf16.msra.mxu0 0
        %7330 = vmatprep.subr.bf16.mxu0 0
        %7331 = vmatpush1.bf16.msra.mxu0 0
        %7332 = vmatprep.subr.bf16.mxu0 0
        %7333 = vmatpush1.bf16.msra.mxu0 0
        %7334 = vmatprep.mubr.bf16.mxu0 0
        %7335 = vmatmul.mubr.bf16.gmra.mrb[0].mxu0 %v7300
        %v7336 = vpop.f32.mrb[0].mxu0
        %v7337 = vadd.f32 %v7272, %v7336
        %v7338 = vpop.f32.mrb[0].mxu0
        %v7339 = vpop.f32.mrb[0].mxu0
        %v7340 = vadd.f32 %v7272, %v7339
        %v7341 = vpop.f32.mrb[0].mxu0
        %7342 = vdwg.mxu0
        %v7343 = vadd.f32 %v7337, 0.0
        %v7344 = vadd.f32 %v7340, 0.0
        %v7345 = vtanh.pop %v7343
        %v7346 = vtanh.pop %v7344
        %v7347 = vmul.f32 %v7345, 2.002
        %v7348 = vmul.f32 %v7346, 2.002
        %v7349 = vround.ne.pseudo %v7347
        %v7350 = vround.ne.pseudo %v7348
        %v7351 = vmul.f32 %v7349, 0.5
        %v7352 = vmul.f32 %v7350, 0.5
        %v7353 = vpack.c.bf16 %v7352, %v7351
        %v7354 = vld [vmem:[#allocation11] sm:$0x1]
        %v7355 = vld [vmem:[#allocation13] sm:$0x1]
        %v7357 = vlaneseq
        %v7358 = vshrl.u32 %v7357, 7
        %v7359 = vsub.s32 0, %v7358
        %v7360 = vrot.slane %v7355, %v7359
        %vm7362 = vcmask 15360
        %v7364 = vsel %vm7362, %v7353, 0
        %vm7366 = vcmask 1040384
        %v7368 = vsel %vm7366, %v7354, 0
        %7370 = vmatprep.subr.bf16.mxu0 0
        %7371 = vmatpush1.bf16.msra.mxu0 %v7368
        %7372 = vmatprep.subr.bf16.mxu0 0
        %7373 = vmatpush1.bf16.msra.mxu0 0
        %7374 = vmatprep.subr.bf16.mxu0 0
        %7375 = vmatpush1.bf16.msra.mxu0 0
        %7376 = vmatprep.subr.bf16.mxu0 0
        %7377 = vmatpush1.bf16.msra.mxu0 0
        %7378 = vmatprep.subr.bf16.mxu0 0
        %7379 = vmatpush1.bf16.msra.mxu0 0
        %7380 = vmatprep.subr.bf16.mxu0 0
        %7381 = vmatpush1.bf16.msra.mxu0 0
        %7382 = vmatprep.subr.bf16.mxu0 0
        %7383 = vmatpush1.bf16.msra.mxu0 0
        %7384 = vmatprep.subr.bf16.mxu0 0
        %7385 = vmatpush1.bf16.msra.mxu0 0
        %7386 = vmatprep.subr.bf16.mxu0 0
        %7387 = vmatpush1.bf16.msra.mxu0 0
        %7388 = vmatprep.subr.bf16.mxu0 0
        %7389 = vmatpush1.bf16.msra.mxu0 0
        %7390 = vmatprep.subr.bf16.mxu0 0
        %7391 = vmatpush1.bf16.msra.mxu0 0
        %7392 = vmatprep.subr.bf16.mxu0 0
        %7393 = vmatpush1.bf16.msra.mxu0 0
        %7394 = vmatprep.subr.bf16.mxu0 0
        %7395 = vmatpush1.bf16.msra.mxu0 0
        %7396 = vmatprep.subr.bf16.mxu0 0
        %7397 = vmatpush1.bf16.msra.mxu0 0
        %7398 = vmatprep.subr.bf16.mxu0 0
        %7399 = vmatpush1.bf16.msra.mxu0 0
        %7400 = vmatprep.subr.bf16.mxu0 0
        %7401 = vmatpush1.bf16.msra.mxu0 0
        %7402 = vmatprep.mubr.bf16.mxu0 0
        %7403 = vmatmul.mubr.bf16.gmra.mrb[0].mxu0 %v7364
        %v7404 = vpop.f32.mrb[0].mxu0
        %v7405 = vadd.f32 %v7360, %v7404
        %v7406 = vpop.f32.mrb[0].mxu0
        %v7407 = vpop.f32.mrb[0].mxu0
        %v7408 = vadd.f32 %v7360, %v7407
        %v7409 = vpop.f32.mrb[0].mxu0
        %7410 = vdwg.mxu0
        %v7411 = vxor.u32 %v7405, 2147483648
        %v7412 = vxor.u32 %v7408, 2147483648
        %v7413 = vmul.f32 %v7411, 1.442695
        %v7414 = vpow.pop %v7413
        %v7415 = vmul.f32 %v7412, 1.442695
        %v7416 = vpow.pop %v7415
        %v7417 = vadd.f32 %v7414, 1.0
        %v7418 = vadd.f32 %v7416, 1.0
        %v7419 = vrcp.pop %v7417
        %v7420 = vmul.f32 1.0, %v7419
        %v7421 = vrcp.pop %v7418
        %v7422 = vmul.f32 1.0, %v7421
        %v7423 = vmul.f32 %v7405, %v7420
        %v7424 = vmul.f32 %v7408, %v7422
        %v7425 = vpack.c.bf16 %v7424, %v7423
        %v7426 = vld [vmem:[#allocation14] sm:$0xf]
        %v7427 = vld [vmem:[#allocation14 + $0x4] sm:$0xf]
        %v7428 = vld [vmem:[#allocation14 + $0x8] sm:$0xf]
        %v7429 = vld [vmem:[#allocation14 + $0xc] sm:$0xf]
        %v7430 = vld [vmem:[#allocation14 + $0x10] sm:$0xf]
        %v7431 = vld [vmem:[#allocation14 + $0x14] sm:$0xf]
        %v7432 = vld [vmem:[#allocation14 + $0x18] sm:$0xf]
        %v7433 = vld [vmem:[#allocation14 + $0x1c] sm:$0xf]
        %v7434 = vld [vmem:[#allocation16] sm:$0x1]
        %v7436 = vlaneseq
        %v7437 = vshrl.u32 %v7436, 7
        %v7438 = vsub.s32 0, %v7437
        %v7439 = vrot.slane %v7434, %v7438
        %v7449 = vunpack.c.l.b16 %v7426
        %v7450 = vunpack.c.l.b16 %v7427
        %v7451 = vunpack.c.l.b16 %v7428
        %v7452 = vunpack.c.l.b16 %v7429
        %v7453 = vunpack.c.l.b16 %v7430
        %v7454 = vunpack.c.l.b16 %v7431
        %v7455 = vunpack.c.l.b16 %v7432
        %v7456 = vunpack.c.l.b16 %v7433
        %v7457 = vpack.c.b16 %v7450, %v7449
        %v7458 = vpack.c.b16 %v7452, %v7451
        %v7459 = vpack.c.b16 %v7454, %v7453
        %v7460 = vpack.c.b16 %v7456, %v7455
        %v7466 = vsel %vm7298, %v7425, 0
        %7468 = vmatprep.subr.bf16.mxu0 0
        %7469 = vmatpush1.bf16.msra.mxu0 %v7457
        %7470 = vmatprep.subr.bf16.mxu0 0
        %7471 = vmatpush1.bf16.msra.mxu0 %v7458
        %7472 = vmatprep.subr.bf16.mxu0 0
        %7473 = vmatpush1.bf16.msra.mxu0 %v7459
        %7474 = vmatprep.subr.bf16.mxu0 0
        %7475 = vmatpush1.bf16.msra.mxu0 %v7460
        %7476 = vmatprep.subr.bf16.mxu0 0
        %7477 = vmatpush1.bf16.msra.mxu0 0
        %7478 = vmatprep.subr.bf16.mxu0 0
        %7479 = vmatpush1.bf16.msra.mxu0 0
        %7480 = vmatprep.subr.bf16.mxu0 0
        %7481 = vmatpush1.bf16.msra.mxu0 0
        %7482 = vmatprep.subr.bf16.mxu0 0
        %7483 = vmatpush1.bf16.msra.mxu0 0
        %7484 = vmatprep.subr.bf16.mxu0 0
        %7485 = vmatpush1.bf16.msra.mxu0 0
        %7486 = vmatprep.subr.bf16.mxu0 0
        %7487 = vmatpush1.bf16.msra.mxu0 0
        %7488 = vmatprep.subr.bf16.mxu0 0
        %7489 = vmatpush1.bf16.msra.mxu0 0
        %7490 = vmatprep.subr.bf16.mxu0 0
        %7491 = vmatpush1.bf16.msra.mxu0 0
        %7492 = vmatprep.subr.bf16.mxu0 0
        %7493 = vmatpush1.bf16.msra.mxu0 0
        %7494 = vmatprep.subr.bf16.mxu0 0
        %7495 = vmatpush1.bf16.msra.mxu0 0
        %7496 = vmatprep.subr.bf16.mxu0 0
        %7497 = vmatpush1.bf16.msra.mxu0 0
        %7498 = vmatprep.subr.bf16.mxu0 0
        %7499 = vmatpush1.bf16.msra.mxu0 0
        %7500 = vmatprep.mubr.bf16.mxu0 0
        %7501 = vmatmul.mubr.bf16.gmra.mrb[0].mxu0 %v7466
        %v7502 = vpop.f32.mrb[0].mxu0
        %v7503 = vadd.f32 %v7439, %v7502
        %v7504 = vpop.f32.mrb[0].mxu0
        %v7505 = vpop.f32.mrb[0].mxu0
        %v7506 = vadd.f32 %v7439, %v7505
        %v7507 = vpop.f32.mrb[0].mxu0
        %7508 = vdwg.mxu0
        %v7509 = vxor.u32 %v7503, 2147483648
        %v7510 = vxor.u32 %v7506, 2147483648
        %v7511 = vmul.f32 %v7509, 1.442695
        %v7512 = vpow.pop %v7511
        %v7513 = vmul.f32 %v7510, 1.442695
        %v7514 = vpow.pop %v7513
        %v7515 = vadd.f32 %v7512, 1.0
        %v7516 = vadd.f32 %v7514, 1.0
        %v7517 = vrcp.pop %v7515
        %v7518 = vmul.f32 1.0, %v7517
        %v7519 = vrcp.pop %v7516
        %v7520 = vmul.f32 1.0, %v7519
        %v7521 = vmul.f32 %v7503, %v7518
        %v7522 = vmul.f32 %v7506, %v7520
        %v7523 = vpack.c.bf16 %v7522, %v7521
        %v7524 = vld [vmem:[#allocation17] sm:$0xf]
        %v7525 = vld [vmem:[#allocation17 + $0x4] sm:$0xf]
        %v7526 = vld [vmem:[#allocation17 + $0x8] sm:$0xf]
        %v7527 = vld [vmem:[#allocation17 + $0xc] sm:$0xf]
        %v7528 = vld [vmem:[#allocation17 + $0x10] sm:$0xf]
        %v7529 = vld [vmem:[#allocation17 + $0x14] sm:$0xf]
        %v7530 = vld [vmem:[#allocation17 + $0x18] sm:$0xf]
        %v7531 = vld [vmem:[#allocation17 + $0x1c] sm:$0xf]
        %v7532 = vld [vmem:[#allocation19] sm:$0x1]
        %v7534 = vlaneseq
        %v7535 = vshrl.u32 %v7534, 7
        %v7536 = vsub.s32 0, %v7535
        %v7537 = vrot.slane %v7532, %v7536
        %v7547 = vunpack.c.l.b16 %v7524
        %v7548 = vunpack.c.l.b16 %v7525
        %v7549 = vunpack.c.l.b16 %v7526
        %v7550 = vunpack.c.l.b16 %v7527
        %v7551 = vunpack.c.l.b16 %v7528
        %v7552 = vunpack.c.l.b16 %v7529
        %v7553 = vunpack.c.l.b16 %v7530
        %v7554 = vunpack.c.l.b16 %v7531
        %v7555 = vpack.c.b16 %v7548, %v7547
        %v7556 = vpack.c.b16 %v7550, %v7549
        %v7557 = vpack.c.b16 %v7552, %v7551
        %v7558 = vpack.c.b16 %v7554, %v7553
        %v7564 = vsel %vm7298, %v7523, 0
        %7566 = vmatprep.subr.bf16.mxu0 0
        %7567 = vmatpush1.bf16.msra.mxu0 %v7555
        %7568 = vmatprep.subr.bf16.mxu0 0
        %7569 = vmatpush1.bf16.msra.mxu0 %v7556
        %7570 = vmatprep.subr.bf16.mxu0 0
        %7571 = vmatpush1.bf16.msra.mxu0 %v7557
        %7572 = vmatprep.subr.bf16.mxu0 0
        %7573 = vmatpush1.bf16.msra.mxu0 %v7558
        %7574 = vmatprep.subr.bf16.mxu0 0
        %7575 = vmatpush1.bf16.msra.mxu0 0
        %7576 = vmatprep.subr.bf16.mxu0 0
        %7577 = vmatpush1.bf16.msra.mxu0 0
        %7578 = vmatprep.subr.bf16.mxu0 0
        %7579 = vmatpush1.bf16.msra.mxu0 0
        %7580 = vmatprep.subr.bf16.mxu0 0
        %7581 = vmatpush1.bf16.msra.mxu0 0
        %7582 = vmatprep.subr.bf16.mxu0 0
        %7583 = vmatpush1.bf16.msra.mxu0 0
        %7584 = vmatprep.subr.bf16.mxu0 0
        %7585 = vmatpush1.bf16.msra.mxu0 0
        %7586 = vmatprep.subr.bf16.mxu0 0
        %7587 = vmatpush1.bf16.msra.mxu0 0
        %7588 = vmatprep.subr.bf16.mxu0 0
        %7589 = vmatpush1.bf16.msra.mxu0 0
        %7590 = vmatprep.subr.bf16.mxu0 0
        %7591 = vmatpush1.bf16.msra.mxu0 0
        %7592 = vmatprep.subr.bf16.mxu0 0
        %7593 = vmatpush1.bf16.msra.mxu0 0
        %7594 = vmatprep.subr.bf16.mxu0 0
        %7595 = vmatpush1.bf16.msra.mxu0 0
        %7596 = vmatprep.subr.bf16.mxu0 0
        %7597 = vmatpush1.bf16.msra.mxu0 0
        %7598 = vmatprep.mubr.bf16.mxu0 0
        %7599 = vmatmul.mubr.bf16.gmra.mrb[0].mxu0 %v7564
        %v7600 = vpop.f32.mrb[0].mxu0
        %v7601 = vadd.f32 %v7537, %v7600
        %v7602 = vpop.f32.mrb[0].mxu0
        %v7603 = vpop.f32.mrb[0].mxu0
        %v7604 = vadd.f32 %v7537, %v7603
        %v7605 = vpop.f32.mrb[0].mxu0
        %7606 = vdwg.mxu0
        %7607 = vst [vmem:[%s590] sm:$0xff] %v7601
        %7608 = vst [vmem:[%s590 + $0x8] sm:$0xff] %v7604
        %s7609 = sand.u32 %s321, 1
        %s7610 = scalar_lea.sflag [#allocation4], %s7609
        %s7611 = sand.u32 %s321, 1
        %s7612 = smul.addr %s7611, 16
        %s7613 = scalar_lea.vmem [#allocation20], %s7612
        // Predicated region
        $region117: #{tpu_custom_call.1} parent=71 // pred_check
          %p7614 = pneg %p331
        $region118: #{tpu_custom_call.1} parent=71 // pred_check_branch
          %7616 = sbr.rel (%p7614) target = $region120
        $region119: #{tpu_custom_call.1} parent=71 // pred_region
          %s7617 = smul.u32 2, %s35
          %s7619 = ssub.s32 256, 256
          %7620 = vsyncadd %s7610, %s7619
          %s7621 = smul.addr %s7617, 128
          %s7622 = scalar_lea.hbm %s13, %s7621
          %s7623 = sshll.u32 %s7613, 4
          %s7624 = int_to_ptr.vmem [resolvable:$true] %s7623
          %7629 = dma.vmem_to_hbm [thread:$0]  %s7624, 256, %s7622, %s7610, 128, 128, 8
        $region120: #{tpu_custom_call.1} parent=71 // pred_fallthru
          _
      $region72: #{tpu_custom_call.1} parent=5 // pred_fallthru
        _
      %p7630 = scmp.le.s32.totalorder 2, %s30
      // Predicated region
      $region121: #{tpu_custom_call.1} parent=5 // pred_check
        %p7631 = pneg %p7630
      $region122: #{tpu_custom_call.1} parent=5 // pred_check_branch
        %7633 = sbr.rel (%p7631) target = $region124
      $region123: #{tpu_custom_call.1} parent=5 // pred_region
        %s7634 = ssub.s32 %s30, 2
        // Predicated region
        $region125: #{tpu_custom_call.1} parent=123 // pred_check
          %p7635 = pneg %p337
        $region126: #{tpu_custom_call.1} parent=123 // pred_check_branch
          %7637 = sbr.rel (%p7635) target = $region128
        $region127: #{tpu_custom_call.1} parent=123 // pred_region
          %s7638 = sand.u32 %s322, 1
          %s7639 = scalar_lea.sflag [#allocation4], %s7638
          %s7640 = sand.u32 %s322, 1
          %s7641 = smul.addr %s7640, 16
          %s7642 = scalar_lea.vmem [#allocation20], %s7641
          %7643 = dma.done %s7639, 256
        $region128: #{tpu_custom_call.1} parent=123 // pred_fallthru
          _
      $region124: #{tpu_custom_call.1} parent=5 // pred_fallthru
        _
    $region6: #{tpu_custom_call.1} parent=1 // loop_footer
      %s34 = sadd.s32 1, %s30
    $region7: #{tpu_custom_call.1} parent=1 // loop_footer_branch
      %29 = sbr.rel target = $region3
    $region8: #{tpu_custom_call.1} parent=1 // loop_exit
      _
    %7644 = vsyncpa [#allocation3], 1
    %s7645 = scalar_lea.sflag [#allocation3], 1
    %7646 = vsyncpa %s7645, 1
    %7647 = vsyncpa [#allocation6], 1
    %7648 = vsyncpa [#allocation9], 1
    %7649 = vsyncpa [#allocation12], 1
    %7650 = vsyncpa [#allocation15], 1
    %7651 = vsyncpa [#allocation18], 1
    %7652 = vsyncpa [#allocation4], 1
    %s7653 = scalar_lea.sflag [#allocation4], 1
    %7654 = vsyncpa %s7653, 1

</llo_original>
